<compile_context>
chip_gen: v7x
topology: tpu7x:2x2x1
jax: 0.10.0
libtpu: 0.0.40
codegen_flags: <defaults>
</compile_context>

<pallas_src>
import functools

import jax
import jax.numpy as jnp
import numpy as np
from jax.experimental import pallas as pl
from jax.experimental.pallas import tpu as pltpu


_DILATIONS = (1, 2, 3)
_DIL_BASE = {d: i * 9 for i, d in enumerate(_DILATIONS)}


# ------------------------------ fused kernel --------------------------------
def _fca_kernel(x_ref, mask_ref,
                fw, fb, ew, eb,
                w3a, b3a, w3b, b3b,
                w5a, b5a, w5b, b5b,
                w7a, b7a, w7b, b7b,
                rw, rb, caw1, cab1, caw2, cab2,
                o_ref, *, N, H, W):
    HW = H * W

    # Fold batch onto lanes: (Cin, N*HW).  Roll+mask im2col stays correct per
    # image because every *valid* tap offset lands inside the same image.
    x = jnp.concatenate([x_ref[n] for n in range(N)], axis=1)

    # ---- fusion 1x1 and expand 1x1 (lane-dense (C, N*HW) matmuls) ----
    xf = jnp.dot(fw[...], x, preferred_element_type=jnp.float32) + fb[...]
    xe = jnp.dot(ew[...], xf, preferred_element_type=jnp.float32) + eb[...]

    # Precomputed 0/1 boundary masks, one row per (dilation, tap): (27, N*HW).
    masks = mask_ref[...]

    def im2col(s, dil):
        # (Cin_b, N*HW) -> (9*Cin_b, N*HW) patch matrix for a 3x3 conv with
        # padding == dilation, built entirely in VMEM (no HBM pad).
        base = _DIL_BASE[dil]
        cols = []
        for ky in range(3):
            for kx in range(3):
                dy = (ky - 1) * dil
                dx = (kx - 1) * dil
                off = dy * W + dx
                if off == 0:
                    cols.append(s)
                else:
                    # out[:, l] = s[:, l + off] where in-bounds, else 0.
                    cols.append(jnp.roll(s, -off, axis=1) *
                                masks[base + ky * 3 + kx])
        return jnp.concatenate(cols, axis=0)

    def branch(s, wa, ba, wb, bb, dil2):
        t = jnp.dot(wa[...], im2col(s, 1),
                    preferred_element_type=jnp.float32) + ba[...]
        t = jnp.maximum(t, 0.0)
        t = jnp.dot(wb[...], im2col(t, dil2),
                    preferred_element_type=jnp.float32) + bb[...]
        return t + s

    r3 = branch(xe[0:24],  w3a, b3a, w3b, b3b, 1)             # (24, N*HW)
    r5 = branch(xe[24:40], w5a, b5a, w5b, b5b, 2)             # (16, N*HW)
    r7 = branch(xe[40:48], w7a, b7a, w7b, b7b, 3)             # (8,  N*HW)

    res = jnp.concatenate([r3, r5, r7], axis=0)               # (48, N*HW)
    res = jnp.dot(rw[...], res, preferred_element_type=jnp.float32) + rb[...]

    # ---- channel attention (squeeze-excite) per image, VPU/XLU only ----
    for n in range(N):                                        # static, N small
        sl = slice(n * HW, (n + 1) * HW)                      # 128-aligned
        res_n = res[:, sl]                                    # (C, HW)
        pooled = jnp.mean(res_n, axis=1, keepdims=True)                     # (C, 1)
        y = jnp.sum(caw1[...] * pooled, axis=0, keepdims=True) + cab1[...]  # (1, Cr)
        y = jnp.maximum(y, 0.0)
        y = jnp.sum(caw2[...] * y, axis=1, keepdims=True) + cab2[...]       # (C, 1)
        y = jax.nn.sigmoid(y)
        o_ref[n] = res_n * y + xf[:, sl]                      # CA gate + residual


# --------------------------- host-side constants ------------------------------
def _make_tap_masks(H, W, N):
    """0/1 validity masks for each (dilation, tap), tiled over N images."""
    HW = H * W
    hh = np.arange(HW) // W
    ww = np.arange(HW) % W
    rows = []
    for dil in _DILATIONS:
        for ky in range(3):
            for kx in range(3):
                dy, dx = (ky - 1) * dil, (kx - 1) * dil
                valid = ((hh + dy >= 0) & (hh + dy < H) &
                         (ww + dx >= 0) & (ww + dx < W)).astype(np.float32)
                rows.append(np.tile(valid, N))
    return jnp.asarray(np.stack(rows, axis=0))                # (27, N*HW)


def _prepare_kernel_params(p):
    def conv_mat(w_hwio):
        # HWIO (3,3,Ci,Co) -> (Co, 9*Ci); column index = (ky*3+kx)*Ci + ci,
        # matching the im2col row ordering.
        co = w_hwio.shape[-1]
        return jnp.transpose(w_hwio, (3, 0, 1, 2)).reshape(co, -1)

    col = lambda b: b.reshape(-1, 1)
    return dict(
        fw=p["fusion_w"].T, fb=col(p["fusion_b"]),
        ew=p["expand_w"].T, eb=col(p["expand_b"]),
        w3a=conv_mat(p["k3_w1"]), b3a=col(p["k3_b1"]),
        w3b=conv_mat(p["k3_w2"]), b3b=col(p["k3_b2"]),
        w5a=conv_mat(p["k5_w1"]), b5a=col(p["k5_b1"]),
        w5b=conv_mat(p["k5_w2"]), b5b=col(p["k5_b2"]),
        w7a=conv_mat(p["k7_w1"]), b7a=col(p["k7_b1"]),
        w7b=conv_mat(p["k7_w2"]), b7b=col(p["k7_b2"]),
        rw=p["red_w"].T, rb=col(p["red_b"]),
        caw1=p["ca_w1"], cab1=p["ca_b1"].reshape(1, -1),
        caw2=p["ca_w2"].T, cab2=col(p["ca_b2"]),
    )


_WEIGHT_ORDER = ("fw", "fb", "ew", "eb",
                 "w3a", "b3a", "w3b", "b3b",
                 "w5a", "b5a", "w5b", "b5b",
                 "w7a", "b7a", "w7b", "b7b",
                 "rw", "rb", "caw1", "cab1", "caw2", "cab2")


# ------------------------------ FCA forward ---------------------------------
def fca_forward(x_nchw, p):
    N, Cin, H, W = x_nchw.shape
    HW = H * W
    C = p["fusion_w"].shape[1]
    x = x_nchw.reshape(N, Cin, HW)          # NCHW -> (N, Cin, HW): pure reshape

    kp = _prepare_kernel_params(p)
    weights = [kp[k] for k in _WEIGHT_ORDER]
    masks = _make_tap_masks(H, W, N)

    # Single invocation: all activations (< ~6 MiB) + weights fit in VMEM, so
    # no grid / no BlockSpec pipelining is needed; full arrays land in VMEM.
    out = pl.pallas_call(
        functools.partial(_fca_kernel, N=N, H=H, W=W),
        out_shape=jax.ShapeDtypeStruct((N, C, HW), jnp.float32),
    )(x, masks, *weights)
    return out.reshape(N, C, H, W)


# ----------------------------- reference (JAX) -------------------------------
def ref_forward(x_nhwc, p):
    def c1(x, w, b):
        return jnp.einsum("nhwc,cd->nhwd", x, w) + b.reshape(1, 1, 1, -1)

    def c3(x, w, b, dil, relu=False):
        out = jax.lax.conv_general_dilated(
            x, w, (1, 1), ((dil, dil), (dil, dil)),
            rhs_dilation=(dil, dil),
            dimension_numbers=("NHWC", "HWIO", "NHWC"),
        ) + b.reshape(1, 1, 1, -1)
        return jnp.maximum(out, 0.0) if relu else out

    xf = c1(x_nhwc, p["fusion_w"], p["fusion_b"])
    xe = c1(xf, p["expand_w"], p["expand_b"])
    s3, s5, s7 = xe[..., :24], xe[..., 24:40], xe[..., 40:]
    r3 = c3(c3(s3, p["k3_w1"], p["k3_b1"], 1, True), p["k3_w2"], p["k3_b2"], 1) + s3
    r5 = c3(c3(s5, p["k5_w1"], p["k5_b1"], 1, True), p["k5_w2"], p["k5_b2"], 2) + s5
    r7 = c3(c3(s7, p["k7_w1"], p["k7_b1"], 1, True), p["k7_w2"], p["k7_b2"], 3) + s7
    res = c1(jnp.concatenate([r3, r5, r7], -1), p["red_w"], p["red_b"])
    pooled = jnp.mean(res, axis=(1, 2))
    y = jnp.maximum(pooled @ p["ca_w1"] + p["ca_b1"].reshape(1, -1), 0.0)
    y = jax.nn.sigmoid(y @ p["ca_w2"] + p["ca_b2"].reshape(1, -1))
    return res * y[:, None, None, :] + xf


# ------------------------------ params --------------------------------------
def init_params(key, in_channels, out_channels):
    C = out_channels
    ks = jax.random.split(key, 22)

    def w(k, shape):
        return jax.random.normal(k, shape, jnp.float32) * 0.1

    def b(k, n):
        return jax.random.normal(k, (n,), jnp.float32) * 0.1

    p = {}
    p["fusion_w"], p["fusion_b"] = w(ks[0], (in_channels, C)), b(ks[1], C)
    p["expand_w"], p["expand_b"] = w(ks[2], (C, 48)), b(ks[3], 48)
    p["k3_w1"], p["k3_b1"] = w(ks[4], (3, 3, 24, 96)), b(ks[5], 96)
    p["k3_w2"], p["k3_b2"] = w(ks[6], (3, 3, 96, 24)), b(ks[7], 24)
    p["k5_w1"], p["k5_b1"] = w(ks[8], (3, 3, 16, 64)), b(ks[9], 64)
    p["k5_w2"], p["k5_b2"] = w(ks[10], (3, 3, 64, 16)), b(ks[11], 16)
    p["k7_w1"], p["k7_b1"] = w(ks[12], (3, 3, 8, 32)), b(ks[13], 32)
    p["k7_w2"], p["k7_b2"] = w(ks[14], (3, 3, 32, 8)), b(ks[15], 8)
    p["red_w"], p["red_b"] = w(ks[16], (48, C)), b(ks[17], C)
    p["ca_w1"], p["ca_b1"] = w(ks[18], (C, C // 8)), b(ks[19], C // 8)
    p["ca_w2"], p["ca_b2"] = w(ks[20], (C // 8, C)), b(ks[21], C)
    return p


if __name__ == "__main__":
    key = jax.random.PRNGKey(0)
    kx, kp_key = jax.random.split(key)

    N, Cin, H, W = 2, 4, 16, 16
    Cout = 16  # n_feats; must be divisible by 8 for the CA layer

    x_nchw = jax.random.normal(kx, (N, Cin, H, W), jnp.float32)
    params = init_params(kp_key, Cin, Cout)

    out = fca_forward(x_nchw, params)
    out = jax.block_until_ready(out)
    assert out.shape == (N, Cout, H, W)

    # verify against plain-JAX reference
    x_nhwc = jnp.transpose(x_nchw, (0, 2, 3, 1))
    ref = jnp.transpose(ref_forward(x_nhwc, params), (0, 3, 1, 2))
    np.testing.assert_allclose(np.asarray(out), np.asarray(ref), atol=1e-4, rtol=1e-4)

    print("KERNEL_OK")
</pallas_src>

<mosaic_0001>
module attributes {stable_mosaic.version = 11 : i64} {
  func.func @_fca_kernel(%arg0: memref<2x4x256xf32, #tpu.memory_space<vmem>>, %arg1: memref<27x512xf32, #tpu.memory_space<vmem>>, %arg2: memref<16x4xf32, #tpu.memory_space<vmem>>, %arg3: memref<16x1xf32, #tpu.memory_space<vmem>>, %arg4: memref<48x16xf32, #tpu.memory_space<vmem>>, %arg5: memref<48x1xf32, #tpu.memory_space<vmem>>, %arg6: memref<96x216xf32, #tpu.memory_space<vmem>>, %arg7: memref<96x1xf32, #tpu.memory_space<vmem>>, %arg8: memref<24x864xf32, #tpu.memory_space<vmem>>, %arg9: memref<24x1xf32, #tpu.memory_space<vmem>>, %arg10: memref<64x144xf32, #tpu.memory_space<vmem>>, %arg11: memref<64x1xf32, #tpu.memory_space<vmem>>, %arg12: memref<16x576xf32, #tpu.memory_space<vmem>>, %arg13: memref<16x1xf32, #tpu.memory_space<vmem>>, %arg14: memref<32x72xf32, #tpu.memory_space<vmem>>, %arg15: memref<32x1xf32, #tpu.memory_space<vmem>>, %arg16: memref<8x288xf32, #tpu.memory_space<vmem>>, %arg17: memref<8x1xf32, #tpu.memory_space<vmem>>, %arg18: memref<16x48xf32, #tpu.memory_space<vmem>>, %arg19: memref<16x1xf32, #tpu.memory_space<vmem>>, %arg20: memref<16x2xf32, #tpu.memory_space<vmem>>, %arg21: memref<1x2xf32, #tpu.memory_space<vmem>>, %arg22: memref<16x2xf32, #tpu.memory_space<vmem>>, %arg23: memref<16x1xf32, #tpu.memory_space<vmem>>, %arg24: memref<2x16x256xf32, #tpu.memory_space<vmem>>) attributes {dimension_semantics = [], scalar_prefetch = 0 : i64, scratch_operands = 0 : i64, tpu.core_type = #tpu.core_type<tc>} {
    %c0 = arith.constant 0 : index
    %c0_0 = arith.constant 0 : index
    %c0_1 = arith.constant 0 : index
    %0 = vector.load %arg0[%c0, %c0_0, %c0_1] : memref<2x4x256xf32, #tpu.memory_space<vmem>>, vector<1x4x256xf32>
    %1 = vector.shape_cast %0 : vector<1x4x256xf32> to vector<4x256xf32>
    %c1 = arith.constant 1 : index
    %c0_2 = arith.constant 0 : index
    %c0_3 = arith.constant 0 : index
    %2 = vector.load %arg0[%c1, %c0_2, %c0_3] : memref<2x4x256xf32, #tpu.memory_space<vmem>>, vector<1x4x256xf32>
    %3 = vector.shape_cast %2 : vector<1x4x256xf32> to vector<4x256xf32>
    %4 = tpu.concatenate %1, %3 in 1 : vector<4x256xf32>, vector<4x256xf32> -> vector<4x512xf32>
    %c0_4 = arith.constant 0 : index
    %c0_5 = arith.constant 0 : index
    %5 = vector.load %arg2[%c0_4, %c0_5] : memref<16x4xf32, #tpu.memory_space<vmem>>, vector<16x4xf32>
    %cst = arith.constant dense<0.000000e+00> : vector<16x512xf32>
    %6 = tpu.matmul %5, %4, %cst {dimension_numbers = #tpu.dot_dimension_numbers<[1], [0], [0], [1], [0, 0, 1, 1], [], []>} : vector<16x4xf32>, vector<4x512xf32>, vector<16x512xf32> -> vector<16x512xf32>
    %c0_6 = arith.constant 0 : index
    %c0_7 = arith.constant 0 : index
    %7 = vector.load %arg3[%c0_6, %c0_7] : memref<16x1xf32, #tpu.memory_space<vmem>>, vector<16x1xf32>
    %8 = vector.broadcast %7 : vector<16x1xf32> to vector<16x512xf32>
    %9 = arith.addf %6, %8 : vector<16x512xf32>
    %c0_8 = arith.constant 0 : index
    %c0_9 = arith.constant 0 : index
    %10 = vector.load %arg4[%c0_8, %c0_9] : memref<48x16xf32, #tpu.memory_space<vmem>>, vector<48x16xf32>
    %cst_10 = arith.constant dense<0.000000e+00> : vector<48x512xf32>
    %11 = tpu.matmul %10, %9, %cst_10 {dimension_numbers = #tpu.dot_dimension_numbers<[1], [0], [0], [1], [0, 0, 1, 1], [], []>} : vector<48x16xf32>, vector<16x512xf32>, vector<48x512xf32> -> vector<48x512xf32>
    %c0_11 = arith.constant 0 : index
    %c0_12 = arith.constant 0 : index
    %12 = vector.load %arg5[%c0_11, %c0_12] : memref<48x1xf32, #tpu.memory_space<vmem>>, vector<48x1xf32>
    %13 = vector.broadcast %12 : vector<48x1xf32> to vector<48x512xf32>
    %14 = arith.addf %11, %13 : vector<48x512xf32>
    %c0_13 = arith.constant 0 : index
    %c0_14 = arith.constant 0 : index
    %15 = vector.load %arg1[%c0_13, %c0_14] : memref<27x512xf32, #tpu.memory_space<vmem>>, vector<27x512xf32>
    %16 = vector.extract_strided_slice %14 {offsets = [0, 0], sizes = [24, 512], strides = [1, 1]} : vector<48x512xf32> to vector<24x512xf32>
    %c0_15 = arith.constant 0 : index
    %c0_16 = arith.constant 0 : index
    %17 = vector.load %arg6[%c0_15, %c0_16] : memref<96x216xf32, #tpu.memory_space<vmem>>, vector<96x216xf32>
    %18 = vector.extract_strided_slice %16 {offsets = [0, 495], sizes = [24, 17], strides = [1, 1]} : vector<24x512xf32> to vector<24x17xf32>
    %19 = vector.extract_strided_slice %16 {offsets = [0, 0], sizes = [24, 495], strides = [1, 1]} : vector<24x512xf32> to vector<24x495xf32>
    %20 = tpu.concatenate %18, %19 in 1 : vector<24x17xf32>, vector<24x495xf32> -> vector<24x512xf32>
    %21 = vector.extract_strided_slice %15 {offsets = [0, 0], sizes = [1, 512], strides = [1, 1]} : vector<27x512xf32> to vector<1x512xf32>
    %22 = vector.shape_cast %21 : vector<1x512xf32> to vector<512xf32>
    %23 = vector.shape_cast %22 : vector<512xf32> to vector<1x512xf32>
    %24 = vector.broadcast %23 : vector<1x512xf32> to vector<24x512xf32>
    %25 = arith.mulf %20, %24 : vector<24x512xf32>
    %26 = vector.extract_strided_slice %16 {offsets = [0, 496], sizes = [24, 16], strides = [1, 1]} : vector<24x512xf32> to vector<24x16xf32>
    %27 = vector.extract_strided_slice %16 {offsets = [0, 0], sizes = [24, 496], strides = [1, 1]} : vector<24x512xf32> to vector<24x496xf32>
    %28 = tpu.concatenate %26, %27 in 1 : vector<24x16xf32>, vector<24x496xf32> -> vector<24x512xf32>
    %29 = vector.extract_strided_slice %15 {offsets = [1, 0], sizes = [1, 512], strides = [1, 1]} : vector<27x512xf32> to vector<1x512xf32>
    %30 = vector.shape_cast %29 : vector<1x512xf32> to vector<512xf32>
    %31 = vector.shape_cast %30 : vector<512xf32> to vector<1x512xf32>
    %32 = vector.broadcast %31 : vector<1x512xf32> to vector<24x512xf32>
    %33 = arith.mulf %28, %32 : vector<24x512xf32>
    %34 = vector.extract_strided_slice %16 {offsets = [0, 497], sizes = [24, 15], strides = [1, 1]} : vector<24x512xf32> to vector<24x15xf32>
    %35 = vector.extract_strided_slice %16 {offsets = [0, 0], sizes = [24, 497], strides = [1, 1]} : vector<24x512xf32> to vector<24x497xf32>
    %36 = tpu.concatenate %34, %35 in 1 : vector<24x15xf32>, vector<24x497xf32> -> vector<24x512xf32>
    %37 = vector.extract_strided_slice %15 {offsets = [2, 0], sizes = [1, 512], strides = [1, 1]} : vector<27x512xf32> to vector<1x512xf32>
    %38 = vector.shape_cast %37 : vector<1x512xf32> to vector<512xf32>
    %39 = vector.shape_cast %38 : vector<512xf32> to vector<1x512xf32>
    %40 = vector.broadcast %39 : vector<1x512xf32> to vector<24x512xf32>
    %41 = arith.mulf %36, %40 : vector<24x512xf32>
    %42 = vector.extract_strided_slice %16 {offsets = [0, 511], sizes = [24, 1], strides = [1, 1]} : vector<24x512xf32> to vector<24x1xf32>
    %43 = vector.extract_strided_slice %16 {offsets = [0, 0], sizes = [24, 511], strides = [1, 1]} : vector<24x512xf32> to vector<24x511xf32>
    %44 = tpu.concatenate %42, %43 in 1 : vector<24x1xf32>, vector<24x511xf32> -> vector<24x512xf32>
    %45 = vector.extract_strided_slice %15 {offsets = [3, 0], sizes = [1, 512], strides = [1, 1]} : vector<27x512xf32> to vector<1x512xf32>
    %46 = vector.shape_cast %45 : vector<1x512xf32> to vector<512xf32>
    %47 = vector.shape_cast %46 : vector<512xf32> to vector<1x512xf32>
    %48 = vector.broadcast %47 : vector<1x512xf32> to vector<24x512xf32>
    %49 = arith.mulf %44, %48 : vector<24x512xf32>
    %50 = vector.extract_strided_slice %16 {offsets = [0, 1], sizes = [24, 511], strides = [1, 1]} : vector<24x512xf32> to vector<24x511xf32>
    %51 = vector.extract_strided_slice %16 {offsets = [0, 0], sizes = [24, 1], strides = [1, 1]} : vector<24x512xf32> to vector<24x1xf32>
    %52 = tpu.concatenate %50, %51 in 1 : vector<24x511xf32>, vector<24x1xf32> -> vector<24x512xf32>
    %53 = vector.extract_strided_slice %15 {offsets = [5, 0], sizes = [1, 512], strides = [1, 1]} : vector<27x512xf32> to vector<1x512xf32>
    %54 = vector.shape_cast %53 : vector<1x512xf32> to vector<512xf32>
    %55 = vector.shape_cast %54 : vector<512xf32> to vector<1x512xf32>
    %56 = vector.broadcast %55 : vector<1x512xf32> to vector<24x512xf32>
    %57 = arith.mulf %52, %56 : vector<24x512xf32>
    %58 = vector.extract_strided_slice %16 {offsets = [0, 15], sizes = [24, 497], strides = [1, 1]} : vector<24x512xf32> to vector<24x497xf32>
    %59 = vector.extract_strided_slice %16 {offsets = [0, 0], sizes = [24, 15], strides = [1, 1]} : vector<24x512xf32> to vector<24x15xf32>
    %60 = tpu.concatenate %58, %59 in 1 : vector<24x497xf32>, vector<24x15xf32> -> vector<24x512xf32>
    %61 = vector.extract_strided_slice %15 {offsets = [6, 0], sizes = [1, 512], strides = [1, 1]} : vector<27x512xf32> to vector<1x512xf32>
    %62 = vector.shape_cast %61 : vector<1x512xf32> to vector<512xf32>
    %63 = vector.shape_cast %62 : vector<512xf32> to vector<1x512xf32>
    %64 = vector.broadcast %63 : vector<1x512xf32> to vector<24x512xf32>
    %65 = arith.mulf %60, %64 : vector<24x512xf32>
    %66 = vector.extract_strided_slice %16 {offsets = [0, 16], sizes = [24, 496], strides = [1, 1]} : vector<24x512xf32> to vector<24x496xf32>
    %67 = vector.extract_strided_slice %16 {offsets = [0, 0], sizes = [24, 16], strides = [1, 1]} : vector<24x512xf32> to vector<24x16xf32>
    %68 = tpu.concatenate %66, %67 in 1 : vector<24x496xf32>, vector<24x16xf32> -> vector<24x512xf32>
    %69 = vector.extract_strided_slice %15 {offsets = [7, 0], sizes = [1, 512], strides = [1, 1]} : vector<27x512xf32> to vector<1x512xf32>
    %70 = vector.shape_cast %69 : vector<1x512xf32> to vector<512xf32>
    %71 = vector.shape_cast %70 : vector<512xf32> to vector<1x512xf32>
    %72 = vector.broadcast %71 : vector<1x512xf32> to vector<24x512xf32>
    %73 = arith.mulf %68, %72 : vector<24x512xf32>
    %74 = vector.extract_strided_slice %16 {offsets = [0, 17], sizes = [24, 495], strides = [1, 1]} : vector<24x512xf32> to vector<24x495xf32>
    %75 = vector.extract_strided_slice %16 {offsets = [0, 0], sizes = [24, 17], strides = [1, 1]} : vector<24x512xf32> to vector<24x17xf32>
    %76 = tpu.concatenate %74, %75 in 1 : vector<24x495xf32>, vector<24x17xf32> -> vector<24x512xf32>
    %77 = vector.extract_strided_slice %15 {offsets = [8, 0], sizes = [1, 512], strides = [1, 1]} : vector<27x512xf32> to vector<1x512xf32>
    %78 = vector.shape_cast %77 : vector<1x512xf32> to vector<512xf32>
    %79 = vector.shape_cast %78 : vector<512xf32> to vector<1x512xf32>
    %80 = vector.broadcast %79 : vector<1x512xf32> to vector<24x512xf32>
    %81 = arith.mulf %76, %80 : vector<24x512xf32>
    %82 = tpu.concatenate %25, %33, %41, %49, %16, %57, %65, %73, %81 in 0 : vector<24x512xf32>, vector<24x512xf32>, vector<24x512xf32>, vector<24x512xf32>, vector<24x512xf32>, vector<24x512xf32>, vector<24x512xf32>, vector<24x512xf32>, vector<24x512xf32> -> vector<216x512xf32>
    %cst_17 = arith.constant dense<0.000000e+00> : vector<96x512xf32>
    %83 = tpu.matmul %17, %82, %cst_17 {dimension_numbers = #tpu.dot_dimension_numbers<[1], [0], [0], [1], [0, 0, 1, 1], [], []>} : vector<96x216xf32>, vector<216x512xf32>, vector<96x512xf32> -> vector<96x512xf32>
    %c0_18 = arith.constant 0 : index
    %c0_19 = arith.constant 0 : index
    %84 = vector.load %arg7[%c0_18, %c0_19] : memref<96x1xf32, #tpu.memory_space<vmem>>, vector<96x1xf32>
    %85 = vector.broadcast %84 : vector<96x1xf32> to vector<96x512xf32>
    %86 = arith.addf %83, %85 : vector<96x512xf32>
    %cst_20 = arith.constant 0.000000e+00 : f32
    %87 = vector.broadcast %cst_20 : f32 to vector<96x512xf32>
    %88 = arith.maximumf %86, %87 : vector<96x512xf32>
    %c0_21 = arith.constant 0 : index
    %c0_22 = arith.constant 0 : index
    %89 = vector.load %arg8[%c0_21, %c0_22] : memref<24x864xf32, #tpu.memory_space<vmem>>, vector<24x864xf32>
    %90 = vector.extract_strided_slice %88 {offsets = [0, 495], sizes = [96, 17], strides = [1, 1]} : vector<96x512xf32> to vector<96x17xf32>
    %91 = vector.extract_strided_slice %88 {offsets = [0, 0], sizes = [96, 495], strides = [1, 1]} : vector<96x512xf32> to vector<96x495xf32>
    %92 = tpu.concatenate %90, %91 in 1 : vector<96x17xf32>, vector<96x495xf32> -> vector<96x512xf32>
    %93 = vector.extract_strided_slice %15 {offsets = [0, 0], sizes = [1, 512], strides = [1, 1]} : vector<27x512xf32> to vector<1x512xf32>
    %94 = vector.shape_cast %93 : vector<1x512xf32> to vector<512xf32>
    %95 = vector.shape_cast %94 : vector<512xf32> to vector<1x512xf32>
    %96 = vector.broadcast %95 : vector<1x512xf32> to vector<96x512xf32>
    %97 = arith.mulf %92, %96 : vector<96x512xf32>
    %98 = vector.extract_strided_slice %88 {offsets = [0, 496], sizes = [96, 16], strides = [1, 1]} : vector<96x512xf32> to vector<96x16xf32>
    %99 = vector.extract_strided_slice %88 {offsets = [0, 0], sizes = [96, 496], strides = [1, 1]} : vector<96x512xf32> to vector<96x496xf32>
    %100 = tpu.concatenate %98, %99 in 1 : vector<96x16xf32>, vector<96x496xf32> -> vector<96x512xf32>
    %101 = vector.extract_strided_slice %15 {offsets = [1, 0], sizes = [1, 512], strides = [1, 1]} : vector<27x512xf32> to vector<1x512xf32>
    %102 = vector.shape_cast %101 : vector<1x512xf32> to vector<512xf32>
    %103 = vector.shape_cast %102 : vector<512xf32> to vector<1x512xf32>
    %104 = vector.broadcast %103 : vector<1x512xf32> to vector<96x512xf32>
    %105 = arith.mulf %100, %104 : vector<96x512xf32>
    %106 = vector.extract_strided_slice %88 {offsets = [0, 497], sizes = [96, 15], strides = [1, 1]} : vector<96x512xf32> to vector<96x15xf32>
    %107 = vector.extract_strided_slice %88 {offsets = [0, 0], sizes = [96, 497], strides = [1, 1]} : vector<96x512xf32> to vector<96x497xf32>
    %108 = tpu.concatenate %106, %107 in 1 : vector<96x15xf32>, vector<96x497xf32> -> vector<96x512xf32>
    %109 = vector.extract_strided_slice %15 {offsets = [2, 0], sizes = [1, 512], strides = [1, 1]} : vector<27x512xf32> to vector<1x512xf32>
    %110 = vector.shape_cast %109 : vector<1x512xf32> to vector<512xf32>
    %111 = vector.shape_cast %110 : vector<512xf32> to vector<1x512xf32>
    %112 = vector.broadcast %111 : vector<1x512xf32> to vector<96x512xf32>
    %113 = arith.mulf %108, %112 : vector<96x512xf32>
    %114 = vector.extract_strided_slice %88 {offsets = [0, 511], sizes = [96, 1], strides = [1, 1]} : vector<96x512xf32> to vector<96x1xf32>
    %115 = vector.extract_strided_slice %88 {offsets = [0, 0], sizes = [96, 511], strides = [1, 1]} : vector<96x512xf32> to vector<96x511xf32>
    %116 = tpu.concatenate %114, %115 in 1 : vector<96x1xf32>, vector<96x511xf32> -> vector<96x512xf32>
    %117 = vector.extract_strided_slice %15 {offsets = [3, 0], sizes = [1, 512], strides = [1, 1]} : vector<27x512xf32> to vector<1x512xf32>
    %118 = vector.shape_cast %117 : vector<1x512xf32> to vector<512xf32>
    %119 = vector.shape_cast %118 : vector<512xf32> to vector<1x512xf32>
    %120 = vector.broadcast %119 : vector<1x512xf32> to vector<96x512xf32>
    %121 = arith.mulf %116, %120 : vector<96x512xf32>
    %122 = vector.extract_strided_slice %88 {offsets = [0, 1], sizes = [96, 511], strides = [1, 1]} : vector<96x512xf32> to vector<96x511xf32>
    %123 = vector.extract_strided_slice %88 {offsets = [0, 0], sizes = [96, 1], strides = [1, 1]} : vector<96x512xf32> to vector<96x1xf32>
    %124 = tpu.concatenate %122, %123 in 1 : vector<96x511xf32>, vector<96x1xf32> -> vector<96x512xf32>
    %125 = vector.extract_strided_slice %15 {offsets = [5, 0], sizes = [1, 512], strides = [1, 1]} : vector<27x512xf32> to vector<1x512xf32>
    %126 = vector.shape_cast %125 : vector<1x512xf32> to vector<512xf32>
    %127 = vector.shape_cast %126 : vector<512xf32> to vector<1x512xf32>
    %128 = vector.broadcast %127 : vector<1x512xf32> to vector<96x512xf32>
    %129 = arith.mulf %124, %128 : vector<96x512xf32>
    %130 = vector.extract_strided_slice %88 {offsets = [0, 15], sizes = [96, 497], strides = [1, 1]} : vector<96x512xf32> to vector<96x497xf32>
    %131 = vector.extract_strided_slice %88 {offsets = [0, 0], sizes = [96, 15], strides = [1, 1]} : vector<96x512xf32> to vector<96x15xf32>
    %132 = tpu.concatenate %130, %131 in 1 : vector<96x497xf32>, vector<96x15xf32> -> vector<96x512xf32>
    %133 = vector.extract_strided_slice %15 {offsets = [6, 0], sizes = [1, 512], strides = [1, 1]} : vector<27x512xf32> to vector<1x512xf32>
    %134 = vector.shape_cast %133 : vector<1x512xf32> to vector<512xf32>
    %135 = vector.shape_cast %134 : vector<512xf32> to vector<1x512xf32>
    %136 = vector.broadcast %135 : vector<1x512xf32> to vector<96x512xf32>
    %137 = arith.mulf %132, %136 : vector<96x512xf32>
    %138 = vector.extract_strided_slice %88 {offsets = [0, 16], sizes = [96, 496], strides = [1, 1]} : vector<96x512xf32> to vector<96x496xf32>
    %139 = vector.extract_strided_slice %88 {offsets = [0, 0], sizes = [96, 16], strides = [1, 1]} : vector<96x512xf32> to vector<96x16xf32>
    %140 = tpu.concatenate %138, %139 in 1 : vector<96x496xf32>, vector<96x16xf32> -> vector<96x512xf32>
    %141 = vector.extract_strided_slice %15 {offsets = [7, 0], sizes = [1, 512], strides = [1, 1]} : vector<27x512xf32> to vector<1x512xf32>
    %142 = vector.shape_cast %141 : vector<1x512xf32> to vector<512xf32>
    %143 = vector.shape_cast %142 : vector<512xf32> to vector<1x512xf32>
    %144 = vector.broadcast %143 : vector<1x512xf32> to vector<96x512xf32>
    %145 = arith.mulf %140, %144 : vector<96x512xf32>
    %146 = vector.extract_strided_slice %88 {offsets = [0, 17], sizes = [96, 495], strides = [1, 1]} : vector<96x512xf32> to vector<96x495xf32>
    %147 = vector.extract_strided_slice %88 {offsets = [0, 0], sizes = [96, 17], strides = [1, 1]} : vector<96x512xf32> to vector<96x17xf32>
    %148 = tpu.concatenate %146, %147 in 1 : vector<96x495xf32>, vector<96x17xf32> -> vector<96x512xf32>
    %149 = vector.extract_strided_slice %15 {offsets = [8, 0], sizes = [1, 512], strides = [1, 1]} : vector<27x512xf32> to vector<1x512xf32>
    %150 = vector.shape_cast %149 : vector<1x512xf32> to vector<512xf32>
    %151 = vector.shape_cast %150 : vector<512xf32> to vector<1x512xf32>
    %152 = vector.broadcast %151 : vector<1x512xf32> to vector<96x512xf32>
    %153 = arith.mulf %148, %152 : vector<96x512xf32>
    %154 = tpu.concatenate %97, %105, %113, %121, %88, %129, %137, %145, %153 in 0 : vector<96x512xf32>, vector<96x512xf32>, vector<96x512xf32>, vector<96x512xf32>, vector<96x512xf32>, vector<96x512xf32>, vector<96x512xf32>, vector<96x512xf32>, vector<96x512xf32> -> vector<864x512xf32>
    %cst_23 = arith.constant dense<0.000000e+00> : vector<24x512xf32>
    %155 = tpu.matmul %89, %154, %cst_23 {dimension_numbers = #tpu.dot_dimension_numbers<[1], [0], [0], [1], [0, 0, 1, 1], [], []>} : vector<24x864xf32>, vector<864x512xf32>, vector<24x512xf32> -> vector<24x512xf32>
    %c0_24 = arith.constant 0 : index
    %c0_25 = arith.constant 0 : index
    %156 = vector.load %arg9[%c0_24, %c0_25] : memref<24x1xf32, #tpu.memory_space<vmem>>, vector<24x1xf32>
    %157 = vector.broadcast %156 : vector<24x1xf32> to vector<24x512xf32>
    %158 = arith.addf %155, %157 : vector<24x512xf32>
    %159 = arith.addf %158, %16 : vector<24x512xf32>
    %160 = vector.extract_strided_slice %14 {offsets = [24, 0], sizes = [16, 512], strides = [1, 1]} : vector<48x512xf32> to vector<16x512xf32>
    %c0_26 = arith.constant 0 : index
    %c0_27 = arith.constant 0 : index
    %161 = vector.load %arg10[%c0_26, %c0_27] : memref<64x144xf32, #tpu.memory_space<vmem>>, vector<64x144xf32>
    %162 = vector.extract_strided_slice %160 {offsets = [0, 495], sizes = [16, 17], strides = [1, 1]} : vector<16x512xf32> to vector<16x17xf32>
    %163 = vector.extract_strided_slice %160 {offsets = [0, 0], sizes = [16, 495], strides = [1, 1]} : vector<16x512xf32> to vector<16x495xf32>
    %164 = tpu.concatenate %162, %163 in 1 : vector<16x17xf32>, vector<16x495xf32> -> vector<16x512xf32>
    %165 = vector.extract_strided_slice %15 {offsets = [0, 0], sizes = [1, 512], strides = [1, 1]} : vector<27x512xf32> to vector<1x512xf32>
    %166 = vector.shape_cast %165 : vector<1x512xf32> to vector<512xf32>
    %167 = vector.shape_cast %166 : vector<512xf32> to vector<1x512xf32>
    %168 = vector.broadcast %167 : vector<1x512xf32> to vector<16x512xf32>
    %169 = arith.mulf %164, %168 : vector<16x512xf32>
    %170 = vector.extract_strided_slice %160 {offsets = [0, 496], sizes = [16, 16], strides = [1, 1]} : vector<16x512xf32> to vector<16x16xf32>
    %171 = vector.extract_strided_slice %160 {offsets = [0, 0], sizes = [16, 496], strides = [1, 1]} : vector<16x512xf32> to vector<16x496xf32>
    %172 = tpu.concatenate %170, %171 in 1 : vector<16x16xf32>, vector<16x496xf32> -> vector<16x512xf32>
    %173 = vector.extract_strided_slice %15 {offsets = [1, 0], sizes = [1, 512], strides = [1, 1]} : vector<27x512xf32> to vector<1x512xf32>
    %174 = vector.shape_cast %173 : vector<1x512xf32> to vector<512xf32>
    %175 = vector.shape_cast %174 : vector<512xf32> to vector<1x512xf32>
    %176 = vector.broadcast %175 : vector<1x512xf32> to vector<16x512xf32>
    %177 = arith.mulf %172, %176 : vector<16x512xf32>
    %178 = vector.extract_strided_slice %160 {offsets = [0, 497], sizes = [16, 15], strides = [1, 1]} : vector<16x512xf32> to vector<16x15xf32>
    %179 = vector.extract_strided_slice %160 {offsets = [0, 0], sizes = [16, 497], strides = [1, 1]} : vector<16x512xf32> to vector<16x497xf32>
    %180 = tpu.concatenate %178, %179 in 1 : vector<16x15xf32>, vector<16x497xf32> -> vector<16x512xf32>
    %181 = vector.extract_strided_slice %15 {offsets = [2, 0], sizes = [1, 512], strides = [1, 1]} : vector<27x512xf32> to vector<1x512xf32>
    %182 = vector.shape_cast %181 : vector<1x512xf32> to vector<512xf32>
    %183 = vector.shape_cast %182 : vector<512xf32> to vector<1x512xf32>
    %184 = vector.broadcast %183 : vector<1x512xf32> to vector<16x512xf32>
    %185 = arith.mulf %180, %184 : vector<16x512xf32>
    %186 = vector.extract_strided_slice %160 {offsets = [0, 511], sizes = [16, 1], strides = [1, 1]} : vector<16x512xf32> to vector<16x1xf32>
    %187 = vector.extract_strided_slice %160 {offsets = [0, 0], sizes = [16, 511], strides = [1, 1]} : vector<16x512xf32> to vector<16x511xf32>
    %188 = tpu.concatenate %186, %187 in 1 : vector<16x1xf32>, vector<16x511xf32> -> vector<16x512xf32>
    %189 = vector.extract_strided_slice %15 {offsets = [3, 0], sizes = [1, 512], strides = [1, 1]} : vector<27x512xf32> to vector<1x512xf32>
    %190 = vector.shape_cast %189 : vector<1x512xf32> to vector<512xf32>
    %191 = vector.shape_cast %190 : vector<512xf32> to vector<1x512xf32>
    %192 = vector.broadcast %191 : vector<1x512xf32> to vector<16x512xf32>
    %193 = arith.mulf %188, %192 : vector<16x512xf32>
    %194 = vector.extract_strided_slice %160 {offsets = [0, 1], sizes = [16, 511], strides = [1, 1]} : vector<16x512xf32> to vector<16x511xf32>
    %195 = vector.extract_strided_slice %160 {offsets = [0, 0], sizes = [16, 1], strides = [1, 1]} : vector<16x512xf32> to vector<16x1xf32>
    %196 = tpu.concatenate %194, %195 in 1 : vector<16x511xf32>, vector<16x1xf32> -> vector<16x512xf32>
    %197 = vector.extract_strided_slice %15 {offsets = [5, 0], sizes = [1, 512], strides = [1, 1]} : vector<27x512xf32> to vector<1x512xf32>
    %198 = vector.shape_cast %197 : vector<1x512xf32> to vector<512xf32>
    %199 = vector.shape_cast %198 : vector<512xf32> to vector<1x512xf32>
    %200 = vector.broadcast %199 : vector<1x512xf32> to vector<16x512xf32>
    %201 = arith.mulf %196, %200 : vector<16x512xf32>
    %202 = vector.extract_strided_slice %160 {offsets = [0, 15], sizes = [16, 497], strides = [1, 1]} : vector<16x512xf32> to vector<16x497xf32>
    %203 = vector.extract_strided_slice %160 {offsets = [0, 0], sizes = [16, 15], strides = [1, 1]} : vector<16x512xf32> to vector<16x15xf32>
    %204 = tpu.concatenate %202, %203 in 1 : vector<16x497xf32>, vector<16x15xf32> -> vector<16x512xf32>
    %205 = vector.extract_strided_slice %15 {offsets = [6, 0], sizes = [1, 512], strides = [1, 1]} : vector<27x512xf32> to vector<1x512xf32>
    %206 = vector.shape_cast %205 : vector<1x512xf32> to vector<512xf32>
    %207 = vector.shape_cast %206 : vector<512xf32> to vector<1x512xf32>
    %208 = vector.broadcast %207 : vector<1x512xf32> to vector<16x512xf32>
    %209 = arith.mulf %204, %208 : vector<16x512xf32>
    %210 = vector.extract_strided_slice %160 {offsets = [0, 16], sizes = [16, 496], strides = [1, 1]} : vector<16x512xf32> to vector<16x496xf32>
    %211 = vector.extract_strided_slice %160 {offsets = [0, 0], sizes = [16, 16], strides = [1, 1]} : vector<16x512xf32> to vector<16x16xf32>
    %212 = tpu.concatenate %210, %211 in 1 : vector<16x496xf32>, vector<16x16xf32> -> vector<16x512xf32>
    %213 = vector.extract_strided_slice %15 {offsets = [7, 0], sizes = [1, 512], strides = [1, 1]} : vector<27x512xf32> to vector<1x512xf32>
    %214 = vector.shape_cast %213 : vector<1x512xf32> to vector<512xf32>
    %215 = vector.shape_cast %214 : vector<512xf32> to vector<1x512xf32>
    %216 = vector.broadcast %215 : vector<1x512xf32> to vector<16x512xf32>
    %217 = arith.mulf %212, %216 : vector<16x512xf32>
    %218 = vector.extract_strided_slice %160 {offsets = [0, 17], sizes = [16, 495], strides = [1, 1]} : vector<16x512xf32> to vector<16x495xf32>
    %219 = vector.extract_strided_slice %160 {offsets = [0, 0], sizes = [16, 17], strides = [1, 1]} : vector<16x512xf32> to vector<16x17xf32>
    %220 = tpu.concatenate %218, %219 in 1 : vector<16x495xf32>, vector<16x17xf32> -> vector<16x512xf32>
    %221 = vector.extract_strided_slice %15 {offsets = [8, 0], sizes = [1, 512], strides = [1, 1]} : vector<27x512xf32> to vector<1x512xf32>
    %222 = vector.shape_cast %221 : vector<1x512xf32> to vector<512xf32>
    %223 = vector.shape_cast %222 : vector<512xf32> to vector<1x512xf32>
    %224 = vector.broadcast %223 : vector<1x512xf32> to vector<16x512xf32>
    %225 = arith.mulf %220, %224 : vector<16x512xf32>
    %226 = tpu.concatenate %169, %177, %185, %193, %160, %201, %209, %217, %225 in 0 : vector<16x512xf32>, vector<16x512xf32>, vector<16x512xf32>, vector<16x512xf32>, vector<16x512xf32>, vector<16x512xf32>, vector<16x512xf32>, vector<16x512xf32>, vector<16x512xf32> -> vector<144x512xf32>
    %cst_28 = arith.constant dense<0.000000e+00> : vector<64x512xf32>
    %227 = tpu.matmul %161, %226, %cst_28 {dimension_numbers = #tpu.dot_dimension_numbers<[1], [0], [0], [1], [0, 0, 1, 1], [], []>} : vector<64x144xf32>, vector<144x512xf32>, vector<64x512xf32> -> vector<64x512xf32>
    %c0_29 = arith.constant 0 : index
    %c0_30 = arith.constant 0 : index
    %228 = vector.load %arg11[%c0_29, %c0_30] : memref<64x1xf32, #tpu.memory_space<vmem>>, vector<64x1xf32>
    %229 = vector.broadcast %228 : vector<64x1xf32> to vector<64x512xf32>
    %230 = arith.addf %227, %229 : vector<64x512xf32>
    %cst_31 = arith.constant 0.000000e+00 : f32
    %231 = vector.broadcast %cst_31 : f32 to vector<64x512xf32>
    %232 = arith.maximumf %230, %231 : vector<64x512xf32>
    %c0_32 = arith.constant 0 : index
    %c0_33 = arith.constant 0 : index
    %233 = vector.load %arg12[%c0_32, %c0_33] : memref<16x576xf32, #tpu.memory_space<vmem>>, vector<16x576xf32>
    %234 = vector.extract_strided_slice %232 {offsets = [0, 478], sizes = [64, 34], strides = [1, 1]} : vector<64x512xf32> to vector<64x34xf32>
    %235 = vector.extract_strided_slice %232 {offsets = [0, 0], sizes = [64, 478], strides = [1, 1]} : vector<64x512xf32> to vector<64x478xf32>
    %236 = tpu.concatenate %234, %235 in 1 : vector<64x34xf32>, vector<64x478xf32> -> vector<64x512xf32>
    %237 = vector.extract_strided_slice %15 {offsets = [9, 0], sizes = [1, 512], strides = [1, 1]} : vector<27x512xf32> to vector<1x512xf32>
    %238 = vector.shape_cast %237 : vector<1x512xf32> to vector<512xf32>
    %239 = vector.shape_cast %238 : vector<512xf32> to vector<1x512xf32>
    %240 = vector.broadcast %239 : vector<1x512xf32> to vector<64x512xf32>
    %241 = arith.mulf %236, %240 : vector<64x512xf32>
    %242 = vector.extract_strided_slice %232 {offsets = [0, 480], sizes = [64, 32], strides = [1, 1]} : vector<64x512xf32> to vector<64x32xf32>
    %243 = vector.extract_strided_slice %232 {offsets = [0, 0], sizes = [64, 480], strides = [1, 1]} : vector<64x512xf32> to vector<64x480xf32>
    %244 = tpu.concatenate %242, %243 in 1 : vector<64x32xf32>, vector<64x480xf32> -> vector<64x512xf32>
    %245 = vector.extract_strided_slice %15 {offsets = [10, 0], sizes = [1, 512], strides = [1, 1]} : vector<27x512xf32> to vector<1x512xf32>
    %246 = vector.shape_cast %245 : vector<1x512xf32> to vector<512xf32>
    %247 = vector.shape_cast %246 : vector<512xf32> to vector<1x512xf32>
    %248 = vector.broadcast %247 : vector<1x512xf32> to vector<64x512xf32>
    %249 = arith.mulf %244, %248 : vector<64x512xf32>
    %250 = vector.extract_strided_slice %232 {offsets = [0, 482], sizes = [64, 30], strides = [1, 1]} : vector<64x512xf32> to vector<64x30xf32>
    %251 = vector.extract_strided_slice %232 {offsets = [0, 0], sizes = [64, 482], strides = [1, 1]} : vector<64x512xf32> to vector<64x482xf32>
    %252 = tpu.concatenate %250, %251 in 1 : vector<64x30xf32>, vector<64x482xf32> -> vector<64x512xf32>
    %253 = vector.extract_strided_slice %15 {offsets = [11, 0], sizes = [1, 512], strides = [1, 1]} : vector<27x512xf32> to vector<1x512xf32>
    %254 = vector.shape_cast %253 : vector<1x512xf32> to vector<512xf32>
    %255 = vector.shape_cast %254 : vector<512xf32> to vector<1x512xf32>
    %256 = vector.broadcast %255 : vector<1x512xf32> to vector<64x512xf32>
    %257 = arith.mulf %252, %256 : vector<64x512xf32>
    %258 = vector.extract_strided_slice %232 {offsets = [0, 510], sizes = [64, 2], strides = [1, 1]} : vector<64x512xf32> to vector<64x2xf32>
    %259 = vector.extract_strided_slice %232 {offsets = [0, 0], sizes = [64, 510], strides = [1, 1]} : vector<64x512xf32> to vector<64x510xf32>
    %260 = tpu.concatenate %258, %259 in 1 : vector<64x2xf32>, vector<64x510xf32> -> vector<64x512xf32>
    %261 = vector.extract_strided_slice %15 {offsets = [12, 0], sizes = [1, 512], strides = [1, 1]} : vector<27x512xf32> to vector<1x512xf32>
    %262 = vector.shape_cast %261 : vector<1x512xf32> to vector<512xf32>
    %263 = vector.shape_cast %262 : vector<512xf32> to vector<1x512xf32>
    %264 = vector.broadcast %263 : vector<1x512xf32> to vector<64x512xf32>
    %265 = arith.mulf %260, %264 : vector<64x512xf32>
    %266 = vector.extract_strided_slice %232 {offsets = [0, 2], sizes = [64, 510], strides = [1, 1]} : vector<64x512xf32> to vector<64x510xf32>
    %267 = vector.extract_strided_slice %232 {offsets = [0, 0], sizes = [64, 2], strides = [1, 1]} : vector<64x512xf32> to vector<64x2xf32>
    %268 = tpu.concatenate %266, %267 in 1 : vector<64x510xf32>, vector<64x2xf32> -> vector<64x512xf32>
    %269 = vector.extract_strided_slice %15 {offsets = [14, 0], sizes = [1, 512], strides = [1, 1]} : vector<27x512xf32> to vector<1x512xf32>
    %270 = vector.shape_cast %269 : vector<1x512xf32> to vector<512xf32>
    %271 = vector.shape_cast %270 : vector<512xf32> to vector<1x512xf32>
    %272 = vector.broadcast %271 : vector<1x512xf32> to vector<64x512xf32>
    %273 = arith.mulf %268, %272 : vector<64x512xf32>
    %274 = vector.extract_strided_slice %232 {offsets = [0, 30], sizes = [64, 482], strides = [1, 1]} : vector<64x512xf32> to vector<64x482xf32>
    %275 = vector.extract_strided_slice %232 {offsets = [0, 0], sizes = [64, 30], strides = [1, 1]} : vector<64x512xf32> to vector<64x30xf32>
    %276 = tpu.concatenate %274, %275 in 1 : vector<64x482xf32>, vector<64x30xf32> -> vector<64x512xf32>
    %277 = vector.extract_strided_slice %15 {offsets = [15, 0], sizes = [1, 512], strides = [1, 1]} : vector<27x512xf32> to vector<1x512xf32>
    %278 = vector.shape_cast %277 : vector<1x512xf32> to vector<512xf32>
    %279 = vector.shape_cast %278 : vector<512xf32> to vector<1x512xf32>
    %280 = vector.broadcast %279 : vector<1x512xf32> to vector<64x512xf32>
    %281 = arith.mulf %276, %280 : vector<64x512xf32>
    %282 = vector.extract_strided_slice %232 {offsets = [0, 32], sizes = [64, 480], strides = [1, 1]} : vector<64x512xf32> to vector<64x480xf32>
    %283 = vector.extract_strided_slice %232 {offsets = [0, 0], sizes = [64, 32], strides = [1, 1]} : vector<64x512xf32> to vector<64x32xf32>
    %284 = tpu.concatenate %282, %283 in 1 : vector<64x480xf32>, vector<64x32xf32> -> vector<64x512xf32>
    %285 = vector.extract_strided_slice %15 {offsets = [16, 0], sizes = [1, 512], strides = [1, 1]} : vector<27x512xf32> to vector<1x512xf32>
    %286 = vector.shape_cast %285 : vector<1x512xf32> to vector<512xf32>
    %287 = vector.shape_cast %286 : vector<512xf32> to vector<1x512xf32>
    %288 = vector.broadcast %287 : vector<1x512xf32> to vector<64x512xf32>
    %289 = arith.mulf %284, %288 : vector<64x512xf32>
    %290 = vector.extract_strided_slice %232 {offsets = [0, 34], sizes = [64, 478], strides = [1, 1]} : vector<64x512xf32> to vector<64x478xf32>
    %291 = vector.extract_strided_slice %232 {offsets = [0, 0], sizes = [64, 34], strides = [1, 1]} : vector<64x512xf32> to vector<64x34xf32>
    %292 = tpu.concatenate %290, %291 in 1 : vector<64x478xf32>, vector<64x34xf32> -> vector<64x512xf32>
    %293 = vector.extract_strided_slice %15 {offsets = [17, 0], sizes = [1, 512], strides = [1, 1]} : vector<27x512xf32> to vector<1x512xf32>
    %294 = vector.shape_cast %293 : vector<1x512xf32> to vector<512xf32>
    %295 = vector.shape_cast %294 : vector<512xf32> to vector<1x512xf32>
    %296 = vector.broadcast %295 : vector<1x512xf32> to vector<64x512xf32>
    %297 = arith.mulf %292, %296 : vector<64x512xf32>
    %298 = tpu.concatenate %241, %249, %257, %265, %232, %273, %281, %289, %297 in 0 : vector<64x512xf32>, vector<64x512xf32>, vector<64x512xf32>, vector<64x512xf32>, vector<64x512xf32>, vector<64x512xf32>, vector<64x512xf32>, vector<64x512xf32>, vector<64x512xf32> -> vector<576x512xf32>
    %cst_34 = arith.constant dense<0.000000e+00> : vector<16x512xf32>
    %299 = tpu.matmul %233, %298, %cst_34 {dimension_numbers = #tpu.dot_dimension_numbers<[1], [0], [0], [1], [0, 0, 1, 1], [], []>} : vector<16x576xf32>, vector<576x512xf32>, vector<16x512xf32> -> vector<16x512xf32>
    %c0_35 = arith.constant 0 : index
    %c0_36 = arith.constant 0 : index
    %300 = vector.load %arg13[%c0_35, %c0_36] : memref<16x1xf32, #tpu.memory_space<vmem>>, vector<16x1xf32>
    %301 = vector.broadcast %300 : vector<16x1xf32> to vector<16x512xf32>
    %302 = arith.addf %299, %301 : vector<16x512xf32>
    %303 = arith.addf %302, %160 : vector<16x512xf32>
    %304 = vector.extract_strided_slice %14 {offsets = [40, 0], sizes = [8, 512], strides = [1, 1]} : vector<48x512xf32> to vector<8x512xf32>
    %c0_37 = arith.constant 0 : index
    %c0_38 = arith.constant 0 : index
    %305 = vector.load %arg14[%c0_37, %c0_38] : memref<32x72xf32, #tpu.memory_space<vmem>>, vector<32x72xf32>
    %306 = vector.extract_strided_slice %304 {offsets = [0, 495], sizes = [8, 17], strides = [1, 1]} : vector<8x512xf32> to vector<8x17xf32>
    %307 = vector.extract_strided_slice %304 {offsets = [0, 0], sizes = [8, 495], strides = [1, 1]} : vector<8x512xf32> to vector<8x495xf32>
    %308 = tpu.concatenate %306, %307 in 1 : vector<8x17xf32>, vector<8x495xf32> -> vector<8x512xf32>
    %309 = vector.extract_strided_slice %15 {offsets = [0, 0], sizes = [1, 512], strides = [1, 1]} : vector<27x512xf32> to vector<1x512xf32>
    %310 = vector.shape_cast %309 : vector<1x512xf32> to vector<512xf32>
    %311 = vector.shape_cast %310 : vector<512xf32> to vector<1x512xf32>
    %312 = vector.broadcast %311 : vector<1x512xf32> to vector<8x512xf32>
    %313 = arith.mulf %308, %312 : vector<8x512xf32>
    %314 = vector.extract_strided_slice %304 {offsets = [0, 496], sizes = [8, 16], strides = [1, 1]} : vector<8x512xf32> to vector<8x16xf32>
    %315 = vector.extract_strided_slice %304 {offsets = [0, 0], sizes = [8, 496], strides = [1, 1]} : vector<8x512xf32> to vector<8x496xf32>
    %316 = tpu.concatenate %314, %315 in 1 : vector<8x16xf32>, vector<8x496xf32> -> vector<8x512xf32>
    %317 = vector.extract_strided_slice %15 {offsets = [1, 0], sizes = [1, 512], strides = [1, 1]} : vector<27x512xf32> to vector<1x512xf32>
    %318 = vector.shape_cast %317 : vector<1x512xf32> to vector<512xf32>
    %319 = vector.shape_cast %318 : vector<512xf32> to vector<1x512xf32>
    %320 = vector.broadcast %319 : vector<1x512xf32> to vector<8x512xf32>
    %321 = arith.mulf %316, %320 : vector<8x512xf32>
    %322 = vector.extract_strided_slice %304 {offsets = [0, 497], sizes = [8, 15], strides = [1, 1]} : vector<8x512xf32> to vector<8x15xf32>
    %323 = vector.extract_strided_slice %304 {offsets = [0, 0], sizes = [8, 497], strides = [1, 1]} : vector<8x512xf32> to vector<8x497xf32>
    %324 = tpu.concatenate %322, %323 in 1 : vector<8x15xf32>, vector<8x497xf32> -> vector<8x512xf32>
    %325 = vector.extract_strided_slice %15 {offsets = [2, 0], sizes = [1, 512], strides = [1, 1]} : vector<27x512xf32> to vector<1x512xf32>
    %326 = vector.shape_cast %325 : vector<1x512xf32> to vector<512xf32>
    %327 = vector.shape_cast %326 : vector<512xf32> to vector<1x512xf32>
    %328 = vector.broadcast %327 : vector<1x512xf32> to vector<8x512xf32>
    %329 = arith.mulf %324, %328 : vector<8x512xf32>
    %330 = vector.extract_strided_slice %304 {offsets = [0, 511], sizes = [8, 1], strides = [1, 1]} : vector<8x512xf32> to vector<8x1xf32>
    %331 = vector.extract_strided_slice %304 {offsets = [0, 0], sizes = [8, 511], strides = [1, 1]} : vector<8x512xf32> to vector<8x511xf32>
    %332 = tpu.concatenate %330, %331 in 1 : vector<8x1xf32>, vector<8x511xf32> -> vector<8x512xf32>
    %333 = vector.extract_strided_slice %15 {offsets = [3, 0], sizes = [1, 512], strides = [1, 1]} : vector<27x512xf32> to vector<1x512xf32>
    %334 = vector.shape_cast %333 : vector<1x512xf32> to vector<512xf32>
    %335 = vector.shape_cast %334 : vector<512xf32> to vector<1x512xf32>
    %336 = vector.broadcast %335 : vector<1x512xf32> to vector<8x512xf32>
    %337 = arith.mulf %332, %336 : vector<8x512xf32>
    %338 = vector.extract_strided_slice %304 {offsets = [0, 1], sizes = [8, 511], strides = [1, 1]} : vector<8x512xf32> to vector<8x511xf32>
    %339 = vector.extract_strided_slice %304 {offsets = [0, 0], sizes = [8, 1], strides = [1, 1]} : vector<8x512xf32> to vector<8x1xf32>
    %340 = tpu.concatenate %338, %339 in 1 : vector<8x511xf32>, vector<8x1xf32> -> vector<8x512xf32>
    %341 = vector.extract_strided_slice %15 {offsets = [5, 0], sizes = [1, 512], strides = [1, 1]} : vector<27x512xf32> to vector<1x512xf32>
    %342 = vector.shape_cast %341 : vector<1x512xf32> to vector<512xf32>
    %343 = vector.shape_cast %342 : vector<512xf32> to vector<1x512xf32>
    %344 = vector.broadcast %343 : vector<1x512xf32> to vector<8x512xf32>
    %345 = arith.mulf %340, %344 : vector<8x512xf32>
    %346 = vector.extract_strided_slice %304 {offsets = [0, 15], sizes = [8, 497], strides = [1, 1]} : vector<8x512xf32> to vector<8x497xf32>
    %347 = vector.extract_strided_slice %304 {offsets = [0, 0], sizes = [8, 15], strides = [1, 1]} : vector<8x512xf32> to vector<8x15xf32>
    %348 = tpu.concatenate %346, %347 in 1 : vector<8x497xf32>, vector<8x15xf32> -> vector<8x512xf32>
    %349 = vector.extract_strided_slice %15 {offsets = [6, 0], sizes = [1, 512], strides = [1, 1]} : vector<27x512xf32> to vector<1x512xf32>
    %350 = vector.shape_cast %349 : vector<1x512xf32> to vector<512xf32>
    %351 = vector.shape_cast %350 : vector<512xf32> to vector<1x512xf32>
    %352 = vector.broadcast %351 : vector<1x512xf32> to vector<8x512xf32>
    %353 = arith.mulf %348, %352 : vector<8x512xf32>
    %354 = vector.extract_strided_slice %304 {offsets = [0, 16], sizes = [8, 496], strides = [1, 1]} : vector<8x512xf32> to vector<8x496xf32>
    %355 = vector.extract_strided_slice %304 {offsets = [0, 0], sizes = [8, 16], strides = [1, 1]} : vector<8x512xf32> to vector<8x16xf32>
    %356 = tpu.concatenate %354, %355 in 1 : vector<8x496xf32>, vector<8x16xf32> -> vector<8x512xf32>
    %357 = vector.extract_strided_slice %15 {offsets = [7, 0], sizes = [1, 512], strides = [1, 1]} : vector<27x512xf32> to vector<1x512xf32>
    %358 = vector.shape_cast %357 : vector<1x512xf32> to vector<512xf32>
    %359 = vector.shape_cast %358 : vector<512xf32> to vector<1x512xf32>
    %360 = vector.broadcast %359 : vector<1x512xf32> to vector<8x512xf32>
    %361 = arith.mulf %356, %360 : vector<8x512xf32>
    %362 = vector.extract_strided_slice %304 {offsets = [0, 17], sizes = [8, 495], strides = [1, 1]} : vector<8x512xf32> to vector<8x495xf32>
    %363 = vector.extract_strided_slice %304 {offsets = [0, 0], sizes = [8, 17], strides = [1, 1]} : vector<8x512xf32> to vector<8x17xf32>
    %364 = tpu.concatenate %362, %363 in 1 : vector<8x495xf32>, vector<8x17xf32> -> vector<8x512xf32>
    %365 = vector.extract_strided_slice %15 {offsets = [8, 0], sizes = [1, 512], strides = [1, 1]} : vector<27x512xf32> to vector<1x512xf32>
    %366 = vector.shape_cast %365 : vector<1x512xf32> to vector<512xf32>
    %367 = vector.shape_cast %366 : vector<512xf32> to vector<1x512xf32>
    %368 = vector.broadcast %367 : vector<1x512xf32> to vector<8x512xf32>
    %369 = arith.mulf %364, %368 : vector<8x512xf32>
    %370 = tpu.concatenate %313, %321, %329, %337, %304, %345, %353, %361, %369 in 0 : vector<8x512xf32>, vector<8x512xf32>, vector<8x512xf32>, vector<8x512xf32>, vector<8x512xf32>, vector<8x512xf32>, vector<8x512xf32>, vector<8x512xf32>, vector<8x512xf32> -> vector<72x512xf32>
    %cst_39 = arith.constant dense<0.000000e+00> : vector<32x512xf32>
    %371 = tpu.matmul %305, %370, %cst_39 {dimension_numbers = #tpu.dot_dimension_numbers<[1], [0], [0], [1], [0, 0, 1, 1], [], []>} : vector<32x72xf32>, vector<72x512xf32>, vector<32x512xf32> -> vector<32x512xf32>
    %c0_40 = arith.constant 0 : index
    %c0_41 = arith.constant 0 : index
    %372 = vector.load %arg15[%c0_40, %c0_41] : memref<32x1xf32, #tpu.memory_space<vmem>>, vector<32x1xf32>
    %373 = vector.broadcast %372 : vector<32x1xf32> to vector<32x512xf32>
    %374 = arith.addf %371, %373 : vector<32x512xf32>
    %cst_42 = arith.constant 0.000000e+00 : f32
    %375 = vector.broadcast %cst_42 : f32 to vector<32x512xf32>
    %376 = arith.maximumf %374, %375 : vector<32x512xf32>
    %c0_43 = arith.constant 0 : index
    %c0_44 = arith.constant 0 : index
    %377 = vector.load %arg16[%c0_43, %c0_44] : memref<8x288xf32, #tpu.memory_space<vmem>>, vector<8x288xf32>
    %378 = vector.extract_strided_slice %376 {offsets = [0, 461], sizes = [32, 51], strides = [1, 1]} : vector<32x512xf32> to vector<32x51xf32>
    %379 = vector.extract_strided_slice %376 {offsets = [0, 0], sizes = [32, 461], strides = [1, 1]} : vector<32x512xf32> to vector<32x461xf32>
    %380 = tpu.concatenate %378, %379 in 1 : vector<32x51xf32>, vector<32x461xf32> -> vector<32x512xf32>
    %381 = vector.extract_strided_slice %15 {offsets = [18, 0], sizes = [1, 512], strides = [1, 1]} : vector<27x512xf32> to vector<1x512xf32>
    %382 = vector.shape_cast %381 : vector<1x512xf32> to vector<512xf32>
    %383 = vector.shape_cast %382 : vector<512xf32> to vector<1x512xf32>
    %384 = vector.broadcast %383 : vector<1x512xf32> to vector<32x512xf32>
    %385 = arith.mulf %380, %384 : vector<32x512xf32>
    %386 = vector.extract_strided_slice %376 {offsets = [0, 464], sizes = [32, 48], strides = [1, 1]} : vector<32x512xf32> to vector<32x48xf32>
    %387 = vector.extract_strided_slice %376 {offsets = [0, 0], sizes = [32, 464], strides = [1, 1]} : vector<32x512xf32> to vector<32x464xf32>
    %388 = tpu.concatenate %386, %387 in 1 : vector<32x48xf32>, vector<32x464xf32> -> vector<32x512xf32>
    %389 = vector.extract_strided_slice %15 {offsets = [19, 0], sizes = [1, 512], strides = [1, 1]} : vector<27x512xf32> to vector<1x512xf32>
    %390 = vector.shape_cast %389 : vector<1x512xf32> to vector<512xf32>
    %391 = vector.shape_cast %390 : vector<512xf32> to vector<1x512xf32>
    %392 = vector.broadcast %391 : vector<1x512xf32> to vector<32x512xf32>
    %393 = arith.mulf %388, %392 : vector<32x512xf32>
    %394 = vector.extract_strided_slice %376 {offsets = [0, 467], sizes = [32, 45], strides = [1, 1]} : vector<32x512xf32> to vector<32x45xf32>
    %395 = vector.extract_strided_slice %376 {offsets = [0, 0], sizes = [32, 467], strides = [1, 1]} : vector<32x512xf32> to vector<32x467xf32>
    %396 = tpu.concatenate %394, %395 in 1 : vector<32x45xf32>, vector<32x467xf32> -> vector<32x512xf32>
    %397 = vector.extract_strided_slice %15 {offsets = [20, 0], sizes = [1, 512], strides = [1, 1]} : vector<27x512xf32> to vector<1x512xf32>
    %398 = vector.shape_cast %397 : vector<1x512xf32> to vector<512xf32>
    %399 = vector.shape_cast %398 : vector<512xf32> to vector<1x512xf32>
    %400 = vector.broadcast %399 : vector<1x512xf32> to vector<32x512xf32>
    %401 = arith.mulf %396, %400 : vector<32x512xf32>
    %402 = vector.extract_strided_slice %376 {offsets = [0, 509], sizes = [32, 3], strides = [1, 1]} : vector<32x512xf32> to vector<32x3xf32>
    %403 = vector.extract_strided_slice %376 {offsets = [0, 0], sizes = [32, 509], strides = [1, 1]} : vector<32x512xf32> to vector<32x509xf32>
    %404 = tpu.concatenate %402, %403 in 1 : vector<32x3xf32>, vector<32x509xf32> -> vector<32x512xf32>
    %405 = vector.extract_strided_slice %15 {offsets = [21, 0], sizes = [1, 512], strides = [1, 1]} : vector<27x512xf32> to vector<1x512xf32>
    %406 = vector.shape_cast %405 : vector<1x512xf32> to vector<512xf32>
    %407 = vector.shape_cast %406 : vector<512xf32> to vector<1x512xf32>
    %408 = vector.broadcast %407 : vector<1x512xf32> to vector<32x512xf32>
    %409 = arith.mulf %404, %408 : vector<32x512xf32>
    %410 = vector.extract_strided_slice %376 {offsets = [0, 3], sizes = [32, 509], strides = [1, 1]} : vector<32x512xf32> to vector<32x509xf32>
    %411 = vector.extract_strided_slice %376 {offsets = [0, 0], sizes = [32, 3], strides = [1, 1]} : vector<32x512xf32> to vector<32x3xf32>
    %412 = tpu.concatenate %410, %411 in 1 : vector<32x509xf32>, vector<32x3xf32> -> vector<32x512xf32>
    %413 = vector.extract_strided_slice %15 {offsets = [23, 0], sizes = [1, 512], strides = [1, 1]} : vector<27x512xf32> to vector<1x512xf32>
    %414 = vector.shape_cast %413 : vector<1x512xf32> to vector<512xf32>
    %415 = vector.shape_cast %414 : vector<512xf32> to vector<1x512xf32>
    %416 = vector.broadcast %415 : vector<1x512xf32> to vector<32x512xf32>
    %417 = arith.mulf %412, %416 : vector<32x512xf32>
    %418 = vector.extract_strided_slice %376 {offsets = [0, 45], sizes = [32, 467], strides = [1, 1]} : vector<32x512xf32> to vector<32x467xf32>
    %419 = vector.extract_strided_slice %376 {offsets = [0, 0], sizes = [32, 45], strides = [1, 1]} : vector<32x512xf32> to vector<32x45xf32>
    %420 = tpu.concatenate %418, %419 in 1 : vector<32x467xf32>, vector<32x45xf32> -> vector<32x512xf32>
    %421 = vector.extract_strided_slice %15 {offsets = [24, 0], sizes = [1, 512], strides = [1, 1]} : vector<27x512xf32> to vector<1x512xf32>
    %422 = vector.shape_cast %421 : vector<1x512xf32> to vector<512xf32>
    %423 = vector.shape_cast %422 : vector<512xf32> to vector<1x512xf32>
    %424 = vector.broadcast %423 : vector<1x512xf32> to vector<32x512xf32>
    %425 = arith.mulf %420, %424 : vector<32x512xf32>
    %426 = vector.extract_strided_slice %376 {offsets = [0, 48], sizes = [32, 464], strides = [1, 1]} : vector<32x512xf32> to vector<32x464xf32>
    %427 = vector.extract_strided_slice %376 {offsets = [0, 0], sizes = [32, 48], strides = [1, 1]} : vector<32x512xf32> to vector<32x48xf32>
    %428 = tpu.concatenate %426, %427 in 1 : vector<32x464xf32>, vector<32x48xf32> -> vector<32x512xf32>
    %429 = vector.extract_strided_slice %15 {offsets = [25, 0], sizes = [1, 512], strides = [1, 1]} : vector<27x512xf32> to vector<1x512xf32>
    %430 = vector.shape_cast %429 : vector<1x512xf32> to vector<512xf32>
    %431 = vector.shape_cast %430 : vector<512xf32> to vector<1x512xf32>
    %432 = vector.broadcast %431 : vector<1x512xf32> to vector<32x512xf32>
    %433 = arith.mulf %428, %432 : vector<32x512xf32>
    %434 = vector.extract_strided_slice %376 {offsets = [0, 51], sizes = [32, 461], strides = [1, 1]} : vector<32x512xf32> to vector<32x461xf32>
    %435 = vector.extract_strided_slice %376 {offsets = [0, 0], sizes = [32, 51], strides = [1, 1]} : vector<32x512xf32> to vector<32x51xf32>
    %436 = tpu.concatenate %434, %435 in 1 : vector<32x461xf32>, vector<32x51xf32> -> vector<32x512xf32>
    %437 = vector.extract_strided_slice %15 {offsets = [26, 0], sizes = [1, 512], strides = [1, 1]} : vector<27x512xf32> to vector<1x512xf32>
    %438 = vector.shape_cast %437 : vector<1x512xf32> to vector<512xf32>
    %439 = vector.shape_cast %438 : vector<512xf32> to vector<1x512xf32>
    %440 = vector.broadcast %439 : vector<1x512xf32> to vector<32x512xf32>
    %441 = arith.mulf %436, %440 : vector<32x512xf32>
    %442 = tpu.concatenate %385, %393, %401, %409, %376, %417, %425, %433, %441 in 0 : vector<32x512xf32>, vector<32x512xf32>, vector<32x512xf32>, vector<32x512xf32>, vector<32x512xf32>, vector<32x512xf32>, vector<32x512xf32>, vector<32x512xf32>, vector<32x512xf32> -> vector<288x512xf32>
    %cst_45 = arith.constant dense<0.000000e+00> : vector<8x512xf32>
    %443 = tpu.matmul %377, %442, %cst_45 {dimension_numbers = #tpu.dot_dimension_numbers<[1], [0], [0], [1], [0, 0, 1, 1], [], []>} : vector<8x288xf32>, vector<288x512xf32>, vector<8x512xf32> -> vector<8x512xf32>
    %c0_46 = arith.constant 0 : index
    %c0_47 = arith.constant 0 : index
    %444 = vector.load %arg17[%c0_46, %c0_47] : memref<8x1xf32, #tpu.memory_space<vmem>>, vector<8x1xf32>
    %445 = vector.broadcast %444 : vector<8x1xf32> to vector<8x512xf32>
    %446 = arith.addf %443, %445 : vector<8x512xf32>
    %447 = arith.addf %446, %304 : vector<8x512xf32>
    %448 = tpu.concatenate %159, %303, %447 in 0 : vector<24x512xf32>, vector<16x512xf32>, vector<8x512xf32> -> vector<48x512xf32>
    %c0_48 = arith.constant 0 : index
    %c0_49 = arith.constant 0 : index
    %449 = vector.load %arg18[%c0_48, %c0_49] : memref<16x48xf32, #tpu.memory_space<vmem>>, vector<16x48xf32>
    %cst_50 = arith.constant dense<0.000000e+00> : vector<16x512xf32>
    %450 = tpu.matmul %449, %448, %cst_50 {dimension_numbers = #tpu.dot_dimension_numbers<[1], [0], [0], [1], [0, 0, 1, 1], [], []>} : vector<16x48xf32>, vector<48x512xf32>, vector<16x512xf32> -> vector<16x512xf32>
    %c0_51 = arith.constant 0 : index
    %c0_52 = arith.constant 0 : index
    %451 = vector.load %arg19[%c0_51, %c0_52] : memref<16x1xf32, #tpu.memory_space<vmem>>, vector<16x1xf32>
    %452 = vector.broadcast %451 : vector<16x1xf32> to vector<16x512xf32>
    %453 = arith.addf %450, %452 : vector<16x512xf32>
    %454 = vector.extract_strided_slice %453 {offsets = [0, 0], sizes = [16, 256], strides = [1, 1]} : vector<16x512xf32> to vector<16x256xf32>
    %cst_53 = arith.constant dense<0.000000e+00> : vector<16xf32>
    %455 = vector.multi_reduction <add>, %454, %cst_53 [1] : vector<16x256xf32> to vector<16xf32>
    %456 = vector.shape_cast %455 : vector<16xf32> to vector<16x1xf32>
    %cst_54 = arith.constant 2.560000e+02 : f32
    %457 = vector.broadcast %cst_54 : f32 to vector<16x1xf32>
    %458 = arith.divf %456, %457 : vector<16x1xf32>
    %c0_55 = arith.constant 0 : index
    %c0_56 = arith.constant 0 : index
    %459 = vector.load %arg20[%c0_55, %c0_56] : memref<16x2xf32, #tpu.memory_space<vmem>>, vector<16x2xf32>
    %460 = vector.broadcast %458 : vector<16x1xf32> to vector<16x2xf32>
    %461 = arith.mulf %459, %460 : vector<16x2xf32>
    %cst_57 = arith.constant dense<0.000000e+00> : vector<2xf32>
    %462 = vector.multi_reduction <add>, %461, %cst_57 [0] : vector<16x2xf32> to vector<2xf32>
    %463 = vector.shape_cast %462 : vector<2xf32> to vector<1x2xf32>
    %c0_58 = arith.constant 0 : index
    %c0_59 = arith.constant 0 : index
    %464 = vector.load %arg21[%c0_58, %c0_59] : memref<1x2xf32, #tpu.memory_space<vmem>>, vector<1x2xf32>
    %465 = arith.addf %463, %464 : vector<1x2xf32>
    %cst_60 = arith.constant 0.000000e+00 : f32
    %466 = vector.broadcast %cst_60 : f32 to vector<1x2xf32>
    %467 = arith.maximumf %465, %466 : vector<1x2xf32>
    %c0_61 = arith.constant 0 : index
    %c0_62 = arith.constant 0 : index
    %468 = vector.load %arg22[%c0_61, %c0_62] : memref<16x2xf32, #tpu.memory_space<vmem>>, vector<16x2xf32>
    %469 = vector.broadcast %467 : vector<1x2xf32> to vector<16x2xf32>
    %470 = arith.mulf %468, %469 : vector<16x2xf32>
    %cst_63 = arith.constant dense<0.000000e+00> : vector<16xf32>
    %471 = vector.multi_reduction <add>, %470, %cst_63 [1] : vector<16x2xf32> to vector<16xf32>
    %472 = vector.shape_cast %471 : vector<16xf32> to vector<16x1xf32>
    %c0_64 = arith.constant 0 : index
    %c0_65 = arith.constant 0 : index
    %473 = vector.load %arg23[%c0_64, %c0_65] : memref<16x1xf32, #tpu.memory_space<vmem>>, vector<16x1xf32>
    %474 = arith.addf %472, %473 : vector<16x1xf32>
    %475 = arith.negf %474 : vector<16x1xf32>
    %476 = math.exp %475 : vector<16x1xf32>
    %cst_66 = arith.constant 1.000000e+00 : f32
    %477 = vector.broadcast %cst_66 : f32 to vector<16x1xf32>
    %478 = arith.addf %477, %476 : vector<16x1xf32>
    %479 = arith.divf %477, %478 : vector<16x1xf32>
    %480 = vector.broadcast %479 : vector<16x1xf32> to vector<16x256xf32>
    %481 = arith.mulf %454, %480 : vector<16x256xf32>
    %482 = vector.extract_strided_slice %9 {offsets = [0, 0], sizes = [16, 256], strides = [1, 1]} : vector<16x512xf32> to vector<16x256xf32>
    %483 = arith.addf %481, %482 : vector<16x256xf32>
    %c0_67 = arith.constant 0 : index
    %c0_68 = arith.constant 0 : index
    %c0_69 = arith.constant 0 : index
    %484 = vector.load %arg24[%c0_67, %c0_68, %c0_69] : memref<2x16x256xf32, #tpu.memory_space<vmem>>, vector<1x16x256xf32>
    %485 = vector.shape_cast %484 : vector<1x16x256xf32> to vector<16x256xf32>
    %486 = vector.shape_cast %483 : vector<16x256xf32> to vector<1x16x256xf32>
    tpu.vector_store %arg24[%c0_67, %c0_68, %c0_69], %486 {strides = array<i32>} : memref<2x16x256xf32, #tpu.memory_space<vmem>>, vector<1x16x256xf32>,
    %487 = vector.extract_strided_slice %453 {offsets = [0, 256], sizes = [16, 256], strides = [1, 1]} : vector<16x512xf32> to vector<16x256xf32>
    %cst_70 = arith.constant dense<0.000000e+00> : vector<16xf32>
    %488 = vector.multi_reduction <add>, %487, %cst_70 [1] : vector<16x256xf32> to vector<16xf32>
    %489 = vector.shape_cast %488 : vector<16xf32> to vector<16x1xf32>
    %cst_71 = arith.constant 2.560000e+02 : f32
    %490 = vector.broadcast %cst_71 : f32 to vector<16x1xf32>
    %491 = arith.divf %489, %490 : vector<16x1xf32>
    %c0_72 = arith.constant 0 : index
    %c0_73 = arith.constant 0 : index
    %492 = vector.load %arg20[%c0_72, %c0_73] : memref<16x2xf32, #tpu.memory_space<vmem>>, vector<16x2xf32>
    %493 = vector.broadcast %491 : vector<16x1xf32> to vector<16x2xf32>
    %494 = arith.mulf %492, %493 : vector<16x2xf32>
    %cst_74 = arith.constant dense<0.000000e+00> : vector<2xf32>
    %495 = vector.multi_reduction <add>, %494, %cst_74 [0] : vector<16x2xf32> to vector<2xf32>
    %496 = vector.shape_cast %495 : vector<2xf32> to vector<1x2xf32>
    %c0_75 = arith.constant 0 : index
    %c0_76 = arith.constant 0 : index
    %497 = vector.load %arg21[%c0_75, %c0_76] : memref<1x2xf32, #tpu.memory_space<vmem>>, vector<1x2xf32>
    %498 = arith.addf %496, %497 : vector<1x2xf32>
    %cst_77 = arith.constant 0.000000e+00 : f32
    %499 = vector.broadcast %cst_77 : f32 to vector<1x2xf32>
    %500 = arith.maximumf %498, %499 : vector<1x2xf32>
    %c0_78 = arith.constant 0 : index
    %c0_79 = arith.constant 0 : index
    %501 = vector.load %arg22[%c0_78, %c0_79] : memref<16x2xf32, #tpu.memory_space<vmem>>, vector<16x2xf32>
    %502 = vector.broadcast %500 : vector<1x2xf32> to vector<16x2xf32>
    %503 = arith.mulf %501, %502 : vector<16x2xf32>
    %cst_80 = arith.constant dense<0.000000e+00> : vector<16xf32>
    %504 = vector.multi_reduction <add>, %503, %cst_80 [1] : vector<16x2xf32> to vector<16xf32>
    %505 = vector.shape_cast %504 : vector<16xf32> to vector<16x1xf32>
    %c0_81 = arith.constant 0 : index
    %c0_82 = arith.constant 0 : index
    %506 = vector.load %arg23[%c0_81, %c0_82] : memref<16x1xf32, #tpu.memory_space<vmem>>, vector<16x1xf32>
    %507 = arith.addf %505, %506 : vector<16x1xf32>
    %508 = arith.negf %507 : vector<16x1xf32>
    %509 = math.exp %508 : vector<16x1xf32>
    %cst_83 = arith.constant 1.000000e+00 : f32
    %510 = vector.broadcast %cst_83 : f32 to vector<16x1xf32>
    %511 = arith.addf %510, %509 : vector<16x1xf32>
    %512 = arith.divf %510, %511 : vector<16x1xf32>
    %513 = vector.broadcast %512 : vector<16x1xf32> to vector<16x256xf32>
    %514 = arith.mulf %487, %513 : vector<16x256xf32>
    %515 = vector.extract_strided_slice %9 {offsets = [0, 256], sizes = [16, 256], strides = [1, 1]} : vector<16x512xf32> to vector<16x256xf32>
    %516 = arith.addf %514, %515 : vector<16x256xf32>
    %c1_84 = arith.constant 1 : index
    %c0_85 = arith.constant 0 : index
    %c0_86 = arith.constant 0 : index
    %517 = vector.load %arg24[%c1_84, %c0_85, %c0_86] : memref<2x16x256xf32, #tpu.memory_space<vmem>>, vector<1x16x256xf32>
    %518 = vector.shape_cast %517 : vector<1x16x256xf32> to vector<16x256xf32>
    %519 = vector.shape_cast %516 : vector<16x256xf32> to vector<1x16x256xf32>
    tpu.vector_store %arg24[%c1_84, %c0_85, %c0_86], %519 {strides = array<i32>} : memref<2x16x256xf32, #tpu.memory_space<vmem>>, vector<1x16x256xf32>,
    return
  }
}

</mosaic_0001>

<llo_original>
// kernel: tpu_custom_call.1
$region0: #{tpu_custom_call.1}
  #allocation0 [shape = 'u32[]', space=smem, size = 0x4, offset = 0x4, fixed_abs, tag = 'smem constant byte address 0x4 - core index']
  #allocation1 [shape = 'u32[144,128]{1,0:T(1,128)}', space=vmem, size = 0x12000, scoped, tag = 'internal scratch']
  %s0 = inlined_call_operand.hbm [shape: f32[2,4,256], index: 0, kind: input, shape index: {}]
  %s1 = inlined_call_operand.hbm [shape: f32[27,512], index: 1, kind: input, shape index: {}]
  %s2 = inlined_call_operand.vmem [shape: f32[16,4], index: 2, kind: input, shape index: {}]
  %s3 = inlined_call_operand.vmem [shape: f32[16,1], index: 3, kind: input, shape index: {}]
  %s4 = inlined_call_operand.vmem [shape: f32[48,16], index: 4, kind: input, shape index: {}]
  %s5 = inlined_call_operand.vmem [shape: f32[48,1], index: 5, kind: input, shape index: {}]
  %s6 = inlined_call_operand.vmem [shape: f32[96,216], index: 6, kind: input, shape index: {}]
  %s7 = inlined_call_operand.vmem [shape: f32[96,1], index: 7, kind: input, shape index: {}]
  %s8 = inlined_call_operand.vmem [shape: f32[24,864], index: 8, kind: input, shape index: {}]
  %s9 = inlined_call_operand.vmem [shape: f32[24,1], index: 9, kind: input, shape index: {}]
  %s10 = inlined_call_operand.vmem [shape: f32[64,144], index: 10, kind: input, shape index: {}]
  %s11 = inlined_call_operand.vmem [shape: f32[64,1], index: 11, kind: input, shape index: {}]
  %s12 = inlined_call_operand.hbm [shape: f32[16,576], index: 12, kind: input, shape index: {}]
  %s13 = inlined_call_operand.vmem [shape: f32[16,1], index: 13, kind: input, shape index: {}]
  %s14 = inlined_call_operand.hbm [shape: f32[32,72], index: 14, kind: input, shape index: {}]
  %s15 = inlined_call_operand.vmem [shape: f32[32,1], index: 15, kind: input, shape index: {}]
  %s16 = inlined_call_operand.vmem [shape: f32[8,288], index: 16, kind: input, shape index: {}]
  %s17 = inlined_call_operand.vmem [shape: f32[8,1], index: 17, kind: input, shape index: {}]
  %s18 = inlined_call_operand.vmem [shape: f32[16,48], index: 18, kind: input, shape index: {}]
  %s19 = inlined_call_operand.vmem [shape: f32[16,1], index: 19, kind: input, shape index: {}]
  %s20 = inlined_call_operand.vmem [shape: f32[16,2], index: 20, kind: input, shape index: {}]
  %s21 = inlined_call_operand.vmem [shape: f32[1,2], index: 21, kind: input, shape index: {}]
  %s22 = inlined_call_operand.vmem [shape: f32[16,2], index: 22, kind: input, shape index: {}]
  %s23 = inlined_call_operand.vmem [shape: f32[16,1], index: 23, kind: input, shape index: {}]
  %s24 = inlined_call_operand.hbm [shape: f32[2,16,256], index: 24, kind: output, shape index: {}]
  %s25 = sld [smem:[#allocation0]]
  $region122: #{tpu_custom_call.1} parent=0
    _
  %s27 = ssub.s32 1, %s25
  %s28 = scalar_select 0, %s27, %s25
  $region1: #{tpu_custom_call.1} parent=0
    #allocation2 [shape = 'u8[8192]{0}', space=vmem, size = 0x2000, scoped, tag = 'input window, operand 0, single buffered']
    #allocation3 [shape = 's32[1]{0}', space=sflag, size = 0x4, scoped, tag = 'scoped memory for tpu_custom_call.1']
    #allocation4 [shape = 's32[1]{0}', space=sflag, size = 0x4, scoped, tag = 'scoped memory for tpu_custom_call.1']
    #allocation5 [shape = 'u8[65536]{0}', space=vmem, size = 0x10000, scoped, tag = 'input window, operand 1, single buffered']
    #allocation6 [shape = 's32[1]{0}', space=sflag, size = 0x4, scoped, tag = 'scoped memory for tpu_custom_call.1']
    #allocation7 [shape = 'u8[40960]{0}', space=vmem, size = 0xa000, scoped, tag = 'input window, operand 12, single buffered']
    #allocation8 [shape = 'u8[16384]{0}', space=vmem, size = 0x4000, scoped, tag = 'input window, operand 14, single buffered']
    #allocation9 [shape = 's32[1]{0}', space=sflag, size = 0x4, scoped, tag = 'scoped memory for tpu_custom_call.1']
    #allocation10 [shape = 'u8[32768]{0}', space=vmem, size = 0x8000, scoped, tag = 'output window, operand 0, single buffered']
    %29 = vsyncpa [#allocation3], 0
    %30 = vsyncpa [#allocation6], 0
    %31 = vsyncpa [#allocation9], 0
    %32 = vsyncpa [#allocation4], 0
    // Predicated region
    $region2: #{tpu_custom_call.1} parent=1 // pred_check
      _
    $region3: #{tpu_custom_call.1} parent=1 // pred_check_branch
      %34 = sbr.rel (0) target = $region5
    $region4: #{tpu_custom_call.1} parent=1 // pred_region
      %s36 = ssub.s32 256, 256
      %37 = vsyncadd [#allocation3], %s36
      %s38 = sshll.u32 [#allocation2], 4
      %s39 = int_to_ptr.vmem [resolvable:$true] %s38
      %44 = dma.hbm_to_vmem [thread:$0]  %s0, 256, %s39, [#allocation3], 128, 128, 8
    $region5: #{tpu_custom_call.1} parent=1 // pred_fallthru
      _
    // Predicated region
    $region6: #{tpu_custom_call.1} parent=1 // pred_check
      _
    $region7: #{tpu_custom_call.1} parent=1 // pred_check_branch
      %46 = sbr.rel (0) target = $region9
    $region8: #{tpu_custom_call.1} parent=1 // pred_region
      %s48 = ssub.s32 2048, 2048
      %49 = vsyncadd [#allocation6], %s48
      %s50 = sshll.u32 [#allocation5], 4
      %s51 = int_to_ptr.vmem [resolvable:$true] %s50
      %56 = dma.hbm_to_vmem [thread:$0]  %s1, 2048, %s51, [#allocation6], 512, 512, 32
    $region9: #{tpu_custom_call.1} parent=1 // pred_fallthru
      _
    // Predicated region
    $region10: #{tpu_custom_call.1} parent=1 // pred_check
      _
    $region11: #{tpu_custom_call.1} parent=1 // pred_check_branch
      %58 = sbr.rel (0) target = $region13
    $region12: #{tpu_custom_call.1} parent=1 // pred_region
      _
    $region13: #{tpu_custom_call.1} parent=1 // pred_fallthru
      _
    // Predicated region
    $region14: #{tpu_custom_call.1} parent=1 // pred_check
      _
    $region15: #{tpu_custom_call.1} parent=1 // pred_check_branch
      %60 = sbr.rel (0) target = $region17
    $region16: #{tpu_custom_call.1} parent=1 // pred_region
      _
    $region17: #{tpu_custom_call.1} parent=1 // pred_fallthru
      _
    // Predicated region
    $region18: #{tpu_custom_call.1} parent=1 // pred_check
      _
    $region19: #{tpu_custom_call.1} parent=1 // pred_check_branch
      %62 = sbr.rel (0) target = $region21
    $region20: #{tpu_custom_call.1} parent=1 // pred_region
      _
    $region21: #{tpu_custom_call.1} parent=1 // pred_fallthru
      _
    // Predicated region
    $region22: #{tpu_custom_call.1} parent=1 // pred_check
      _
    $region23: #{tpu_custom_call.1} parent=1 // pred_check_branch
      %64 = sbr.rel (0) target = $region25
    $region24: #{tpu_custom_call.1} parent=1 // pred_region
      _
    $region25: #{tpu_custom_call.1} parent=1 // pred_fallthru
      _
    // Predicated region
    $region26: #{tpu_custom_call.1} parent=1 // pred_check
      _
    $region27: #{tpu_custom_call.1} parent=1 // pred_check_branch
      %66 = sbr.rel (0) target = $region29
    $region28: #{tpu_custom_call.1} parent=1 // pred_region
      _
    $region29: #{tpu_custom_call.1} parent=1 // pred_fallthru
      _
    // Predicated region
    $region30: #{tpu_custom_call.1} parent=1 // pred_check
      _
    $region31: #{tpu_custom_call.1} parent=1 // pred_check_branch
      %68 = sbr.rel (0) target = $region33
    $region32: #{tpu_custom_call.1} parent=1 // pred_region
      _
    $region33: #{tpu_custom_call.1} parent=1 // pred_fallthru
      _
    // Predicated region
    $region34: #{tpu_custom_call.1} parent=1 // pred_check
      _
    $region35: #{tpu_custom_call.1} parent=1 // pred_check_branch
      %70 = sbr.rel (0) target = $region37
    $region36: #{tpu_custom_call.1} parent=1 // pred_region
      _
    $region37: #{tpu_custom_call.1} parent=1 // pred_fallthru
      _
    // Predicated region
    $region38: #{tpu_custom_call.1} parent=1 // pred_check
      _
    $region39: #{tpu_custom_call.1} parent=1 // pred_check_branch
      %72 = sbr.rel (0) target = $region41
    $region40: #{tpu_custom_call.1} parent=1 // pred_region
      _
    $region41: #{tpu_custom_call.1} parent=1 // pred_fallthru
      _
    // Predicated region
    $region42: #{tpu_custom_call.1} parent=1 // pred_check
      _
    $region43: #{tpu_custom_call.1} parent=1 // pred_check_branch
      %74 = sbr.rel (0) target = $region45
    $region44: #{tpu_custom_call.1} parent=1 // pred_region
      _
    $region45: #{tpu_custom_call.1} parent=1 // pred_fallthru
      _
    // Predicated region
    $region46: #{tpu_custom_call.1} parent=1 // pred_check
      _
    $region47: #{tpu_custom_call.1} parent=1 // pred_check_branch
      %76 = sbr.rel (0) target = $region49
    $region48: #{tpu_custom_call.1} parent=1 // pred_region
      _
    $region49: #{tpu_custom_call.1} parent=1 // pred_fallthru
      _
    // Predicated region
    $region50: #{tpu_custom_call.1} parent=1 // pred_check
      _
    $region51: #{tpu_custom_call.1} parent=1 // pred_check_branch
      %78 = sbr.rel (0) target = $region53
    $region52: #{tpu_custom_call.1} parent=1 // pred_region
      %s80 = ssub.s32 1280, 1280
      %81 = vsyncadd [#allocation6], %s80
      %s82 = sshll.u32 [#allocation7], 4
      %s83 = int_to_ptr.vmem [resolvable:$true] %s82
      %88 = dma.hbm_to_vmem [thread:$0]  %s12, 1280, %s83, [#allocation6], 640, 640, 40
    $region53: #{tpu_custom_call.1} parent=1 // pred_fallthru
      _
    // Predicated region
    $region54: #{tpu_custom_call.1} parent=1 // pred_check
      _
    $region55: #{tpu_custom_call.1} parent=1 // pred_check_branch
      %90 = sbr.rel (0) target = $region57
    $region56: #{tpu_custom_call.1} parent=1 // pred_region
      _
    $region57: #{tpu_custom_call.1} parent=1 // pred_fallthru
      _
    // Predicated region
    $region58: #{tpu_custom_call.1} parent=1 // pred_check
      _
    $region59: #{tpu_custom_call.1} parent=1 // pred_check_branch
      %92 = sbr.rel (0) target = $region61
    $region60: #{tpu_custom_call.1} parent=1 // pred_region
      %s94 = ssub.s32 512, 512
      %95 = vsyncadd [#allocation9], %s94
      %s96 = sshll.u32 [#allocation8], 4
      %s97 = int_to_ptr.vmem [resolvable:$true] %s96
      %102 = dma.hbm_to_vmem [thread:$0]  %s14, 512, %s97, [#allocation9], 128, 128, 8
    $region61: #{tpu_custom_call.1} parent=1 // pred_fallthru
      _
    // Predicated region
    $region62: #{tpu_custom_call.1} parent=1 // pred_check
      _
    $region63: #{tpu_custom_call.1} parent=1 // pred_check_branch
      %104 = sbr.rel (0) target = $region65
    $region64: #{tpu_custom_call.1} parent=1 // pred_region
      _
    $region65: #{tpu_custom_call.1} parent=1 // pred_fallthru
      _
    // Predicated region
    $region66: #{tpu_custom_call.1} parent=1 // pred_check
      _
    $region67: #{tpu_custom_call.1} parent=1 // pred_check_branch
      %106 = sbr.rel (0) target = $region69
    $region68: #{tpu_custom_call.1} parent=1 // pred_region
      _
    $region69: #{tpu_custom_call.1} parent=1 // pred_fallthru
      _
    // Predicated region
    $region70: #{tpu_custom_call.1} parent=1 // pred_check
      _
    $region71: #{tpu_custom_call.1} parent=1 // pred_check_branch
      %108 = sbr.rel (0) target = $region73
    $region72: #{tpu_custom_call.1} parent=1 // pred_region
      _
    $region73: #{tpu_custom_call.1} parent=1 // pred_fallthru
      _
    // Predicated region
    $region74: #{tpu_custom_call.1} parent=1 // pred_check
      _
    $region75: #{tpu_custom_call.1} parent=1 // pred_check_branch
      %110 = sbr.rel (0) target = $region77
    $region76: #{tpu_custom_call.1} parent=1 // pred_region
      _
    $region77: #{tpu_custom_call.1} parent=1 // pred_fallthru
      _
    // Predicated region
    $region78: #{tpu_custom_call.1} parent=1 // pred_check
      _
    $region79: #{tpu_custom_call.1} parent=1 // pred_check_branch
      %112 = sbr.rel (0) target = $region81
    $region80: #{tpu_custom_call.1} parent=1 // pred_region
      _
    $region81: #{tpu_custom_call.1} parent=1 // pred_fallthru
      _
    // Predicated region
    $region82: #{tpu_custom_call.1} parent=1 // pred_check
      _
    $region83: #{tpu_custom_call.1} parent=1 // pred_check_branch
      %114 = sbr.rel (0) target = $region85
    $region84: #{tpu_custom_call.1} parent=1 // pred_region
      _
    $region85: #{tpu_custom_call.1} parent=1 // pred_fallthru
      _
    // Predicated region
    $region86: #{tpu_custom_call.1} parent=1 // pred_check
      _
    $region87: #{tpu_custom_call.1} parent=1 // pred_check_branch
      %116 = sbr.rel (0) target = $region89
    $region88: #{tpu_custom_call.1} parent=1 // pred_region
      _
    $region89: #{tpu_custom_call.1} parent=1 // pred_fallthru
      _
    // Predicated region
    $region90: #{tpu_custom_call.1} parent=1 // pred_check
      _
    $region91: #{tpu_custom_call.1} parent=1 // pred_check_branch
      %118 = sbr.rel (0) target = $region93
    $region92: #{tpu_custom_call.1} parent=1 // pred_region
      _
    $region93: #{tpu_custom_call.1} parent=1 // pred_fallthru
      _
    // Predicated region
    $region94: #{tpu_custom_call.1} parent=1 // pred_check
      _
    $region95: #{tpu_custom_call.1} parent=1 // pred_check_branch
      %120 = sbr.rel (0) target = $region97
    $region96: #{tpu_custom_call.1} parent=1 // pred_region
      _
    $region97: #{tpu_custom_call.1} parent=1 // pred_fallthru
      _
    // Predicated region
    $region98: #{tpu_custom_call.1} parent=1 // pred_check
      _
    $region99: #{tpu_custom_call.1} parent=1 // pred_check_branch
      %122 = sbr.rel (0) target = $region101
    $region100: #{tpu_custom_call.1} parent=1 // pred_region
      %123 = dma.done [#allocation3], 256
    $region101: #{tpu_custom_call.1} parent=1 // pred_fallthru
      _
    // Predicated region
    $region102: #{tpu_custom_call.1} parent=1 // pred_check
      _
    $region103: #{tpu_custom_call.1} parent=1 // pred_check_branch
      %125 = sbr.rel (0) target = $region105
    $region104: #{tpu_custom_call.1} parent=1 // pred_region
      %126 = dma.done [#allocation6], 2048
    $region105: #{tpu_custom_call.1} parent=1 // pred_fallthru
      _
    // Predicated region
    $region106: #{tpu_custom_call.1} parent=1 // pred_check
      _
    $region107: #{tpu_custom_call.1} parent=1 // pred_check_branch
      %128 = sbr.rel (0) target = $region109
    $region108: #{tpu_custom_call.1} parent=1 // pred_region
      %129 = dma.done [#allocation6], 1280
    $region109: #{tpu_custom_call.1} parent=1 // pred_fallthru
      _
    // Predicated region
    $region110: #{tpu_custom_call.1} parent=1 // pred_check
      _
    $region111: #{tpu_custom_call.1} parent=1 // pred_check_branch
      %131 = sbr.rel (0) target = $region113
    $region112: #{tpu_custom_call.1} parent=1 // pred_region
      %132 = dma.done [#allocation9], 512
    $region113: #{tpu_custom_call.1} parent=1 // pred_fallthru
      _
    %v133 = vld [vmem:[#allocation2] sm:$0xff]
    %s134 = scalar_lea.vmem [#allocation2], 8
    %v135 = vld [vmem:[%s134] sm:$0xff]
    %v137 = vcombine.high %v133, %v133
    %v139 = vcombine.high %v135, %v135
    %v140 = vld [vmem:[%s2] sm:$0xff]
    %v141 = vld [vmem:[%s2 + $0x8] sm:$0xff]
    %v142 = vld [vmem:[%s3] sm:$0xff]
    %v143 = vld [vmem:[%s3 + $0x8] sm:$0xff]
    %145 = vset.pattern.permute.xlu0 0
    %146 = vperm.xlu0 %145, %v142
    %v147 = vpop.permute.xlu0 %146
    %150 = vset.pattern.permute.xlu0 0
    %151 = vperm.xlu0 %150, %v143
    %v152 = vpop.permute.xlu0 %151
    %vm154 = vcmask 31744
    %v156 = vsel %vm154, %v140, 0
    %v159 = vsel %vm154, %v141, 0
    %vm161 = vcmask 1043456
    %v162 = vsel %vm161, %v133, 0
    %v164 = vsel %vm161, %v137, 0
    %v166 = vsel %vm161, %v135, 0
    %v168 = vsel %vm161, %v139, 0
    %170 = vmatprep.subr.mxu0 %v164
    %171 = vmatpush1.msra.mxu0 %v162
    %172 = vmatprep.subr.mxu0 0.0
    %173 = vmatpush1.msra.mxu0 0.0
    %174 = vmatprep.subr.mxu0 0.0
    %175 = vmatpush1.msra.mxu0 0.0
    %176 = vmatprep.subr.mxu0 0.0
    %177 = vmatpush1.msra.mxu0 0.0
    %178 = vmatprep.subr.mxu0 0.0
    %179 = vmatpush1.msra.mxu0 0.0
    %180 = vmatprep.subr.mxu0 0.0
    %181 = vmatpush1.msra.mxu0 0.0
    %182 = vmatprep.subr.mxu0 0.0
    %183 = vmatpush1.msra.mxu0 0.0
    %184 = vmatprep.subr.mxu0 0.0
    %185 = vmatpush1.msra.mxu0 0.0
    %186 = vmatprep.subr.mxu0 0.0
    %187 = vmatpush1.msra.mxu0 0.0
    %188 = vmatprep.subr.mxu0 0.0
    %189 = vmatpush1.msra.mxu0 0.0
    %190 = vmatprep.subr.mxu0 0.0
    %191 = vmatpush1.msra.mxu0 0.0
    %192 = vmatprep.subr.mxu0 0.0
    %193 = vmatpush1.msra.mxu0 0.0
    %194 = vmatprep.subr.mxu0 0.0
    %195 = vmatpush1.msra.mxu0 0.0
    %196 = vmatprep.subr.mxu0 0.0
    %197 = vmatpush1.msra.mxu0 0.0
    %198 = vmatprep.subr.mxu0 0.0
    %199 = vmatpush1.msra.mxu0 0.0
    %200 = vmatprep.subr.mxu0 0.0
    %201 = vmatpush1.msra.mxu0 0.0
    %202 = vmatprep.subr.mxu0 0.0
    %203 = vmatpush1.msra.mxu0 0.0
    %204 = vmatprep.subr.mxu0 0.0
    %205 = vmatpush1.msra.mxu0 0.0
    %206 = vmatprep.subr.mxu0 0.0
    %207 = vmatpush1.msra.mxu0 0.0
    %208 = vmatprep.subr.mxu0 0.0
    %209 = vmatpush1.msra.mxu0 0.0
    %210 = vmatprep.subr.mxu0 0.0
    %211 = vmatpush1.msra.mxu0 0.0
    %212 = vmatprep.subr.mxu0 0.0
    %213 = vmatpush1.msra.mxu0 0.0
    %214 = vmatprep.subr.mxu0 0.0
    %215 = vmatpush1.msra.mxu0 0.0
    %216 = vmatprep.subr.mxu0 0.0
    %217 = vmatpush1.msra.mxu0 0.0
    %218 = vmatprep.subr.mxu0 0.0
    %219 = vmatpush1.msra.mxu0 0.0
    %220 = vmatprep.subr.mxu0 0.0
    %221 = vmatpush1.msra.mxu0 0.0
    %222 = vmatprep.subr.mxu0 0.0
    %223 = vmatpush1.msra.mxu0 0.0
    %224 = vmatprep.subr.mxu0 0.0
    %225 = vmatpush1.msra.mxu0 0.0
    %226 = vmatprep.subr.mxu0 0.0
    %227 = vmatpush1.msra.mxu0 0.0
    %228 = vmatprep.subr.mxu0 0.0
    %229 = vmatpush1.msra.mxu0 0.0
    %230 = vmatprep.subr.mxu0 0.0
    %231 = vmatpush1.msra.mxu0 0.0
    %232 = vmatprep.subr.mxu0 0.0
    %233 = vmatpush1.msra.mxu0 0.0
    %234 = vmatprep.mubr.f32.mxu0 0.0
    %235 = vmatmul.mubr.f32.gmra.mrb[0].mxu0 %v156
    %v236 = vpop.f32.mrb[0].mxu0
    %v237 = vadd.f32 %v147, %v236
    %v238 = vpop.f32.mrb[0].mxu0
    %v239 = vadd.f32 %v147, %v238
    %240 = vmatprep.mubr.f32.mxu0 0.0
    %241 = vmatmul.mubr.f32.gmra.mrb[0].mxu0 %v159
    %v242 = vpop.f32.mrb[0].mxu0
    %v243 = vadd.f32 %v152, %v242
    %v244 = vpop.f32.mrb[0].mxu0
    %v245 = vadd.f32 %v152, %v244
    %246 = vdwg.mxu0
    %247 = vmatprep.subr.mxu0 %v168
    %248 = vmatpush1.msra.mxu0 %v166
    %249 = vmatprep.subr.mxu0 0.0
    %250 = vmatpush1.msra.mxu0 0.0
    %251 = vmatprep.subr.mxu0 0.0
    %252 = vmatpush1.msra.mxu0 0.0
    %253 = vmatprep.subr.mxu0 0.0
    %254 = vmatpush1.msra.mxu0 0.0
    %255 = vmatprep.subr.mxu0 0.0
    %256 = vmatpush1.msra.mxu0 0.0
    %257 = vmatprep.subr.mxu0 0.0
    %258 = vmatpush1.msra.mxu0 0.0
    %259 = vmatprep.subr.mxu0 0.0
    %260 = vmatpush1.msra.mxu0 0.0
    %261 = vmatprep.subr.mxu0 0.0
    %262 = vmatpush1.msra.mxu0 0.0
    %263 = vmatprep.subr.mxu0 0.0
    %264 = vmatpush1.msra.mxu0 0.0
    %265 = vmatprep.subr.mxu0 0.0
    %266 = vmatpush1.msra.mxu0 0.0
    %267 = vmatprep.subr.mxu0 0.0
    %268 = vmatpush1.msra.mxu0 0.0
    %269 = vmatprep.subr.mxu0 0.0
    %270 = vmatpush1.msra.mxu0 0.0
    %271 = vmatprep.subr.mxu0 0.0
    %272 = vmatpush1.msra.mxu0 0.0
    %273 = vmatprep.subr.mxu0 0.0
    %274 = vmatpush1.msra.mxu0 0.0
    %275 = vmatprep.subr.mxu0 0.0
    %276 = vmatpush1.msra.mxu0 0.0
    %277 = vmatprep.subr.mxu0 0.0
    %278 = vmatpush1.msra.mxu0 0.0
    %279 = vmatprep.subr.mxu0 0.0
    %280 = vmatpush1.msra.mxu0 0.0
    %281 = vmatprep.subr.mxu0 0.0
    %282 = vmatpush1.msra.mxu0 0.0
    %283 = vmatprep.subr.mxu0 0.0
    %284 = vmatpush1.msra.mxu0 0.0
    %285 = vmatprep.subr.mxu0 0.0
    %286 = vmatpush1.msra.mxu0 0.0
    %287 = vmatprep.subr.mxu0 0.0
    %288 = vmatpush1.msra.mxu0 0.0
    %289 = vmatprep.subr.mxu0 0.0
    %290 = vmatpush1.msra.mxu0 0.0
    %291 = vmatprep.subr.mxu0 0.0
    %292 = vmatpush1.msra.mxu0 0.0
    %293 = vmatprep.subr.mxu0 0.0
    %294 = vmatpush1.msra.mxu0 0.0
    %295 = vmatprep.subr.mxu0 0.0
    %296 = vmatpush1.msra.mxu0 0.0
    %297 = vmatprep.subr.mxu0 0.0
    %298 = vmatpush1.msra.mxu0 0.0
    %299 = vmatprep.subr.mxu0 0.0
    %300 = vmatpush1.msra.mxu0 0.0
    %301 = vmatprep.subr.mxu0 0.0
    %302 = vmatpush1.msra.mxu0 0.0
    %303 = vmatprep.subr.mxu0 0.0
    %304 = vmatpush1.msra.mxu0 0.0
    %305 = vmatprep.subr.mxu0 0.0
    %306 = vmatpush1.msra.mxu0 0.0
    %307 = vmatprep.subr.mxu0 0.0
    %308 = vmatpush1.msra.mxu0 0.0
    %309 = vmatprep.subr.mxu0 0.0
    %310 = vmatpush1.msra.mxu0 0.0
    %311 = vmatprep.mubr.f32.mxu0 0.0
    %312 = vmatmul.mubr.f32.gmra.mrb[0].mxu0 %v156
    %v313 = vpop.f32.mrb[0].mxu0
    %v314 = vadd.f32 %v147, %v313
    %v315 = vpop.f32.mrb[0].mxu0
    %v316 = vadd.f32 %v147, %v315
    %317 = vmatprep.mubr.f32.mxu0 0.0
    %318 = vmatmul.mubr.f32.gmra.mrb[0].mxu0 %v159
    %v319 = vpop.f32.mrb[0].mxu0
    %v320 = vadd.f32 %v152, %v319
    %v321 = vpop.f32.mrb[0].mxu0
    %v322 = vadd.f32 %v152, %v321
    %323 = vdwg.mxu0
    %v324 = vld [vmem:[%s4] sm:$0xff]
    %v325 = vld [vmem:[%s4 + $0x8] sm:$0xff]
    %v326 = vld [vmem:[%s4 + $0x10] sm:$0xff]
    %v327 = vld [vmem:[%s4 + $0x18] sm:$0xff]
    %v328 = vld [vmem:[%s4 + $0x20] sm:$0xff]
    %v329 = vld [vmem:[%s4 + $0x28] sm:$0xff]
    %v330 = vld [vmem:[%s5] sm:$0xff]
    %v331 = vld [vmem:[%s5 + $0x8] sm:$0xff]
    %v332 = vld [vmem:[%s5 + $0x10] sm:$0xff]
    %v333 = vld [vmem:[%s5 + $0x18] sm:$0xff]
    %v334 = vld [vmem:[%s5 + $0x20] sm:$0xff]
    %v335 = vld [vmem:[%s5 + $0x28] sm:$0xff]
    %337 = vset.pattern.permute.xlu0 0
    %338 = vperm.xlu0 %337, %v330
    %v339 = vpop.permute.xlu0 %338
    %342 = vset.pattern.permute.xlu0 0
    %343 = vperm.xlu0 %342, %v331
    %v344 = vpop.permute.xlu0 %343
    %347 = vset.pattern.permute.xlu0 0
    %348 = vperm.xlu0 %347, %v332
    %v349 = vpop.permute.xlu0 %348
    %352 = vset.pattern.permute.xlu0 0
    %353 = vperm.xlu0 %352, %v333
    %v354 = vpop.permute.xlu0 %353
    %357 = vset.pattern.permute.xlu0 0
    %358 = vperm.xlu0 %357, %v334
    %v359 = vpop.permute.xlu0 %358
    %362 = vset.pattern.permute.xlu0 0
    %363 = vperm.xlu0 %362, %v335
    %v364 = vpop.permute.xlu0 %363
    %vm366 = vcmask 130048
    %v368 = vsel %vm366, %v324, 0
    %v371 = vsel %vm366, %v325, 0
    %v374 = vsel %vm366, %v326, 0
    %v377 = vsel %vm366, %v327, 0
    %v380 = vsel %vm366, %v328, 0
    %v383 = vsel %vm366, %v329, 0
    %385 = vmatprep.subr.mxu0 %v239
    %386 = vmatpush1.msra.mxu0 %v237
    %387 = vmatprep.subr.mxu0 %v245
    %388 = vmatpush1.msra.mxu0 %v243
    %389 = vmatprep.subr.mxu0 0.0
    %390 = vmatpush1.msra.mxu0 0.0
    %391 = vmatprep.subr.mxu0 0.0
    %392 = vmatpush1.msra.mxu0 0.0
    %393 = vmatprep.subr.mxu0 0.0
    %394 = vmatpush1.msra.mxu0 0.0
    %395 = vmatprep.subr.mxu0 0.0
    %396 = vmatpush1.msra.mxu0 0.0
    %397 = vmatprep.subr.mxu0 0.0
    %398 = vmatpush1.msra.mxu0 0.0
    %399 = vmatprep.subr.mxu0 0.0
    %400 = vmatpush1.msra.mxu0 0.0
    %401 = vmatprep.subr.mxu0 0.0
    %402 = vmatpush1.msra.mxu0 0.0
    %403 = vmatprep.subr.mxu0 0.0
    %404 = vmatpush1.msra.mxu0 0.0
    %405 = vmatprep.subr.mxu0 0.0
    %406 = vmatpush1.msra.mxu0 0.0
    %407 = vmatprep.subr.mxu0 0.0
    %408 = vmatpush1.msra.mxu0 0.0
    %409 = vmatprep.subr.mxu0 0.0
    %410 = vmatpush1.msra.mxu0 0.0
    %411 = vmatprep.subr.mxu0 0.0
    %412 = vmatpush1.msra.mxu0 0.0
    %413 = vmatprep.subr.mxu0 0.0
    %414 = vmatpush1.msra.mxu0 0.0
    %415 = vmatprep.subr.mxu0 0.0
    %416 = vmatpush1.msra.mxu0 0.0
    %417 = vmatprep.subr.mxu0 0.0
    %418 = vmatpush1.msra.mxu0 0.0
    %419 = vmatprep.subr.mxu0 0.0
    %420 = vmatpush1.msra.mxu0 0.0
    %421 = vmatprep.subr.mxu0 0.0
    %422 = vmatpush1.msra.mxu0 0.0
    %423 = vmatprep.subr.mxu0 0.0
    %424 = vmatpush1.msra.mxu0 0.0
    %425 = vmatprep.subr.mxu0 0.0
    %426 = vmatpush1.msra.mxu0 0.0
    %427 = vmatprep.subr.mxu0 0.0
    %428 = vmatpush1.msra.mxu0 0.0
    %429 = vmatprep.subr.mxu0 0.0
    %430 = vmatpush1.msra.mxu0 0.0
    %431 = vmatprep.subr.mxu0 0.0
    %432 = vmatpush1.msra.mxu0 0.0
    %433 = vmatprep.subr.mxu0 0.0
    %434 = vmatpush1.msra.mxu0 0.0
    %435 = vmatprep.subr.mxu0 0.0
    %436 = vmatpush1.msra.mxu0 0.0
    %437 = vmatprep.subr.mxu0 0.0
    %438 = vmatpush1.msra.mxu0 0.0
    %439 = vmatprep.subr.mxu0 0.0
    %440 = vmatpush1.msra.mxu0 0.0
    %441 = vmatprep.subr.mxu0 0.0
    %442 = vmatpush1.msra.mxu0 0.0
    %443 = vmatprep.subr.mxu0 0.0
    %444 = vmatpush1.msra.mxu0 0.0
    %445 = vmatprep.subr.mxu0 0.0
    %446 = vmatpush1.msra.mxu0 0.0
    %447 = vmatprep.subr.mxu0 0.0
    %448 = vmatpush1.msra.mxu0 0.0
    %449 = vmatprep.mubr.f32.mxu0 0.0
    %450 = vmatmul.mubr.f32.gmra.mrb[0].mxu0 %v368
    %v451 = vpop.f32.mrb[0].mxu0
    %v452 = vadd.f32 %v339, %v451
    %v453 = vpop.f32.mrb[0].mxu0
    %v454 = vadd.f32 %v339, %v453
    %455 = vmatprep.mubr.f32.mxu0 0.0
    %456 = vmatmul.mubr.f32.gmra.mrb[0].mxu0 %v371
    %v457 = vpop.f32.mrb[0].mxu0
    %v458 = vadd.f32 %v344, %v457
    %v459 = vpop.f32.mrb[0].mxu0
    %v460 = vadd.f32 %v344, %v459
    %461 = vmatprep.mubr.f32.mxu0 0.0
    %462 = vmatmul.mubr.f32.gmra.mrb[0].mxu0 %v374
    %v463 = vpop.f32.mrb[0].mxu0
    %v464 = vadd.f32 %v349, %v463
    %v465 = vpop.f32.mrb[0].mxu0
    %v466 = vadd.f32 %v349, %v465
    %467 = vmatprep.mubr.f32.mxu0 0.0
    %468 = vmatmul.mubr.f32.gmra.mrb[0].mxu0 %v377
    %v469 = vpop.f32.mrb[0].mxu0
    %v470 = vadd.f32 %v354, %v469
    %v471 = vpop.f32.mrb[0].mxu0
    %v472 = vadd.f32 %v354, %v471
    %473 = vmatprep.mubr.f32.mxu0 0.0
    %474 = vmatmul.mubr.f32.gmra.mrb[0].mxu0 %v380
    %v475 = vpop.f32.mrb[0].mxu0
    %v476 = vadd.f32 %v359, %v475
    %v477 = vpop.f32.mrb[0].mxu0
    %v478 = vadd.f32 %v359, %v477
    %479 = vmatprep.mubr.f32.mxu0 0.0
    %480 = vmatmul.mubr.f32.gmra.mrb[0].mxu0 %v383
    %v481 = vpop.f32.mrb[0].mxu0
    %v482 = vadd.f32 %v364, %v481
    %v483 = vpop.f32.mrb[0].mxu0
    %v484 = vadd.f32 %v364, %v483
    %485 = vdwg.mxu0
    %486 = vmatprep.subr.mxu0 %v316
    %487 = vmatpush1.msra.mxu0 %v314
    %488 = vmatprep.subr.mxu0 %v322
    %489 = vmatpush1.msra.mxu0 %v320
    %490 = vmatprep.subr.mxu0 0.0
    %491 = vmatpush1.msra.mxu0 0.0
    %492 = vmatprep.subr.mxu0 0.0
    %493 = vmatpush1.msra.mxu0 0.0
    %494 = vmatprep.subr.mxu0 0.0
    %495 = vmatpush1.msra.mxu0 0.0
    %496 = vmatprep.subr.mxu0 0.0
    %497 = vmatpush1.msra.mxu0 0.0
    %498 = vmatprep.subr.mxu0 0.0
    %499 = vmatpush1.msra.mxu0 0.0
    %500 = vmatprep.subr.mxu0 0.0
    %501 = vmatpush1.msra.mxu0 0.0
    %502 = vmatprep.subr.mxu0 0.0
    %503 = vmatpush1.msra.mxu0 0.0
    %504 = vmatprep.subr.mxu0 0.0
    %505 = vmatpush1.msra.mxu0 0.0
    %506 = vmatprep.subr.mxu0 0.0
    %507 = vmatpush1.msra.mxu0 0.0
    %508 = vmatprep.subr.mxu0 0.0
    %509 = vmatpush1.msra.mxu0 0.0
    %510 = vmatprep.subr.mxu0 0.0
    %511 = vmatpush1.msra.mxu0 0.0
    %512 = vmatprep.subr.mxu0 0.0
    %513 = vmatpush1.msra.mxu0 0.0
    %514 = vmatprep.subr.mxu0 0.0
    %515 = vmatpush1.msra.mxu0 0.0
    %516 = vmatprep.subr.mxu0 0.0
    %517 = vmatpush1.msra.mxu0 0.0
    %518 = vmatprep.subr.mxu0 0.0
    %519 = vmatpush1.msra.mxu0 0.0
    %520 = vmatprep.subr.mxu0 0.0
    %521 = vmatpush1.msra.mxu0 0.0
    %522 = vmatprep.subr.mxu0 0.0
    %523 = vmatpush1.msra.mxu0 0.0
    %524 = vmatprep.subr.mxu0 0.0
    %525 = vmatpush1.msra.mxu0 0.0
    %526 = vmatprep.subr.mxu0 0.0
    %527 = vmatpush1.msra.mxu0 0.0
    %528 = vmatprep.subr.mxu0 0.0
    %529 = vmatpush1.msra.mxu0 0.0
    %530 = vmatprep.subr.mxu0 0.0
    %531 = vmatpush1.msra.mxu0 0.0
    %532 = vmatprep.subr.mxu0 0.0
    %533 = vmatpush1.msra.mxu0 0.0
    %534 = vmatprep.subr.mxu0 0.0
    %535 = vmatpush1.msra.mxu0 0.0
    %536 = vmatprep.subr.mxu0 0.0
    %537 = vmatpush1.msra.mxu0 0.0
    %538 = vmatprep.subr.mxu0 0.0
    %539 = vmatpush1.msra.mxu0 0.0
    %540 = vmatprep.subr.mxu0 0.0
    %541 = vmatpush1.msra.mxu0 0.0
    %542 = vmatprep.subr.mxu0 0.0
    %543 = vmatpush1.msra.mxu0 0.0
    %544 = vmatprep.subr.mxu0 0.0
    %545 = vmatpush1.msra.mxu0 0.0
    %546 = vmatprep.subr.mxu0 0.0
    %547 = vmatpush1.msra.mxu0 0.0
    %548 = vmatprep.subr.mxu0 0.0
    %549 = vmatpush1.msra.mxu0 0.0
    %550 = vmatprep.mubr.f32.mxu0 0.0
    %551 = vmatmul.mubr.f32.gmra.mrb[0].mxu0 %v368
    %v552 = vpop.f32.mrb[0].mxu0
    %v553 = vadd.f32 %v339, %v552
    %v554 = vpop.f32.mrb[0].mxu0
    %v555 = vadd.f32 %v339, %v554
    %556 = vmatprep.mubr.f32.mxu0 0.0
    %557 = vmatmul.mubr.f32.gmra.mrb[0].mxu0 %v371
    %v558 = vpop.f32.mrb[0].mxu0
    %v559 = vadd.f32 %v344, %v558
    %v560 = vpop.f32.mrb[0].mxu0
    %v561 = vadd.f32 %v344, %v560
    %562 = vmatprep.mubr.f32.mxu0 0.0
    %563 = vmatmul.mubr.f32.gmra.mrb[0].mxu0 %v374
    %v564 = vpop.f32.mrb[0].mxu0
    %v565 = vadd.f32 %v349, %v564
    %v566 = vpop.f32.mrb[0].mxu0
    %v567 = vadd.f32 %v349, %v566
    %568 = vmatprep.mubr.f32.mxu0 0.0
    %569 = vmatmul.mubr.f32.gmra.mrb[0].mxu0 %v377
    %v570 = vpop.f32.mrb[0].mxu0
    %v571 = vadd.f32 %v354, %v570
    %v572 = vpop.f32.mrb[0].mxu0
    %v573 = vadd.f32 %v354, %v572
    %574 = vmatprep.mubr.f32.mxu0 0.0
    %575 = vmatmul.mubr.f32.gmra.mrb[0].mxu0 %v380
    %v576 = vpop.f32.mrb[0].mxu0
    %v577 = vadd.f32 %v359, %v576
    %v578 = vpop.f32.mrb[0].mxu0
    %v579 = vadd.f32 %v359, %v578
    %580 = vmatprep.mubr.f32.mxu0 0.0
    %581 = vmatmul.mubr.f32.gmra.mrb[0].mxu0 %v383
    %v582 = vpop.f32.mrb[0].mxu0
    %v583 = vadd.f32 %v364, %v582
    %v584 = vpop.f32.mrb[0].mxu0
    %v585 = vadd.f32 %v364, %v584
    %586 = vdwg.mxu0
    %v587 = vld [vmem:[#allocation5] sm:$0xff]
    %v588 = vld [vmem:[#allocation5 + $0x8] sm:$0xff]
    %v589 = vld [vmem:[#allocation5 + $0x10] sm:$0xff]
    %v590 = vld [vmem:[#allocation5 + $0x18] sm:$0xff]
    %v591 = vld [vmem:[#allocation5 + $0x20] sm:$0xff]
    %v592 = vld [vmem:[#allocation5 + $0x28] sm:$0xff]
    %v593 = vld [vmem:[#allocation5 + $0x30] sm:$0xff]
    %v594 = vld [vmem:[#allocation5 + $0x38] sm:$0xff]
    %v595 = vld [vmem:[#allocation5 + $0x40] sm:$0xff]
    %v596 = vld [vmem:[#allocation5 + $0x48] sm:$0xff]
    %v597 = vld [vmem:[#allocation5 + $0x50] sm:$0xff]
    %v598 = vld [vmem:[#allocation5 + $0x58] sm:$0xff]
    %v599 = vld [vmem:[#allocation5 + $0x60] sm:$0x7]
    %v600 = vld [vmem:[#allocation5 + $0x68] sm:$0x7]
    %v601 = vld [vmem:[#allocation5 + $0x70] sm:$0x7]
    %v602 = vld [vmem:[#allocation5 + $0x78] sm:$0x7]
    %v603 = vld [vmem:[%s6] sm:$0xff]
    %v604 = vld [vmem:[%s6 + $0x8] sm:$0xff]
    %v605 = vld [vmem:[%s6 + $0x10] sm:$0xff]
    %v606 = vld [vmem:[%s6 + $0x18] sm:$0xff]
    %v607 = vld [vmem:[%s6 + $0x20] sm:$0xff]
    %v608 = vld [vmem:[%s6 + $0x28] sm:$0xff]
    %v609 = vld [vmem:[%s6 + $0x30] sm:$0xff]
    %v610 = vld [vmem:[%s6 + $0x38] sm:$0xff]
    %v611 = vld [vmem:[%s6 + $0x40] sm:$0xff]
    %v612 = vld [vmem:[%s6 + $0x48] sm:$0xff]
    %v613 = vld [vmem:[%s6 + $0x50] sm:$0xff]
    %v614 = vld [vmem:[%s6 + $0x58] sm:$0xff]
    %v615 = vld [vmem:[%s6 + $0x60] sm:$0xff]
    %v616 = vld [vmem:[%s6 + $0x68] sm:$0xff]
    %v617 = vld [vmem:[%s6 + $0x70] sm:$0xff]
    %v618 = vld [vmem:[%s6 + $0x78] sm:$0xff]
    %v619 = vld [vmem:[%s6 + $0x80] sm:$0xff]
    %v620 = vld [vmem:[%s6 + $0x88] sm:$0xff]
    %v621 = vld [vmem:[%s6 + $0x90] sm:$0xff]
    %v622 = vld [vmem:[%s6 + $0x98] sm:$0xff]
    %v623 = vld [vmem:[%s6 + $0xa0] sm:$0xff]
    %v624 = vld [vmem:[%s6 + $0xa8] sm:$0xff]
    %v625 = vld [vmem:[%s6 + $0xb0] sm:$0xff]
    %v626 = vld [vmem:[%s6 + $0xb8] sm:$0xff]
    %630 = vrot.lane.b32.xlu0 %v555, 17
    %v631 = vpop.permute.xlu0 %630
    %632 = vrot.lane.b32.xlu0 %v561, 17
    %v633 = vpop.permute.xlu0 %632
    %634 = vrot.lane.b32.xlu0 %v567, 17
    %v635 = vpop.permute.xlu0 %634
    %648 = vrot.lane.b32.xlu0 %v452, 17
    %v649 = vpop.permute.xlu0 %648
    %650 = vrot.lane.b32.xlu0 %v454, 17
    %v651 = vpop.permute.xlu0 %650
    %652 = vrot.lane.b32.xlu0 %v553, 17
    %v653 = vpop.permute.xlu0 %652
    %654 = vrot.lane.b32.xlu0 %v458, 17
    %v655 = vpop.permute.xlu0 %654
    %656 = vrot.lane.b32.xlu0 %v460, 17
    %v657 = vpop.permute.xlu0 %656
    %658 = vrot.lane.b32.xlu0 %v559, 17
    %v659 = vpop.permute.xlu0 %658
    %660 = vrot.lane.b32.xlu0 %v464, 17
    %v661 = vpop.permute.xlu0 %660
    %662 = vrot.lane.b32.xlu0 %v466, 17
    %v663 = vpop.permute.xlu0 %662
    %664 = vrot.lane.b32.xlu0 %v565, 17
    %v665 = vpop.permute.xlu0 %664
    %vm666 = vcmask 138240
    %v667 = vsel %vm666, %v649, %v651
    %v668 = vsel %vm666, %v651, %v653
    %v669 = vsel %vm666, %v653, %v631
    %v670 = vsel %vm666, %v655, %v657
    %v671 = vsel %vm666, %v657, %v659
    %v672 = vsel %vm666, %v659, %v633
    %v673 = vsel %vm666, %v661, %v663
    %v674 = vsel %vm666, %v663, %v665
    %v675 = vsel %vm666, %v665, %v635
    %v688 = vsel %vm666, %v631, %v649
    %v689 = vsel %vm666, %v633, %v655
    %v690 = vsel %vm666, %v635, %v661
    %v691 = vlaneseq
    %v692 = vshrl.u32 %v691, 7
    %v693 = vsub.s32 0, %v692
    %v694 = vrot.slane %v587, %v693
    %v695 = vlaneseq
    %v696 = vshrl.u32 %v695, 7
    %v697 = vsub.s32 0, %v696
    %v698 = vrot.slane %v588, %v697
    %v699 = vlaneseq
    %v700 = vshrl.u32 %v699, 7
    %v701 = vsub.s32 0, %v700
    %v702 = vrot.slane %v589, %v701
    %v703 = vlaneseq
    %v704 = vshrl.u32 %v703, 7
    %v705 = vsub.s32 0, %v704
    %v706 = vrot.slane %v590, %v705
    %v707 = vmul.f32 %v688, %v694
    %v708 = vmul.f32 %v667, %v698
    %v709 = vmul.f32 %v668, %v702
    %v710 = vmul.f32 %v669, %v706
    %v711 = vmul.f32 %v689, %v694
    %v712 = vmul.f32 %v670, %v698
    %v713 = vmul.f32 %v671, %v702
    %v714 = vmul.f32 %v672, %v706
    %v715 = vmul.f32 %v690, %v694
    %v716 = vmul.f32 %v673, %v698
    %v717 = vmul.f32 %v674, %v702
    %v718 = vmul.f32 %v675, %v706
    %719 = vrot.lane.b32.xlu0 %v555, 16
    %v720 = vpop.permute.xlu0 %719
    %721 = vrot.lane.b32.xlu0 %v561, 16
    %v722 = vpop.permute.xlu0 %721
    %723 = vrot.lane.b32.xlu0 %v567, 16
    %v724 = vpop.permute.xlu0 %723
    %728 = vrot.lane.b32.xlu0 %v452, 16
    %v729 = vpop.permute.xlu0 %728
    %730 = vrot.lane.b32.xlu0 %v454, 16
    %v731 = vpop.permute.xlu0 %730
    %732 = vrot.lane.b32.xlu0 %v553, 16
    %v733 = vpop.permute.xlu0 %732
    %734 = vrot.lane.b32.xlu0 %v458, 16
    %v735 = vpop.permute.xlu0 %734
    %736 = vrot.lane.b32.xlu0 %v460, 16
    %v737 = vpop.permute.xlu0 %736
    %738 = vrot.lane.b32.xlu0 %v559, 16
    %v739 = vpop.permute.xlu0 %738
    %740 = vrot.lane.b32.xlu0 %v464, 16
    %v741 = vpop.permute.xlu0 %740
    %742 = vrot.lane.b32.xlu0 %v466, 16
    %v743 = vpop.permute.xlu0 %742
    %744 = vrot.lane.b32.xlu0 %v565, 16
    %v745 = vpop.permute.xlu0 %744
    %v746 = vsel %vm366, %v729, %v731
    %v747 = vsel %vm366, %v731, %v733
    %v748 = vsel %vm366, %v733, %v720
    %v749 = vsel %vm366, %v735, %v737
    %v750 = vsel %vm366, %v737, %v739
    %v751 = vsel %vm366, %v739, %v722
    %v752 = vsel %vm366, %v741, %v743
    %v753 = vsel %vm366, %v743, %v745
    %v754 = vsel %vm366, %v745, %v724
    %v767 = vsel %vm366, %v720, %v729
    %v768 = vsel %vm366, %v722, %v735
    %v769 = vsel %vm366, %v724, %v741
    %v770 = vlaneseq
    %v771 = vshrl.u32 %v770, 7
    %v772 = vsub.s32 1, %v771
    %v773 = vrot.slane %v587, %v772
    %v774 = vlaneseq
    %v775 = vshrl.u32 %v774, 7
    %v776 = vsub.s32 1, %v775
    %v777 = vrot.slane %v588, %v776
    %v778 = vlaneseq
    %v779 = vshrl.u32 %v778, 7
    %v780 = vsub.s32 1, %v779
    %v781 = vrot.slane %v589, %v780
    %v782 = vlaneseq
    %v783 = vshrl.u32 %v782, 7
    %v784 = vsub.s32 1, %v783
    %v785 = vrot.slane %v590, %v784
    %v786 = vmul.f32 %v767, %v773
    %v787 = vmul.f32 %v746, %v777
    %v788 = vmul.f32 %v747, %v781
    %v789 = vmul.f32 %v748, %v785
    %v790 = vmul.f32 %v768, %v773
    %v791 = vmul.f32 %v749, %v777
    %v792 = vmul.f32 %v750, %v781
    %v793 = vmul.f32 %v751, %v785
    %v794 = vmul.f32 %v769, %v773
    %v795 = vmul.f32 %v752, %v777
    %v796 = vmul.f32 %v753, %v781
    %v797 = vmul.f32 %v754, %v785
    %798 = vrot.lane.b32.xlu0 %v555, 15
    %v799 = vpop.permute.xlu0 %798
    %800 = vrot.lane.b32.xlu0 %v561, 15
    %v801 = vpop.permute.xlu0 %800
    %802 = vrot.lane.b32.xlu0 %v567, 15
    %v803 = vpop.permute.xlu0 %802
    %807 = vrot.lane.b32.xlu0 %v452, 15
    %v808 = vpop.permute.xlu0 %807
    %809 = vrot.lane.b32.xlu0 %v454, 15
    %v810 = vpop.permute.xlu0 %809
    %811 = vrot.lane.b32.xlu0 %v553, 15
    %v812 = vpop.permute.xlu0 %811
    %813 = vrot.lane.b32.xlu0 %v458, 15
    %v814 = vpop.permute.xlu0 %813
    %815 = vrot.lane.b32.xlu0 %v460, 15
    %v816 = vpop.permute.xlu0 %815
    %817 = vrot.lane.b32.xlu0 %v559, 15
    %v818 = vpop.permute.xlu0 %817
    %819 = vrot.lane.b32.xlu0 %v464, 15
    %v820 = vpop.permute.xlu0 %819
    %821 = vrot.lane.b32.xlu0 %v466, 15
    %v822 = vpop.permute.xlu0 %821
    %823 = vrot.lane.b32.xlu0 %v565, 15
    %v824 = vpop.permute.xlu0 %823
    %vm825 = vcmask 121856
    %v826 = vsel %vm825, %v808, %v810
    %v827 = vsel %vm825, %v810, %v812
    %v828 = vsel %vm825, %v812, %v799
    %v829 = vsel %vm825, %v814, %v816
    %v830 = vsel %vm825, %v816, %v818
    %v831 = vsel %vm825, %v818, %v801
    %v832 = vsel %vm825, %v820, %v822
    %v833 = vsel %vm825, %v822, %v824
    %v834 = vsel %vm825, %v824, %v803
    %v847 = vsel %vm825, %v799, %v808
    %v848 = vsel %vm825, %v801, %v814
    %v849 = vsel %vm825, %v803, %v820
    %v850 = vlaneseq
    %v851 = vshrl.u32 %v850, 7
    %v852 = vsub.s32 2, %v851
    %v853 = vrot.slane %v587, %v852
    %v854 = vlaneseq
    %v855 = vshrl.u32 %v854, 7
    %v856 = vsub.s32 2, %v855
    %v857 = vrot.slane %v588, %v856
    %v858 = vlaneseq
    %v859 = vshrl.u32 %v858, 7
    %v860 = vsub.s32 2, %v859
    %v861 = vrot.slane %v589, %v860
    %v862 = vlaneseq
    %v863 = vshrl.u32 %v862, 7
    %v864 = vsub.s32 2, %v863
    %v865 = vrot.slane %v590, %v864
    %v866 = vmul.f32 %v847, %v853
    %v867 = vmul.f32 %v826, %v857
    %v868 = vmul.f32 %v827, %v861
    %v869 = vmul.f32 %v828, %v865
    %v870 = vmul.f32 %v848, %v853
    %v871 = vmul.f32 %v829, %v857
    %v872 = vmul.f32 %v830, %v861
    %v873 = vmul.f32 %v831, %v865
    %v874 = vmul.f32 %v849, %v853
    %v875 = vmul.f32 %v832, %v857
    %v876 = vmul.f32 %v833, %v861
    %v877 = vmul.f32 %v834, %v865
    %878 = vrot.lane.b32.xlu0 %v555, 1
    %v879 = vpop.permute.xlu0 %878
    %880 = vrot.lane.b32.xlu0 %v561, 1
    %v881 = vpop.permute.xlu0 %880
    %882 = vrot.lane.b32.xlu0 %v567, 1
    %v883 = vpop.permute.xlu0 %882
    %887 = vrot.lane.b32.xlu0 %v452, 1
    %v888 = vpop.permute.xlu0 %887
    %889 = vrot.lane.b32.xlu0 %v454, 1
    %v890 = vpop.permute.xlu0 %889
    %891 = vrot.lane.b32.xlu0 %v553, 1
    %v892 = vpop.permute.xlu0 %891
    %893 = vrot.lane.b32.xlu0 %v458, 1
    %v894 = vpop.permute.xlu0 %893
    %895 = vrot.lane.b32.xlu0 %v460, 1
    %v896 = vpop.permute.xlu0 %895
    %897 = vrot.lane.b32.xlu0 %v559, 1
    %v898 = vpop.permute.xlu0 %897
    %899 = vrot.lane.b32.xlu0 %v464, 1
    %v900 = vpop.permute.xlu0 %899
    %901 = vrot.lane.b32.xlu0 %v466, 1
    %v902 = vpop.permute.xlu0 %901
    %903 = vrot.lane.b32.xlu0 %v565, 1
    %v904 = vpop.permute.xlu0 %903
    %vm905 = vcmask 7168
    %v906 = vsel %vm905, %v888, %v890
    %v907 = vsel %vm905, %v890, %v892
    %v908 = vsel %vm905, %v892, %v879
    %v909 = vsel %vm905, %v894, %v896
    %v910 = vsel %vm905, %v896, %v898
    %v911 = vsel %vm905, %v898, %v881
    %v912 = vsel %vm905, %v900, %v902
    %v913 = vsel %vm905, %v902, %v904
    %v914 = vsel %vm905, %v904, %v883
    %v927 = vsel %vm905, %v879, %v888
    %v928 = vsel %vm905, %v881, %v894
    %v929 = vsel %vm905, %v883, %v900
    %v930 = vlaneseq
    %v931 = vshrl.u32 %v930, 7
    %v932 = vsub.s32 3, %v931
    %v933 = vrot.slane %v587, %v932
    %v934 = vlaneseq
    %v935 = vshrl.u32 %v934, 7
    %v936 = vsub.s32 3, %v935
    %v937 = vrot.slane %v588, %v936
    %v938 = vlaneseq
    %v939 = vshrl.u32 %v938, 7
    %v940 = vsub.s32 3, %v939
    %v941 = vrot.slane %v589, %v940
    %v942 = vlaneseq
    %v943 = vshrl.u32 %v942, 7
    %v944 = vsub.s32 3, %v943
    %v945 = vrot.slane %v590, %v944
    %v946 = vmul.f32 %v927, %v933
    %v947 = vmul.f32 %v906, %v937
    %v948 = vmul.f32 %v907, %v941
    %v949 = vmul.f32 %v908, %v945
    %v950 = vmul.f32 %v928, %v933
    %v951 = vmul.f32 %v909, %v937
    %v952 = vmul.f32 %v910, %v941
    %v953 = vmul.f32 %v911, %v945
    %v954 = vmul.f32 %v929, %v933
    %v955 = vmul.f32 %v912, %v937
    %v956 = vmul.f32 %v913, %v941
    %v957 = vmul.f32 %v914, %v945
    %958 = vrot.lane.b32.xlu0 %v452, 127
    %v959 = vpop.permute.xlu0 %958
    %960 = vrot.lane.b32.xlu0 %v454, 127
    %v961 = vpop.permute.xlu0 %960
    %962 = vrot.lane.b32.xlu0 %v553, 127
    %v963 = vpop.permute.xlu0 %962
    %964 = vrot.lane.b32.xlu0 %v555, 127
    %v965 = vpop.permute.xlu0 %964
    %966 = vrot.lane.b32.xlu0 %v458, 127
    %v967 = vpop.permute.xlu0 %966
    %968 = vrot.lane.b32.xlu0 %v460, 127
    %v969 = vpop.permute.xlu0 %968
    %970 = vrot.lane.b32.xlu0 %v559, 127
    %v971 = vpop.permute.xlu0 %970
    %972 = vrot.lane.b32.xlu0 %v561, 127
    %v973 = vpop.permute.xlu0 %972
    %974 = vrot.lane.b32.xlu0 %v464, 127
    %v975 = vpop.permute.xlu0 %974
    %976 = vrot.lane.b32.xlu0 %v466, 127
    %v977 = vpop.permute.xlu0 %976
    %978 = vrot.lane.b32.xlu0 %v565, 127
    %v979 = vpop.permute.xlu0 %978
    %980 = vrot.lane.b32.xlu0 %v567, 127
    %v981 = vpop.permute.xlu0 %980
    %vm982 = vcmask 1039360
    %v983 = vsel %vm982, %v959, %v961
    %v984 = vsel %vm982, %v961, %v963
    %v985 = vsel %vm982, %v963, %v965
    %v986 = vsel %vm982, %v967, %v969
    %v987 = vsel %vm982, %v969, %v971
    %v988 = vsel %vm982, %v971, %v973
    %v989 = vsel %vm982, %v975, %v977
    %v990 = vsel %vm982, %v977, %v979
    %v991 = vsel %vm982, %v979, %v981
    %v1007 = vsel %vm982, %v965, %v959
    %v1008 = vsel %vm982, %v973, %v967
    %v1009 = vsel %vm982, %v981, %v975
    %v1010 = vlaneseq
    %v1011 = vshrl.u32 %v1010, 7
    %v1012 = vsub.s32 5, %v1011
    %v1013 = vrot.slane %v587, %v1012
    %v1014 = vlaneseq
    %v1015 = vshrl.u32 %v1014, 7
    %v1016 = vsub.s32 5, %v1015
    %v1017 = vrot.slane %v588, %v1016
    %v1018 = vlaneseq
    %v1019 = vshrl.u32 %v1018, 7
    %v1020 = vsub.s32 5, %v1019
    %v1021 = vrot.slane %v589, %v1020
    %v1022 = vlaneseq
    %v1023 = vshrl.u32 %v1022, 7
    %v1024 = vsub.s32 5, %v1023
    %v1025 = vrot.slane %v590, %v1024
    %v1026 = vmul.f32 %v983, %v1013
    %v1027 = vmul.f32 %v984, %v1017
    %v1028 = vmul.f32 %v985, %v1021
    %v1029 = vmul.f32 %v1007, %v1025
    %v1030 = vmul.f32 %v986, %v1013
    %v1031 = vmul.f32 %v987, %v1017
    %v1032 = vmul.f32 %v988, %v1021
    %v1033 = vmul.f32 %v1008, %v1025
    %v1034 = vmul.f32 %v989, %v1013
    %v1035 = vmul.f32 %v990, %v1017
    %v1036 = vmul.f32 %v991, %v1021
    %v1037 = vmul.f32 %v1009, %v1025
    %1038 = vrot.lane.b32.xlu0 %v452, 113
    %v1039 = vpop.permute.xlu0 %1038
    %1040 = vrot.lane.b32.xlu0 %v454, 113
    %v1041 = vpop.permute.xlu0 %1040
    %1042 = vrot.lane.b32.xlu0 %v553, 113
    %v1043 = vpop.permute.xlu0 %1042
    %1044 = vrot.lane.b32.xlu0 %v555, 113
    %v1045 = vpop.permute.xlu0 %1044
    %1046 = vrot.lane.b32.xlu0 %v458, 113
    %v1047 = vpop.permute.xlu0 %1046
    %1048 = vrot.lane.b32.xlu0 %v460, 113
    %v1049 = vpop.permute.xlu0 %1048
    %1050 = vrot.lane.b32.xlu0 %v559, 113
    %v1051 = vpop.permute.xlu0 %1050
    %1052 = vrot.lane.b32.xlu0 %v561, 113
    %v1053 = vpop.permute.xlu0 %1052
    %1054 = vrot.lane.b32.xlu0 %v464, 113
    %v1055 = vpop.permute.xlu0 %1054
    %1056 = vrot.lane.b32.xlu0 %v466, 113
    %v1057 = vpop.permute.xlu0 %1056
    %1058 = vrot.lane.b32.xlu0 %v565, 113
    %v1059 = vpop.permute.xlu0 %1058
    %1060 = vrot.lane.b32.xlu0 %v567, 113
    %v1061 = vpop.permute.xlu0 %1060
    %vm1062 = vcmask 924672
    %v1063 = vsel %vm1062, %v1039, %v1041
    %v1064 = vsel %vm1062, %v1041, %v1043
    %v1065 = vsel %vm1062, %v1043, %v1045
    %v1066 = vsel %vm1062, %v1047, %v1049
    %v1067 = vsel %vm1062, %v1049, %v1051
    %v1068 = vsel %vm1062, %v1051, %v1053
    %v1069 = vsel %vm1062, %v1055, %v1057
    %v1070 = vsel %vm1062, %v1057, %v1059
    %v1071 = vsel %vm1062, %v1059, %v1061
    %v1087 = vsel %vm1062, %v1045, %v1039
    %v1088 = vsel %vm1062, %v1053, %v1047
    %v1089 = vsel %vm1062, %v1061, %v1055
    %v1090 = vlaneseq
    %v1091 = vshrl.u32 %v1090, 7
    %v1092 = vsub.s32 6, %v1091
    %v1093 = vrot.slane %v587, %v1092
    %v1094 = vlaneseq
    %v1095 = vshrl.u32 %v1094, 7
    %v1096 = vsub.s32 6, %v1095
    %v1097 = vrot.slane %v588, %v1096
    %v1098 = vlaneseq
    %v1099 = vshrl.u32 %v1098, 7
    %v1100 = vsub.s32 6, %v1099
    %v1101 = vrot.slane %v589, %v1100
    %v1102 = vlaneseq
    %v1103 = vshrl.u32 %v1102, 7
    %v1104 = vsub.s32 6, %v1103
    %v1105 = vrot.slane %v590, %v1104
    %v1106 = vmul.f32 %v1063, %v1093
    %v1107 = vmul.f32 %v1064, %v1097
    %v1108 = vmul.f32 %v1065, %v1101
    %v1109 = vmul.f32 %v1087, %v1105
    %v1110 = vmul.f32 %v1066, %v1093
    %v1111 = vmul.f32 %v1067, %v1097
    %v1112 = vmul.f32 %v1068, %v1101
    %v1113 = vmul.f32 %v1088, %v1105
    %v1114 = vmul.f32 %v1069, %v1093
    %v1115 = vmul.f32 %v1070, %v1097
    %v1116 = vmul.f32 %v1071, %v1101
    %v1117 = vmul.f32 %v1089, %v1105
    %1118 = vrot.lane.b32.xlu0 %v452, 112
    %v1119 = vpop.permute.xlu0 %1118
    %1120 = vrot.lane.b32.xlu0 %v454, 112
    %v1121 = vpop.permute.xlu0 %1120
    %1122 = vrot.lane.b32.xlu0 %v553, 112
    %v1123 = vpop.permute.xlu0 %1122
    %1124 = vrot.lane.b32.xlu0 %v555, 112
    %v1125 = vpop.permute.xlu0 %1124
    %1126 = vrot.lane.b32.xlu0 %v458, 112
    %v1127 = vpop.permute.xlu0 %1126
    %1128 = vrot.lane.b32.xlu0 %v460, 112
    %v1129 = vpop.permute.xlu0 %1128
    %1130 = vrot.lane.b32.xlu0 %v559, 112
    %v1131 = vpop.permute.xlu0 %1130
    %1132 = vrot.lane.b32.xlu0 %v561, 112
    %v1133 = vpop.permute.xlu0 %1132
    %1134 = vrot.lane.b32.xlu0 %v464, 112
    %v1135 = vpop.permute.xlu0 %1134
    %1136 = vrot.lane.b32.xlu0 %v466, 112
    %v1137 = vpop.permute.xlu0 %1136
    %1138 = vrot.lane.b32.xlu0 %v565, 112
    %v1139 = vpop.permute.xlu0 %1138
    %1140 = vrot.lane.b32.xlu0 %v567, 112
    %v1141 = vpop.permute.xlu0 %1140
    %vm1142 = vcmask 916480
    %v1143 = vsel %vm1142, %v1119, %v1121
    %v1144 = vsel %vm1142, %v1121, %v1123
    %v1145 = vsel %vm1142, %v1123, %v1125
    %v1146 = vsel %vm1142, %v1127, %v1129
    %v1147 = vsel %vm1142, %v1129, %v1131
    %v1148 = vsel %vm1142, %v1131, %v1133
    %v1149 = vsel %vm1142, %v1135, %v1137
    %v1150 = vsel %vm1142, %v1137, %v1139
    %v1151 = vsel %vm1142, %v1139, %v1141
    %v1167 = vsel %vm1142, %v1125, %v1119
    %v1168 = vsel %vm1142, %v1133, %v1127
    %v1169 = vsel %vm1142, %v1141, %v1135
    %v1170 = vlaneseq
    %v1171 = vshrl.u32 %v1170, 7
    %v1172 = vsub.s32 7, %v1171
    %v1173 = vrot.slane %v587, %v1172
    %v1174 = vlaneseq
    %v1175 = vshrl.u32 %v1174, 7
    %v1176 = vsub.s32 7, %v1175
    %v1177 = vrot.slane %v588, %v1176
    %v1178 = vlaneseq
    %v1179 = vshrl.u32 %v1178, 7
    %v1180 = vsub.s32 7, %v1179
    %v1181 = vrot.slane %v589, %v1180
    %v1182 = vlaneseq
    %v1183 = vshrl.u32 %v1182, 7
    %v1184 = vsub.s32 7, %v1183
    %v1185 = vrot.slane %v590, %v1184
    %v1186 = vmul.f32 %v1143, %v1173
    %v1187 = vmul.f32 %v1144, %v1177
    %v1188 = vmul.f32 %v1145, %v1181
    %v1189 = vmul.f32 %v1167, %v1185
    %v1190 = vmul.f32 %v1146, %v1173
    %v1191 = vmul.f32 %v1147, %v1177
    %v1192 = vmul.f32 %v1148, %v1181
    %v1193 = vmul.f32 %v1168, %v1185
    %v1194 = vmul.f32 %v1149, %v1173
    %v1195 = vmul.f32 %v1150, %v1177
    %v1196 = vmul.f32 %v1151, %v1181
    %v1197 = vmul.f32 %v1169, %v1185
    %1198 = vrot.lane.b32.xlu0 %v452, 111
    %v1199 = vpop.permute.xlu0 %1198
    %1200 = vrot.lane.b32.xlu0 %v454, 111
    %v1201 = vpop.permute.xlu0 %1200
    %1202 = vrot.lane.b32.xlu0 %v553, 111
    %v1203 = vpop.permute.xlu0 %1202
    %1204 = vrot.lane.b32.xlu0 %v555, 111
    %v1205 = vpop.permute.xlu0 %1204
    %1206 = vrot.lane.b32.xlu0 %v458, 111
    %v1207 = vpop.permute.xlu0 %1206
    %1208 = vrot.lane.b32.xlu0 %v460, 111
    %v1209 = vpop.permute.xlu0 %1208
    %1210 = vrot.lane.b32.xlu0 %v559, 111
    %v1211 = vpop.permute.xlu0 %1210
    %1212 = vrot.lane.b32.xlu0 %v561, 111
    %v1213 = vpop.permute.xlu0 %1212
    %1214 = vrot.lane.b32.xlu0 %v464, 111
    %v1215 = vpop.permute.xlu0 %1214
    %1216 = vrot.lane.b32.xlu0 %v466, 111
    %v1217 = vpop.permute.xlu0 %1216
    %1218 = vrot.lane.b32.xlu0 %v565, 111
    %v1219 = vpop.permute.xlu0 %1218
    %1220 = vrot.lane.b32.xlu0 %v567, 111
    %v1221 = vpop.permute.xlu0 %1220
    %vm1222 = vcmask 908288
    %v1223 = vsel %vm1222, %v1199, %v1201
    %v1224 = vsel %vm1222, %v1201, %v1203
    %v1225 = vsel %vm1222, %v1203, %v1205
    %v1226 = vsel %vm1222, %v1207, %v1209
    %v1227 = vsel %vm1222, %v1209, %v1211
    %v1228 = vsel %vm1222, %v1211, %v1213
    %v1229 = vsel %vm1222, %v1215, %v1217
    %v1230 = vsel %vm1222, %v1217, %v1219
    %v1231 = vsel %vm1222, %v1219, %v1221
    %v1247 = vsel %vm1222, %v1205, %v1199
    %v1248 = vsel %vm1222, %v1213, %v1207
    %v1249 = vsel %vm1222, %v1221, %v1215
    %v1250 = vlaneseq
    %v1251 = vshrl.u32 %v1250, 7
    %v1252 = vsub.s32 0, %v1251
    %v1253 = vrot.slane %v591, %v1252
    %v1254 = vlaneseq
    %v1255 = vshrl.u32 %v1254, 7
    %v1256 = vsub.s32 0, %v1255
    %v1257 = vrot.slane %v592, %v1256
    %v1258 = vlaneseq
    %v1259 = vshrl.u32 %v1258, 7
    %v1260 = vsub.s32 0, %v1259
    %v1261 = vrot.slane %v593, %v1260
    %v1262 = vlaneseq
    %v1263 = vshrl.u32 %v1262, 7
    %v1264 = vsub.s32 0, %v1263
    %v1265 = vrot.slane %v594, %v1264
    %v1266 = vmul.f32 %v1223, %v1253
    %v1267 = vmul.f32 %v1224, %v1257
    %v1268 = vmul.f32 %v1225, %v1261
    %v1269 = vmul.f32 %v1247, %v1265
    %v1270 = vmul.f32 %v1226, %v1253
    %v1271 = vmul.f32 %v1227, %v1257
    %v1272 = vmul.f32 %v1228, %v1261
    %v1273 = vmul.f32 %v1248, %v1265
    %v1274 = vmul.f32 %v1229, %v1253
    %v1275 = vmul.f32 %v1230, %v1257
    %v1276 = vmul.f32 %v1231, %v1261
    %v1277 = vmul.f32 %v1249, %v1265
    %v1278 = vld [vmem:[%s7] sm:$0xff]
    %v1279 = vld [vmem:[%s7 + $0x8] sm:$0xff]
    %v1280 = vld [vmem:[%s7 + $0x10] sm:$0xff]
    %v1281 = vld [vmem:[%s7 + $0x18] sm:$0xff]
    %v1282 = vld [vmem:[%s7 + $0x20] sm:$0xff]
    %v1283 = vld [vmem:[%s7 + $0x28] sm:$0xff]
    %v1284 = vld [vmem:[%s7 + $0x30] sm:$0xff]
    %v1285 = vld [vmem:[%s7 + $0x38] sm:$0xff]
    %v1286 = vld [vmem:[%s7 + $0x40] sm:$0xff]
    %v1287 = vld [vmem:[%s7 + $0x48] sm:$0xff]
    %v1288 = vld [vmem:[%s7 + $0x50] sm:$0xff]
    %v1289 = vld [vmem:[%s7 + $0x58] sm:$0xff]
    %1291 = vset.pattern.permute.xlu0 0
    %1292 = vperm.xlu0 %1291, %v1278
    %v1293 = vpop.permute.xlu0 %1292
    %1296 = vset.pattern.permute.xlu0 0
    %1297 = vperm.xlu0 %1296, %v1279
    %v1298 = vpop.permute.xlu0 %1297
    %1301 = vset.pattern.permute.xlu0 0
    %1302 = vperm.xlu0 %1301, %v1280
    %v1303 = vpop.permute.xlu0 %1302
    %1306 = vset.pattern.permute.xlu0 0
    %1307 = vperm.xlu0 %1306, %v1281
    %v1308 = vpop.permute.xlu0 %1307
    %1311 = vset.pattern.permute.xlu0 0
    %1312 = vperm.xlu0 %1311, %v1282
    %v1313 = vpop.permute.xlu0 %1312
    %1316 = vset.pattern.permute.xlu0 0
    %1317 = vperm.xlu0 %1316, %v1283
    %v1318 = vpop.permute.xlu0 %1317
    %1321 = vset.pattern.permute.xlu0 0
    %1322 = vperm.xlu0 %1321, %v1284
    %v1323 = vpop.permute.xlu0 %1322
    %1326 = vset.pattern.permute.xlu0 0
    %1327 = vperm.xlu0 %1326, %v1285
    %v1328 = vpop.permute.xlu0 %1327
    %1331 = vset.pattern.permute.xlu0 0
    %1332 = vperm.xlu0 %1331, %v1286
    %v1333 = vpop.permute.xlu0 %1332
    %1336 = vset.pattern.permute.xlu0 0
    %1337 = vperm.xlu0 %1336, %v1287
    %v1338 = vpop.permute.xlu0 %1337
    %1341 = vset.pattern.permute.xlu0 0
    %1342 = vperm.xlu0 %1341, %v1288
    %v1343 = vpop.permute.xlu0 %1342
    %1346 = vset.pattern.permute.xlu0 0
    %1347 = vperm.xlu0 %1346, %v1289
    %v1348 = vpop.permute.xlu0 %1347
    %vm1350 = vcmask 719872
    %v1352 = vsel %vm1350, %v604, 0
    %v1355 = vsel %vm1350, %v606, 0
    %v1358 = vsel %vm1350, %v608, 0
    %v1361 = vsel %vm1350, %v610, 0
    %v1364 = vsel %vm1350, %v612, 0
    %v1367 = vsel %vm1350, %v614, 0
    %v1370 = vsel %vm1350, %v616, 0
    %v1373 = vsel %vm1350, %v618, 0
    %v1376 = vsel %vm1350, %v620, 0
    %v1379 = vsel %vm1350, %v622, 0
    %v1382 = vsel %vm1350, %v624, 0
    %v1385 = vsel %vm1350, %v626, 0
    %1387 = vmatprep.subr.mxu0 %v708
    %1388 = vmatpush1.msra.mxu0 %v707
    %1389 = vmatprep.subr.mxu0 %v712
    %1390 = vmatpush1.msra.mxu0 %v711
    %1391 = vmatprep.subr.mxu0 %v716
    %1392 = vmatpush1.msra.mxu0 %v715
    %1393 = vmatprep.subr.mxu0 %v787
    %1394 = vmatpush1.msra.mxu0 %v786
    %1395 = vmatprep.subr.mxu0 %v791
    %1396 = vmatpush1.msra.mxu0 %v790
    %1397 = vmatprep.subr.mxu0 %v795
    %1398 = vmatpush1.msra.mxu0 %v794
    %1399 = vmatprep.subr.mxu0 %v867
    %1400 = vmatpush1.msra.mxu0 %v866
    %1401 = vmatprep.subr.mxu0 %v871
    %1402 = vmatpush1.msra.mxu0 %v870
    %1403 = vmatprep.subr.mxu0 %v875
    %1404 = vmatpush1.msra.mxu0 %v874
    %1405 = vmatprep.subr.mxu0 %v947
    %1406 = vmatpush1.msra.mxu0 %v946
    %1407 = vmatprep.subr.mxu0 %v951
    %1408 = vmatpush1.msra.mxu0 %v950
    %1409 = vmatprep.subr.mxu0 %v955
    %1410 = vmatpush1.msra.mxu0 %v954
    %1411 = vmatprep.subr.mxu0 %v454
    %1412 = vmatpush1.msra.mxu0 %v452
    %1413 = vmatprep.subr.mxu0 %v460
    %1414 = vmatpush1.msra.mxu0 %v458
    %1415 = vmatprep.subr.mxu0 %v466
    %1416 = vmatpush1.msra.mxu0 %v464
    %1417 = vmatprep.subr.mxu0 %v1027
    %1418 = vmatpush1.msra.mxu0 %v1026
    %1419 = vmatprep.subr.mxu0 %v1031
    %1420 = vmatpush1.msra.mxu0 %v1030
    %1421 = vmatprep.subr.mxu0 %v1035
    %1422 = vmatpush1.msra.mxu0 %v1034
    %1423 = vmatprep.subr.mxu0 %v1107
    %1424 = vmatpush1.msra.mxu0 %v1106
    %1425 = vmatprep.subr.mxu0 %v1111
    %1426 = vmatpush1.msra.mxu0 %v1110
    %1427 = vmatprep.subr.mxu0 %v1115
    %1428 = vmatpush1.msra.mxu0 %v1114
    %1429 = vmatprep.subr.mxu0 %v1187
    %1430 = vmatpush1.msra.mxu0 %v1186
    %1431 = vmatprep.subr.mxu0 %v1191
    %1432 = vmatpush1.msra.mxu0 %v1190
    %1433 = vmatprep.subr.mxu0 %v1195
    %1434 = vmatpush1.msra.mxu0 %v1194
    %1435 = vmatprep.subr.mxu0 %v1267
    %1436 = vmatpush1.msra.mxu0 %v1266
    %1437 = vmatprep.subr.mxu0 %v1271
    %1438 = vmatpush1.msra.mxu0 %v1270
    %1439 = vmatprep.subr.mxu0 %v1275
    %1440 = vmatpush1.msra.mxu0 %v1274
    %1441 = vmatprep.subr.mxu0 0.0
    %1442 = vmatpush1.msra.mxu0 0.0
    %1443 = vmatprep.subr.mxu0 0.0
    %1444 = vmatpush1.msra.mxu0 0.0
    %1445 = vmatprep.subr.mxu0 0.0
    %1446 = vmatpush1.msra.mxu0 0.0
    %1447 = vmatprep.subr.mxu0 0.0
    %1448 = vmatpush1.msra.mxu0 0.0
    %1449 = vmatprep.subr.mxu0 0.0
    %1450 = vmatpush1.msra.mxu0 0.0
    %1451 = vmatprep.mubr.f32.mxu0 %v1352
    %1452 = vmatmul.mubr.f32.gmra.mrb[0].mxu0 %v603
    %v1453 = vpop.f32.mrb[0].mxu0
    %v1454 = vadd.f32 %v1293, %v1453
    %v1455 = vpop.f32.mrb[0].mxu0
    %v1456 = vadd.f32 %v1293, %v1455
    %1457 = vmatprep.mubr.f32.mxu0 %v1355
    %1458 = vmatmul.mubr.f32.gmra.mrb[0].mxu0 %v605
    %v1459 = vpop.f32.mrb[0].mxu0
    %v1460 = vadd.f32 %v1298, %v1459
    %v1461 = vpop.f32.mrb[0].mxu0
    %v1462 = vadd.f32 %v1298, %v1461
    %1463 = vmatprep.mubr.f32.mxu0 %v1358
    %1464 = vmatmul.mubr.f32.gmra.mrb[0].mxu0 %v607
    %v1465 = vpop.f32.mrb[0].mxu0
    %v1466 = vadd.f32 %v1303, %v1465
    %v1467 = vpop.f32.mrb[0].mxu0
    %v1468 = vadd.f32 %v1303, %v1467
    %1469 = vmatprep.mubr.f32.mxu0 %v1361
    %1470 = vmatmul.mubr.f32.gmra.mrb[0].mxu0 %v609
    %v1471 = vpop.f32.mrb[0].mxu0
    %v1472 = vadd.f32 %v1308, %v1471
    %v1473 = vpop.f32.mrb[0].mxu0
    %v1474 = vadd.f32 %v1308, %v1473
    %1475 = vmatprep.mubr.f32.mxu0 %v1364
    %1476 = vmatmul.mubr.f32.gmra.mrb[0].mxu0 %v611
    %v1477 = vpop.f32.mrb[0].mxu0
    %v1478 = vadd.f32 %v1313, %v1477
    %v1479 = vpop.f32.mrb[0].mxu0
    %v1480 = vadd.f32 %v1313, %v1479
    %1481 = vmatprep.mubr.f32.mxu0 %v1367
    %1482 = vmatmul.mubr.f32.gmra.mrb[0].mxu0 %v613
    %v1483 = vpop.f32.mrb[0].mxu0
    %v1484 = vadd.f32 %v1318, %v1483
    %v1485 = vpop.f32.mrb[0].mxu0
    %v1486 = vadd.f32 %v1318, %v1485
    %1487 = vmatprep.mubr.f32.mxu0 %v1370
    %1488 = vmatmul.mubr.f32.gmra.mrb[0].mxu0 %v615
    %v1489 = vpop.f32.mrb[0].mxu0
    %v1490 = vadd.f32 %v1323, %v1489
    %v1491 = vpop.f32.mrb[0].mxu0
    %v1492 = vadd.f32 %v1323, %v1491
    %1493 = vmatprep.mubr.f32.mxu0 %v1373
    %1494 = vmatmul.mubr.f32.gmra.mrb[0].mxu0 %v617
    %v1495 = vpop.f32.mrb[0].mxu0
    %v1496 = vadd.f32 %v1328, %v1495
    %v1497 = vpop.f32.mrb[0].mxu0
    %v1498 = vadd.f32 %v1328, %v1497
    %1499 = vmatprep.mubr.f32.mxu0 %v1376
    %1500 = vmatmul.mubr.f32.gmra.mrb[0].mxu0 %v619
    %v1501 = vpop.f32.mrb[0].mxu0
    %v1502 = vadd.f32 %v1333, %v1501
    %v1503 = vpop.f32.mrb[0].mxu0
    %v1504 = vadd.f32 %v1333, %v1503
    %1505 = vmatprep.mubr.f32.mxu0 %v1379
    %1506 = vmatmul.mubr.f32.gmra.mrb[0].mxu0 %v621
    %v1507 = vpop.f32.mrb[0].mxu0
    %v1508 = vadd.f32 %v1338, %v1507
    %v1509 = vpop.f32.mrb[0].mxu0
    %v1510 = vadd.f32 %v1338, %v1509
    %1511 = vmatprep.mubr.f32.mxu0 %v1382
    %1512 = vmatmul.mubr.f32.gmra.mrb[0].mxu0 %v623
    %v1513 = vpop.f32.mrb[0].mxu0
    %v1514 = vadd.f32 %v1343, %v1513
    %v1515 = vpop.f32.mrb[0].mxu0
    %v1516 = vadd.f32 %v1343, %v1515
    %1517 = vmatprep.mubr.f32.mxu0 %v1385
    %1518 = vmatmul.mubr.f32.gmra.mrb[0].mxu0 %v625
    %v1519 = vpop.f32.mrb[0].mxu0
    %v1520 = vadd.f32 %v1348, %v1519
    %v1521 = vpop.f32.mrb[0].mxu0
    %v1522 = vadd.f32 %v1348, %v1521
    %1523 = vdwg.mxu0
    %1524 = vmatprep.subr.mxu0 %v710
    %1525 = vmatpush1.msra.mxu0 %v709
    %1526 = vmatprep.subr.mxu0 %v714
    %1527 = vmatpush1.msra.mxu0 %v713
    %1528 = vmatprep.subr.mxu0 %v718
    %1529 = vmatpush1.msra.mxu0 %v717
    %1530 = vmatprep.subr.mxu0 %v789
    %1531 = vmatpush1.msra.mxu0 %v788
    %1532 = vmatprep.subr.mxu0 %v793
    %1533 = vmatpush1.msra.mxu0 %v792
    %1534 = vmatprep.subr.mxu0 %v797
    %1535 = vmatpush1.msra.mxu0 %v796
    %1536 = vmatprep.subr.mxu0 %v869
    %1537 = vmatpush1.msra.mxu0 %v868
    %1538 = vmatprep.subr.mxu0 %v873
    %1539 = vmatpush1.msra.mxu0 %v872
    %1540 = vmatprep.subr.mxu0 %v877
    %1541 = vmatpush1.msra.mxu0 %v876
    %1542 = vmatprep.subr.mxu0 %v949
    %1543 = vmatpush1.msra.mxu0 %v948
    %1544 = vmatprep.subr.mxu0 %v953
    %1545 = vmatpush1.msra.mxu0 %v952
    %1546 = vmatprep.subr.mxu0 %v957
    %1547 = vmatpush1.msra.mxu0 %v956
    %1548 = vmatprep.subr.mxu0 %v555
    %1549 = vmatpush1.msra.mxu0 %v553
    %1550 = vmatprep.subr.mxu0 %v561
    %1551 = vmatpush1.msra.mxu0 %v559
    %1552 = vmatprep.subr.mxu0 %v567
    %1553 = vmatpush1.msra.mxu0 %v565
    %1554 = vmatprep.subr.mxu0 %v1029
    %1555 = vmatpush1.msra.mxu0 %v1028
    %1556 = vmatprep.subr.mxu0 %v1033
    %1557 = vmatpush1.msra.mxu0 %v1032
    %1558 = vmatprep.subr.mxu0 %v1037
    %1559 = vmatpush1.msra.mxu0 %v1036
    %1560 = vmatprep.subr.mxu0 %v1109
    %1561 = vmatpush1.msra.mxu0 %v1108
    %1562 = vmatprep.subr.mxu0 %v1113
    %1563 = vmatpush1.msra.mxu0 %v1112
    %1564 = vmatprep.subr.mxu0 %v1117
    %1565 = vmatpush1.msra.mxu0 %v1116
    %1566 = vmatprep.subr.mxu0 %v1189
    %1567 = vmatpush1.msra.mxu0 %v1188
    %1568 = vmatprep.subr.mxu0 %v1193
    %1569 = vmatpush1.msra.mxu0 %v1192
    %1570 = vmatprep.subr.mxu0 %v1197
    %1571 = vmatpush1.msra.mxu0 %v1196
    %1572 = vmatprep.subr.mxu0 %v1269
    %1573 = vmatpush1.msra.mxu0 %v1268
    %1574 = vmatprep.subr.mxu0 %v1273
    %1575 = vmatpush1.msra.mxu0 %v1272
    %1576 = vmatprep.subr.mxu0 %v1277
    %1577 = vmatpush1.msra.mxu0 %v1276
    %1578 = vmatprep.subr.mxu0 0.0
    %1579 = vmatpush1.msra.mxu0 0.0
    %1580 = vmatprep.subr.mxu0 0.0
    %1581 = vmatpush1.msra.mxu0 0.0
    %1582 = vmatprep.subr.mxu0 0.0
    %1583 = vmatpush1.msra.mxu0 0.0
    %1584 = vmatprep.subr.mxu0 0.0
    %1585 = vmatpush1.msra.mxu0 0.0
    %1586 = vmatprep.subr.mxu0 0.0
    %1587 = vmatpush1.msra.mxu0 0.0
    %1588 = vmatprep.mubr.f32.mxu0 %v1352
    %1589 = vmatmul.mubr.f32.gmra.mrb[0].mxu0 %v603
    %v1590 = vpop.f32.mrb[0].mxu0
    %v1591 = vadd.f32 %v1293, %v1590
    %v1592 = vpop.f32.mrb[0].mxu0
    %v1593 = vadd.f32 %v1293, %v1592
    %1594 = vmatprep.mubr.f32.mxu0 %v1355
    %1595 = vmatmul.mubr.f32.gmra.mrb[0].mxu0 %v605
    %v1596 = vpop.f32.mrb[0].mxu0
    %v1597 = vadd.f32 %v1298, %v1596
    %v1598 = vpop.f32.mrb[0].mxu0
    %v1599 = vadd.f32 %v1298, %v1598
    %1600 = vmatprep.mubr.f32.mxu0 %v1358
    %1601 = vmatmul.mubr.f32.gmra.mrb[0].mxu0 %v607
    %v1602 = vpop.f32.mrb[0].mxu0
    %v1603 = vadd.f32 %v1303, %v1602
    %v1604 = vpop.f32.mrb[0].mxu0
    %v1605 = vadd.f32 %v1303, %v1604
    %1606 = vmatprep.mubr.f32.mxu0 %v1361
    %1607 = vmatmul.mubr.f32.gmra.mrb[0].mxu0 %v609
    %v1608 = vpop.f32.mrb[0].mxu0
    %v1609 = vadd.f32 %v1308, %v1608
    %v1610 = vpop.f32.mrb[0].mxu0
    %v1611 = vadd.f32 %v1308, %v1610
    %1612 = vmatprep.mubr.f32.mxu0 %v1364
    %1613 = vmatmul.mubr.f32.gmra.mrb[0].mxu0 %v611
    %v1614 = vpop.f32.mrb[0].mxu0
    %v1615 = vadd.f32 %v1313, %v1614
    %v1616 = vpop.f32.mrb[0].mxu0
    %v1617 = vadd.f32 %v1313, %v1616
    %1618 = vmatprep.mubr.f32.mxu0 %v1367
    %1619 = vmatmul.mubr.f32.gmra.mrb[0].mxu0 %v613
    %v1620 = vpop.f32.mrb[0].mxu0
    %v1621 = vadd.f32 %v1318, %v1620
    %v1622 = vpop.f32.mrb[0].mxu0
    %v1623 = vadd.f32 %v1318, %v1622
    %1624 = vmatprep.mubr.f32.mxu0 %v1370
    %1625 = vmatmul.mubr.f32.gmra.mrb[0].mxu0 %v615
    %v1626 = vpop.f32.mrb[0].mxu0
    %v1627 = vadd.f32 %v1323, %v1626
    %v1628 = vpop.f32.mrb[0].mxu0
    %v1629 = vadd.f32 %v1323, %v1628
    %1630 = vmatprep.mubr.f32.mxu0 %v1373
    %1631 = vmatmul.mubr.f32.gmra.mrb[0].mxu0 %v617
    %v1632 = vpop.f32.mrb[0].mxu0
    %v1633 = vadd.f32 %v1328, %v1632
    %v1634 = vpop.f32.mrb[0].mxu0
    %v1635 = vadd.f32 %v1328, %v1634
    %1636 = vmatprep.mubr.f32.mxu0 %v1376
    %1637 = vmatmul.mubr.f32.gmra.mrb[0].mxu0 %v619
    %v1638 = vpop.f32.mrb[0].mxu0
    %v1639 = vadd.f32 %v1333, %v1638
    %v1640 = vpop.f32.mrb[0].mxu0
    %v1641 = vadd.f32 %v1333, %v1640
    %1642 = vmatprep.mubr.f32.mxu0 %v1379
    %1643 = vmatmul.mubr.f32.gmra.mrb[0].mxu0 %v621
    %v1644 = vpop.f32.mrb[0].mxu0
    %v1645 = vadd.f32 %v1338, %v1644
    %v1646 = vpop.f32.mrb[0].mxu0
    %v1647 = vadd.f32 %v1338, %v1646
    %1648 = vmatprep.mubr.f32.mxu0 %v1382
    %1649 = vmatmul.mubr.f32.gmra.mrb[0].mxu0 %v623
    %v1650 = vpop.f32.mrb[0].mxu0
    %v1651 = vadd.f32 %v1343, %v1650
    %v1652 = vpop.f32.mrb[0].mxu0
    %v1653 = vadd.f32 %v1343, %v1652
    %1654 = vmatprep.mubr.f32.mxu0 %v1385
    %1655 = vmatmul.mubr.f32.gmra.mrb[0].mxu0 %v625
    %v1656 = vpop.f32.mrb[0].mxu0
    %v1657 = vadd.f32 %v1348, %v1656
    %v1658 = vpop.f32.mrb[0].mxu0
    %v1659 = vadd.f32 %v1348, %v1658
    %1660 = vdwg.mxu0
    %v1661 = vmax.f32 %v1454, 0.0
    %v1662 = vmax.f32 %v1456, 0.0
    %v1663 = vmax.f32 %v1591, 0.0
    %v1664 = vmax.f32 %v1593, 0.0
    %v1665 = vmax.f32 %v1460, 0.0
    %v1666 = vmax.f32 %v1462, 0.0
    %v1667 = vmax.f32 %v1597, 0.0
    %v1668 = vmax.f32 %v1599, 0.0
    %v1669 = vmax.f32 %v1466, 0.0
    %v1670 = vmax.f32 %v1468, 0.0
    %v1671 = vmax.f32 %v1603, 0.0
    %v1672 = vmax.f32 %v1605, 0.0
    %v1673 = vmax.f32 %v1472, 0.0
    %v1674 = vmax.f32 %v1474, 0.0
    %v1675 = vmax.f32 %v1609, 0.0
    %v1676 = vmax.f32 %v1611, 0.0
    %v1677 = vmax.f32 %v1478, 0.0
    %v1678 = vmax.f32 %v1480, 0.0
    %v1679 = vmax.f32 %v1615, 0.0
    %v1680 = vmax.f32 %v1617, 0.0
    %v1681 = vmax.f32 %v1484, 0.0
    %v1682 = vmax.f32 %v1486, 0.0
    %v1683 = vmax.f32 %v1621, 0.0
    %v1684 = vmax.f32 %v1623, 0.0
    %v1685 = vmax.f32 %v1490, 0.0
    %v1686 = vmax.f32 %v1492, 0.0
    %v1687 = vmax.f32 %v1627, 0.0
    %v1688 = vmax.f32 %v1629, 0.0
    %v1689 = vmax.f32 %v1496, 0.0
    %v1690 = vmax.f32 %v1498, 0.0
    %v1691 = vmax.f32 %v1633, 0.0
    %v1692 = vmax.f32 %v1635, 0.0
    %v1693 = vmax.f32 %v1502, 0.0
    %v1694 = vmax.f32 %v1504, 0.0
    %v1695 = vmax.f32 %v1639, 0.0
    %v1696 = vmax.f32 %v1641, 0.0
    %v1697 = vmax.f32 %v1508, 0.0
    %v1698 = vmax.f32 %v1510, 0.0
    %v1699 = vmax.f32 %v1645, 0.0
    %v1700 = vmax.f32 %v1647, 0.0
    %v1701 = vmax.f32 %v1514, 0.0
    %v1702 = vmax.f32 %v1516, 0.0
    %v1703 = vmax.f32 %v1651, 0.0
    %v1704 = vmax.f32 %v1653, 0.0
    %v1705 = vmax.f32 %v1520, 0.0
    %v1706 = vmax.f32 %v1522, 0.0
    %v1707 = vmax.f32 %v1657, 0.0
    %v1708 = vmax.f32 %v1659, 0.0
    %v1709 = vld [vmem:[%s8] sm:$0xff]
    %v1710 = vld [vmem:[%s8 + $0x8] sm:$0xff]
    %v1711 = vld [vmem:[%s8 + $0x10] sm:$0xff]
    %v1712 = vld [vmem:[%s8 + $0x18] sm:$0xff]
    %v1713 = vld [vmem:[%s8 + $0x20] sm:$0xff]
    %v1714 = vld [vmem:[%s8 + $0x28] sm:$0xff]
    %v1715 = vld [vmem:[%s8 + $0x30] sm:$0xff]
    %v1716 = vld [vmem:[%s8 + $0x38] sm:$0xff]
    %v1717 = vld [vmem:[%s8 + $0x40] sm:$0xff]
    %v1718 = vld [vmem:[%s8 + $0x48] sm:$0xff]
    %v1719 = vld [vmem:[%s8 + $0x50] sm:$0xff]
    %v1720 = vld [vmem:[%s8 + $0x58] sm:$0xff]
    %v1721 = vld [vmem:[%s8 + $0x60] sm:$0xff]
    %v1722 = vld [vmem:[%s8 + $0x68] sm:$0xff]
    %v1723 = vld [vmem:[%s8 + $0x70] sm:$0xff]
    %v1724 = vld [vmem:[%s8 + $0x78] sm:$0xff]
    %v1725 = vld [vmem:[%s8 + $0x80] sm:$0xff]
    %v1726 = vld [vmem:[%s8 + $0x88] sm:$0xff]
    %v1727 = vld [vmem:[%s8 + $0x90] sm:$0xff]
    %v1728 = vld [vmem:[%s8 + $0x98] sm:$0xff]
    %v1729 = vld [vmem:[%s8 + $0xa0] sm:$0xff]
    %1742 = vrot.lane.b32.xlu0 %v1664, 17
    %v1743 = vpop.permute.xlu0 %1742
    %1744 = vrot.lane.b32.xlu0 %v1668, 17
    %v1745 = vpop.permute.xlu0 %1744
    %1746 = vrot.lane.b32.xlu0 %v1672, 17
    %v1747 = vpop.permute.xlu0 %1746
    %1748 = vrot.lane.b32.xlu0 %v1676, 17
    %v1749 = vpop.permute.xlu0 %1748
    %1750 = vrot.lane.b32.xlu0 %v1680, 17
    %v1751 = vpop.permute.xlu0 %1750
    %1752 = vrot.lane.b32.xlu0 %v1684, 17
    %v1753 = vpop.permute.xlu0 %1752
    %1754 = vrot.lane.b32.xlu0 %v1688, 17
    %v1755 = vpop.permute.xlu0 %1754
    %1756 = vrot.lane.b32.xlu0 %v1692, 17
    %v1757 = vpop.permute.xlu0 %1756
    %1758 = vrot.lane.b32.xlu0 %v1696, 17
    %v1759 = vpop.permute.xlu0 %1758
    %1760 = vrot.lane.b32.xlu0 %v1700, 17
    %v1761 = vpop.permute.xlu0 %1760
    %1762 = vrot.lane.b32.xlu0 %v1704, 17
    %v1763 = vpop.permute.xlu0 %1762
    %1764 = vrot.lane.b32.xlu0 %v1708, 17
    %v1765 = vpop.permute.xlu0 %1764
    %1814 = vrot.lane.b32.xlu0 %v1661, 17
    %v1815 = vpop.permute.xlu0 %1814
    %1816 = vrot.lane.b32.xlu0 %v1662, 17
    %v1817 = vpop.permute.xlu0 %1816
    %1818 = vrot.lane.b32.xlu0 %v1663, 17
    %v1819 = vpop.permute.xlu0 %1818
    %1820 = vrot.lane.b32.xlu0 %v1665, 17
    %v1821 = vpop.permute.xlu0 %1820
    %1822 = vrot.lane.b32.xlu0 %v1666, 17
    %v1823 = vpop.permute.xlu0 %1822
    %1824 = vrot.lane.b32.xlu0 %v1667, 17
    %v1825 = vpop.permute.xlu0 %1824
    %1826 = vrot.lane.b32.xlu0 %v1669, 17
    %v1827 = vpop.permute.xlu0 %1826
    %1828 = vrot.lane.b32.xlu0 %v1670, 17
    %v1829 = vpop.permute.xlu0 %1828
    %1830 = vrot.lane.b32.xlu0 %v1671, 17
    %v1831 = vpop.permute.xlu0 %1830
    %1832 = vrot.lane.b32.xlu0 %v1673, 17
    %v1833 = vpop.permute.xlu0 %1832
    %1834 = vrot.lane.b32.xlu0 %v1674, 17
    %v1835 = vpop.permute.xlu0 %1834
    %1836 = vrot.lane.b32.xlu0 %v1675, 17
    %v1837 = vpop.permute.xlu0 %1836
    %1838 = vrot.lane.b32.xlu0 %v1677, 17
    %v1839 = vpop.permute.xlu0 %1838
    %1840 = vrot.lane.b32.xlu0 %v1678, 17
    %v1841 = vpop.permute.xlu0 %1840
    %1842 = vrot.lane.b32.xlu0 %v1679, 17
    %v1843 = vpop.permute.xlu0 %1842
    %1844 = vrot.lane.b32.xlu0 %v1681, 17
    %v1845 = vpop.permute.xlu0 %1844
    %1846 = vrot.lane.b32.xlu0 %v1682, 17
    %v1847 = vpop.permute.xlu0 %1846
    %1848 = vrot.lane.b32.xlu0 %v1683, 17
    %v1849 = vpop.permute.xlu0 %1848
    %1850 = vrot.lane.b32.xlu0 %v1685, 17
    %v1851 = vpop.permute.xlu0 %1850
    %1852 = vrot.lane.b32.xlu0 %v1686, 17
    %v1853 = vpop.permute.xlu0 %1852
    %1854 = vrot.lane.b32.xlu0 %v1687, 17
    %v1855 = vpop.permute.xlu0 %1854
    %1856 = vrot.lane.b32.xlu0 %v1689, 17
    %v1857 = vpop.permute.xlu0 %1856
    %1858 = vrot.lane.b32.xlu0 %v1690, 17
    %v1859 = vpop.permute.xlu0 %1858
    %1860 = vrot.lane.b32.xlu0 %v1691, 17
    %v1861 = vpop.permute.xlu0 %1860
    %1862 = vrot.lane.b32.xlu0 %v1693, 17
    %v1863 = vpop.permute.xlu0 %1862
    %1864 = vrot.lane.b32.xlu0 %v1694, 17
    %v1865 = vpop.permute.xlu0 %1864
    %1866 = vrot.lane.b32.xlu0 %v1695, 17
    %v1867 = vpop.permute.xlu0 %1866
    %1868 = vrot.lane.b32.xlu0 %v1697, 17
    %v1869 = vpop.permute.xlu0 %1868
    %1870 = vrot.lane.b32.xlu0 %v1698, 17
    %v1871 = vpop.permute.xlu0 %1870
    %1872 = vrot.lane.b32.xlu0 %v1699, 17
    %v1873 = vpop.permute.xlu0 %1872
    %1874 = vrot.lane.b32.xlu0 %v1701, 17
    %v1875 = vpop.permute.xlu0 %1874
    %1876 = vrot.lane.b32.xlu0 %v1702, 17
    %v1877 = vpop.permute.xlu0 %1876
    %1878 = vrot.lane.b32.xlu0 %v1703, 17
    %v1879 = vpop.permute.xlu0 %1878
    %1880 = vrot.lane.b32.xlu0 %v1705, 17
    %v1881 = vpop.permute.xlu0 %1880
    %1882 = vrot.lane.b32.xlu0 %v1706, 17
    %v1883 = vpop.permute.xlu0 %1882
    %1884 = vrot.lane.b32.xlu0 %v1707, 17
    %v1885 = vpop.permute.xlu0 %1884
    %v1886 = vsel %vm666, %v1815, %v1817
    %v1887 = vsel %vm666, %v1817, %v1819
    %v1888 = vsel %vm666, %v1819, %v1743
    %v1889 = vsel %vm666, %v1821, %v1823
    %v1890 = vsel %vm666, %v1823, %v1825
    %v1891 = vsel %vm666, %v1825, %v1745
    %v1892 = vsel %vm666, %v1827, %v1829
    %v1893 = vsel %vm666, %v1829, %v1831
    %v1894 = vsel %vm666, %v1831, %v1747
    %v1895 = vsel %vm666, %v1833, %v1835
    %v1896 = vsel %vm666, %v1835, %v1837
    %v1897 = vsel %vm666, %v1837, %v1749
    %v1898 = vsel %vm666, %v1839, %v1841
    %v1899 = vsel %vm666, %v1841, %v1843
    %v1900 = vsel %vm666, %v1843, %v1751
    %v1901 = vsel %vm666, %v1845, %v1847
    %v1902 = vsel %vm666, %v1847, %v1849
    %v1903 = vsel %vm666, %v1849, %v1753
    %v1904 = vsel %vm666, %v1851, %v1853
    %v1905 = vsel %vm666, %v1853, %v1855
    %v1906 = vsel %vm666, %v1855, %v1755
    %v1907 = vsel %vm666, %v1857, %v1859
    %v1908 = vsel %vm666, %v1859, %v1861
    %v1909 = vsel %vm666, %v1861, %v1757
    %v1910 = vsel %vm666, %v1863, %v1865
    %v1911 = vsel %vm666, %v1865, %v1867
    %v1912 = vsel %vm666, %v1867, %v1759
    %v1913 = vsel %vm666, %v1869, %v1871
    %v1914 = vsel %vm666, %v1871, %v1873
    %v1915 = vsel %vm666, %v1873, %v1761
    %v1916 = vsel %vm666, %v1875, %v1877
    %v1917 = vsel %vm666, %v1877, %v1879
    %v1918 = vsel %vm666, %v1879, %v1763
    %v1919 = vsel %vm666, %v1881, %v1883
    %v1920 = vsel %vm666, %v1883, %v1885
    %v1921 = vsel %vm666, %v1885, %v1765
    %v1970 = vsel %vm666, %v1743, %v1815
    %v1971 = vsel %vm666, %v1745, %v1821
    %v1972 = vsel %vm666, %v1747, %v1827
    %v1973 = vsel %vm666, %v1749, %v1833
    %v1974 = vsel %vm666, %v1751, %v1839
    %v1975 = vsel %vm666, %v1753, %v1845
    %v1976 = vsel %vm666, %v1755, %v1851
    %v1977 = vsel %vm666, %v1757, %v1857
    %v1978 = vsel %vm666, %v1759, %v1863
    %v1979 = vsel %vm666, %v1761, %v1869
    %v1980 = vsel %vm666, %v1763, %v1875
    %v1981 = vsel %vm666, %v1765, %v1881
    %v1982 = vmul.f32 %v1970, %v694
    %v1983 = vmul.f32 %v1886, %v698
    %v1984 = vmul.f32 %v1887, %v702
    %v1985 = vmul.f32 %v1888, %v706
    %v1986 = vmul.f32 %v1971, %v694
    %v1987 = vmul.f32 %v1889, %v698
    %v1988 = vmul.f32 %v1890, %v702
    %v1989 = vmul.f32 %v1891, %v706
    %v1990 = vmul.f32 %v1972, %v694
    %v1991 = vmul.f32 %v1892, %v698
    %v1992 = vmul.f32 %v1893, %v702
    %v1993 = vmul.f32 %v1894, %v706
    %v1994 = vmul.f32 %v1973, %v694
    %v1995 = vmul.f32 %v1895, %v698
    %v1996 = vmul.f32 %v1896, %v702
    %v1997 = vmul.f32 %v1897, %v706
    %v1998 = vmul.f32 %v1974, %v694
    %v1999 = vmul.f32 %v1898, %v698
    %v2000 = vmul.f32 %v1899, %v702
    %v2001 = vmul.f32 %v1900, %v706
    %v2002 = vmul.f32 %v1975, %v694
    %v2003 = vmul.f32 %v1901, %v698
    %v2004 = vmul.f32 %v1902, %v702
    %v2005 = vmul.f32 %v1903, %v706
    %v2006 = vmul.f32 %v1976, %v694
    %v2007 = vmul.f32 %v1904, %v698
    %v2008 = vmul.f32 %v1905, %v702
    %v2009 = vmul.f32 %v1906, %v706
    %v2010 = vmul.f32 %v1977, %v694
    %v2011 = vmul.f32 %v1907, %v698
    %v2012 = vmul.f32 %v1908, %v702
    %v2013 = vmul.f32 %v1909, %v706
    %v2014 = vmul.f32 %v1978, %v694
    %v2015 = vmul.f32 %v1910, %v698
    %v2016 = vmul.f32 %v1911, %v702
    %v2017 = vmul.f32 %v1912, %v706
    %v2018 = vmul.f32 %v1979, %v694
    %v2019 = vmul.f32 %v1913, %v698
    %v2020 = vmul.f32 %v1914, %v702
    %v2021 = vmul.f32 %v1915, %v706
    %v2022 = vmul.f32 %v1980, %v694
    %v2023 = vmul.f32 %v1916, %v698
    %v2024 = vmul.f32 %v1917, %v702
    %v2025 = vmul.f32 %v1918, %v706
    %v2026 = vmul.f32 %v1981, %v694
    %v2027 = vmul.f32 %v1919, %v698
    %v2028 = vmul.f32 %v1920, %v702
    %v2029 = vmul.f32 %v1921, %v706
    %2030 = vrot.lane.b32.xlu0 %v1664, 16
    %v2031 = vpop.permute.xlu0 %2030
    %2032 = vrot.lane.b32.xlu0 %v1668, 16
    %v2033 = vpop.permute.xlu0 %2032
    %2034 = vrot.lane.b32.xlu0 %v1672, 16
    %v2035 = vpop.permute.xlu0 %2034
    %2036 = vrot.lane.b32.xlu0 %v1676, 16
    %v2037 = vpop.permute.xlu0 %2036
    %2038 = vrot.lane.b32.xlu0 %v1680, 16
    %v2039 = vpop.permute.xlu0 %2038
    %2040 = vrot.lane.b32.xlu0 %v1684, 16
    %v2041 = vpop.permute.xlu0 %2040
    %2042 = vrot.lane.b32.xlu0 %v1688, 16
    %v2043 = vpop.permute.xlu0 %2042
    %2044 = vrot.lane.b32.xlu0 %v1692, 16
    %v2045 = vpop.permute.xlu0 %2044
    %2046 = vrot.lane.b32.xlu0 %v1696, 16
    %v2047 = vpop.permute.xlu0 %2046
    %2048 = vrot.lane.b32.xlu0 %v1700, 16
    %v2049 = vpop.permute.xlu0 %2048
    %2050 = vrot.lane.b32.xlu0 %v1704, 16
    %v2051 = vpop.permute.xlu0 %2050
    %2052 = vrot.lane.b32.xlu0 %v1708, 16
    %v2053 = vpop.permute.xlu0 %2052
    %2066 = vrot.lane.b32.xlu0 %v1661, 16
    %v2067 = vpop.permute.xlu0 %2066
    %2068 = vrot.lane.b32.xlu0 %v1662, 16
    %v2069 = vpop.permute.xlu0 %2068
    %2070 = vrot.lane.b32.xlu0 %v1663, 16
    %v2071 = vpop.permute.xlu0 %2070
    %2072 = vrot.lane.b32.xlu0 %v1665, 16
    %v2073 = vpop.permute.xlu0 %2072
    %2074 = vrot.lane.b32.xlu0 %v1666, 16
    %v2075 = vpop.permute.xlu0 %2074
    %2076 = vrot.lane.b32.xlu0 %v1667, 16
    %v2077 = vpop.permute.xlu0 %2076
    %2078 = vrot.lane.b32.xlu0 %v1669, 16
    %v2079 = vpop.permute.xlu0 %2078
    %2080 = vrot.lane.b32.xlu0 %v1670, 16
    %v2081 = vpop.permute.xlu0 %2080
    %2082 = vrot.lane.b32.xlu0 %v1671, 16
    %v2083 = vpop.permute.xlu0 %2082
    %2084 = vrot.lane.b32.xlu0 %v1673, 16
    %v2085 = vpop.permute.xlu0 %2084
    %2086 = vrot.lane.b32.xlu0 %v1674, 16
    %v2087 = vpop.permute.xlu0 %2086
    %2088 = vrot.lane.b32.xlu0 %v1675, 16
    %v2089 = vpop.permute.xlu0 %2088
    %2090 = vrot.lane.b32.xlu0 %v1677, 16
    %v2091 = vpop.permute.xlu0 %2090
    %2092 = vrot.lane.b32.xlu0 %v1678, 16
    %v2093 = vpop.permute.xlu0 %2092
    %2094 = vrot.lane.b32.xlu0 %v1679, 16
    %v2095 = vpop.permute.xlu0 %2094
    %2096 = vrot.lane.b32.xlu0 %v1681, 16
    %v2097 = vpop.permute.xlu0 %2096
    %2098 = vrot.lane.b32.xlu0 %v1682, 16
    %v2099 = vpop.permute.xlu0 %2098
    %2100 = vrot.lane.b32.xlu0 %v1683, 16
    %v2101 = vpop.permute.xlu0 %2100
    %2102 = vrot.lane.b32.xlu0 %v1685, 16
    %v2103 = vpop.permute.xlu0 %2102
    %2104 = vrot.lane.b32.xlu0 %v1686, 16
    %v2105 = vpop.permute.xlu0 %2104
    %2106 = vrot.lane.b32.xlu0 %v1687, 16
    %v2107 = vpop.permute.xlu0 %2106
    %2108 = vrot.lane.b32.xlu0 %v1689, 16
    %v2109 = vpop.permute.xlu0 %2108
    %2110 = vrot.lane.b32.xlu0 %v1690, 16
    %v2111 = vpop.permute.xlu0 %2110
    %2112 = vrot.lane.b32.xlu0 %v1691, 16
    %v2113 = vpop.permute.xlu0 %2112
    %2114 = vrot.lane.b32.xlu0 %v1693, 16
    %v2115 = vpop.permute.xlu0 %2114
    %2116 = vrot.lane.b32.xlu0 %v1694, 16
    %v2117 = vpop.permute.xlu0 %2116
    %2118 = vrot.lane.b32.xlu0 %v1695, 16
    %v2119 = vpop.permute.xlu0 %2118
    %2120 = vrot.lane.b32.xlu0 %v1697, 16
    %v2121 = vpop.permute.xlu0 %2120
    %2122 = vrot.lane.b32.xlu0 %v1698, 16
    %v2123 = vpop.permute.xlu0 %2122
    %2124 = vrot.lane.b32.xlu0 %v1699, 16
    %v2125 = vpop.permute.xlu0 %2124
    %2126 = vrot.lane.b32.xlu0 %v1701, 16
    %v2127 = vpop.permute.xlu0 %2126
    %2128 = vrot.lane.b32.xlu0 %v1702, 16
    %v2129 = vpop.permute.xlu0 %2128
    %2130 = vrot.lane.b32.xlu0 %v1703, 16
    %v2131 = vpop.permute.xlu0 %2130
    %2132 = vrot.lane.b32.xlu0 %v1705, 16
    %v2133 = vpop.permute.xlu0 %2132
    %2134 = vrot.lane.b32.xlu0 %v1706, 16
    %v2135 = vpop.permute.xlu0 %2134
    %2136 = vrot.lane.b32.xlu0 %v1707, 16
    %v2137 = vpop.permute.xlu0 %2136
    %v2138 = vsel %vm366, %v2067, %v2069
    %v2139 = vsel %vm366, %v2069, %v2071
    %v2140 = vsel %vm366, %v2071, %v2031
    %v2141 = vsel %vm366, %v2073, %v2075
    %v2142 = vsel %vm366, %v2075, %v2077
    %v2143 = vsel %vm366, %v2077, %v2033
    %v2144 = vsel %vm366, %v2079, %v2081
    %v2145 = vsel %vm366, %v2081, %v2083
    %v2146 = vsel %vm366, %v2083, %v2035
    %v2147 = vsel %vm366, %v2085, %v2087
    %v2148 = vsel %vm366, %v2087, %v2089
    %v2149 = vsel %vm366, %v2089, %v2037
    %v2150 = vsel %vm366, %v2091, %v2093
    %v2151 = vsel %vm366, %v2093, %v2095
    %v2152 = vsel %vm366, %v2095, %v2039
    %v2153 = vsel %vm366, %v2097, %v2099
    %v2154 = vsel %vm366, %v2099, %v2101
    %v2155 = vsel %vm366, %v2101, %v2041
    %v2156 = vsel %vm366, %v2103, %v2105
    %v2157 = vsel %vm366, %v2105, %v2107
    %v2158 = vsel %vm366, %v2107, %v2043
    %v2159 = vsel %vm366, %v2109, %v2111
    %v2160 = vsel %vm366, %v2111, %v2113
    %v2161 = vsel %vm366, %v2113, %v2045
    %v2162 = vsel %vm366, %v2115, %v2117
    %v2163 = vsel %vm366, %v2117, %v2119
    %v2164 = vsel %vm366, %v2119, %v2047
    %v2165 = vsel %vm366, %v2121, %v2123
    %v2166 = vsel %vm366, %v2123, %v2125
    %v2167 = vsel %vm366, %v2125, %v2049
    %v2168 = vsel %vm366, %v2127, %v2129
    %v2169 = vsel %vm366, %v2129, %v2131
    %v2170 = vsel %vm366, %v2131, %v2051
    %v2171 = vsel %vm366, %v2133, %v2135
    %v2172 = vsel %vm366, %v2135, %v2137
    %v2173 = vsel %vm366, %v2137, %v2053
    %v2222 = vsel %vm366, %v2031, %v2067
    %v2223 = vsel %vm366, %v2033, %v2073
    %v2224 = vsel %vm366, %v2035, %v2079
    %v2225 = vsel %vm366, %v2037, %v2085
    %v2226 = vsel %vm366, %v2039, %v2091
    %v2227 = vsel %vm366, %v2041, %v2097
    %v2228 = vsel %vm366, %v2043, %v2103
    %v2229 = vsel %vm366, %v2045, %v2109
    %v2230 = vsel %vm366, %v2047, %v2115
    %v2231 = vsel %vm366, %v2049, %v2121
    %v2232 = vsel %vm366, %v2051, %v2127
    %v2233 = vsel %vm366, %v2053, %v2133
    %v2234 = vmul.f32 %v2222, %v773
    %v2235 = vmul.f32 %v2138, %v777
    %v2236 = vmul.f32 %v2139, %v781
    %v2237 = vmul.f32 %v2140, %v785
    %v2238 = vmul.f32 %v2223, %v773
    %v2239 = vmul.f32 %v2141, %v777
    %v2240 = vmul.f32 %v2142, %v781
    %v2241 = vmul.f32 %v2143, %v785
    %v2242 = vmul.f32 %v2224, %v773
    %v2243 = vmul.f32 %v2144, %v777
    %v2244 = vmul.f32 %v2145, %v781
    %v2245 = vmul.f32 %v2146, %v785
    %v2246 = vmul.f32 %v2225, %v773
    %v2247 = vmul.f32 %v2147, %v777
    %v2248 = vmul.f32 %v2148, %v781
    %v2249 = vmul.f32 %v2149, %v785
    %v2250 = vmul.f32 %v2226, %v773
    %v2251 = vmul.f32 %v2150, %v777
    %v2252 = vmul.f32 %v2151, %v781
    %v2253 = vmul.f32 %v2152, %v785
    %v2254 = vmul.f32 %v2227, %v773
    %v2255 = vmul.f32 %v2153, %v777
    %v2256 = vmul.f32 %v2154, %v781
    %v2257 = vmul.f32 %v2155, %v785
    %v2258 = vmul.f32 %v2228, %v773
    %v2259 = vmul.f32 %v2156, %v777
    %v2260 = vmul.f32 %v2157, %v781
    %v2261 = vmul.f32 %v2158, %v785
    %v2262 = vmul.f32 %v2229, %v773
    %v2263 = vmul.f32 %v2159, %v777
    %v2264 = vmul.f32 %v2160, %v781
    %v2265 = vmul.f32 %v2161, %v785
    %v2266 = vmul.f32 %v2230, %v773
    %v2267 = vmul.f32 %v2162, %v777
    %v2268 = vmul.f32 %v2163, %v781
    %v2269 = vmul.f32 %v2164, %v785
    %v2270 = vmul.f32 %v2231, %v773
    %v2271 = vmul.f32 %v2165, %v777
    %v2272 = vmul.f32 %v2166, %v781
    %v2273 = vmul.f32 %v2167, %v785
    %v2274 = vmul.f32 %v2232, %v773
    %v2275 = vmul.f32 %v2168, %v777
    %v2276 = vmul.f32 %v2169, %v781
    %v2277 = vmul.f32 %v2170, %v785
    %v2278 = vmul.f32 %v2233, %v773
    %v2279 = vmul.f32 %v2171, %v777
    %v2280 = vmul.f32 %v2172, %v781
    %v2281 = vmul.f32 %v2173, %v785
    %2282 = vrot.lane.b32.xlu0 %v1664, 15
    %v2283 = vpop.permute.xlu0 %2282
    %2284 = vrot.lane.b32.xlu0 %v1668, 15
    %v2285 = vpop.permute.xlu0 %2284
    %2286 = vrot.lane.b32.xlu0 %v1672, 15
    %v2287 = vpop.permute.xlu0 %2286
    %2288 = vrot.lane.b32.xlu0 %v1676, 15
    %v2289 = vpop.permute.xlu0 %2288
    %2290 = vrot.lane.b32.xlu0 %v1680, 15
    %v2291 = vpop.permute.xlu0 %2290
    %2292 = vrot.lane.b32.xlu0 %v1684, 15
    %v2293 = vpop.permute.xlu0 %2292
    %2294 = vrot.lane.b32.xlu0 %v1688, 15
    %v2295 = vpop.permute.xlu0 %2294
    %2296 = vrot.lane.b32.xlu0 %v1692, 15
    %v2297 = vpop.permute.xlu0 %2296
    %2298 = vrot.lane.b32.xlu0 %v1696, 15
    %v2299 = vpop.permute.xlu0 %2298
    %2300 = vrot.lane.b32.xlu0 %v1700, 15
    %v2301 = vpop.permute.xlu0 %2300
    %2302 = vrot.lane.b32.xlu0 %v1704, 15
    %v2303 = vpop.permute.xlu0 %2302
    %2304 = vrot.lane.b32.xlu0 %v1708, 15
    %v2305 = vpop.permute.xlu0 %2304
    %2318 = vrot.lane.b32.xlu0 %v1661, 15
    %v2319 = vpop.permute.xlu0 %2318
    %2320 = vrot.lane.b32.xlu0 %v1662, 15
    %v2321 = vpop.permute.xlu0 %2320
    %2322 = vrot.lane.b32.xlu0 %v1663, 15
    %v2323 = vpop.permute.xlu0 %2322
    %2324 = vrot.lane.b32.xlu0 %v1665, 15
    %v2325 = vpop.permute.xlu0 %2324
    %2326 = vrot.lane.b32.xlu0 %v1666, 15
    %v2327 = vpop.permute.xlu0 %2326
    %2328 = vrot.lane.b32.xlu0 %v1667, 15
    %v2329 = vpop.permute.xlu0 %2328
    %2330 = vrot.lane.b32.xlu0 %v1669, 15
    %v2331 = vpop.permute.xlu0 %2330
    %2332 = vrot.lane.b32.xlu0 %v1670, 15
    %v2333 = vpop.permute.xlu0 %2332
    %2334 = vrot.lane.b32.xlu0 %v1671, 15
    %v2335 = vpop.permute.xlu0 %2334
    %2336 = vrot.lane.b32.xlu0 %v1673, 15
    %v2337 = vpop.permute.xlu0 %2336
    %2338 = vrot.lane.b32.xlu0 %v1674, 15
    %v2339 = vpop.permute.xlu0 %2338
    %2340 = vrot.lane.b32.xlu0 %v1675, 15
    %v2341 = vpop.permute.xlu0 %2340
    %2342 = vrot.lane.b32.xlu0 %v1677, 15
    %v2343 = vpop.permute.xlu0 %2342
    %2344 = vrot.lane.b32.xlu0 %v1678, 15
    %v2345 = vpop.permute.xlu0 %2344
    %2346 = vrot.lane.b32.xlu0 %v1679, 15
    %v2347 = vpop.permute.xlu0 %2346
    %2348 = vrot.lane.b32.xlu0 %v1681, 15
    %v2349 = vpop.permute.xlu0 %2348
    %2350 = vrot.lane.b32.xlu0 %v1682, 15
    %v2351 = vpop.permute.xlu0 %2350
    %2352 = vrot.lane.b32.xlu0 %v1683, 15
    %v2353 = vpop.permute.xlu0 %2352
    %2354 = vrot.lane.b32.xlu0 %v1685, 15
    %v2355 = vpop.permute.xlu0 %2354
    %2356 = vrot.lane.b32.xlu0 %v1686, 15
    %v2357 = vpop.permute.xlu0 %2356
    %2358 = vrot.lane.b32.xlu0 %v1687, 15
    %v2359 = vpop.permute.xlu0 %2358
    %2360 = vrot.lane.b32.xlu0 %v1689, 15
    %v2361 = vpop.permute.xlu0 %2360
    %2362 = vrot.lane.b32.xlu0 %v1690, 15
    %v2363 = vpop.permute.xlu0 %2362
    %2364 = vrot.lane.b32.xlu0 %v1691, 15
    %v2365 = vpop.permute.xlu0 %2364
    %2366 = vrot.lane.b32.xlu0 %v1693, 15
    %v2367 = vpop.permute.xlu0 %2366
    %2368 = vrot.lane.b32.xlu0 %v1694, 15
    %v2369 = vpop.permute.xlu0 %2368
    %2370 = vrot.lane.b32.xlu0 %v1695, 15
    %v2371 = vpop.permute.xlu0 %2370
    %2372 = vrot.lane.b32.xlu0 %v1697, 15
    %v2373 = vpop.permute.xlu0 %2372
    %2374 = vrot.lane.b32.xlu0 %v1698, 15
    %v2375 = vpop.permute.xlu0 %2374
    %2376 = vrot.lane.b32.xlu0 %v1699, 15
    %v2377 = vpop.permute.xlu0 %2376
    %2378 = vrot.lane.b32.xlu0 %v1701, 15
    %v2379 = vpop.permute.xlu0 %2378
    %2380 = vrot.lane.b32.xlu0 %v1702, 15
    %v2381 = vpop.permute.xlu0 %2380
    %2382 = vrot.lane.b32.xlu0 %v1703, 15
    %v2383 = vpop.permute.xlu0 %2382
    %2384 = vrot.lane.b32.xlu0 %v1705, 15
    %v2385 = vpop.permute.xlu0 %2384
    %2386 = vrot.lane.b32.xlu0 %v1706, 15
    %v2387 = vpop.permute.xlu0 %2386
    %2388 = vrot.lane.b32.xlu0 %v1707, 15
    %v2389 = vpop.permute.xlu0 %2388
    %v2390 = vsel %vm825, %v2319, %v2321
    %v2391 = vsel %vm825, %v2321, %v2323
    %v2392 = vsel %vm825, %v2323, %v2283
    %v2393 = vsel %vm825, %v2325, %v2327
    %v2394 = vsel %vm825, %v2327, %v2329
    %v2395 = vsel %vm825, %v2329, %v2285
    %v2396 = vsel %vm825, %v2331, %v2333
    %v2397 = vsel %vm825, %v2333, %v2335
    %v2398 = vsel %vm825, %v2335, %v2287
    %v2399 = vsel %vm825, %v2337, %v2339
    %v2400 = vsel %vm825, %v2339, %v2341
    %v2401 = vsel %vm825, %v2341, %v2289
    %v2402 = vsel %vm825, %v2343, %v2345
    %v2403 = vsel %vm825, %v2345, %v2347
    %v2404 = vsel %vm825, %v2347, %v2291
    %v2405 = vsel %vm825, %v2349, %v2351
    %v2406 = vsel %vm825, %v2351, %v2353
    %v2407 = vsel %vm825, %v2353, %v2293
    %v2408 = vsel %vm825, %v2355, %v2357
    %v2409 = vsel %vm825, %v2357, %v2359
    %v2410 = vsel %vm825, %v2359, %v2295
    %v2411 = vsel %vm825, %v2361, %v2363
    %v2412 = vsel %vm825, %v2363, %v2365
    %v2413 = vsel %vm825, %v2365, %v2297
    %v2414 = vsel %vm825, %v2367, %v2369
    %v2415 = vsel %vm825, %v2369, %v2371
    %v2416 = vsel %vm825, %v2371, %v2299
    %v2417 = vsel %vm825, %v2373, %v2375
    %v2418 = vsel %vm825, %v2375, %v2377
    %v2419 = vsel %vm825, %v2377, %v2301
    %v2420 = vsel %vm825, %v2379, %v2381
    %v2421 = vsel %vm825, %v2381, %v2383
    %v2422 = vsel %vm825, %v2383, %v2303
    %v2423 = vsel %vm825, %v2385, %v2387
    %v2424 = vsel %vm825, %v2387, %v2389
    %v2425 = vsel %vm825, %v2389, %v2305
    %v2474 = vsel %vm825, %v2283, %v2319
    %v2475 = vsel %vm825, %v2285, %v2325
    %v2476 = vsel %vm825, %v2287, %v2331
    %v2477 = vsel %vm825, %v2289, %v2337
    %v2478 = vsel %vm825, %v2291, %v2343
    %v2479 = vsel %vm825, %v2293, %v2349
    %v2480 = vsel %vm825, %v2295, %v2355
    %v2481 = vsel %vm825, %v2297, %v2361
    %v2482 = vsel %vm825, %v2299, %v2367
    %v2483 = vsel %vm825, %v2301, %v2373
    %v2484 = vsel %vm825, %v2303, %v2379
    %v2485 = vsel %vm825, %v2305, %v2385
    %v2486 = vmul.f32 %v2474, %v853
    %v2487 = vmul.f32 %v2390, %v857
    %v2488 = vmul.f32 %v2391, %v861
    %v2489 = vmul.f32 %v2392, %v865
    %v2490 = vmul.f32 %v2475, %v853
    %v2491 = vmul.f32 %v2393, %v857
    %v2492 = vmul.f32 %v2394, %v861
    %v2493 = vmul.f32 %v2395, %v865
    %v2494 = vmul.f32 %v2476, %v853
    %v2495 = vmul.f32 %v2396, %v857
    %v2496 = vmul.f32 %v2397, %v861
    %v2497 = vmul.f32 %v2398, %v865
    %v2498 = vmul.f32 %v2477, %v853
    %v2499 = vmul.f32 %v2399, %v857
    %v2500 = vmul.f32 %v2400, %v861
    %v2501 = vmul.f32 %v2401, %v865
    %v2502 = vmul.f32 %v2478, %v853
    %v2503 = vmul.f32 %v2402, %v857
    %v2504 = vmul.f32 %v2403, %v861
    %v2505 = vmul.f32 %v2404, %v865
    %v2506 = vmul.f32 %v2479, %v853
    %v2507 = vmul.f32 %v2405, %v857
    %v2508 = vmul.f32 %v2406, %v861
    %v2509 = vmul.f32 %v2407, %v865
    %v2510 = vmul.f32 %v2480, %v853
    %v2511 = vmul.f32 %v2408, %v857
    %v2512 = vmul.f32 %v2409, %v861
    %v2513 = vmul.f32 %v2410, %v865
    %v2514 = vmul.f32 %v2481, %v853
    %v2515 = vmul.f32 %v2411, %v857
    %v2516 = vmul.f32 %v2412, %v861
    %v2517 = vmul.f32 %v2413, %v865
    %v2518 = vmul.f32 %v2482, %v853
    %v2519 = vmul.f32 %v2414, %v857
    %v2520 = vmul.f32 %v2415, %v861
    %v2521 = vmul.f32 %v2416, %v865
    %v2522 = vmul.f32 %v2483, %v853
    %v2523 = vmul.f32 %v2417, %v857
    %v2524 = vmul.f32 %v2418, %v861
    %v2525 = vmul.f32 %v2419, %v865
    %v2526 = vmul.f32 %v2484, %v853
    %v2527 = vmul.f32 %v2420, %v857
    %v2528 = vmul.f32 %v2421, %v861
    %v2529 = vmul.f32 %v2422, %v865
    %v2530 = vmul.f32 %v2485, %v853
    %v2531 = vmul.f32 %v2423, %v857
    %v2532 = vmul.f32 %v2424, %v861
    %v2533 = vmul.f32 %v2425, %v865
    %2534 = vrot.lane.b32.xlu0 %v1664, 1
    %v2535 = vpop.permute.xlu0 %2534
    %2536 = vrot.lane.b32.xlu0 %v1668, 1
    %v2537 = vpop.permute.xlu0 %2536
    %2538 = vrot.lane.b32.xlu0 %v1672, 1
    %v2539 = vpop.permute.xlu0 %2538
    %2540 = vrot.lane.b32.xlu0 %v1676, 1
    %v2541 = vpop.permute.xlu0 %2540
    %2542 = vrot.lane.b32.xlu0 %v1680, 1
    %v2543 = vpop.permute.xlu0 %2542
    %2544 = vrot.lane.b32.xlu0 %v1684, 1
    %v2545 = vpop.permute.xlu0 %2544
    %2546 = vrot.lane.b32.xlu0 %v1688, 1
    %v2547 = vpop.permute.xlu0 %2546
    %2548 = vrot.lane.b32.xlu0 %v1692, 1
    %v2549 = vpop.permute.xlu0 %2548
    %2550 = vrot.lane.b32.xlu0 %v1696, 1
    %v2551 = vpop.permute.xlu0 %2550
    %2552 = vrot.lane.b32.xlu0 %v1700, 1
    %v2553 = vpop.permute.xlu0 %2552
    %2554 = vrot.lane.b32.xlu0 %v1704, 1
    %v2555 = vpop.permute.xlu0 %2554
    %2556 = vrot.lane.b32.xlu0 %v1708, 1
    %v2557 = vpop.permute.xlu0 %2556
    %2570 = vrot.lane.b32.xlu0 %v1661, 1
    %v2571 = vpop.permute.xlu0 %2570
    %2572 = vrot.lane.b32.xlu0 %v1662, 1
    %v2573 = vpop.permute.xlu0 %2572
    %2574 = vrot.lane.b32.xlu0 %v1663, 1
    %v2575 = vpop.permute.xlu0 %2574
    %2576 = vrot.lane.b32.xlu0 %v1665, 1
    %v2577 = vpop.permute.xlu0 %2576
    %2578 = vrot.lane.b32.xlu0 %v1666, 1
    %v2579 = vpop.permute.xlu0 %2578
    %2580 = vrot.lane.b32.xlu0 %v1667, 1
    %v2581 = vpop.permute.xlu0 %2580
    %2582 = vrot.lane.b32.xlu0 %v1669, 1
    %v2583 = vpop.permute.xlu0 %2582
    %2584 = vrot.lane.b32.xlu0 %v1670, 1
    %v2585 = vpop.permute.xlu0 %2584
    %2586 = vrot.lane.b32.xlu0 %v1671, 1
    %v2587 = vpop.permute.xlu0 %2586
    %2588 = vrot.lane.b32.xlu0 %v1673, 1
    %v2589 = vpop.permute.xlu0 %2588
    %2590 = vrot.lane.b32.xlu0 %v1674, 1
    %v2591 = vpop.permute.xlu0 %2590
    %2592 = vrot.lane.b32.xlu0 %v1675, 1
    %v2593 = vpop.permute.xlu0 %2592
    %2594 = vrot.lane.b32.xlu0 %v1677, 1
    %v2595 = vpop.permute.xlu0 %2594
    %2596 = vrot.lane.b32.xlu0 %v1678, 1
    %v2597 = vpop.permute.xlu0 %2596
    %2598 = vrot.lane.b32.xlu0 %v1679, 1
    %v2599 = vpop.permute.xlu0 %2598
    %2600 = vrot.lane.b32.xlu0 %v1681, 1
    %v2601 = vpop.permute.xlu0 %2600
    %2602 = vrot.lane.b32.xlu0 %v1682, 1
    %v2603 = vpop.permute.xlu0 %2602
    %2604 = vrot.lane.b32.xlu0 %v1683, 1
    %v2605 = vpop.permute.xlu0 %2604
    %2606 = vrot.lane.b32.xlu0 %v1685, 1
    %v2607 = vpop.permute.xlu0 %2606
    %2608 = vrot.lane.b32.xlu0 %v1686, 1
    %v2609 = vpop.permute.xlu0 %2608
    %2610 = vrot.lane.b32.xlu0 %v1687, 1
    %v2611 = vpop.permute.xlu0 %2610
    %2612 = vrot.lane.b32.xlu0 %v1689, 1
    %v2613 = vpop.permute.xlu0 %2612
    %2614 = vrot.lane.b32.xlu0 %v1690, 1
    %v2615 = vpop.permute.xlu0 %2614
    %2616 = vrot.lane.b32.xlu0 %v1691, 1
    %v2617 = vpop.permute.xlu0 %2616
    %2618 = vrot.lane.b32.xlu0 %v1693, 1
    %v2619 = vpop.permute.xlu0 %2618
    %2620 = vrot.lane.b32.xlu0 %v1694, 1
    %v2621 = vpop.permute.xlu0 %2620
    %2622 = vrot.lane.b32.xlu0 %v1695, 1
    %v2623 = vpop.permute.xlu0 %2622
    %2624 = vrot.lane.b32.xlu0 %v1697, 1
    %v2625 = vpop.permute.xlu0 %2624
    %2626 = vrot.lane.b32.xlu0 %v1698, 1
    %v2627 = vpop.permute.xlu0 %2626
    %2628 = vrot.lane.b32.xlu0 %v1699, 1
    %v2629 = vpop.permute.xlu0 %2628
    %2630 = vrot.lane.b32.xlu0 %v1701, 1
    %v2631 = vpop.permute.xlu0 %2630
    %2632 = vrot.lane.b32.xlu0 %v1702, 1
    %v2633 = vpop.permute.xlu0 %2632
    %2634 = vrot.lane.b32.xlu0 %v1703, 1
    %v2635 = vpop.permute.xlu0 %2634
    %2636 = vrot.lane.b32.xlu0 %v1705, 1
    %v2637 = vpop.permute.xlu0 %2636
    %2638 = vrot.lane.b32.xlu0 %v1706, 1
    %v2639 = vpop.permute.xlu0 %2638
    %2640 = vrot.lane.b32.xlu0 %v1707, 1
    %v2641 = vpop.permute.xlu0 %2640
    %v2642 = vsel %vm905, %v2571, %v2573
    %v2643 = vsel %vm905, %v2573, %v2575
    %v2644 = vsel %vm905, %v2575, %v2535
    %v2645 = vsel %vm905, %v2577, %v2579
    %v2646 = vsel %vm905, %v2579, %v2581
    %v2647 = vsel %vm905, %v2581, %v2537
    %v2648 = vsel %vm905, %v2583, %v2585
    %v2649 = vsel %vm905, %v2585, %v2587
    %v2650 = vsel %vm905, %v2587, %v2539
    %v2651 = vsel %vm905, %v2589, %v2591
    %v2652 = vsel %vm905, %v2591, %v2593
    %v2653 = vsel %vm905, %v2593, %v2541
    %v2654 = vsel %vm905, %v2595, %v2597
    %v2655 = vsel %vm905, %v2597, %v2599
    %v2656 = vsel %vm905, %v2599, %v2543
    %v2657 = vsel %vm905, %v2601, %v2603
    %v2658 = vsel %vm905, %v2603, %v2605
    %v2659 = vsel %vm905, %v2605, %v2545
    %v2660 = vsel %vm905, %v2607, %v2609
    %v2661 = vsel %vm905, %v2609, %v2611
    %v2662 = vsel %vm905, %v2611, %v2547
    %v2663 = vsel %vm905, %v2613, %v2615
    %v2664 = vsel %vm905, %v2615, %v2617
    %v2665 = vsel %vm905, %v2617, %v2549
    %v2666 = vsel %vm905, %v2619, %v2621
    %v2667 = vsel %vm905, %v2621, %v2623
    %v2668 = vsel %vm905, %v2623, %v2551
    %v2669 = vsel %vm905, %v2625, %v2627
    %v2670 = vsel %vm905, %v2627, %v2629
    %v2671 = vsel %vm905, %v2629, %v2553
    %v2672 = vsel %vm905, %v2631, %v2633
    %v2673 = vsel %vm905, %v2633, %v2635
    %v2674 = vsel %vm905, %v2635, %v2555
    %v2675 = vsel %vm905, %v2637, %v2639
    %v2676 = vsel %vm905, %v2639, %v2641
    %v2677 = vsel %vm905, %v2641, %v2557
    %v2726 = vsel %vm905, %v2535, %v2571
    %v2727 = vsel %vm905, %v2537, %v2577
    %v2728 = vsel %vm905, %v2539, %v2583
    %v2729 = vsel %vm905, %v2541, %v2589
    %v2730 = vsel %vm905, %v2543, %v2595
    %v2731 = vsel %vm905, %v2545, %v2601
    %v2732 = vsel %vm905, %v2547, %v2607
    %v2733 = vsel %vm905, %v2549, %v2613
    %v2734 = vsel %vm905, %v2551, %v2619
    %v2735 = vsel %vm905, %v2553, %v2625
    %v2736 = vsel %vm905, %v2555, %v2631
    %v2737 = vsel %vm905, %v2557, %v2637
    %v2738 = vmul.f32 %v2726, %v933
    %v2739 = vmul.f32 %v2642, %v937
    %v2740 = vmul.f32 %v2643, %v941
    %v2741 = vmul.f32 %v2644, %v945
    %v2742 = vmul.f32 %v2727, %v933
    %v2743 = vmul.f32 %v2645, %v937
    %v2744 = vmul.f32 %v2646, %v941
    %v2745 = vmul.f32 %v2647, %v945
    %v2746 = vmul.f32 %v2728, %v933
    %v2747 = vmul.f32 %v2648, %v937
    %v2748 = vmul.f32 %v2649, %v941
    %v2749 = vmul.f32 %v2650, %v945
    %v2750 = vmul.f32 %v2729, %v933
    %v2751 = vmul.f32 %v2651, %v937
    %v2752 = vmul.f32 %v2652, %v941
    %v2753 = vmul.f32 %v2653, %v945
    %v2754 = vmul.f32 %v2730, %v933
    %v2755 = vmul.f32 %v2654, %v937
    %v2756 = vmul.f32 %v2655, %v941
    %v2757 = vmul.f32 %v2656, %v945
    %v2758 = vmul.f32 %v2731, %v933
    %v2759 = vmul.f32 %v2657, %v937
    %v2760 = vmul.f32 %v2658, %v941
    %v2761 = vmul.f32 %v2659, %v945
    %v2762 = vmul.f32 %v2732, %v933
    %v2763 = vmul.f32 %v2660, %v937
    %v2764 = vmul.f32 %v2661, %v941
    %v2765 = vmul.f32 %v2662, %v945
    %v2766 = vmul.f32 %v2733, %v933
    %v2767 = vmul.f32 %v2663, %v937
    %v2768 = vmul.f32 %v2664, %v941
    %v2769 = vmul.f32 %v2665, %v945
    %v2770 = vmul.f32 %v2734, %v933
    %v2771 = vmul.f32 %v2666, %v937
    %v2772 = vmul.f32 %v2667, %v941
    %v2773 = vmul.f32 %v2668, %v945
    %v2774 = vmul.f32 %v2735, %v933
    %v2775 = vmul.f32 %v2669, %v937
    %v2776 = vmul.f32 %v2670, %v941
    %v2777 = vmul.f32 %v2671, %v945
    %v2778 = vmul.f32 %v2736, %v933
    %v2779 = vmul.f32 %v2672, %v937
    %v2780 = vmul.f32 %v2673, %v941
    %v2781 = vmul.f32 %v2674, %v945
    %v2782 = vmul.f32 %v2737, %v933
    %v2783 = vmul.f32 %v2675, %v937
    %v2784 = vmul.f32 %v2676, %v941
    %v2785 = vmul.f32 %v2677, %v945
    %2786 = vrot.lane.b32.xlu0 %v1661, 127
    %v2787 = vpop.permute.xlu0 %2786
    %2788 = vrot.lane.b32.xlu0 %v1662, 127
    %v2789 = vpop.permute.xlu0 %2788
    %2790 = vrot.lane.b32.xlu0 %v1663, 127
    %v2791 = vpop.permute.xlu0 %2790
    %2792 = vrot.lane.b32.xlu0 %v1664, 127
    %v2793 = vpop.permute.xlu0 %2792
    %2794 = vrot.lane.b32.xlu0 %v1665, 127
    %v2795 = vpop.permute.xlu0 %2794
    %2796 = vrot.lane.b32.xlu0 %v1666, 127
    %v2797 = vpop.permute.xlu0 %2796
    %2798 = vrot.lane.b32.xlu0 %v1667, 127
    %v2799 = vpop.permute.xlu0 %2798
    %2800 = vrot.lane.b32.xlu0 %v1668, 127
    %v2801 = vpop.permute.xlu0 %2800
    %2802 = vrot.lane.b32.xlu0 %v1669, 127
    %v2803 = vpop.permute.xlu0 %2802
    %2804 = vrot.lane.b32.xlu0 %v1670, 127
    %v2805 = vpop.permute.xlu0 %2804
    %2806 = vrot.lane.b32.xlu0 %v1671, 127
    %v2807 = vpop.permute.xlu0 %2806
    %2808 = vrot.lane.b32.xlu0 %v1672, 127
    %v2809 = vpop.permute.xlu0 %2808
    %2810 = vrot.lane.b32.xlu0 %v1673, 127
    %v2811 = vpop.permute.xlu0 %2810
    %2812 = vrot.lane.b32.xlu0 %v1674, 127
    %v2813 = vpop.permute.xlu0 %2812
    %2814 = vrot.lane.b32.xlu0 %v1675, 127
    %v2815 = vpop.permute.xlu0 %2814
    %2816 = vrot.lane.b32.xlu0 %v1676, 127
    %v2817 = vpop.permute.xlu0 %2816
    %2818 = vrot.lane.b32.xlu0 %v1677, 127
    %v2819 = vpop.permute.xlu0 %2818
    %2820 = vrot.lane.b32.xlu0 %v1678, 127
    %v2821 = vpop.permute.xlu0 %2820
    %2822 = vrot.lane.b32.xlu0 %v1679, 127
    %v2823 = vpop.permute.xlu0 %2822
    %2824 = vrot.lane.b32.xlu0 %v1680, 127
    %v2825 = vpop.permute.xlu0 %2824
    %2826 = vrot.lane.b32.xlu0 %v1681, 127
    %v2827 = vpop.permute.xlu0 %2826
    %2828 = vrot.lane.b32.xlu0 %v1682, 127
    %v2829 = vpop.permute.xlu0 %2828
    %2830 = vrot.lane.b32.xlu0 %v1683, 127
    %v2831 = vpop.permute.xlu0 %2830
    %2832 = vrot.lane.b32.xlu0 %v1684, 127
    %v2833 = vpop.permute.xlu0 %2832
    %2834 = vrot.lane.b32.xlu0 %v1685, 127
    %v2835 = vpop.permute.xlu0 %2834
    %2836 = vrot.lane.b32.xlu0 %v1686, 127
    %v2837 = vpop.permute.xlu0 %2836
    %2838 = vrot.lane.b32.xlu0 %v1687, 127
    %v2839 = vpop.permute.xlu0 %2838
    %2840 = vrot.lane.b32.xlu0 %v1688, 127
    %v2841 = vpop.permute.xlu0 %2840
    %2842 = vrot.lane.b32.xlu0 %v1689, 127
    %v2843 = vpop.permute.xlu0 %2842
    %2844 = vrot.lane.b32.xlu0 %v1690, 127
    %v2845 = vpop.permute.xlu0 %2844
    %2846 = vrot.lane.b32.xlu0 %v1691, 127
    %v2847 = vpop.permute.xlu0 %2846
    %2848 = vrot.lane.b32.xlu0 %v1692, 127
    %v2849 = vpop.permute.xlu0 %2848
    %2850 = vrot.lane.b32.xlu0 %v1693, 127
    %v2851 = vpop.permute.xlu0 %2850
    %2852 = vrot.lane.b32.xlu0 %v1694, 127
    %v2853 = vpop.permute.xlu0 %2852
    %2854 = vrot.lane.b32.xlu0 %v1695, 127
    %v2855 = vpop.permute.xlu0 %2854
    %2856 = vrot.lane.b32.xlu0 %v1696, 127
    %v2857 = vpop.permute.xlu0 %2856
    %2858 = vrot.lane.b32.xlu0 %v1697, 127
    %v2859 = vpop.permute.xlu0 %2858
    %2860 = vrot.lane.b32.xlu0 %v1698, 127
    %v2861 = vpop.permute.xlu0 %2860
    %2862 = vrot.lane.b32.xlu0 %v1699, 127
    %v2863 = vpop.permute.xlu0 %2862
    %2864 = vrot.lane.b32.xlu0 %v1700, 127
    %v2865 = vpop.permute.xlu0 %2864
    %2866 = vrot.lane.b32.xlu0 %v1701, 127
    %v2867 = vpop.permute.xlu0 %2866
    %2868 = vrot.lane.b32.xlu0 %v1702, 127
    %v2869 = vpop.permute.xlu0 %2868
    %2870 = vrot.lane.b32.xlu0 %v1703, 127
    %v2871 = vpop.permute.xlu0 %2870
    %2872 = vrot.lane.b32.xlu0 %v1704, 127
    %v2873 = vpop.permute.xlu0 %2872
    %2874 = vrot.lane.b32.xlu0 %v1705, 127
    %v2875 = vpop.permute.xlu0 %2874
    %2876 = vrot.lane.b32.xlu0 %v1706, 127
    %v2877 = vpop.permute.xlu0 %2876
    %2878 = vrot.lane.b32.xlu0 %v1707, 127
    %v2879 = vpop.permute.xlu0 %2878
    %2880 = vrot.lane.b32.xlu0 %v1708, 127
    %v2881 = vpop.permute.xlu0 %2880
    %v2882 = vsel %vm982, %v2787, %v2789
    %v2883 = vsel %vm982, %v2789, %v2791
    %v2884 = vsel %vm982, %v2791, %v2793
    %v2885 = vsel %vm982, %v2795, %v2797
    %v2886 = vsel %vm982, %v2797, %v2799
    %v2887 = vsel %vm982, %v2799, %v2801
    %v2888 = vsel %vm982, %v2803, %v2805
    %v2889 = vsel %vm982, %v2805, %v2807
    %v2890 = vsel %vm982, %v2807, %v2809
    %v2891 = vsel %vm982, %v2811, %v2813
    %v2892 = vsel %vm982, %v2813, %v2815
    %v2893 = vsel %vm982, %v2815, %v2817
    %v2894 = vsel %vm982, %v2819, %v2821
    %v2895 = vsel %vm982, %v2821, %v2823
    %v2896 = vsel %vm982, %v2823, %v2825
    %v2897 = vsel %vm982, %v2827, %v2829
    %v2898 = vsel %vm982, %v2829, %v2831
    %v2899 = vsel %vm982, %v2831, %v2833
    %v2900 = vsel %vm982, %v2835, %v2837
    %v2901 = vsel %vm982, %v2837, %v2839
    %v2902 = vsel %vm982, %v2839, %v2841
    %v2903 = vsel %vm982, %v2843, %v2845
    %v2904 = vsel %vm982, %v2845, %v2847
    %v2905 = vsel %vm982, %v2847, %v2849
    %v2906 = vsel %vm982, %v2851, %v2853
    %v2907 = vsel %vm982, %v2853, %v2855
    %v2908 = vsel %vm982, %v2855, %v2857
    %v2909 = vsel %vm982, %v2859, %v2861
    %v2910 = vsel %vm982, %v2861, %v2863
    %v2911 = vsel %vm982, %v2863, %v2865
    %v2912 = vsel %vm982, %v2867, %v2869
    %v2913 = vsel %vm982, %v2869, %v2871
    %v2914 = vsel %vm982, %v2871, %v2873
    %v2915 = vsel %vm982, %v2875, %v2877
    %v2916 = vsel %vm982, %v2877, %v2879
    %v2917 = vsel %vm982, %v2879, %v2881
    %v2978 = vsel %vm982, %v2793, %v2787
    %v2979 = vsel %vm982, %v2801, %v2795
    %v2980 = vsel %vm982, %v2809, %v2803
    %v2981 = vsel %vm982, %v2817, %v2811
    %v2982 = vsel %vm982, %v2825, %v2819
    %v2983 = vsel %vm982, %v2833, %v2827
    %v2984 = vsel %vm982, %v2841, %v2835
    %v2985 = vsel %vm982, %v2849, %v2843
    %v2986 = vsel %vm982, %v2857, %v2851
    %v2987 = vsel %vm982, %v2865, %v2859
    %v2988 = vsel %vm982, %v2873, %v2867
    %v2989 = vsel %vm982, %v2881, %v2875
    %v2990 = vmul.f32 %v2882, %v1013
    %v2991 = vmul.f32 %v2883, %v1017
    %v2992 = vmul.f32 %v2884, %v1021
    %v2993 = vmul.f32 %v2978, %v1025
    %v2994 = vmul.f32 %v2885, %v1013
    %v2995 = vmul.f32 %v2886, %v1017
    %v2996 = vmul.f32 %v2887, %v1021
    %v2997 = vmul.f32 %v2979, %v1025
    %v2998 = vmul.f32 %v2888, %v1013
    %v2999 = vmul.f32 %v2889, %v1017
    %v3000 = vmul.f32 %v2890, %v1021
    %v3001 = vmul.f32 %v2980, %v1025
    %v3002 = vmul.f32 %v2891, %v1013
    %v3003 = vmul.f32 %v2892, %v1017
    %v3004 = vmul.f32 %v2893, %v1021
    %v3005 = vmul.f32 %v2981, %v1025
    %v3006 = vmul.f32 %v2894, %v1013
    %v3007 = vmul.f32 %v2895, %v1017
    %v3008 = vmul.f32 %v2896, %v1021
    %v3009 = vmul.f32 %v2982, %v1025
    %v3010 = vmul.f32 %v2897, %v1013
    %v3011 = vmul.f32 %v2898, %v1017
    %v3012 = vmul.f32 %v2899, %v1021
    %v3013 = vmul.f32 %v2983, %v1025
    %v3014 = vmul.f32 %v2900, %v1013
    %v3015 = vmul.f32 %v2901, %v1017
    %v3016 = vmul.f32 %v2902, %v1021
    %v3017 = vmul.f32 %v2984, %v1025
    %v3018 = vmul.f32 %v2903, %v1013
    %v3019 = vmul.f32 %v2904, %v1017
    %v3020 = vmul.f32 %v2905, %v1021
    %v3021 = vmul.f32 %v2985, %v1025
    %v3022 = vmul.f32 %v2906, %v1013
    %v3023 = vmul.f32 %v2907, %v1017
    %v3024 = vmul.f32 %v2908, %v1021
    %v3025 = vmul.f32 %v2986, %v1025
    %v3026 = vmul.f32 %v2909, %v1013
    %v3027 = vmul.f32 %v2910, %v1017
    %v3028 = vmul.f32 %v2911, %v1021
    %v3029 = vmul.f32 %v2987, %v1025
    %v3030 = vmul.f32 %v2912, %v1013
    %v3031 = vmul.f32 %v2913, %v1017
    %v3032 = vmul.f32 %v2914, %v1021
    %v3033 = vmul.f32 %v2988, %v1025
    %v3034 = vmul.f32 %v2915, %v1013
    %v3035 = vmul.f32 %v2916, %v1017
    %v3036 = vmul.f32 %v2917, %v1021
    %v3037 = vmul.f32 %v2989, %v1025
    %3038 = vrot.lane.b32.xlu0 %v1661, 113
    %v3039 = vpop.permute.xlu0 %3038
    %3040 = vrot.lane.b32.xlu0 %v1662, 113
    %v3041 = vpop.permute.xlu0 %3040
    %3042 = vrot.lane.b32.xlu0 %v1663, 113
    %v3043 = vpop.permute.xlu0 %3042
    %3044 = vrot.lane.b32.xlu0 %v1664, 113
    %v3045 = vpop.permute.xlu0 %3044
    %3046 = vrot.lane.b32.xlu0 %v1665, 113
    %v3047 = vpop.permute.xlu0 %3046
    %3048 = vrot.lane.b32.xlu0 %v1666, 113
    %v3049 = vpop.permute.xlu0 %3048
    %3050 = vrot.lane.b32.xlu0 %v1667, 113
    %v3051 = vpop.permute.xlu0 %3050
    %3052 = vrot.lane.b32.xlu0 %v1668, 113
    %v3053 = vpop.permute.xlu0 %3052
    %3054 = vrot.lane.b32.xlu0 %v1669, 113
    %v3055 = vpop.permute.xlu0 %3054
    %3056 = vrot.lane.b32.xlu0 %v1670, 113
    %v3057 = vpop.permute.xlu0 %3056
    %3058 = vrot.lane.b32.xlu0 %v1671, 113
    %v3059 = vpop.permute.xlu0 %3058
    %3060 = vrot.lane.b32.xlu0 %v1672, 113
    %v3061 = vpop.permute.xlu0 %3060
    %3062 = vrot.lane.b32.xlu0 %v1673, 113
    %v3063 = vpop.permute.xlu0 %3062
    %3064 = vrot.lane.b32.xlu0 %v1674, 113
    %v3065 = vpop.permute.xlu0 %3064
    %3066 = vrot.lane.b32.xlu0 %v1675, 113
    %v3067 = vpop.permute.xlu0 %3066
    %3068 = vrot.lane.b32.xlu0 %v1676, 113
    %v3069 = vpop.permute.xlu0 %3068
    %3070 = vrot.lane.b32.xlu0 %v1677, 113
    %v3071 = vpop.permute.xlu0 %3070
    %3072 = vrot.lane.b32.xlu0 %v1678, 113
    %v3073 = vpop.permute.xlu0 %3072
    %3074 = vrot.lane.b32.xlu0 %v1679, 113
    %v3075 = vpop.permute.xlu0 %3074
    %3076 = vrot.lane.b32.xlu0 %v1680, 113
    %v3077 = vpop.permute.xlu0 %3076
    %3078 = vrot.lane.b32.xlu0 %v1681, 113
    %v3079 = vpop.permute.xlu0 %3078
    %3080 = vrot.lane.b32.xlu0 %v1682, 113
    %v3081 = vpop.permute.xlu0 %3080
    %3082 = vrot.lane.b32.xlu0 %v1683, 113
    %v3083 = vpop.permute.xlu0 %3082
    %3084 = vrot.lane.b32.xlu0 %v1684, 113
    %v3085 = vpop.permute.xlu0 %3084
    %3086 = vrot.lane.b32.xlu0 %v1685, 113
    %v3087 = vpop.permute.xlu0 %3086
    %3088 = vrot.lane.b32.xlu0 %v1686, 113
    %v3089 = vpop.permute.xlu0 %3088
    %3090 = vrot.lane.b32.xlu0 %v1687, 113
    %v3091 = vpop.permute.xlu0 %3090
    %3092 = vrot.lane.b32.xlu0 %v1688, 113
    %v3093 = vpop.permute.xlu0 %3092
    %3094 = vrot.lane.b32.xlu0 %v1689, 113
    %v3095 = vpop.permute.xlu0 %3094
    %3096 = vrot.lane.b32.xlu0 %v1690, 113
    %v3097 = vpop.permute.xlu0 %3096
    %3098 = vrot.lane.b32.xlu0 %v1691, 113
    %v3099 = vpop.permute.xlu0 %3098
    %3100 = vrot.lane.b32.xlu0 %v1692, 113
    %v3101 = vpop.permute.xlu0 %3100
    %3102 = vrot.lane.b32.xlu0 %v1693, 113
    %v3103 = vpop.permute.xlu0 %3102
    %3104 = vrot.lane.b32.xlu0 %v1694, 113
    %v3105 = vpop.permute.xlu0 %3104
    %3106 = vrot.lane.b32.xlu0 %v1695, 113
    %v3107 = vpop.permute.xlu0 %3106
    %3108 = vrot.lane.b32.xlu0 %v1696, 113
    %v3109 = vpop.permute.xlu0 %3108
    %3110 = vrot.lane.b32.xlu0 %v1697, 113
    %v3111 = vpop.permute.xlu0 %3110
    %3112 = vrot.lane.b32.xlu0 %v1698, 113
    %v3113 = vpop.permute.xlu0 %3112
    %3114 = vrot.lane.b32.xlu0 %v1699, 113
    %v3115 = vpop.permute.xlu0 %3114
    %3116 = vrot.lane.b32.xlu0 %v1700, 113
    %v3117 = vpop.permute.xlu0 %3116
    %3118 = vrot.lane.b32.xlu0 %v1701, 113
    %v3119 = vpop.permute.xlu0 %3118
    %3120 = vrot.lane.b32.xlu0 %v1702, 113
    %v3121 = vpop.permute.xlu0 %3120
    %3122 = vrot.lane.b32.xlu0 %v1703, 113
    %v3123 = vpop.permute.xlu0 %3122
    %3124 = vrot.lane.b32.xlu0 %v1704, 113
    %v3125 = vpop.permute.xlu0 %3124
    %3126 = vrot.lane.b32.xlu0 %v1705, 113
    %v3127 = vpop.permute.xlu0 %3126
    %3128 = vrot.lane.b32.xlu0 %v1706, 113
    %v3129 = vpop.permute.xlu0 %3128
    %3130 = vrot.lane.b32.xlu0 %v1707, 113
    %v3131 = vpop.permute.xlu0 %3130
    %3132 = vrot.lane.b32.xlu0 %v1708, 113
    %v3133 = vpop.permute.xlu0 %3132
    %v3134 = vsel %vm1062, %v3039, %v3041
    %v3135 = vsel %vm1062, %v3041, %v3043
    %v3136 = vsel %vm1062, %v3043, %v3045
    %v3137 = vsel %vm1062, %v3047, %v3049
    %v3138 = vsel %vm1062, %v3049, %v3051
    %v3139 = vsel %vm1062, %v3051, %v3053
    %v3140 = vsel %vm1062, %v3055, %v3057
    %v3141 = vsel %vm1062, %v3057, %v3059
    %v3142 = vsel %vm1062, %v3059, %v3061
    %v3143 = vsel %vm1062, %v3063, %v3065
    %v3144 = vsel %vm1062, %v3065, %v3067
    %v3145 = vsel %vm1062, %v3067, %v3069
    %v3146 = vsel %vm1062, %v3071, %v3073
    %v3147 = vsel %vm1062, %v3073, %v3075
    %v3148 = vsel %vm1062, %v3075, %v3077
    %v3149 = vsel %vm1062, %v3079, %v3081
    %v3150 = vsel %vm1062, %v3081, %v3083
    %v3151 = vsel %vm1062, %v3083, %v3085
    %v3152 = vsel %vm1062, %v3087, %v3089
    %v3153 = vsel %vm1062, %v3089, %v3091
    %v3154 = vsel %vm1062, %v3091, %v3093
    %v3155 = vsel %vm1062, %v3095, %v3097
    %v3156 = vsel %vm1062, %v3097, %v3099
    %v3157 = vsel %vm1062, %v3099, %v3101
    %v3158 = vsel %vm1062, %v3103, %v3105
    %v3159 = vsel %vm1062, %v3105, %v3107
    %v3160 = vsel %vm1062, %v3107, %v3109
    %v3161 = vsel %vm1062, %v3111, %v3113
    %v3162 = vsel %vm1062, %v3113, %v3115
    %v3163 = vsel %vm1062, %v3115, %v3117
    %v3164 = vsel %vm1062, %v3119, %v3121
    %v3165 = vsel %vm1062, %v3121, %v3123
    %v3166 = vsel %vm1062, %v3123, %v3125
    %v3167 = vsel %vm1062, %v3127, %v3129
    %v3168 = vsel %vm1062, %v3129, %v3131
    %v3169 = vsel %vm1062, %v3131, %v3133
    %v3230 = vsel %vm1062, %v3045, %v3039
    %v3231 = vsel %vm1062, %v3053, %v3047
    %v3232 = vsel %vm1062, %v3061, %v3055
    %v3233 = vsel %vm1062, %v3069, %v3063
    %v3234 = vsel %vm1062, %v3077, %v3071
    %v3235 = vsel %vm1062, %v3085, %v3079
    %v3236 = vsel %vm1062, %v3093, %v3087
    %v3237 = vsel %vm1062, %v3101, %v3095
    %v3238 = vsel %vm1062, %v3109, %v3103
    %v3239 = vsel %vm1062, %v3117, %v3111
    %v3240 = vsel %vm1062, %v3125, %v3119
    %v3241 = vsel %vm1062, %v3133, %v3127
    %v3242 = vmul.f32 %v3134, %v1093
    %v3243 = vmul.f32 %v3135, %v1097
    %v3244 = vmul.f32 %v3136, %v1101
    %v3245 = vmul.f32 %v3230, %v1105
    %v3246 = vmul.f32 %v3137, %v1093
    %v3247 = vmul.f32 %v3138, %v1097
    %v3248 = vmul.f32 %v3139, %v1101
    %v3249 = vmul.f32 %v3231, %v1105
    %v3250 = vmul.f32 %v3140, %v1093
    %v3251 = vmul.f32 %v3141, %v1097
    %v3252 = vmul.f32 %v3142, %v1101
    %v3253 = vmul.f32 %v3232, %v1105
    %v3254 = vmul.f32 %v3143, %v1093
    %v3255 = vmul.f32 %v3144, %v1097
    %v3256 = vmul.f32 %v3145, %v1101
    %v3257 = vmul.f32 %v3233, %v1105
    %v3258 = vmul.f32 %v3146, %v1093
    %v3259 = vmul.f32 %v3147, %v1097
    %v3260 = vmul.f32 %v3148, %v1101
    %v3261 = vmul.f32 %v3234, %v1105
    %v3262 = vmul.f32 %v3149, %v1093
    %v3263 = vmul.f32 %v3150, %v1097
    %v3264 = vmul.f32 %v3151, %v1101
    %v3265 = vmul.f32 %v3235, %v1105
    %v3266 = vmul.f32 %v3152, %v1093
    %v3267 = vmul.f32 %v3153, %v1097
    %v3268 = vmul.f32 %v3154, %v1101
    %v3269 = vmul.f32 %v3236, %v1105
    %v3270 = vmul.f32 %v3155, %v1093
    %v3271 = vmul.f32 %v3156, %v1097
    %v3272 = vmul.f32 %v3157, %v1101
    %v3273 = vmul.f32 %v3237, %v1105
    %v3274 = vmul.f32 %v3158, %v1093
    %v3275 = vmul.f32 %v3159, %v1097
    %v3276 = vmul.f32 %v3160, %v1101
    %v3277 = vmul.f32 %v3238, %v1105
    %v3278 = vmul.f32 %v3161, %v1093
    %v3279 = vmul.f32 %v3162, %v1097
    %v3280 = vmul.f32 %v3163, %v1101
    %v3281 = vmul.f32 %v3239, %v1105
    %v3282 = vmul.f32 %v3164, %v1093
    %v3283 = vmul.f32 %v3165, %v1097
    %v3284 = vmul.f32 %v3166, %v1101
    %v3285 = vmul.f32 %v3240, %v1105
    %v3286 = vmul.f32 %v3167, %v1093
    %v3287 = vmul.f32 %v3168, %v1097
    %v3288 = vmul.f32 %v3169, %v1101
    %v3289 = vmul.f32 %v3241, %v1105
    %3290 = vrot.lane.b32.xlu0 %v1661, 112
    %v3291 = vpop.permute.xlu0 %3290
    %3292 = vrot.lane.b32.xlu0 %v1662, 112
    %v3293 = vpop.permute.xlu0 %3292
    %3294 = vrot.lane.b32.xlu0 %v1663, 112
    %v3295 = vpop.permute.xlu0 %3294
    %3296 = vrot.lane.b32.xlu0 %v1664, 112
    %v3297 = vpop.permute.xlu0 %3296
    %3298 = vrot.lane.b32.xlu0 %v1665, 112
    %v3299 = vpop.permute.xlu0 %3298
    %3300 = vrot.lane.b32.xlu0 %v1666, 112
    %v3301 = vpop.permute.xlu0 %3300
    %3302 = vrot.lane.b32.xlu0 %v1667, 112
    %v3303 = vpop.permute.xlu0 %3302
    %3304 = vrot.lane.b32.xlu0 %v1668, 112
    %v3305 = vpop.permute.xlu0 %3304
    %3306 = vrot.lane.b32.xlu0 %v1669, 112
    %v3307 = vpop.permute.xlu0 %3306
    %3308 = vrot.lane.b32.xlu0 %v1670, 112
    %v3309 = vpop.permute.xlu0 %3308
    %3310 = vrot.lane.b32.xlu0 %v1671, 112
    %v3311 = vpop.permute.xlu0 %3310
    %3312 = vrot.lane.b32.xlu0 %v1672, 112
    %v3313 = vpop.permute.xlu0 %3312
    %3314 = vrot.lane.b32.xlu0 %v1673, 112
    %v3315 = vpop.permute.xlu0 %3314
    %3316 = vrot.lane.b32.xlu0 %v1674, 112
    %v3317 = vpop.permute.xlu0 %3316
    %3318 = vrot.lane.b32.xlu0 %v1675, 112
    %v3319 = vpop.permute.xlu0 %3318
    %3320 = vrot.lane.b32.xlu0 %v1676, 112
    %v3321 = vpop.permute.xlu0 %3320
    %3322 = vrot.lane.b32.xlu0 %v1677, 112
    %v3323 = vpop.permute.xlu0 %3322
    %3324 = vrot.lane.b32.xlu0 %v1678, 112
    %v3325 = vpop.permute.xlu0 %3324
    %3326 = vrot.lane.b32.xlu0 %v1679, 112
    %v3327 = vpop.permute.xlu0 %3326
    %3328 = vrot.lane.b32.xlu0 %v1680, 112
    %v3329 = vpop.permute.xlu0 %3328
    %3330 = vrot.lane.b32.xlu0 %v1681, 112
    %v3331 = vpop.permute.xlu0 %3330
    %3332 = vrot.lane.b32.xlu0 %v1682, 112
    %v3333 = vpop.permute.xlu0 %3332
    %3334 = vrot.lane.b32.xlu0 %v1683, 112
    %v3335 = vpop.permute.xlu0 %3334
    %3336 = vrot.lane.b32.xlu0 %v1684, 112
    %v3337 = vpop.permute.xlu0 %3336
    %3338 = vrot.lane.b32.xlu0 %v1685, 112
    %v3339 = vpop.permute.xlu0 %3338
    %3340 = vrot.lane.b32.xlu0 %v1686, 112
    %v3341 = vpop.permute.xlu0 %3340
    %3342 = vrot.lane.b32.xlu0 %v1687, 112
    %v3343 = vpop.permute.xlu0 %3342
    %3344 = vrot.lane.b32.xlu0 %v1688, 112
    %v3345 = vpop.permute.xlu0 %3344
    %3346 = vrot.lane.b32.xlu0 %v1689, 112
    %v3347 = vpop.permute.xlu0 %3346
    %3348 = vrot.lane.b32.xlu0 %v1690, 112
    %v3349 = vpop.permute.xlu0 %3348
    %3350 = vrot.lane.b32.xlu0 %v1691, 112
    %v3351 = vpop.permute.xlu0 %3350
    %3352 = vrot.lane.b32.xlu0 %v1692, 112
    %v3353 = vpop.permute.xlu0 %3352
    %3354 = vrot.lane.b32.xlu0 %v1693, 112
    %v3355 = vpop.permute.xlu0 %3354
    %3356 = vrot.lane.b32.xlu0 %v1694, 112
    %v3357 = vpop.permute.xlu0 %3356
    %3358 = vrot.lane.b32.xlu0 %v1695, 112
    %v3359 = vpop.permute.xlu0 %3358
    %3360 = vrot.lane.b32.xlu0 %v1696, 112
    %v3361 = vpop.permute.xlu0 %3360
    %3362 = vrot.lane.b32.xlu0 %v1697, 112
    %v3363 = vpop.permute.xlu0 %3362
    %3364 = vrot.lane.b32.xlu0 %v1698, 112
    %v3365 = vpop.permute.xlu0 %3364
    %3366 = vrot.lane.b32.xlu0 %v1699, 112
    %v3367 = vpop.permute.xlu0 %3366
    %3368 = vrot.lane.b32.xlu0 %v1700, 112
    %v3369 = vpop.permute.xlu0 %3368
    %3370 = vrot.lane.b32.xlu0 %v1701, 112
    %v3371 = vpop.permute.xlu0 %3370
    %3372 = vrot.lane.b32.xlu0 %v1702, 112
    %v3373 = vpop.permute.xlu0 %3372
    %3374 = vrot.lane.b32.xlu0 %v1703, 112
    %v3375 = vpop.permute.xlu0 %3374
    %3376 = vrot.lane.b32.xlu0 %v1704, 112
    %v3377 = vpop.permute.xlu0 %3376
    %3378 = vrot.lane.b32.xlu0 %v1705, 112
    %v3379 = vpop.permute.xlu0 %3378
    %3380 = vrot.lane.b32.xlu0 %v1706, 112
    %v3381 = vpop.permute.xlu0 %3380
    %3382 = vrot.lane.b32.xlu0 %v1707, 112
    %v3383 = vpop.permute.xlu0 %3382
    %3384 = vrot.lane.b32.xlu0 %v1708, 112
    %v3385 = vpop.permute.xlu0 %3384
    %v3386 = vsel %vm1142, %v3291, %v3293
    %v3387 = vsel %vm1142, %v3293, %v3295
    %v3388 = vsel %vm1142, %v3295, %v3297
    %v3389 = vsel %vm1142, %v3299, %v3301
    %v3390 = vsel %vm1142, %v3301, %v3303
    %v3391 = vsel %vm1142, %v3303, %v3305
    %v3392 = vsel %vm1142, %v3307, %v3309
    %v3393 = vsel %vm1142, %v3309, %v3311
    %v3394 = vsel %vm1142, %v3311, %v3313
    %v3395 = vsel %vm1142, %v3315, %v3317
    %v3396 = vsel %vm1142, %v3317, %v3319
    %v3397 = vsel %vm1142, %v3319, %v3321
    %v3398 = vsel %vm1142, %v3323, %v3325
    %v3399 = vsel %vm1142, %v3325, %v3327
    %v3400 = vsel %vm1142, %v3327, %v3329
    %v3401 = vsel %vm1142, %v3331, %v3333
    %v3402 = vsel %vm1142, %v3333, %v3335
    %v3403 = vsel %vm1142, %v3335, %v3337
    %v3404 = vsel %vm1142, %v3339, %v3341
    %v3405 = vsel %vm1142, %v3341, %v3343
    %v3406 = vsel %vm1142, %v3343, %v3345
    %v3407 = vsel %vm1142, %v3347, %v3349
    %v3408 = vsel %vm1142, %v3349, %v3351
    %v3409 = vsel %vm1142, %v3351, %v3353
    %v3410 = vsel %vm1142, %v3355, %v3357
    %v3411 = vsel %vm1142, %v3357, %v3359
    %v3412 = vsel %vm1142, %v3359, %v3361
    %v3413 = vsel %vm1142, %v3363, %v3365
    %v3414 = vsel %vm1142, %v3365, %v3367
    %v3415 = vsel %vm1142, %v3367, %v3369
    %v3416 = vsel %vm1142, %v3371, %v3373
    %v3417 = vsel %vm1142, %v3373, %v3375
    %v3418 = vsel %vm1142, %v3375, %v3377
    %v3419 = vsel %vm1142, %v3379, %v3381
    %v3420 = vsel %vm1142, %v3381, %v3383
    %v3421 = vsel %vm1142, %v3383, %v3385
    %v3482 = vsel %vm1142, %v3297, %v3291
    %v3483 = vsel %vm1142, %v3305, %v3299
    %v3484 = vsel %vm1142, %v3313, %v3307
    %v3485 = vsel %vm1142, %v3321, %v3315
    %v3486 = vsel %vm1142, %v3329, %v3323
    %v3487 = vsel %vm1142, %v3337, %v3331
    %v3488 = vsel %vm1142, %v3345, %v3339
    %v3489 = vsel %vm1142, %v3353, %v3347
    %v3490 = vsel %vm1142, %v3361, %v3355
    %v3491 = vsel %vm1142, %v3369, %v3363
    %v3492 = vsel %vm1142, %v3377, %v3371
    %v3493 = vsel %vm1142, %v3385, %v3379
    %v3494 = vmul.f32 %v3386, %v1173
    %v3495 = vmul.f32 %v3387, %v1177
    %v3496 = vmul.f32 %v3388, %v1181
    %v3497 = vmul.f32 %v3482, %v1185
    %v3498 = vmul.f32 %v3389, %v1173
    %v3499 = vmul.f32 %v3390, %v1177
    %v3500 = vmul.f32 %v3391, %v1181
    %v3501 = vmul.f32 %v3483, %v1185
    %v3502 = vmul.f32 %v3392, %v1173
    %v3503 = vmul.f32 %v3393, %v1177
    %v3504 = vmul.f32 %v3394, %v1181
    %v3505 = vmul.f32 %v3484, %v1185
    %v3506 = vmul.f32 %v3395, %v1173
    %v3507 = vmul.f32 %v3396, %v1177
    %v3508 = vmul.f32 %v3397, %v1181
    %v3509 = vmul.f32 %v3485, %v1185
    %v3510 = vmul.f32 %v3398, %v1173
    %v3511 = vmul.f32 %v3399, %v1177
    %v3512 = vmul.f32 %v3400, %v1181
    %v3513 = vmul.f32 %v3486, %v1185
    %v3514 = vmul.f32 %v3401, %v1173
    %v3515 = vmul.f32 %v3402, %v1177
    %v3516 = vmul.f32 %v3403, %v1181
    %v3517 = vmul.f32 %v3487, %v1185
    %v3518 = vmul.f32 %v3404, %v1173
    %v3519 = vmul.f32 %v3405, %v1177
    %v3520 = vmul.f32 %v3406, %v1181
    %v3521 = vmul.f32 %v3488, %v1185
    %v3522 = vmul.f32 %v3407, %v1173
    %v3523 = vmul.f32 %v3408, %v1177
    %v3524 = vmul.f32 %v3409, %v1181
    %v3525 = vmul.f32 %v3489, %v1185
    %v3526 = vmul.f32 %v3410, %v1173
    %v3527 = vmul.f32 %v3411, %v1177
    %v3528 = vmul.f32 %v3412, %v1181
    %v3529 = vmul.f32 %v3490, %v1185
    %v3530 = vmul.f32 %v3413, %v1173
    %v3531 = vmul.f32 %v3414, %v1177
    %v3532 = vmul.f32 %v3415, %v1181
    %v3533 = vmul.f32 %v3491, %v1185
    %v3534 = vmul.f32 %v3416, %v1173
    %v3535 = vmul.f32 %v3417, %v1177
    %v3536 = vmul.f32 %v3418, %v1181
    %v3537 = vmul.f32 %v3492, %v1185
    %v3538 = vmul.f32 %v3419, %v1173
    %v3539 = vmul.f32 %v3420, %v1177
    %v3540 = vmul.f32 %v3421, %v1181
    %v3541 = vmul.f32 %v3493, %v1185
    %3542 = vrot.lane.b32.xlu0 %v1661, 111
    %v3543 = vpop.permute.xlu0 %3542
    %3544 = vrot.lane.b32.xlu0 %v1662, 111
    %v3545 = vpop.permute.xlu0 %3544
    %3546 = vrot.lane.b32.xlu0 %v1663, 111
    %v3547 = vpop.permute.xlu0 %3546
    %3548 = vrot.lane.b32.xlu0 %v1664, 111
    %v3549 = vpop.permute.xlu0 %3548
    %3550 = vrot.lane.b32.xlu0 %v1665, 111
    %v3551 = vpop.permute.xlu0 %3550
    %3552 = vrot.lane.b32.xlu0 %v1666, 111
    %v3553 = vpop.permute.xlu0 %3552
    %3554 = vrot.lane.b32.xlu0 %v1667, 111
    %v3555 = vpop.permute.xlu0 %3554
    %3556 = vrot.lane.b32.xlu0 %v1668, 111
    %v3557 = vpop.permute.xlu0 %3556
    %3558 = vrot.lane.b32.xlu0 %v1669, 111
    %v3559 = vpop.permute.xlu0 %3558
    %3560 = vrot.lane.b32.xlu0 %v1670, 111
    %v3561 = vpop.permute.xlu0 %3560
    %3562 = vrot.lane.b32.xlu0 %v1671, 111
    %v3563 = vpop.permute.xlu0 %3562
    %3564 = vrot.lane.b32.xlu0 %v1672, 111
    %v3565 = vpop.permute.xlu0 %3564
    %3566 = vrot.lane.b32.xlu0 %v1673, 111
    %v3567 = vpop.permute.xlu0 %3566
    %3568 = vrot.lane.b32.xlu0 %v1674, 111
    %v3569 = vpop.permute.xlu0 %3568
    %3570 = vrot.lane.b32.xlu0 %v1675, 111
    %v3571 = vpop.permute.xlu0 %3570
    %3572 = vrot.lane.b32.xlu0 %v1676, 111
    %v3573 = vpop.permute.xlu0 %3572
    %3574 = vrot.lane.b32.xlu0 %v1677, 111
    %v3575 = vpop.permute.xlu0 %3574
    %3576 = vrot.lane.b32.xlu0 %v1678, 111
    %v3577 = vpop.permute.xlu0 %3576
    %3578 = vrot.lane.b32.xlu0 %v1679, 111
    %v3579 = vpop.permute.xlu0 %3578
    %3580 = vrot.lane.b32.xlu0 %v1680, 111
    %v3581 = vpop.permute.xlu0 %3580
    %3582 = vrot.lane.b32.xlu0 %v1681, 111
    %v3583 = vpop.permute.xlu0 %3582
    %3584 = vrot.lane.b32.xlu0 %v1682, 111
    %v3585 = vpop.permute.xlu0 %3584
    %3586 = vrot.lane.b32.xlu0 %v1683, 111
    %v3587 = vpop.permute.xlu0 %3586
    %3588 = vrot.lane.b32.xlu0 %v1684, 111
    %v3589 = vpop.permute.xlu0 %3588
    %3590 = vrot.lane.b32.xlu0 %v1685, 111
    %v3591 = vpop.permute.xlu0 %3590
    %3592 = vrot.lane.b32.xlu0 %v1686, 111
    %v3593 = vpop.permute.xlu0 %3592
    %3594 = vrot.lane.b32.xlu0 %v1687, 111
    %v3595 = vpop.permute.xlu0 %3594
    %3596 = vrot.lane.b32.xlu0 %v1688, 111
    %v3597 = vpop.permute.xlu0 %3596
    %3598 = vrot.lane.b32.xlu0 %v1689, 111
    %v3599 = vpop.permute.xlu0 %3598
    %3600 = vrot.lane.b32.xlu0 %v1690, 111
    %v3601 = vpop.permute.xlu0 %3600
    %3602 = vrot.lane.b32.xlu0 %v1691, 111
    %v3603 = vpop.permute.xlu0 %3602
    %3604 = vrot.lane.b32.xlu0 %v1692, 111
    %v3605 = vpop.permute.xlu0 %3604
    %3606 = vrot.lane.b32.xlu0 %v1693, 111
    %v3607 = vpop.permute.xlu0 %3606
    %3608 = vrot.lane.b32.xlu0 %v1694, 111
    %v3609 = vpop.permute.xlu0 %3608
    %3610 = vrot.lane.b32.xlu0 %v1695, 111
    %v3611 = vpop.permute.xlu0 %3610
    %3612 = vrot.lane.b32.xlu0 %v1696, 111
    %v3613 = vpop.permute.xlu0 %3612
    %3614 = vrot.lane.b32.xlu0 %v1697, 111
    %v3615 = vpop.permute.xlu0 %3614
    %3616 = vrot.lane.b32.xlu0 %v1698, 111
    %v3617 = vpop.permute.xlu0 %3616
    %3618 = vrot.lane.b32.xlu0 %v1699, 111
    %v3619 = vpop.permute.xlu0 %3618
    %3620 = vrot.lane.b32.xlu0 %v1700, 111
    %v3621 = vpop.permute.xlu0 %3620
    %3622 = vrot.lane.b32.xlu0 %v1701, 111
    %v3623 = vpop.permute.xlu0 %3622
    %3624 = vrot.lane.b32.xlu0 %v1702, 111
    %v3625 = vpop.permute.xlu0 %3624
    %3626 = vrot.lane.b32.xlu0 %v1703, 111
    %v3627 = vpop.permute.xlu0 %3626
    %3628 = vrot.lane.b32.xlu0 %v1704, 111
    %v3629 = vpop.permute.xlu0 %3628
    %3630 = vrot.lane.b32.xlu0 %v1705, 111
    %v3631 = vpop.permute.xlu0 %3630
    %3632 = vrot.lane.b32.xlu0 %v1706, 111
    %v3633 = vpop.permute.xlu0 %3632
    %3634 = vrot.lane.b32.xlu0 %v1707, 111
    %v3635 = vpop.permute.xlu0 %3634
    %3636 = vrot.lane.b32.xlu0 %v1708, 111
    %v3637 = vpop.permute.xlu0 %3636
    %v3638 = vsel %vm1222, %v3543, %v3545
    %v3639 = vsel %vm1222, %v3545, %v3547
    %v3640 = vsel %vm1222, %v3547, %v3549
    %v3641 = vsel %vm1222, %v3551, %v3553
    %v3642 = vsel %vm1222, %v3553, %v3555
    %v3643 = vsel %vm1222, %v3555, %v3557
    %v3644 = vsel %vm1222, %v3559, %v3561
    %v3645 = vsel %vm1222, %v3561, %v3563
    %v3646 = vsel %vm1222, %v3563, %v3565
    %v3647 = vsel %vm1222, %v3567, %v3569
    %v3648 = vsel %vm1222, %v3569, %v3571
    %v3649 = vsel %vm1222, %v3571, %v3573
    %v3650 = vsel %vm1222, %v3575, %v3577
    %v3651 = vsel %vm1222, %v3577, %v3579
    %v3652 = vsel %vm1222, %v3579, %v3581
    %v3653 = vsel %vm1222, %v3583, %v3585
    %v3654 = vsel %vm1222, %v3585, %v3587
    %v3655 = vsel %vm1222, %v3587, %v3589
    %v3656 = vsel %vm1222, %v3591, %v3593
    %v3657 = vsel %vm1222, %v3593, %v3595
    %v3658 = vsel %vm1222, %v3595, %v3597
    %v3659 = vsel %vm1222, %v3599, %v3601
    %v3660 = vsel %vm1222, %v3601, %v3603
    %v3661 = vsel %vm1222, %v3603, %v3605
    %v3662 = vsel %vm1222, %v3607, %v3609
    %v3663 = vsel %vm1222, %v3609, %v3611
    %v3664 = vsel %vm1222, %v3611, %v3613
    %v3665 = vsel %vm1222, %v3615, %v3617
    %v3666 = vsel %vm1222, %v3617, %v3619
    %v3667 = vsel %vm1222, %v3619, %v3621
    %v3668 = vsel %vm1222, %v3623, %v3625
    %v3669 = vsel %vm1222, %v3625, %v3627
    %v3670 = vsel %vm1222, %v3627, %v3629
    %v3671 = vsel %vm1222, %v3631, %v3633
    %v3672 = vsel %vm1222, %v3633, %v3635
    %v3673 = vsel %vm1222, %v3635, %v3637
    %v3734 = vsel %vm1222, %v3549, %v3543
    %v3735 = vsel %vm1222, %v3557, %v3551
    %v3736 = vsel %vm1222, %v3565, %v3559
    %v3737 = vsel %vm1222, %v3573, %v3567
    %v3738 = vsel %vm1222, %v3581, %v3575
    %v3739 = vsel %vm1222, %v3589, %v3583
    %v3740 = vsel %vm1222, %v3597, %v3591
    %v3741 = vsel %vm1222, %v3605, %v3599
    %v3742 = vsel %vm1222, %v3613, %v3607
    %v3743 = vsel %vm1222, %v3621, %v3615
    %v3744 = vsel %vm1222, %v3629, %v3623
    %v3745 = vsel %vm1222, %v3637, %v3631
    %v3746 = vmul.f32 %v3638, %v1253
    %v3747 = vmul.f32 %v3639, %v1257
    %v3748 = vmul.f32 %v3640, %v1261
    %v3749 = vmul.f32 %v3734, %v1265
    %v3750 = vmul.f32 %v3641, %v1253
    %v3751 = vmul.f32 %v3642, %v1257
    %v3752 = vmul.f32 %v3643, %v1261
    %v3753 = vmul.f32 %v3735, %v1265
    %v3754 = vmul.f32 %v3644, %v1253
    %v3755 = vmul.f32 %v3645, %v1257
    %v3756 = vmul.f32 %v3646, %v1261
    %v3757 = vmul.f32 %v3736, %v1265
    %v3758 = vmul.f32 %v3647, %v1253
    %v3759 = vmul.f32 %v3648, %v1257
    %v3760 = vmul.f32 %v3649, %v1261
    %v3761 = vmul.f32 %v3737, %v1265
    %v3762 = vmul.f32 %v3650, %v1253
    %v3763 = vmul.f32 %v3651, %v1257
    %v3764 = vmul.f32 %v3652, %v1261
    %v3765 = vmul.f32 %v3738, %v1265
    %v3766 = vmul.f32 %v3653, %v1253
    %v3767 = vmul.f32 %v3654, %v1257
    %v3768 = vmul.f32 %v3655, %v1261
    %v3769 = vmul.f32 %v3739, %v1265
    %v3770 = vmul.f32 %v3656, %v1253
    %v3771 = vmul.f32 %v3657, %v1257
    %v3772 = vmul.f32 %v3658, %v1261
    %v3773 = vmul.f32 %v3740, %v1265
    %v3774 = vmul.f32 %v3659, %v1253
    %v3775 = vmul.f32 %v3660, %v1257
    %v3776 = vmul.f32 %v3661, %v1261
    %v3777 = vmul.f32 %v3741, %v1265
    %v3778 = vmul.f32 %v3662, %v1253
    %v3779 = vmul.f32 %v3663, %v1257
    %v3780 = vmul.f32 %v3664, %v1261
    %v3781 = vmul.f32 %v3742, %v1265
    %v3782 = vmul.f32 %v3665, %v1253
    %v3783 = vmul.f32 %v3666, %v1257
    %v3784 = vmul.f32 %v3667, %v1261
    %v3785 = vmul.f32 %v3743, %v1265
    %v3786 = vmul.f32 %v3668, %v1253
    %v3787 = vmul.f32 %v3669, %v1257
    %v3788 = vmul.f32 %v3670, %v1261
    %v3789 = vmul.f32 %v3744, %v1265
    %v3790 = vmul.f32 %v3671, %v1253
    %v3791 = vmul.f32 %v3672, %v1257
    %v3792 = vmul.f32 %v3673, %v1261
    %v3793 = vmul.f32 %v3745, %v1265
    %v3794 = vld [vmem:[%s9] sm:$0xff]
    %v3795 = vld [vmem:[%s9 + $0x8] sm:$0xff]
    %v3796 = vld [vmem:[%s9 + $0x10] sm:$0xff]
    %3798 = vset.pattern.permute.xlu0 0
    %3799 = vperm.xlu0 %3798, %v3794
    %v3800 = vpop.permute.xlu0 %3799
    %3803 = vset.pattern.permute.xlu0 0
    %3804 = vperm.xlu0 %3803, %v3795
    %v3805 = vpop.permute.xlu0 %3804
    %3808 = vset.pattern.permute.xlu0 0
    %3809 = vperm.xlu0 %3808, %v3796
    %v3810 = vpop.permute.xlu0 %3809
    %vm3812 = vcmask 785408
    %v3814 = vsel %vm3812, %v1715, 0
    %v3817 = vsel %vm3812, %v1722, 0
    %v3820 = vsel %vm3812, %v1729, 0
    %3822 = vmatprep.subr.mxu0 %v1983
    %3823 = vmatpush1.msra.mxu0 %v1982
    %3824 = vmatprep.subr.mxu0 %v1987
    %3825 = vmatpush1.msra.mxu0 %v1986
    %3826 = vmatprep.subr.mxu0 %v1991
    %3827 = vmatpush1.msra.mxu0 %v1990
    %3828 = vmatprep.subr.mxu0 %v1995
    %3829 = vmatpush1.msra.mxu0 %v1994
    %3830 = vmatprep.subr.mxu0 %v1999
    %3831 = vmatpush1.msra.mxu0 %v1998
    %3832 = vmatprep.subr.mxu0 %v2003
    %3833 = vmatpush1.msra.mxu0 %v2002
    %3834 = vmatprep.subr.mxu0 %v2007
    %3835 = vmatpush1.msra.mxu0 %v2006
    %3836 = vmatprep.subr.mxu0 %v2011
    %3837 = vmatpush1.msra.mxu0 %v2010
    %3838 = vmatprep.subr.mxu0 %v2015
    %3839 = vmatpush1.msra.mxu0 %v2014
    %3840 = vmatprep.subr.mxu0 %v2019
    %3841 = vmatpush1.msra.mxu0 %v2018
    %3842 = vmatprep.subr.mxu0 %v2023
    %3843 = vmatpush1.msra.mxu0 %v2022
    %3844 = vmatprep.subr.mxu0 %v2027
    %3845 = vmatpush1.msra.mxu0 %v2026
    %3846 = vmatprep.subr.mxu0 %v2235
    %3847 = vmatpush1.msra.mxu0 %v2234
    %3848 = vmatprep.subr.mxu0 %v2239
    %3849 = vmatpush1.msra.mxu0 %v2238
    %3850 = vmatprep.subr.mxu0 %v2243
    %3851 = vmatpush1.msra.mxu0 %v2242
    %3852 = vmatprep.subr.mxu0 %v2247
    %3853 = vmatpush1.msra.mxu0 %v2246
    %3854 = vmatprep.subr.mxu0 %v2251
    %3855 = vmatpush1.msra.mxu0 %v2250
    %3856 = vmatprep.subr.mxu0 %v2255
    %3857 = vmatpush1.msra.mxu0 %v2254
    %3858 = vmatprep.subr.mxu0 %v2259
    %3859 = vmatpush1.msra.mxu0 %v2258
    %3860 = vmatprep.subr.mxu0 %v2263
    %3861 = vmatpush1.msra.mxu0 %v2262
    %3862 = vmatprep.subr.mxu0 %v2267
    %3863 = vmatpush1.msra.mxu0 %v2266
    %3864 = vmatprep.subr.mxu0 %v2271
    %3865 = vmatpush1.msra.mxu0 %v2270
    %3866 = vmatprep.subr.mxu0 %v2275
    %3867 = vmatpush1.msra.mxu0 %v2274
    %3868 = vmatprep.subr.mxu0 %v2279
    %3869 = vmatpush1.msra.mxu0 %v2278
    %3870 = vmatprep.subr.mxu0 %v2487
    %3871 = vmatpush1.msra.mxu0 %v2486
    %3872 = vmatprep.subr.mxu0 %v2491
    %3873 = vmatpush1.msra.mxu0 %v2490
    %3874 = vmatprep.subr.mxu0 %v2495
    %3875 = vmatpush1.msra.mxu0 %v2494
    %3876 = vmatprep.subr.mxu0 %v2499
    %3877 = vmatpush1.msra.mxu0 %v2498
    %3878 = vmatprep.subr.mxu0 %v2503
    %3879 = vmatpush1.msra.mxu0 %v2502
    %3880 = vmatprep.subr.mxu0 %v2507
    %3881 = vmatpush1.msra.mxu0 %v2506
    %3882 = vmatprep.subr.mxu0 %v2511
    %3883 = vmatpush1.msra.mxu0 %v2510
    %3884 = vmatprep.subr.mxu0 %v2515
    %3885 = vmatpush1.msra.mxu0 %v2514
    %3886 = vmatprep.mubr.f32.mxu0 %v1710
    %3887 = vmatmul.mubr.f32.gmra.mrb[0].mxu0 %v1709
    %v3888 = vpop.f32.mrb[0].mxu0
    %v3889 = vadd.f32 %v3800, %v3888
    %v3890 = vpop.f32.mrb[0].mxu0
    %v3891 = vadd.f32 %v3800, %v3890
    %3892 = vmatprep.mubr.f32.mxu0 %v1717
    %3893 = vmatmul.mubr.f32.gmra.mrb[0].mxu0 %v1716
    %v3894 = vpop.f32.mrb[0].mxu0
    %v3895 = vadd.f32 %v3805, %v3894
    %v3896 = vpop.f32.mrb[0].mxu0
    %v3897 = vadd.f32 %v3805, %v3896
    %3898 = vmatprep.mubr.f32.mxu0 %v1724
    %3899 = vmatmul.mubr.f32.gmra.mrb[0].mxu0 %v1723
    %v3900 = vpop.f32.mrb[0].mxu0
    %v3901 = vadd.f32 %v3810, %v3900
    %v3902 = vpop.f32.mrb[0].mxu0
    %v3903 = vadd.f32 %v3810, %v3902
    %3904 = vdwg.mxu0
    %3905 = vmatprep.subr.mxu0 %v2519
    %3906 = vmatpush1.msra.mxu0 %v2518
    %3907 = vmatprep.subr.mxu0 %v2523
    %3908 = vmatpush1.msra.mxu0 %v2522
    %3909 = vmatprep.subr.mxu0 %v2527
    %3910 = vmatpush1.msra.mxu0 %v2526
    %3911 = vmatprep.subr.mxu0 %v2531
    %3912 = vmatpush1.msra.mxu0 %v2530
    %3913 = vmatprep.subr.mxu0 %v2739
    %3914 = vmatpush1.msra.mxu0 %v2738
    %3915 = vmatprep.subr.mxu0 %v2743
    %3916 = vmatpush1.msra.mxu0 %v2742
    %3917 = vmatprep.subr.mxu0 %v2747
    %3918 = vmatpush1.msra.mxu0 %v2746
    %3919 = vmatprep.subr.mxu0 %v2751
    %3920 = vmatpush1.msra.mxu0 %v2750
    %3921 = vmatprep.subr.mxu0 %v2755
    %3922 = vmatpush1.msra.mxu0 %v2754
    %3923 = vmatprep.subr.mxu0 %v2759
    %3924 = vmatpush1.msra.mxu0 %v2758
    %3925 = vmatprep.subr.mxu0 %v2763
    %3926 = vmatpush1.msra.mxu0 %v2762
    %3927 = vmatprep.subr.mxu0 %v2767
    %3928 = vmatpush1.msra.mxu0 %v2766
    %3929 = vmatprep.subr.mxu0 %v2771
    %3930 = vmatpush1.msra.mxu0 %v2770
    %3931 = vmatprep.subr.mxu0 %v2775
    %3932 = vmatpush1.msra.mxu0 %v2774
    %3933 = vmatprep.subr.mxu0 %v2779
    %3934 = vmatpush1.msra.mxu0 %v2778
    %3935 = vmatprep.subr.mxu0 %v2783
    %3936 = vmatpush1.msra.mxu0 %v2782
    %3937 = vmatprep.subr.mxu0 %v1662
    %3938 = vmatpush1.msra.mxu0 %v1661
    %3939 = vmatprep.subr.mxu0 %v1666
    %3940 = vmatpush1.msra.mxu0 %v1665
    %3941 = vmatprep.subr.mxu0 %v1670
    %3942 = vmatpush1.msra.mxu0 %v1669
    %3943 = vmatprep.subr.mxu0 %v1674
    %3944 = vmatpush1.msra.mxu0 %v1673
    %3945 = vmatprep.subr.mxu0 %v1678
    %3946 = vmatpush1.msra.mxu0 %v1677
    %3947 = vmatprep.subr.mxu0 %v1682
    %3948 = vmatpush1.msra.mxu0 %v1681
    %3949 = vmatprep.subr.mxu0 %v1686
    %3950 = vmatpush1.msra.mxu0 %v1685
    %3951 = vmatprep.subr.mxu0 %v1690
    %3952 = vmatpush1.msra.mxu0 %v1689
    %3953 = vmatprep.subr.mxu0 %v1694
    %3954 = vmatpush1.msra.mxu0 %v1693
    %3955 = vmatprep.subr.mxu0 %v1698
    %3956 = vmatpush1.msra.mxu0 %v1697
    %3957 = vmatprep.subr.mxu0 %v1702
    %3958 = vmatpush1.msra.mxu0 %v1701
    %3959 = vmatprep.subr.mxu0 %v1706
    %3960 = vmatpush1.msra.mxu0 %v1705
    %3961 = vmatprep.subr.mxu0 %v2991
    %3962 = vmatpush1.msra.mxu0 %v2990
    %3963 = vmatprep.subr.mxu0 %v2995
    %3964 = vmatpush1.msra.mxu0 %v2994
    %3965 = vmatprep.subr.mxu0 %v2999
    %3966 = vmatpush1.msra.mxu0 %v2998
    %3967 = vmatprep.subr.mxu0 %v3003
    %3968 = vmatpush1.msra.mxu0 %v3002
    %3969 = vmatprep.mubr.f32.mxu0 %v1712
    %3970 = vmatmul.mubr.f32.gmra.mrb[0].mxu0 %v1711
    %v3971 = vpop.f32.mrb[0].mxu0
    %v3972 = vadd.f32 %v3889, %v3971
    %v3973 = vpop.f32.mrb[0].mxu0
    %v3974 = vadd.f32 %v3891, %v3973
    %3975 = vmatprep.mubr.f32.mxu0 %v1719
    %3976 = vmatmul.mubr.f32.gmra.mrb[0].mxu0 %v1718
    %v3977 = vpop.f32.mrb[0].mxu0
    %v3978 = vadd.f32 %v3895, %v3977
    %v3979 = vpop.f32.mrb[0].mxu0
    %v3980 = vadd.f32 %v3897, %v3979
    %3981 = vmatprep.mubr.f32.mxu0 %v1726
    %3982 = vmatmul.mubr.f32.gmra.mrb[0].mxu0 %v1725
    %v3983 = vpop.f32.mrb[0].mxu0
    %v3984 = vadd.f32 %v3901, %v3983
    %v3985 = vpop.f32.mrb[0].mxu0
    %v3986 = vadd.f32 %v3903, %v3985
    %3987 = vdwg.mxu0
    %3988 = vmatprep.subr.mxu0 %v3007
    %3989 = vmatpush1.msra.mxu0 %v3006
    %3990 = vmatprep.subr.mxu0 %v3011
    %3991 = vmatpush1.msra.mxu0 %v3010
    %3992 = vmatprep.subr.mxu0 %v3015
    %3993 = vmatpush1.msra.mxu0 %v3014
    %3994 = vmatprep.subr.mxu0 %v3019
    %3995 = vmatpush1.msra.mxu0 %v3018
    %3996 = vmatprep.subr.mxu0 %v3023
    %3997 = vmatpush1.msra.mxu0 %v3022
    %3998 = vmatprep.subr.mxu0 %v3027
    %3999 = vmatpush1.msra.mxu0 %v3026
    %4000 = vmatprep.subr.mxu0 %v3031
    %4001 = vmatpush1.msra.mxu0 %v3030
    %4002 = vmatprep.subr.mxu0 %v3035
    %4003 = vmatpush1.msra.mxu0 %v3034
    %4004 = vmatprep.subr.mxu0 %v3243
    %4005 = vmatpush1.msra.mxu0 %v3242
    %4006 = vmatprep.subr.mxu0 %v3247
    %4007 = vmatpush1.msra.mxu0 %v3246
    %4008 = vmatprep.subr.mxu0 %v3251
    %4009 = vmatpush1.msra.mxu0 %v3250
    %4010 = vmatprep.subr.mxu0 %v3255
    %4011 = vmatpush1.msra.mxu0 %v3254
    %4012 = vmatprep.subr.mxu0 %v3259
    %4013 = vmatpush1.msra.mxu0 %v3258
    %4014 = vmatprep.subr.mxu0 %v3263
    %4015 = vmatpush1.msra.mxu0 %v3262
    %4016 = vmatprep.subr.mxu0 %v3267
    %4017 = vmatpush1.msra.mxu0 %v3266
    %4018 = vmatprep.subr.mxu0 %v3271
    %4019 = vmatpush1.msra.mxu0 %v3270
    %4020 = vmatprep.subr.mxu0 %v3275
    %4021 = vmatpush1.msra.mxu0 %v3274
    %4022 = vmatprep.subr.mxu0 %v3279
    %4023 = vmatpush1.msra.mxu0 %v3278
    %4024 = vmatprep.subr.mxu0 %v3283
    %4025 = vmatpush1.msra.mxu0 %v3282
    %4026 = vmatprep.subr.mxu0 %v3287
    %4027 = vmatpush1.msra.mxu0 %v3286
    %4028 = vmatprep.subr.mxu0 %v3495
    %4029 = vmatpush1.msra.mxu0 %v3494
    %4030 = vmatprep.subr.mxu0 %v3499
    %4031 = vmatpush1.msra.mxu0 %v3498
    %4032 = vmatprep.subr.mxu0 %v3503
    %4033 = vmatpush1.msra.mxu0 %v3502
    %4034 = vmatprep.subr.mxu0 %v3507
    %4035 = vmatpush1.msra.mxu0 %v3506
    %4036 = vmatprep.subr.mxu0 %v3511
    %4037 = vmatpush1.msra.mxu0 %v3510
    %4038 = vmatprep.subr.mxu0 %v3515
    %4039 = vmatpush1.msra.mxu0 %v3514
    %4040 = vmatprep.subr.mxu0 %v3519
    %4041 = vmatpush1.msra.mxu0 %v3518
    %4042 = vmatprep.subr.mxu0 %v3523
    %4043 = vmatpush1.msra.mxu0 %v3522
    %4044 = vmatprep.subr.mxu0 %v3527
    %4045 = vmatpush1.msra.mxu0 %v3526
    %4046 = vmatprep.subr.mxu0 %v3531
    %4047 = vmatpush1.msra.mxu0 %v3530
    %4048 = vmatprep.subr.mxu0 %v3535
    %4049 = vmatpush1.msra.mxu0 %v3534
    %4050 = vmatprep.subr.mxu0 %v3539
    %4051 = vmatpush1.msra.mxu0 %v3538
    %4052 = vmatprep.mubr.f32.mxu0 %v1714
    %4053 = vmatmul.mubr.f32.gmra.mrb[0].mxu0 %v1713
    %v4054 = vpop.f32.mrb[0].mxu0
    %v4055 = vadd.f32 %v3972, %v4054
    %v4056 = vpop.f32.mrb[0].mxu0
    %v4057 = vadd.f32 %v3974, %v4056
    %4058 = vmatprep.mubr.f32.mxu0 %v1721
    %4059 = vmatmul.mubr.f32.gmra.mrb[0].mxu0 %v1720
    %v4060 = vpop.f32.mrb[0].mxu0
    %v4061 = vadd.f32 %v3978, %v4060
    %v4062 = vpop.f32.mrb[0].mxu0
    %v4063 = vadd.f32 %v3980, %v4062
    %4064 = vmatprep.mubr.f32.mxu0 %v1728
    %4065 = vmatmul.mubr.f32.gmra.mrb[0].mxu0 %v1727
    %v4066 = vpop.f32.mrb[0].mxu0
    %v4067 = vadd.f32 %v3984, %v4066
    %v4068 = vpop.f32.mrb[0].mxu0
    %v4069 = vadd.f32 %v3986, %v4068
    %4070 = vdwg.mxu0
    %4071 = vmatprep.subr.mxu0 %v3747
    %4072 = vmatpush1.msra.mxu0 %v3746
    %4073 = vmatprep.subr.mxu0 %v3751
    %4074 = vmatpush1.msra.mxu0 %v3750
    %4075 = vmatprep.subr.mxu0 %v3755
    %4076 = vmatpush1.msra.mxu0 %v3754
    %4077 = vmatprep.subr.mxu0 %v3759
    %4078 = vmatpush1.msra.mxu0 %v3758
    %4079 = vmatprep.subr.mxu0 %v3763
    %4080 = vmatpush1.msra.mxu0 %v3762
    %4081 = vmatprep.subr.mxu0 %v3767
    %4082 = vmatpush1.msra.mxu0 %v3766
    %4083 = vmatprep.subr.mxu0 %v3771
    %4084 = vmatpush1.msra.mxu0 %v3770
    %4085 = vmatprep.subr.mxu0 %v3775
    %4086 = vmatpush1.msra.mxu0 %v3774
    %4087 = vmatprep.subr.mxu0 %v3779
    %4088 = vmatpush1.msra.mxu0 %v3778
    %4089 = vmatprep.subr.mxu0 %v3783
    %4090 = vmatpush1.msra.mxu0 %v3782
    %4091 = vmatprep.subr.mxu0 %v3787
    %4092 = vmatpush1.msra.mxu0 %v3786
    %4093 = vmatprep.subr.mxu0 %v3791
    %4094 = vmatpush1.msra.mxu0 %v3790
    %4095 = vmatprep.subr.mxu0 0.0
    %4096 = vmatpush1.msra.mxu0 0.0
    %4097 = vmatprep.subr.mxu0 0.0
    %4098 = vmatpush1.msra.mxu0 0.0
    %4099 = vmatprep.subr.mxu0 0.0
    %4100 = vmatpush1.msra.mxu0 0.0
    %4101 = vmatprep.subr.mxu0 0.0
    %4102 = vmatpush1.msra.mxu0 0.0
    %4103 = vmatprep.subr.mxu0 0.0
    %4104 = vmatpush1.msra.mxu0 0.0
    %4105 = vmatprep.subr.mxu0 0.0
    %4106 = vmatpush1.msra.mxu0 0.0
    %4107 = vmatprep.subr.mxu0 0.0
    %4108 = vmatpush1.msra.mxu0 0.0
    %4109 = vmatprep.subr.mxu0 0.0
    %4110 = vmatpush1.msra.mxu0 0.0
    %4111 = vmatprep.subr.mxu0 0.0
    %4112 = vmatpush1.msra.mxu0 0.0
    %4113 = vmatprep.subr.mxu0 0.0
    %4114 = vmatpush1.msra.mxu0 0.0
    %4115 = vmatprep.subr.mxu0 0.0
    %4116 = vmatpush1.msra.mxu0 0.0
    %4117 = vmatprep.subr.mxu0 0.0
    %4118 = vmatpush1.msra.mxu0 0.0
    %4119 = vmatprep.subr.mxu0 0.0
    %4120 = vmatpush1.msra.mxu0 0.0
    %4121 = vmatprep.subr.mxu0 0.0
    %4122 = vmatpush1.msra.mxu0 0.0
    %4123 = vmatprep.subr.mxu0 0.0
    %4124 = vmatpush1.msra.mxu0 0.0
    %4125 = vmatprep.subr.mxu0 0.0
    %4126 = vmatpush1.msra.mxu0 0.0
    %4127 = vmatprep.subr.mxu0 0.0
    %4128 = vmatpush1.msra.mxu0 0.0
    %4129 = vmatprep.subr.mxu0 0.0
    %4130 = vmatpush1.msra.mxu0 0.0
    %4131 = vmatprep.subr.mxu0 0.0
    %4132 = vmatpush1.msra.mxu0 0.0
    %4133 = vmatprep.subr.mxu0 0.0
    %4134 = vmatpush1.msra.mxu0 0.0
    %4135 = vmatprep.mubr.f32.mxu0 0.0
    %4136 = vmatmul.mubr.f32.gmra.mrb[0].mxu0 %v3814
    %v4137 = vpop.f32.mrb[0].mxu0
    %v4138 = vadd.f32 %v4055, %v4137
    %v4139 = vpop.f32.mrb[0].mxu0
    %v4140 = vadd.f32 %v4057, %v4139
    %4141 = vmatprep.mubr.f32.mxu0 0.0
    %4142 = vmatmul.mubr.f32.gmra.mrb[0].mxu0 %v3817
    %v4143 = vpop.f32.mrb[0].mxu0
    %v4144 = vadd.f32 %v4061, %v4143
    %v4145 = vpop.f32.mrb[0].mxu0
    %v4146 = vadd.f32 %v4063, %v4145
    %4147 = vmatprep.mubr.f32.mxu0 0.0
    %4148 = vmatmul.mubr.f32.gmra.mrb[0].mxu0 %v3820
    %v4149 = vpop.f32.mrb[0].mxu0
    %v4150 = vadd.f32 %v4067, %v4149
    %v4151 = vpop.f32.mrb[0].mxu0
    %v4152 = vadd.f32 %v4069, %v4151
    %4153 = vdwg.mxu0
    %4154 = vmatprep.subr.mxu0 %v1985
    %4155 = vmatpush1.msra.mxu0 %v1984
    %4156 = vmatprep.subr.mxu0 %v1989
    %4157 = vmatpush1.msra.mxu0 %v1988
    %4158 = vmatprep.subr.mxu0 %v1993
    %4159 = vmatpush1.msra.mxu0 %v1992
    %4160 = vmatprep.subr.mxu0 %v1997
    %4161 = vmatpush1.msra.mxu0 %v1996
    %4162 = vmatprep.subr.mxu0 %v2001
    %4163 = vmatpush1.msra.mxu0 %v2000
    %4164 = vmatprep.subr.mxu0 %v2005
    %4165 = vmatpush1.msra.mxu0 %v2004
    %4166 = vmatprep.subr.mxu0 %v2009
    %4167 = vmatpush1.msra.mxu0 %v2008
    %4168 = vmatprep.subr.mxu0 %v2013
    %4169 = vmatpush1.msra.mxu0 %v2012
    %4170 = vmatprep.subr.mxu0 %v2017
    %4171 = vmatpush1.msra.mxu0 %v2016
    %4172 = vmatprep.subr.mxu0 %v2021
    %4173 = vmatpush1.msra.mxu0 %v2020
    %4174 = vmatprep.subr.mxu0 %v2025
    %4175 = vmatpush1.msra.mxu0 %v2024
    %4176 = vmatprep.subr.mxu0 %v2029
    %4177 = vmatpush1.msra.mxu0 %v2028
    %4178 = vmatprep.subr.mxu0 %v2237
    %4179 = vmatpush1.msra.mxu0 %v2236
    %4180 = vmatprep.subr.mxu0 %v2241
    %4181 = vmatpush1.msra.mxu0 %v2240
    %4182 = vmatprep.subr.mxu0 %v2245
    %4183 = vmatpush1.msra.mxu0 %v2244
    %4184 = vmatprep.subr.mxu0 %v2249
    %4185 = vmatpush1.msra.mxu0 %v2248
    %4186 = vmatprep.subr.mxu0 %v2253
    %4187 = vmatpush1.msra.mxu0 %v2252
    %4188 = vmatprep.subr.mxu0 %v2257
    %4189 = vmatpush1.msra.mxu0 %v2256
    %4190 = vmatprep.subr.mxu0 %v2261
    %4191 = vmatpush1.msra.mxu0 %v2260
    %4192 = vmatprep.subr.mxu0 %v2265
    %4193 = vmatpush1.msra.mxu0 %v2264
    %4194 = vmatprep.subr.mxu0 %v2269
    %4195 = vmatpush1.msra.mxu0 %v2268
    %4196 = vmatprep.subr.mxu0 %v2273
    %4197 = vmatpush1.msra.mxu0 %v2272
    %4198 = vmatprep.subr.mxu0 %v2277
    %4199 = vmatpush1.msra.mxu0 %v2276
    %4200 = vmatprep.subr.mxu0 %v2281
    %4201 = vmatpush1.msra.mxu0 %v2280
    %4202 = vmatprep.subr.mxu0 %v2489
    %4203 = vmatpush1.msra.mxu0 %v2488
    %4204 = vmatprep.subr.mxu0 %v2493
    %4205 = vmatpush1.msra.mxu0 %v2492
    %4206 = vmatprep.subr.mxu0 %v2497
    %4207 = vmatpush1.msra.mxu0 %v2496
    %4208 = vmatprep.subr.mxu0 %v2501
    %4209 = vmatpush1.msra.mxu0 %v2500
    %4210 = vmatprep.subr.mxu0 %v2505
    %4211 = vmatpush1.msra.mxu0 %v2504
    %4212 = vmatprep.subr.mxu0 %v2509
    %4213 = vmatpush1.msra.mxu0 %v2508
    %4214 = vmatprep.subr.mxu0 %v2513
    %4215 = vmatpush1.msra.mxu0 %v2512
    %4216 = vmatprep.subr.mxu0 %v2517
    %4217 = vmatpush1.msra.mxu0 %v2516
    %4218 = vmatprep.mubr.f32.mxu0 %v1710
    %4219 = vmatmul.mubr.f32.gmra.mrb[0].mxu0 %v1709
    %v4220 = vpop.f32.mrb[0].mxu0
    %v4221 = vadd.f32 %v3800, %v4220
    %v4222 = vpop.f32.mrb[0].mxu0
    %v4223 = vadd.f32 %v3800, %v4222
    %4224 = vmatprep.mubr.f32.mxu0 %v1717
    %4225 = vmatmul.mubr.f32.gmra.mrb[0].mxu0 %v1716
    %v4226 = vpop.f32.mrb[0].mxu0
    %v4227 = vadd.f32 %v3805, %v4226
    %v4228 = vpop.f32.mrb[0].mxu0
    %v4229 = vadd.f32 %v3805, %v4228
    %4230 = vmatprep.mubr.f32.mxu0 %v1724
    %4231 = vmatmul.mubr.f32.gmra.mrb[0].mxu0 %v1723
    %v4232 = vpop.f32.mrb[0].mxu0
    %v4233 = vadd.f32 %v3810, %v4232
    %v4234 = vpop.f32.mrb[0].mxu0
    %v4235 = vadd.f32 %v3810, %v4234
    %4236 = vdwg.mxu0
    %4237 = vmatprep.subr.mxu0 %v2521
    %4238 = vmatpush1.msra.mxu0 %v2520
    %4239 = vmatprep.subr.mxu0 %v2525
    %4240 = vmatpush1.msra.mxu0 %v2524
    %4241 = vmatprep.subr.mxu0 %v2529
    %4242 = vmatpush1.msra.mxu0 %v2528
    %4243 = vmatprep.subr.mxu0 %v2533
    %4244 = vmatpush1.msra.mxu0 %v2532
    %4245 = vmatprep.subr.mxu0 %v2741
    %4246 = vmatpush1.msra.mxu0 %v2740
    %4247 = vmatprep.subr.mxu0 %v2745
    %4248 = vmatpush1.msra.mxu0 %v2744
    %4249 = vmatprep.subr.mxu0 %v2749
    %4250 = vmatpush1.msra.mxu0 %v2748
    %4251 = vmatprep.subr.mxu0 %v2753
    %4252 = vmatpush1.msra.mxu0 %v2752
    %4253 = vmatprep.subr.mxu0 %v2757
    %4254 = vmatpush1.msra.mxu0 %v2756
    %4255 = vmatprep.subr.mxu0 %v2761
    %4256 = vmatpush1.msra.mxu0 %v2760
    %4257 = vmatprep.subr.mxu0 %v2765
    %4258 = vmatpush1.msra.mxu0 %v2764
    %4259 = vmatprep.subr.mxu0 %v2769
    %4260 = vmatpush1.msra.mxu0 %v2768
    %4261 = vmatprep.subr.mxu0 %v2773
    %4262 = vmatpush1.msra.mxu0 %v2772
    %4263 = vmatprep.subr.mxu0 %v2777
    %4264 = vmatpush1.msra.mxu0 %v2776
    %4265 = vmatprep.subr.mxu0 %v2781
    %4266 = vmatpush1.msra.mxu0 %v2780
    %4267 = vmatprep.subr.mxu0 %v2785
    %4268 = vmatpush1.msra.mxu0 %v2784
    %4269 = vmatprep.subr.mxu0 %v1664
    %4270 = vmatpush1.msra.mxu0 %v1663
    %4271 = vmatprep.subr.mxu0 %v1668
    %4272 = vmatpush1.msra.mxu0 %v1667
    %4273 = vmatprep.subr.mxu0 %v1672
    %4274 = vmatpush1.msra.mxu0 %v1671
    %4275 = vmatprep.subr.mxu0 %v1676
    %4276 = vmatpush1.msra.mxu0 %v1675
    %4277 = vmatprep.subr.mxu0 %v1680
    %4278 = vmatpush1.msra.mxu0 %v1679
    %4279 = vmatprep.subr.mxu0 %v1684
    %4280 = vmatpush1.msra.mxu0 %v1683
    %4281 = vmatprep.subr.mxu0 %v1688
    %4282 = vmatpush1.msra.mxu0 %v1687
    %4283 = vmatprep.subr.mxu0 %v1692
    %4284 = vmatpush1.msra.mxu0 %v1691
    %4285 = vmatprep.subr.mxu0 %v1696
    %4286 = vmatpush1.msra.mxu0 %v1695
    %4287 = vmatprep.subr.mxu0 %v1700
    %4288 = vmatpush1.msra.mxu0 %v1699
    %4289 = vmatprep.subr.mxu0 %v1704
    %4290 = vmatpush1.msra.mxu0 %v1703
    %4291 = vmatprep.subr.mxu0 %v1708
    %4292 = vmatpush1.msra.mxu0 %v1707
    %4293 = vmatprep.subr.mxu0 %v2993
    %4294 = vmatpush1.msra.mxu0 %v2992
    %4295 = vmatprep.subr.mxu0 %v2997
    %4296 = vmatpush1.msra.mxu0 %v2996
    %4297 = vmatprep.subr.mxu0 %v3001
    %4298 = vmatpush1.msra.mxu0 %v3000
    %4299 = vmatprep.subr.mxu0 %v3005
    %4300 = vmatpush1.msra.mxu0 %v3004
    %4301 = vmatprep.mubr.f32.mxu0 %v1712
    %4302 = vmatmul.mubr.f32.gmra.mrb[0].mxu0 %v1711
    %v4303 = vpop.f32.mrb[0].mxu0
    %v4304 = vadd.f32 %v4221, %v4303
    %v4305 = vpop.f32.mrb[0].mxu0
    %v4306 = vadd.f32 %v4223, %v4305
    %4307 = vmatprep.mubr.f32.mxu0 %v1719
    %4308 = vmatmul.mubr.f32.gmra.mrb[0].mxu0 %v1718
    %v4309 = vpop.f32.mrb[0].mxu0
    %v4310 = vadd.f32 %v4227, %v4309
    %v4311 = vpop.f32.mrb[0].mxu0
    %v4312 = vadd.f32 %v4229, %v4311
    %4313 = vmatprep.mubr.f32.mxu0 %v1726
    %4314 = vmatmul.mubr.f32.gmra.mrb[0].mxu0 %v1725
    %v4315 = vpop.f32.mrb[0].mxu0
    %v4316 = vadd.f32 %v4233, %v4315
    %v4317 = vpop.f32.mrb[0].mxu0
    %v4318 = vadd.f32 %v4235, %v4317
    %4319 = vdwg.mxu0
    %4320 = vmatprep.subr.mxu0 %v3009
    %4321 = vmatpush1.msra.mxu0 %v3008
    %4322 = vmatprep.subr.mxu0 %v3013
    %4323 = vmatpush1.msra.mxu0 %v3012
    %4324 = vmatprep.subr.mxu0 %v3017
    %4325 = vmatpush1.msra.mxu0 %v3016
    %4326 = vmatprep.subr.mxu0 %v3021
    %4327 = vmatpush1.msra.mxu0 %v3020
    %4328 = vmatprep.subr.mxu0 %v3025
    %4329 = vmatpush1.msra.mxu0 %v3024
    %4330 = vmatprep.subr.mxu0 %v3029
    %4331 = vmatpush1.msra.mxu0 %v3028
    %4332 = vmatprep.subr.mxu0 %v3033
    %4333 = vmatpush1.msra.mxu0 %v3032
    %4334 = vmatprep.subr.mxu0 %v3037
    %4335 = vmatpush1.msra.mxu0 %v3036
    %4336 = vmatprep.subr.mxu0 %v3245
    %4337 = vmatpush1.msra.mxu0 %v3244
    %4338 = vmatprep.subr.mxu0 %v3249
    %4339 = vmatpush1.msra.mxu0 %v3248
    %4340 = vmatprep.subr.mxu0 %v3253
    %4341 = vmatpush1.msra.mxu0 %v3252
    %4342 = vmatprep.subr.mxu0 %v3257
    %4343 = vmatpush1.msra.mxu0 %v3256
    %4344 = vmatprep.subr.mxu0 %v3261
    %4345 = vmatpush1.msra.mxu0 %v3260
    %4346 = vmatprep.subr.mxu0 %v3265
    %4347 = vmatpush1.msra.mxu0 %v3264
    %4348 = vmatprep.subr.mxu0 %v3269
    %4349 = vmatpush1.msra.mxu0 %v3268
    %4350 = vmatprep.subr.mxu0 %v3273
    %4351 = vmatpush1.msra.mxu0 %v3272
    %4352 = vmatprep.subr.mxu0 %v3277
    %4353 = vmatpush1.msra.mxu0 %v3276
    %4354 = vmatprep.subr.mxu0 %v3281
    %4355 = vmatpush1.msra.mxu0 %v3280
    %4356 = vmatprep.subr.mxu0 %v3285
    %4357 = vmatpush1.msra.mxu0 %v3284
    %4358 = vmatprep.subr.mxu0 %v3289
    %4359 = vmatpush1.msra.mxu0 %v3288
    %4360 = vmatprep.subr.mxu0 %v3497
    %4361 = vmatpush1.msra.mxu0 %v3496
    %4362 = vmatprep.subr.mxu0 %v3501
    %4363 = vmatpush1.msra.mxu0 %v3500
    %4364 = vmatprep.subr.mxu0 %v3505
    %4365 = vmatpush1.msra.mxu0 %v3504
    %4366 = vmatprep.subr.mxu0 %v3509
    %4367 = vmatpush1.msra.mxu0 %v3508
    %4368 = vmatprep.subr.mxu0 %v3513
    %4369 = vmatpush1.msra.mxu0 %v3512
    %4370 = vmatprep.subr.mxu0 %v3517
    %4371 = vmatpush1.msra.mxu0 %v3516
    %4372 = vmatprep.subr.mxu0 %v3521
    %4373 = vmatpush1.msra.mxu0 %v3520
    %4374 = vmatprep.subr.mxu0 %v3525
    %4375 = vmatpush1.msra.mxu0 %v3524
    %4376 = vmatprep.subr.mxu0 %v3529
    %4377 = vmatpush1.msra.mxu0 %v3528
    %4378 = vmatprep.subr.mxu0 %v3533
    %4379 = vmatpush1.msra.mxu0 %v3532
    %4380 = vmatprep.subr.mxu0 %v3537
    %4381 = vmatpush1.msra.mxu0 %v3536
    %4382 = vmatprep.subr.mxu0 %v3541
    %4383 = vmatpush1.msra.mxu0 %v3540
    %4384 = vmatprep.mubr.f32.mxu0 %v1714
    %4385 = vmatmul.mubr.f32.gmra.mrb[0].mxu0 %v1713
    %v4386 = vpop.f32.mrb[0].mxu0
    %v4387 = vadd.f32 %v4304, %v4386
    %v4388 = vpop.f32.mrb[0].mxu0
    %v4389 = vadd.f32 %v4306, %v4388
    %4390 = vmatprep.mubr.f32.mxu0 %v1721
    %4391 = vmatmul.mubr.f32.gmra.mrb[0].mxu0 %v1720
    %v4392 = vpop.f32.mrb[0].mxu0
    %v4393 = vadd.f32 %v4310, %v4392
    %v4394 = vpop.f32.mrb[0].mxu0
    %v4395 = vadd.f32 %v4312, %v4394
    %4396 = vmatprep.mubr.f32.mxu0 %v1728
    %4397 = vmatmul.mubr.f32.gmra.mrb[0].mxu0 %v1727
    %v4398 = vpop.f32.mrb[0].mxu0
    %v4399 = vadd.f32 %v4316, %v4398
    %v4400 = vpop.f32.mrb[0].mxu0
    %v4401 = vadd.f32 %v4318, %v4400
    %4402 = vdwg.mxu0
    %4403 = vmatprep.subr.mxu0 %v3749
    %4404 = vmatpush1.msra.mxu0 %v3748
    %4405 = vmatprep.subr.mxu0 %v3753
    %4406 = vmatpush1.msra.mxu0 %v3752
    %4407 = vmatprep.subr.mxu0 %v3757
    %4408 = vmatpush1.msra.mxu0 %v3756
    %4409 = vmatprep.subr.mxu0 %v3761
    %4410 = vmatpush1.msra.mxu0 %v3760
    %4411 = vmatprep.subr.mxu0 %v3765
    %4412 = vmatpush1.msra.mxu0 %v3764
    %4413 = vmatprep.subr.mxu0 %v3769
    %4414 = vmatpush1.msra.mxu0 %v3768
    %4415 = vmatprep.subr.mxu0 %v3773
    %4416 = vmatpush1.msra.mxu0 %v3772
    %4417 = vmatprep.subr.mxu0 %v3777
    %4418 = vmatpush1.msra.mxu0 %v3776
    %4419 = vmatprep.subr.mxu0 %v3781
    %4420 = vmatpush1.msra.mxu0 %v3780
    %4421 = vmatprep.subr.mxu0 %v3785
    %4422 = vmatpush1.msra.mxu0 %v3784
    %4423 = vmatprep.subr.mxu0 %v3789
    %4424 = vmatpush1.msra.mxu0 %v3788
    %4425 = vmatprep.subr.mxu0 %v3793
    %4426 = vmatpush1.msra.mxu0 %v3792
    %4427 = vmatprep.subr.mxu0 0.0
    %4428 = vmatpush1.msra.mxu0 0.0
    %4429 = vmatprep.subr.mxu0 0.0
    %4430 = vmatpush1.msra.mxu0 0.0
    %4431 = vmatprep.subr.mxu0 0.0
    %4432 = vmatpush1.msra.mxu0 0.0
    %4433 = vmatprep.subr.mxu0 0.0
    %4434 = vmatpush1.msra.mxu0 0.0
    %4435 = vmatprep.subr.mxu0 0.0
    %4436 = vmatpush1.msra.mxu0 0.0
    %4437 = vmatprep.subr.mxu0 0.0
    %4438 = vmatpush1.msra.mxu0 0.0
    %4439 = vmatprep.subr.mxu0 0.0
    %4440 = vmatpush1.msra.mxu0 0.0
    %4441 = vmatprep.subr.mxu0 0.0
    %4442 = vmatpush1.msra.mxu0 0.0
    %4443 = vmatprep.subr.mxu0 0.0
    %4444 = vmatpush1.msra.mxu0 0.0
    %4445 = vmatprep.subr.mxu0 0.0
    %4446 = vmatpush1.msra.mxu0 0.0
    %4447 = vmatprep.subr.mxu0 0.0
    %4448 = vmatpush1.msra.mxu0 0.0
    %4449 = vmatprep.subr.mxu0 0.0
    %4450 = vmatpush1.msra.mxu0 0.0
    %4451 = vmatprep.subr.mxu0 0.0
    %4452 = vmatpush1.msra.mxu0 0.0
    %4453 = vmatprep.subr.mxu0 0.0
    %4454 = vmatpush1.msra.mxu0 0.0
    %4455 = vmatprep.subr.mxu0 0.0
    %4456 = vmatpush1.msra.mxu0 0.0
    %4457 = vmatprep.subr.mxu0 0.0
    %4458 = vmatpush1.msra.mxu0 0.0
    %4459 = vmatprep.subr.mxu0 0.0
    %4460 = vmatpush1.msra.mxu0 0.0
    %4461 = vmatprep.subr.mxu0 0.0
    %4462 = vmatpush1.msra.mxu0 0.0
    %4463 = vmatprep.subr.mxu0 0.0
    %4464 = vmatpush1.msra.mxu0 0.0
    %4465 = vmatprep.subr.mxu0 0.0
    %4466 = vmatpush1.msra.mxu0 0.0
    %4467 = vmatprep.mubr.f32.mxu0 0.0
    %4468 = vmatmul.mubr.f32.gmra.mrb[0].mxu0 %v3814
    %v4469 = vpop.f32.mrb[0].mxu0
    %v4470 = vadd.f32 %v4387, %v4469
    %v4471 = vpop.f32.mrb[0].mxu0
    %v4472 = vadd.f32 %v4389, %v4471
    %4473 = vmatprep.mubr.f32.mxu0 0.0
    %4474 = vmatmul.mubr.f32.gmra.mrb[0].mxu0 %v3817
    %v4475 = vpop.f32.mrb[0].mxu0
    %v4476 = vadd.f32 %v4393, %v4475
    %v4477 = vpop.f32.mrb[0].mxu0
    %v4478 = vadd.f32 %v4395, %v4477
    %4479 = vmatprep.mubr.f32.mxu0 0.0
    %4480 = vmatmul.mubr.f32.gmra.mrb[0].mxu0 %v3820
    %v4481 = vpop.f32.mrb[0].mxu0
    %v4482 = vadd.f32 %v4399, %v4481
    %v4483 = vpop.f32.mrb[0].mxu0
    %v4484 = vadd.f32 %v4401, %v4483
    %4485 = vdwg.mxu0
    %v4486 = vadd.f32 %v4138, %v452
    %v4487 = vadd.f32 %v4140, %v454
    %v4488 = vadd.f32 %v4470, %v553
    %v4489 = vadd.f32 %v4472, %v555
    %v4490 = vadd.f32 %v4144, %v458
    %v4491 = vadd.f32 %v4146, %v460
    %v4492 = vadd.f32 %v4476, %v559
    %v4493 = vadd.f32 %v4478, %v561
    %v4494 = vadd.f32 %v4150, %v464
    %v4495 = vadd.f32 %v4152, %v466
    %v4496 = vadd.f32 %v4482, %v565
    %v4497 = vadd.f32 %v4484, %v567
    %v4498 = vld [vmem:[%s10] sm:$0xff]
    %v4499 = vld [vmem:[%s10 + $0x8] sm:$0xff]
    %v4500 = vld [vmem:[%s10 + $0x10] sm:$0xff]
    %v4501 = vld [vmem:[%s10 + $0x18] sm:$0xff]
    %v4502 = vld [vmem:[%s10 + $0x20] sm:$0xff]
    %v4503 = vld [vmem:[%s10 + $0x28] sm:$0xff]
    %v4504 = vld [vmem:[%s10 + $0x30] sm:$0xff]
    %v4505 = vld [vmem:[%s10 + $0x38] sm:$0xff]
    %v4506 = vld [vmem:[%s10 + $0x40] sm:$0xff]
    %v4507 = vld [vmem:[%s10 + $0x48] sm:$0xff]
    %v4508 = vld [vmem:[%s10 + $0x50] sm:$0xff]
    %v4509 = vld [vmem:[%s10 + $0x58] sm:$0xff]
    %v4510 = vld [vmem:[%s10 + $0x60] sm:$0xff]
    %v4511 = vld [vmem:[%s10 + $0x68] sm:$0xff]
    %v4512 = vld [vmem:[%s10 + $0x70] sm:$0xff]
    %v4513 = vld [vmem:[%s10 + $0x78] sm:$0xff]
    %4516 = vrot.lane.b32.xlu0 %v573, 17
    %v4517 = vpop.permute.xlu0 %4516
    %4518 = vrot.lane.b32.xlu0 %v579, 17
    %v4519 = vpop.permute.xlu0 %4518
    %4528 = vrot.lane.b32.xlu0 %v470, 17
    %v4529 = vpop.permute.xlu0 %4528
    %4530 = vrot.lane.b32.xlu0 %v472, 17
    %v4531 = vpop.permute.xlu0 %4530
    %4532 = vrot.lane.b32.xlu0 %v571, 17
    %v4533 = vpop.permute.xlu0 %4532
    %4534 = vrot.lane.b32.xlu0 %v476, 17
    %v4535 = vpop.permute.xlu0 %4534
    %4536 = vrot.lane.b32.xlu0 %v478, 17
    %v4537 = vpop.permute.xlu0 %4536
    %4538 = vrot.lane.b32.xlu0 %v577, 17
    %v4539 = vpop.permute.xlu0 %4538
    %v4540 = vsel %vm666, %v4529, %v4531
    %v4541 = vsel %vm666, %v4531, %v4533
    %v4542 = vsel %vm666, %v4533, %v4517
    %v4543 = vsel %vm666, %v4535, %v4537
    %v4544 = vsel %vm666, %v4537, %v4539
    %v4545 = vsel %vm666, %v4539, %v4519
    %v4554 = vsel %vm666, %v4517, %v4529
    %v4555 = vsel %vm666, %v4519, %v4535
    %v4556 = vmul.f32 %v4554, %v694
    %v4557 = vmul.f32 %v4540, %v698
    %v4558 = vmul.f32 %v4541, %v702
    %v4559 = vmul.f32 %v4542, %v706
    %v4560 = vmul.f32 %v4555, %v694
    %v4561 = vmul.f32 %v4543, %v698
    %v4562 = vmul.f32 %v4544, %v702
    %v4563 = vmul.f32 %v4545, %v706
    %4564 = vrot.lane.b32.xlu0 %v573, 16
    %v4565 = vpop.permute.xlu0 %4564
    %4566 = vrot.lane.b32.xlu0 %v579, 16
    %v4567 = vpop.permute.xlu0 %4566
    %4570 = vrot.lane.b32.xlu0 %v470, 16
    %v4571 = vpop.permute.xlu0 %4570
    %4572 = vrot.lane.b32.xlu0 %v472, 16
    %v4573 = vpop.permute.xlu0 %4572
    %4574 = vrot.lane.b32.xlu0 %v571, 16
    %v4575 = vpop.permute.xlu0 %4574
    %4576 = vrot.lane.b32.xlu0 %v476, 16
    %v4577 = vpop.permute.xlu0 %4576
    %4578 = vrot.lane.b32.xlu0 %v478, 16
    %v4579 = vpop.permute.xlu0 %4578
    %4580 = vrot.lane.b32.xlu0 %v577, 16
    %v4581 = vpop.permute.xlu0 %4580
    %v4582 = vsel %vm366, %v4571, %v4573
    %v4583 = vsel %vm366, %v4573, %v4575
    %v4584 = vsel %vm366, %v4575, %v4565
    %v4585 = vsel %vm366, %v4577, %v4579
    %v4586 = vsel %vm366, %v4579, %v4581
    %v4587 = vsel %vm366, %v4581, %v4567
    %v4596 = vsel %vm366, %v4565, %v4571
    %v4597 = vsel %vm366, %v4567, %v4577
    %v4598 = vmul.f32 %v4596, %v773
    %v4599 = vmul.f32 %v4582, %v777
    %v4600 = vmul.f32 %v4583, %v781
    %v4601 = vmul.f32 %v4584, %v785
    %v4602 = vmul.f32 %v4597, %v773
    %v4603 = vmul.f32 %v4585, %v777
    %v4604 = vmul.f32 %v4586, %v781
    %v4605 = vmul.f32 %v4587, %v785
    %4606 = vrot.lane.b32.xlu0 %v573, 15
    %v4607 = vpop.permute.xlu0 %4606
    %4608 = vrot.lane.b32.xlu0 %v579, 15
    %v4609 = vpop.permute.xlu0 %4608
    %4612 = vrot.lane.b32.xlu0 %v470, 15
    %v4613 = vpop.permute.xlu0 %4612
    %4614 = vrot.lane.b32.xlu0 %v472, 15
    %v4615 = vpop.permute.xlu0 %4614
    %4616 = vrot.lane.b32.xlu0 %v571, 15
    %v4617 = vpop.permute.xlu0 %4616
    %4618 = vrot.lane.b32.xlu0 %v476, 15
    %v4619 = vpop.permute.xlu0 %4618
    %4620 = vrot.lane.b32.xlu0 %v478, 15
    %v4621 = vpop.permute.xlu0 %4620
    %4622 = vrot.lane.b32.xlu0 %v577, 15
    %v4623 = vpop.permute.xlu0 %4622
    %v4624 = vsel %vm825, %v4613, %v4615
    %v4625 = vsel %vm825, %v4615, %v4617
    %v4626 = vsel %vm825, %v4617, %v4607
    %v4627 = vsel %vm825, %v4619, %v4621
    %v4628 = vsel %vm825, %v4621, %v4623
    %v4629 = vsel %vm825, %v4623, %v4609
    %v4638 = vsel %vm825, %v4607, %v4613
    %v4639 = vsel %vm825, %v4609, %v4619
    %v4640 = vmul.f32 %v4638, %v853
    %v4641 = vmul.f32 %v4624, %v857
    %v4642 = vmul.f32 %v4625, %v861
    %v4643 = vmul.f32 %v4626, %v865
    %v4644 = vmul.f32 %v4639, %v853
    %v4645 = vmul.f32 %v4627, %v857
    %v4646 = vmul.f32 %v4628, %v861
    %v4647 = vmul.f32 %v4629, %v865
    %4648 = vrot.lane.b32.xlu0 %v573, 1
    %v4649 = vpop.permute.xlu0 %4648
    %4650 = vrot.lane.b32.xlu0 %v579, 1
    %v4651 = vpop.permute.xlu0 %4650
    %4654 = vrot.lane.b32.xlu0 %v470, 1
    %v4655 = vpop.permute.xlu0 %4654
    %4656 = vrot.lane.b32.xlu0 %v472, 1
    %v4657 = vpop.permute.xlu0 %4656
    %4658 = vrot.lane.b32.xlu0 %v571, 1
    %v4659 = vpop.permute.xlu0 %4658
    %4660 = vrot.lane.b32.xlu0 %v476, 1
    %v4661 = vpop.permute.xlu0 %4660
    %4662 = vrot.lane.b32.xlu0 %v478, 1
    %v4663 = vpop.permute.xlu0 %4662
    %4664 = vrot.lane.b32.xlu0 %v577, 1
    %v4665 = vpop.permute.xlu0 %4664
    %v4666 = vsel %vm905, %v4655, %v4657
    %v4667 = vsel %vm905, %v4657, %v4659
    %v4668 = vsel %vm905, %v4659, %v4649
    %v4669 = vsel %vm905, %v4661, %v4663
    %v4670 = vsel %vm905, %v4663, %v4665
    %v4671 = vsel %vm905, %v4665, %v4651
    %v4680 = vsel %vm905, %v4649, %v4655
    %v4681 = vsel %vm905, %v4651, %v4661
    %v4682 = vmul.f32 %v4680, %v933
    %v4683 = vmul.f32 %v4666, %v937
    %v4684 = vmul.f32 %v4667, %v941
    %v4685 = vmul.f32 %v4668, %v945
    %v4686 = vmul.f32 %v4681, %v933
    %v4687 = vmul.f32 %v4669, %v937
    %v4688 = vmul.f32 %v4670, %v941
    %v4689 = vmul.f32 %v4671, %v945
    %4690 = vrot.lane.b32.xlu0 %v470, 127
    %v4691 = vpop.permute.xlu0 %4690
    %4692 = vrot.lane.b32.xlu0 %v472, 127
    %v4693 = vpop.permute.xlu0 %4692
    %4694 = vrot.lane.b32.xlu0 %v571, 127
    %v4695 = vpop.permute.xlu0 %4694
    %4696 = vrot.lane.b32.xlu0 %v573, 127
    %v4697 = vpop.permute.xlu0 %4696
    %4698 = vrot.lane.b32.xlu0 %v476, 127
    %v4699 = vpop.permute.xlu0 %4698
    %4700 = vrot.lane.b32.xlu0 %v478, 127
    %v4701 = vpop.permute.xlu0 %4700
    %4702 = vrot.lane.b32.xlu0 %v577, 127
    %v4703 = vpop.permute.xlu0 %4702
    %4704 = vrot.lane.b32.xlu0 %v579, 127
    %v4705 = vpop.permute.xlu0 %4704
    %v4706 = vsel %vm982, %v4691, %v4693
    %v4707 = vsel %vm982, %v4693, %v4695
    %v4708 = vsel %vm982, %v4695, %v4697
    %v4709 = vsel %vm982, %v4699, %v4701
    %v4710 = vsel %vm982, %v4701, %v4703
    %v4711 = vsel %vm982, %v4703, %v4705
    %v4722 = vsel %vm982, %v4697, %v4691
    %v4723 = vsel %vm982, %v4705, %v4699
    %v4724 = vmul.f32 %v4706, %v1013
    %v4725 = vmul.f32 %v4707, %v1017
    %v4726 = vmul.f32 %v4708, %v1021
    %v4727 = vmul.f32 %v4722, %v1025
    %v4728 = vmul.f32 %v4709, %v1013
    %v4729 = vmul.f32 %v4710, %v1017
    %v4730 = vmul.f32 %v4711, %v1021
    %v4731 = vmul.f32 %v4723, %v1025
    %4732 = vrot.lane.b32.xlu0 %v470, 113
    %v4733 = vpop.permute.xlu0 %4732
    %4734 = vrot.lane.b32.xlu0 %v472, 113
    %v4735 = vpop.permute.xlu0 %4734
    %4736 = vrot.lane.b32.xlu0 %v571, 113
    %v4737 = vpop.permute.xlu0 %4736
    %4738 = vrot.lane.b32.xlu0 %v573, 113
    %v4739 = vpop.permute.xlu0 %4738
    %4740 = vrot.lane.b32.xlu0 %v476, 113
    %v4741 = vpop.permute.xlu0 %4740
    %4742 = vrot.lane.b32.xlu0 %v478, 113
    %v4743 = vpop.permute.xlu0 %4742
    %4744 = vrot.lane.b32.xlu0 %v577, 113
    %v4745 = vpop.permute.xlu0 %4744
    %4746 = vrot.lane.b32.xlu0 %v579, 113
    %v4747 = vpop.permute.xlu0 %4746
    %v4748 = vsel %vm1062, %v4733, %v4735
    %v4749 = vsel %vm1062, %v4735, %v4737
    %v4750 = vsel %vm1062, %v4737, %v4739
    %v4751 = vsel %vm1062, %v4741, %v4743
    %v4752 = vsel %vm1062, %v4743, %v4745
    %v4753 = vsel %vm1062, %v4745, %v4747
    %v4764 = vsel %vm1062, %v4739, %v4733
    %v4765 = vsel %vm1062, %v4747, %v4741
    %v4766 = vmul.f32 %v4748, %v1093
    %v4767 = vmul.f32 %v4749, %v1097
    %v4768 = vmul.f32 %v4750, %v1101
    %v4769 = vmul.f32 %v4764, %v1105
    %v4770 = vmul.f32 %v4751, %v1093
    %v4771 = vmul.f32 %v4752, %v1097
    %v4772 = vmul.f32 %v4753, %v1101
    %v4773 = vmul.f32 %v4765, %v1105
    %4774 = vrot.lane.b32.xlu0 %v470, 112
    %v4775 = vpop.permute.xlu0 %4774
    %4776 = vrot.lane.b32.xlu0 %v472, 112
    %v4777 = vpop.permute.xlu0 %4776
    %4778 = vrot.lane.b32.xlu0 %v571, 112
    %v4779 = vpop.permute.xlu0 %4778
    %4780 = vrot.lane.b32.xlu0 %v573, 112
    %v4781 = vpop.permute.xlu0 %4780
    %4782 = vrot.lane.b32.xlu0 %v476, 112
    %v4783 = vpop.permute.xlu0 %4782
    %4784 = vrot.lane.b32.xlu0 %v478, 112
    %v4785 = vpop.permute.xlu0 %4784
    %4786 = vrot.lane.b32.xlu0 %v577, 112
    %v4787 = vpop.permute.xlu0 %4786
    %4788 = vrot.lane.b32.xlu0 %v579, 112
    %v4789 = vpop.permute.xlu0 %4788
    %v4790 = vsel %vm1142, %v4775, %v4777
    %v4791 = vsel %vm1142, %v4777, %v4779
    %v4792 = vsel %vm1142, %v4779, %v4781
    %v4793 = vsel %vm1142, %v4783, %v4785
    %v4794 = vsel %vm1142, %v4785, %v4787
    %v4795 = vsel %vm1142, %v4787, %v4789
    %v4806 = vsel %vm1142, %v4781, %v4775
    %v4807 = vsel %vm1142, %v4789, %v4783
    %v4808 = vmul.f32 %v4790, %v1173
    %v4809 = vmul.f32 %v4791, %v1177
    %v4810 = vmul.f32 %v4792, %v1181
    %v4811 = vmul.f32 %v4806, %v1185
    %v4812 = vmul.f32 %v4793, %v1173
    %v4813 = vmul.f32 %v4794, %v1177
    %v4814 = vmul.f32 %v4795, %v1181
    %v4815 = vmul.f32 %v4807, %v1185
    %4816 = vrot.lane.b32.xlu0 %v470, 111
    %v4817 = vpop.permute.xlu0 %4816
    %4818 = vrot.lane.b32.xlu0 %v472, 111
    %v4819 = vpop.permute.xlu0 %4818
    %4820 = vrot.lane.b32.xlu0 %v571, 111
    %v4821 = vpop.permute.xlu0 %4820
    %4822 = vrot.lane.b32.xlu0 %v573, 111
    %v4823 = vpop.permute.xlu0 %4822
    %4824 = vrot.lane.b32.xlu0 %v476, 111
    %v4825 = vpop.permute.xlu0 %4824
    %4826 = vrot.lane.b32.xlu0 %v478, 111
    %v4827 = vpop.permute.xlu0 %4826
    %4828 = vrot.lane.b32.xlu0 %v577, 111
    %v4829 = vpop.permute.xlu0 %4828
    %4830 = vrot.lane.b32.xlu0 %v579, 111
    %v4831 = vpop.permute.xlu0 %4830
    %v4832 = vsel %vm1222, %v4817, %v4819
    %v4833 = vsel %vm1222, %v4819, %v4821
    %v4834 = vsel %vm1222, %v4821, %v4823
    %v4835 = vsel %vm1222, %v4825, %v4827
    %v4836 = vsel %vm1222, %v4827, %v4829
    %v4837 = vsel %vm1222, %v4829, %v4831
    %v4848 = vsel %vm1222, %v4823, %v4817
    %v4849 = vsel %vm1222, %v4831, %v4825
    %v4850 = vmul.f32 %v4832, %v1253
    %v4851 = vmul.f32 %v4833, %v1257
    %v4852 = vmul.f32 %v4834, %v1261
    %v4853 = vmul.f32 %v4848, %v1265
    %v4854 = vmul.f32 %v4835, %v1253
    %v4855 = vmul.f32 %v4836, %v1257
    %v4856 = vmul.f32 %v4837, %v1261
    %v4857 = vmul.f32 %v4849, %v1265
    %v4858 = vld [vmem:[%s11] sm:$0xff]
    %v4859 = vld [vmem:[%s11 + $0x8] sm:$0xff]
    %v4860 = vld [vmem:[%s11 + $0x10] sm:$0xff]
    %v4861 = vld [vmem:[%s11 + $0x18] sm:$0xff]
    %v4862 = vld [vmem:[%s11 + $0x20] sm:$0xff]
    %v4863 = vld [vmem:[%s11 + $0x28] sm:$0xff]
    %v4864 = vld [vmem:[%s11 + $0x30] sm:$0xff]
    %v4865 = vld [vmem:[%s11 + $0x38] sm:$0xff]
    %4867 = vset.pattern.permute.xlu0 0
    %4868 = vperm.xlu0 %4867, %v4858
    %v4869 = vpop.permute.xlu0 %4868
    %4872 = vset.pattern.permute.xlu0 0
    %4873 = vperm.xlu0 %4872, %v4859
    %v4874 = vpop.permute.xlu0 %4873
    %4877 = vset.pattern.permute.xlu0 0
    %4878 = vperm.xlu0 %4877, %v4860
    %v4879 = vpop.permute.xlu0 %4878
    %4882 = vset.pattern.permute.xlu0 0
    %4883 = vperm.xlu0 %4882, %v4861
    %v4884 = vpop.permute.xlu0 %4883
    %4887 = vset.pattern.permute.xlu0 0
    %4888 = vperm.xlu0 %4887, %v4862
    %v4889 = vpop.permute.xlu0 %4888
    %4892 = vset.pattern.permute.xlu0 0
    %4893 = vperm.xlu0 %4892, %v4863
    %v4894 = vpop.permute.xlu0 %4893
    %4897 = vset.pattern.permute.xlu0 0
    %4898 = vperm.xlu0 %4897, %v4864
    %v4899 = vpop.permute.xlu0 %4898
    %4902 = vset.pattern.permute.xlu0 0
    %4903 = vperm.xlu0 %4902, %v4865
    %v4904 = vpop.permute.xlu0 %4903
    %v4907 = vsel %vm366, %v4499, 0
    %v4910 = vsel %vm366, %v4501, 0
    %v4913 = vsel %vm366, %v4503, 0
    %v4916 = vsel %vm366, %v4505, 0
    %v4919 = vsel %vm366, %v4507, 0
    %v4922 = vsel %vm366, %v4509, 0
    %v4925 = vsel %vm366, %v4511, 0
    %v4928 = vsel %vm366, %v4513, 0
    %4930 = vmatprep.subr.mxu0 %v4557
    %4931 = vmatpush1.msra.mxu0 %v4556
    %4932 = vmatprep.subr.mxu0 %v4561
    %4933 = vmatpush1.msra.mxu0 %v4560
    %4934 = vmatprep.subr.mxu0 %v4599
    %4935 = vmatpush1.msra.mxu0 %v4598
    %4936 = vmatprep.subr.mxu0 %v4603
    %4937 = vmatpush1.msra.mxu0 %v4602
    %4938 = vmatprep.subr.mxu0 %v4641
    %4939 = vmatpush1.msra.mxu0 %v4640
    %4940 = vmatprep.subr.mxu0 %v4645
    %4941 = vmatpush1.msra.mxu0 %v4644
    %4942 = vmatprep.subr.mxu0 %v4683
    %4943 = vmatpush1.msra.mxu0 %v4682
    %4944 = vmatprep.subr.mxu0 %v4687
    %4945 = vmatpush1.msra.mxu0 %v4686
    %4946 = vmatprep.subr.mxu0 %v472
    %4947 = vmatpush1.msra.mxu0 %v470
    %4948 = vmatprep.subr.mxu0 %v478
    %4949 = vmatpush1.msra.mxu0 %v476
    %4950 = vmatprep.subr.mxu0 %v4725
    %4951 = vmatpush1.msra.mxu0 %v4724
    %4952 = vmatprep.subr.mxu0 %v4729
    %4953 = vmatpush1.msra.mxu0 %v4728
    %4954 = vmatprep.subr.mxu0 %v4767
    %4955 = vmatpush1.msra.mxu0 %v4766
    %4956 = vmatprep.subr.mxu0 %v4771
    %4957 = vmatpush1.msra.mxu0 %v4770
    %4958 = vmatprep.subr.mxu0 %v4809
    %4959 = vmatpush1.msra.mxu0 %v4808
    %4960 = vmatprep.subr.mxu0 %v4813
    %4961 = vmatpush1.msra.mxu0 %v4812
    %4962 = vmatprep.subr.mxu0 %v4851
    %4963 = vmatpush1.msra.mxu0 %v4850
    %4964 = vmatprep.subr.mxu0 %v4855
    %4965 = vmatpush1.msra.mxu0 %v4854
    %4966 = vmatprep.subr.mxu0 0.0
    %4967 = vmatpush1.msra.mxu0 0.0
    %4968 = vmatprep.subr.mxu0 0.0
    %4969 = vmatpush1.msra.mxu0 0.0
    %4970 = vmatprep.subr.mxu0 0.0
    %4971 = vmatpush1.msra.mxu0 0.0
    %4972 = vmatprep.subr.mxu0 0.0
    %4973 = vmatpush1.msra.mxu0 0.0
    %4974 = vmatprep.subr.mxu0 0.0
    %4975 = vmatpush1.msra.mxu0 0.0
    %4976 = vmatprep.subr.mxu0 0.0
    %4977 = vmatpush1.msra.mxu0 0.0
    %4978 = vmatprep.subr.mxu0 0.0
    %4979 = vmatpush1.msra.mxu0 0.0
    %4980 = vmatprep.subr.mxu0 0.0
    %4981 = vmatpush1.msra.mxu0 0.0
    %4982 = vmatprep.subr.mxu0 0.0
    %4983 = vmatpush1.msra.mxu0 0.0
    %4984 = vmatprep.subr.mxu0 0.0
    %4985 = vmatpush1.msra.mxu0 0.0
    %4986 = vmatprep.subr.mxu0 0.0
    %4987 = vmatpush1.msra.mxu0 0.0
    %4988 = vmatprep.subr.mxu0 0.0
    %4989 = vmatpush1.msra.mxu0 0.0
    %4990 = vmatprep.subr.mxu0 0.0
    %4991 = vmatpush1.msra.mxu0 0.0
    %4992 = vmatprep.subr.mxu0 0.0
    %4993 = vmatpush1.msra.mxu0 0.0
    %4994 = vmatprep.mubr.f32.mxu0 %v4907
    %4995 = vmatmul.mubr.f32.gmra.mrb[0].mxu0 %v4498
    %v4996 = vpop.f32.mrb[0].mxu0
    %v4997 = vadd.f32 %v4869, %v4996
    %v4998 = vpop.f32.mrb[0].mxu0
    %v4999 = vadd.f32 %v4869, %v4998
    %5000 = vmatprep.mubr.f32.mxu0 %v4910
    %5001 = vmatmul.mubr.f32.gmra.mrb[0].mxu0 %v4500
    %v5002 = vpop.f32.mrb[0].mxu0
    %v5003 = vadd.f32 %v4874, %v5002
    %v5004 = vpop.f32.mrb[0].mxu0
    %v5005 = vadd.f32 %v4874, %v5004
    %5006 = vmatprep.mubr.f32.mxu0 %v4913
    %5007 = vmatmul.mubr.f32.gmra.mrb[0].mxu0 %v4502
    %v5008 = vpop.f32.mrb[0].mxu0
    %v5009 = vadd.f32 %v4879, %v5008
    %v5010 = vpop.f32.mrb[0].mxu0
    %v5011 = vadd.f32 %v4879, %v5010
    %5012 = vmatprep.mubr.f32.mxu0 %v4916
    %5013 = vmatmul.mubr.f32.gmra.mrb[0].mxu0 %v4504
    %v5014 = vpop.f32.mrb[0].mxu0
    %v5015 = vadd.f32 %v4884, %v5014
    %v5016 = vpop.f32.mrb[0].mxu0
    %v5017 = vadd.f32 %v4884, %v5016
    %5018 = vmatprep.mubr.f32.mxu0 %v4919
    %5019 = vmatmul.mubr.f32.gmra.mrb[0].mxu0 %v4506
    %v5020 = vpop.f32.mrb[0].mxu0
    %v5021 = vadd.f32 %v4889, %v5020
    %v5022 = vpop.f32.mrb[0].mxu0
    %v5023 = vadd.f32 %v4889, %v5022
    %5024 = vmatprep.mubr.f32.mxu0 %v4922
    %5025 = vmatmul.mubr.f32.gmra.mrb[0].mxu0 %v4508
    %v5026 = vpop.f32.mrb[0].mxu0
    %v5027 = vadd.f32 %v4894, %v5026
    %v5028 = vpop.f32.mrb[0].mxu0
    %v5029 = vadd.f32 %v4894, %v5028
    %5030 = vmatprep.mubr.f32.mxu0 %v4925
    %5031 = vmatmul.mubr.f32.gmra.mrb[0].mxu0 %v4510
    %v5032 = vpop.f32.mrb[0].mxu0
    %v5033 = vadd.f32 %v4899, %v5032
    %v5034 = vpop.f32.mrb[0].mxu0
    %v5035 = vadd.f32 %v4899, %v5034
    %5036 = vmatprep.mubr.f32.mxu0 %v4928
    %5037 = vmatmul.mubr.f32.gmra.mrb[0].mxu0 %v4512
    %v5038 = vpop.f32.mrb[0].mxu0
    %v5039 = vadd.f32 %v4904, %v5038
    %v5040 = vpop.f32.mrb[0].mxu0
    %v5041 = vadd.f32 %v4904, %v5040
    %5042 = vdwg.mxu0
    %5043 = vmatprep.subr.mxu0 %v4559
    %5044 = vmatpush1.msra.mxu0 %v4558
    %5045 = vmatprep.subr.mxu0 %v4563
    %5046 = vmatpush1.msra.mxu0 %v4562
    %5047 = vmatprep.subr.mxu0 %v4601
    %5048 = vmatpush1.msra.mxu0 %v4600
    %5049 = vmatprep.subr.mxu0 %v4605
    %5050 = vmatpush1.msra.mxu0 %v4604
    %5051 = vmatprep.subr.mxu0 %v4643
    %5052 = vmatpush1.msra.mxu0 %v4642
    %5053 = vmatprep.subr.mxu0 %v4647
    %5054 = vmatpush1.msra.mxu0 %v4646
    %5055 = vmatprep.subr.mxu0 %v4685
    %5056 = vmatpush1.msra.mxu0 %v4684
    %5057 = vmatprep.subr.mxu0 %v4689
    %5058 = vmatpush1.msra.mxu0 %v4688
    %5059 = vmatprep.subr.mxu0 %v573
    %5060 = vmatpush1.msra.mxu0 %v571
    %5061 = vmatprep.subr.mxu0 %v579
    %5062 = vmatpush1.msra.mxu0 %v577
    %5063 = vmatprep.subr.mxu0 %v4727
    %5064 = vmatpush1.msra.mxu0 %v4726
    %5065 = vmatprep.subr.mxu0 %v4731
    %5066 = vmatpush1.msra.mxu0 %v4730
    %5067 = vmatprep.subr.mxu0 %v4769
    %5068 = vmatpush1.msra.mxu0 %v4768
    %5069 = vmatprep.subr.mxu0 %v4773
    %5070 = vmatpush1.msra.mxu0 %v4772
    %5071 = vmatprep.subr.mxu0 %v4811
    %5072 = vmatpush1.msra.mxu0 %v4810
    %5073 = vmatprep.subr.mxu0 %v4815
    %5074 = vmatpush1.msra.mxu0 %v4814
    %5075 = vmatprep.subr.mxu0 %v4853
    %5076 = vmatpush1.msra.mxu0 %v4852
    %5077 = vmatprep.subr.mxu0 %v4857
    %5078 = vmatpush1.msra.mxu0 %v4856
    %5079 = vmatprep.subr.mxu0 0.0
    %5080 = vmatpush1.msra.mxu0 0.0
    %5081 = vmatprep.subr.mxu0 0.0
    %5082 = vmatpush1.msra.mxu0 0.0
    %5083 = vmatprep.subr.mxu0 0.0
    %5084 = vmatpush1.msra.mxu0 0.0
    %5085 = vmatprep.subr.mxu0 0.0
    %5086 = vmatpush1.msra.mxu0 0.0
    %5087 = vmatprep.subr.mxu0 0.0
    %5088 = vmatpush1.msra.mxu0 0.0
    %5089 = vmatprep.subr.mxu0 0.0
    %5090 = vmatpush1.msra.mxu0 0.0
    %5091 = vmatprep.subr.mxu0 0.0
    %5092 = vmatpush1.msra.mxu0 0.0
    %5093 = vmatprep.subr.mxu0 0.0
    %5094 = vmatpush1.msra.mxu0 0.0
    %5095 = vmatprep.subr.mxu0 0.0
    %5096 = vmatpush1.msra.mxu0 0.0
    %5097 = vmatprep.subr.mxu0 0.0
    %5098 = vmatpush1.msra.mxu0 0.0
    %5099 = vmatprep.subr.mxu0 0.0
    %5100 = vmatpush1.msra.mxu0 0.0
    %5101 = vmatprep.subr.mxu0 0.0
    %5102 = vmatpush1.msra.mxu0 0.0
    %5103 = vmatprep.subr.mxu0 0.0
    %5104 = vmatpush1.msra.mxu0 0.0
    %5105 = vmatprep.subr.mxu0 0.0
    %5106 = vmatpush1.msra.mxu0 0.0
    %5107 = vmatprep.mubr.f32.mxu0 %v4907
    %5108 = vmatmul.mubr.f32.gmra.mrb[0].mxu0 %v4498
    %v5109 = vpop.f32.mrb[0].mxu0
    %v5110 = vadd.f32 %v4869, %v5109
    %v5111 = vpop.f32.mrb[0].mxu0
    %v5112 = vadd.f32 %v4869, %v5111
    %5113 = vmatprep.mubr.f32.mxu0 %v4910
    %5114 = vmatmul.mubr.f32.gmra.mrb[0].mxu0 %v4500
    %v5115 = vpop.f32.mrb[0].mxu0
    %v5116 = vadd.f32 %v4874, %v5115
    %v5117 = vpop.f32.mrb[0].mxu0
    %v5118 = vadd.f32 %v4874, %v5117
    %5119 = vmatprep.mubr.f32.mxu0 %v4913
    %5120 = vmatmul.mubr.f32.gmra.mrb[0].mxu0 %v4502
    %v5121 = vpop.f32.mrb[0].mxu0
    %v5122 = vadd.f32 %v4879, %v5121
    %v5123 = vpop.f32.mrb[0].mxu0
    %v5124 = vadd.f32 %v4879, %v5123
    %5125 = vmatprep.mubr.f32.mxu0 %v4916
    %5126 = vmatmul.mubr.f32.gmra.mrb[0].mxu0 %v4504
    %v5127 = vpop.f32.mrb[0].mxu0
    %v5128 = vadd.f32 %v4884, %v5127
    %v5129 = vpop.f32.mrb[0].mxu0
    %v5130 = vadd.f32 %v4884, %v5129
    %5131 = vmatprep.mubr.f32.mxu0 %v4919
    %5132 = vmatmul.mubr.f32.gmra.mrb[0].mxu0 %v4506
    %v5133 = vpop.f32.mrb[0].mxu0
    %v5134 = vadd.f32 %v4889, %v5133
    %v5135 = vpop.f32.mrb[0].mxu0
    %v5136 = vadd.f32 %v4889, %v5135
    %5137 = vmatprep.mubr.f32.mxu0 %v4922
    %5138 = vmatmul.mubr.f32.gmra.mrb[0].mxu0 %v4508
    %v5139 = vpop.f32.mrb[0].mxu0
    %v5140 = vadd.f32 %v4894, %v5139
    %v5141 = vpop.f32.mrb[0].mxu0
    %v5142 = vadd.f32 %v4894, %v5141
    %5143 = vmatprep.mubr.f32.mxu0 %v4925
    %5144 = vmatmul.mubr.f32.gmra.mrb[0].mxu0 %v4510
    %v5145 = vpop.f32.mrb[0].mxu0
    %v5146 = vadd.f32 %v4899, %v5145
    %v5147 = vpop.f32.mrb[0].mxu0
    %v5148 = vadd.f32 %v4899, %v5147
    %5149 = vmatprep.mubr.f32.mxu0 %v4928
    %5150 = vmatmul.mubr.f32.gmra.mrb[0].mxu0 %v4512
    %v5151 = vpop.f32.mrb[0].mxu0
    %v5152 = vadd.f32 %v4904, %v5151
    %v5153 = vpop.f32.mrb[0].mxu0
    %v5154 = vadd.f32 %v4904, %v5153
    %5155 = vdwg.mxu0
    %v5156 = vmax.f32 %v4997, 0.0
    %v5157 = vmax.f32 %v4999, 0.0
    %v5158 = vmax.f32 %v5110, 0.0
    %v5159 = vmax.f32 %v5112, 0.0
    %v5160 = vmax.f32 %v5003, 0.0
    %v5161 = vmax.f32 %v5005, 0.0
    %v5162 = vmax.f32 %v5116, 0.0
    %v5163 = vmax.f32 %v5118, 0.0
    %v5164 = vmax.f32 %v5009, 0.0
    %v5165 = vmax.f32 %v5011, 0.0
    %v5166 = vmax.f32 %v5122, 0.0
    %v5167 = vmax.f32 %v5124, 0.0
    %v5168 = vmax.f32 %v5015, 0.0
    %v5169 = vmax.f32 %v5017, 0.0
    %v5170 = vmax.f32 %v5128, 0.0
    %v5171 = vmax.f32 %v5130, 0.0
    %v5172 = vmax.f32 %v5021, 0.0
    %v5173 = vmax.f32 %v5023, 0.0
    %v5174 = vmax.f32 %v5134, 0.0
    %v5175 = vmax.f32 %v5136, 0.0
    %v5176 = vmax.f32 %v5027, 0.0
    %v5177 = vmax.f32 %v5029, 0.0
    %v5178 = vmax.f32 %v5140, 0.0
    %v5179 = vmax.f32 %v5142, 0.0
    %v5180 = vmax.f32 %v5033, 0.0
    %v5181 = vmax.f32 %v5035, 0.0
    %v5182 = vmax.f32 %v5146, 0.0
    %v5183 = vmax.f32 %v5148, 0.0
    %v5184 = vmax.f32 %v5039, 0.0
    %v5185 = vmax.f32 %v5041, 0.0
    %v5186 = vmax.f32 %v5152, 0.0
    %v5187 = vmax.f32 %v5154, 0.0
    %v5188 = vld [vmem:[#allocation7] sm:$0xff]
    %v5189 = vld [vmem:[#allocation7 + $0x8] sm:$0xff]
    %v5190 = vld [vmem:[#allocation7 + $0x10] sm:$0xff]
    %v5191 = vld [vmem:[#allocation7 + $0x18] sm:$0xff]
    %v5192 = vld [vmem:[#allocation7 + $0x20] sm:$0xff]
    %v5193 = vld [vmem:[#allocation7 + $0x28] sm:$0xff]
    %v5194 = vld [vmem:[#allocation7 + $0x30] sm:$0xff]
    %v5195 = vld [vmem:[#allocation7 + $0x38] sm:$0xff]
    %v5196 = vld [vmem:[#allocation7 + $0x40] sm:$0xff]
    %v5197 = vld [vmem:[#allocation7 + $0x48] sm:$0xff]
    %5206 = vrot.lane.b32.xlu0 %v5159, 34
    %v5207 = vpop.permute.xlu0 %5206
    %5208 = vrot.lane.b32.xlu0 %v5163, 34
    %v5209 = vpop.permute.xlu0 %5208
    %5210 = vrot.lane.b32.xlu0 %v5167, 34
    %v5211 = vpop.permute.xlu0 %5210
    %5212 = vrot.lane.b32.xlu0 %v5171, 34
    %v5213 = vpop.permute.xlu0 %5212
    %5214 = vrot.lane.b32.xlu0 %v5175, 34
    %v5215 = vpop.permute.xlu0 %5214
    %5216 = vrot.lane.b32.xlu0 %v5179, 34
    %v5217 = vpop.permute.xlu0 %5216
    %5218 = vrot.lane.b32.xlu0 %v5183, 34
    %v5219 = vpop.permute.xlu0 %5218
    %5220 = vrot.lane.b32.xlu0 %v5187, 34
    %v5221 = vpop.permute.xlu0 %5220
    %5254 = vrot.lane.b32.xlu0 %v5156, 34
    %v5255 = vpop.permute.xlu0 %5254
    %5256 = vrot.lane.b32.xlu0 %v5157, 34
    %v5257 = vpop.permute.xlu0 %5256
    %5258 = vrot.lane.b32.xlu0 %v5158, 34
    %v5259 = vpop.permute.xlu0 %5258
    %5260 = vrot.lane.b32.xlu0 %v5160, 34
    %v5261 = vpop.permute.xlu0 %5260
    %5262 = vrot.lane.b32.xlu0 %v5161, 34
    %v5263 = vpop.permute.xlu0 %5262
    %5264 = vrot.lane.b32.xlu0 %v5162, 34
    %v5265 = vpop.permute.xlu0 %5264
    %5266 = vrot.lane.b32.xlu0 %v5164, 34
    %v5267 = vpop.permute.xlu0 %5266
    %5268 = vrot.lane.b32.xlu0 %v5165, 34
    %v5269 = vpop.permute.xlu0 %5268
    %5270 = vrot.lane.b32.xlu0 %v5166, 34
    %v5271 = vpop.permute.xlu0 %5270
    %5272 = vrot.lane.b32.xlu0 %v5168, 34
    %v5273 = vpop.permute.xlu0 %5272
    %5274 = vrot.lane.b32.xlu0 %v5169, 34
    %v5275 = vpop.permute.xlu0 %5274
    %5276 = vrot.lane.b32.xlu0 %v5170, 34
    %v5277 = vpop.permute.xlu0 %5276
    %5278 = vrot.lane.b32.xlu0 %v5172, 34
    %v5279 = vpop.permute.xlu0 %5278
    %5280 = vrot.lane.b32.xlu0 %v5173, 34
    %v5281 = vpop.permute.xlu0 %5280
    %5282 = vrot.lane.b32.xlu0 %v5174, 34
    %v5283 = vpop.permute.xlu0 %5282
    %5284 = vrot.lane.b32.xlu0 %v5176, 34
    %v5285 = vpop.permute.xlu0 %5284
    %5286 = vrot.lane.b32.xlu0 %v5177, 34
    %v5287 = vpop.permute.xlu0 %5286
    %5288 = vrot.lane.b32.xlu0 %v5178, 34
    %v5289 = vpop.permute.xlu0 %5288
    %5290 = vrot.lane.b32.xlu0 %v5180, 34
    %v5291 = vpop.permute.xlu0 %5290
    %5292 = vrot.lane.b32.xlu0 %v5181, 34
    %v5293 = vpop.permute.xlu0 %5292
    %5294 = vrot.lane.b32.xlu0 %v5182, 34
    %v5295 = vpop.permute.xlu0 %5294
    %5296 = vrot.lane.b32.xlu0 %v5184, 34
    %v5297 = vpop.permute.xlu0 %5296
    %5298 = vrot.lane.b32.xlu0 %v5185, 34
    %v5299 = vpop.permute.xlu0 %5298
    %5300 = vrot.lane.b32.xlu0 %v5186, 34
    %v5301 = vpop.permute.xlu0 %5300
    %vm5302 = vcmask 277504
    %v5303 = vsel %vm5302, %v5255, %v5257
    %v5304 = vsel %vm5302, %v5257, %v5259
    %v5305 = vsel %vm5302, %v5259, %v5207
    %v5306 = vsel %vm5302, %v5261, %v5263
    %v5307 = vsel %vm5302, %v5263, %v5265
    %v5308 = vsel %vm5302, %v5265, %v5209
    %v5309 = vsel %vm5302, %v5267, %v5269
    %v5310 = vsel %vm5302, %v5269, %v5271
    %v5311 = vsel %vm5302, %v5271, %v5211
    %v5312 = vsel %vm5302, %v5273, %v5275
    %v5313 = vsel %vm5302, %v5275, %v5277
    %v5314 = vsel %vm5302, %v5277, %v5213
    %v5315 = vsel %vm5302, %v5279, %v5281
    %v5316 = vsel %vm5302, %v5281, %v5283
    %v5317 = vsel %vm5302, %v5283, %v5215
    %v5318 = vsel %vm5302, %v5285, %v5287
    %v5319 = vsel %vm5302, %v5287, %v5289
    %v5320 = vsel %vm5302, %v5289, %v5217
    %v5321 = vsel %vm5302, %v5291, %v5293
    %v5322 = vsel %vm5302, %v5293, %v5295
    %v5323 = vsel %vm5302, %v5295, %v5219
    %v5324 = vsel %vm5302, %v5297, %v5299
    %v5325 = vsel %vm5302, %v5299, %v5301
    %v5326 = vsel %vm5302, %v5301, %v5221
    %v5359 = vsel %vm5302, %v5207, %v5255
    %v5360 = vsel %vm5302, %v5209, %v5261
    %v5361 = vsel %vm5302, %v5211, %v5267
    %v5362 = vsel %vm5302, %v5213, %v5273
    %v5363 = vsel %vm5302, %v5215, %v5279
    %v5364 = vsel %vm5302, %v5217, %v5285
    %v5365 = vsel %vm5302, %v5219, %v5291
    %v5366 = vsel %vm5302, %v5221, %v5297
    %v5367 = vlaneseq
    %v5368 = vshrl.u32 %v5367, 7
    %v5369 = vsub.s32 1, %v5368
    %v5370 = vrot.slane %v591, %v5369
    %v5371 = vlaneseq
    %v5372 = vshrl.u32 %v5371, 7
    %v5373 = vsub.s32 1, %v5372
    %v5374 = vrot.slane %v592, %v5373
    %v5375 = vlaneseq
    %v5376 = vshrl.u32 %v5375, 7
    %v5377 = vsub.s32 1, %v5376
    %v5378 = vrot.slane %v593, %v5377
    %v5379 = vlaneseq
    %v5380 = vshrl.u32 %v5379, 7
    %v5381 = vsub.s32 1, %v5380
    %v5382 = vrot.slane %v594, %v5381
    %v5383 = vmul.f32 %v5359, %v5370
    %v5384 = vmul.f32 %v5303, %v5374
    %v5385 = vmul.f32 %v5304, %v5378
    %v5386 = vmul.f32 %v5305, %v5382
    %v5387 = vmul.f32 %v5360, %v5370
    %v5388 = vmul.f32 %v5306, %v5374
    %v5389 = vmul.f32 %v5307, %v5378
    %v5390 = vmul.f32 %v5308, %v5382
    %v5391 = vmul.f32 %v5361, %v5370
    %v5392 = vmul.f32 %v5309, %v5374
    %v5393 = vmul.f32 %v5310, %v5378
    %v5394 = vmul.f32 %v5311, %v5382
    %v5395 = vmul.f32 %v5362, %v5370
    %v5396 = vmul.f32 %v5312, %v5374
    %v5397 = vmul.f32 %v5313, %v5378
    %v5398 = vmul.f32 %v5314, %v5382
    %v5399 = vmul.f32 %v5363, %v5370
    %v5400 = vmul.f32 %v5315, %v5374
    %v5401 = vmul.f32 %v5316, %v5378
    %v5402 = vmul.f32 %v5317, %v5382
    %v5403 = vmul.f32 %v5364, %v5370
    %v5404 = vmul.f32 %v5318, %v5374
    %v5405 = vmul.f32 %v5319, %v5378
    %v5406 = vmul.f32 %v5320, %v5382
    %v5407 = vmul.f32 %v5365, %v5370
    %v5408 = vmul.f32 %v5321, %v5374
    %v5409 = vmul.f32 %v5322, %v5378
    %v5410 = vmul.f32 %v5323, %v5382
    %v5411 = vmul.f32 %v5366, %v5370
    %v5412 = vmul.f32 %v5324, %v5374
    %v5413 = vmul.f32 %v5325, %v5378
    %v5414 = vmul.f32 %v5326, %v5382
    %5415 = vrot.lane.b32.xlu0 %v5159, 32
    %v5416 = vpop.permute.xlu0 %5415
    %5417 = vrot.lane.b32.xlu0 %v5163, 32
    %v5418 = vpop.permute.xlu0 %5417
    %5419 = vrot.lane.b32.xlu0 %v5167, 32
    %v5420 = vpop.permute.xlu0 %5419
    %5421 = vrot.lane.b32.xlu0 %v5171, 32
    %v5422 = vpop.permute.xlu0 %5421
    %5423 = vrot.lane.b32.xlu0 %v5175, 32
    %v5424 = vpop.permute.xlu0 %5423
    %5425 = vrot.lane.b32.xlu0 %v5179, 32
    %v5426 = vpop.permute.xlu0 %5425
    %5427 = vrot.lane.b32.xlu0 %v5183, 32
    %v5428 = vpop.permute.xlu0 %5427
    %5429 = vrot.lane.b32.xlu0 %v5187, 32
    %v5430 = vpop.permute.xlu0 %5429
    %5439 = vrot.lane.b32.xlu0 %v5156, 32
    %v5440 = vpop.permute.xlu0 %5439
    %5441 = vrot.lane.b32.xlu0 %v5157, 32
    %v5442 = vpop.permute.xlu0 %5441
    %5443 = vrot.lane.b32.xlu0 %v5158, 32
    %v5444 = vpop.permute.xlu0 %5443
    %5445 = vrot.lane.b32.xlu0 %v5160, 32
    %v5446 = vpop.permute.xlu0 %5445
    %5447 = vrot.lane.b32.xlu0 %v5161, 32
    %v5448 = vpop.permute.xlu0 %5447
    %5449 = vrot.lane.b32.xlu0 %v5162, 32
    %v5450 = vpop.permute.xlu0 %5449
    %5451 = vrot.lane.b32.xlu0 %v5164, 32
    %v5452 = vpop.permute.xlu0 %5451
    %5453 = vrot.lane.b32.xlu0 %v5165, 32
    %v5454 = vpop.permute.xlu0 %5453
    %5455 = vrot.lane.b32.xlu0 %v5166, 32
    %v5456 = vpop.permute.xlu0 %5455
    %5457 = vrot.lane.b32.xlu0 %v5168, 32
    %v5458 = vpop.permute.xlu0 %5457
    %5459 = vrot.lane.b32.xlu0 %v5169, 32
    %v5460 = vpop.permute.xlu0 %5459
    %5461 = vrot.lane.b32.xlu0 %v5170, 32
    %v5462 = vpop.permute.xlu0 %5461
    %5463 = vrot.lane.b32.xlu0 %v5172, 32
    %v5464 = vpop.permute.xlu0 %5463
    %5465 = vrot.lane.b32.xlu0 %v5173, 32
    %v5466 = vpop.permute.xlu0 %5465
    %5467 = vrot.lane.b32.xlu0 %v5174, 32
    %v5468 = vpop.permute.xlu0 %5467
    %5469 = vrot.lane.b32.xlu0 %v5176, 32
    %v5470 = vpop.permute.xlu0 %5469
    %5471 = vrot.lane.b32.xlu0 %v5177, 32
    %v5472 = vpop.permute.xlu0 %5471
    %5473 = vrot.lane.b32.xlu0 %v5178, 32
    %v5474 = vpop.permute.xlu0 %5473
    %5475 = vrot.lane.b32.xlu0 %v5180, 32
    %v5476 = vpop.permute.xlu0 %5475
    %5477 = vrot.lane.b32.xlu0 %v5181, 32
    %v5478 = vpop.permute.xlu0 %5477
    %5479 = vrot.lane.b32.xlu0 %v5182, 32
    %v5480 = vpop.permute.xlu0 %5479
    %5481 = vrot.lane.b32.xlu0 %v5184, 32
    %v5482 = vpop.permute.xlu0 %5481
    %5483 = vrot.lane.b32.xlu0 %v5185, 32
    %v5484 = vpop.permute.xlu0 %5483
    %5485 = vrot.lane.b32.xlu0 %v5186, 32
    %v5486 = vpop.permute.xlu0 %5485
    %vm5487 = vcmask 261120
    %v5488 = vsel %vm5487, %v5440, %v5442
    %v5489 = vsel %vm5487, %v5442, %v5444
    %v5490 = vsel %vm5487, %v5444, %v5416
    %v5491 = vsel %vm5487, %v5446, %v5448
    %v5492 = vsel %vm5487, %v5448, %v5450
    %v5493 = vsel %vm5487, %v5450, %v5418
    %v5494 = vsel %vm5487, %v5452, %v5454
    %v5495 = vsel %vm5487, %v5454, %v5456
    %v5496 = vsel %vm5487, %v5456, %v5420
    %v5497 = vsel %vm5487, %v5458, %v5460
    %v5498 = vsel %vm5487, %v5460, %v5462
    %v5499 = vsel %vm5487, %v5462, %v5422
    %v5500 = vsel %vm5487, %v5464, %v5466
    %v5501 = vsel %vm5487, %v5466, %v5468
    %v5502 = vsel %vm5487, %v5468, %v5424
    %v5503 = vsel %vm5487, %v5470, %v5472
    %v5504 = vsel %vm5487, %v5472, %v5474
    %v5505 = vsel %vm5487, %v5474, %v5426
    %v5506 = vsel %vm5487, %v5476, %v5478
    %v5507 = vsel %vm5487, %v5478, %v5480
    %v5508 = vsel %vm5487, %v5480, %v5428
    %v5509 = vsel %vm5487, %v5482, %v5484
    %v5510 = vsel %vm5487, %v5484, %v5486
    %v5511 = vsel %vm5487, %v5486, %v5430
    %v5544 = vsel %vm5487, %v5416, %v5440
    %v5545 = vsel %vm5487, %v5418, %v5446
    %v5546 = vsel %vm5487, %v5420, %v5452
    %v5547 = vsel %vm5487, %v5422, %v5458
    %v5548 = vsel %vm5487, %v5424, %v5464
    %v5549 = vsel %vm5487, %v5426, %v5470
    %v5550 = vsel %vm5487, %v5428, %v5476
    %v5551 = vsel %vm5487, %v5430, %v5482
    %v5552 = vlaneseq
    %v5553 = vshrl.u32 %v5552, 7
    %v5554 = vsub.s32 2, %v5553
    %v5555 = vrot.slane %v591, %v5554
    %v5556 = vlaneseq
    %v5557 = vshrl.u32 %v5556, 7
    %v5558 = vsub.s32 2, %v5557
    %v5559 = vrot.slane %v592, %v5558
    %v5560 = vlaneseq
    %v5561 = vshrl.u32 %v5560, 7
    %v5562 = vsub.s32 2, %v5561
    %v5563 = vrot.slane %v593, %v5562
    %v5564 = vlaneseq
    %v5565 = vshrl.u32 %v5564, 7
    %v5566 = vsub.s32 2, %v5565
    %v5567 = vrot.slane %v594, %v5566
    %v5568 = vmul.f32 %v5544, %v5555
    %v5569 = vmul.f32 %v5488, %v5559
    %v5570 = vmul.f32 %v5489, %v5563
    %v5571 = vmul.f32 %v5490, %v5567
    %v5572 = vmul.f32 %v5545, %v5555
    %v5573 = vmul.f32 %v5491, %v5559
    %v5574 = vmul.f32 %v5492, %v5563
    %v5575 = vmul.f32 %v5493, %v5567
    %v5576 = vmul.f32 %v5546, %v5555
    %v5577 = vmul.f32 %v5494, %v5559
    %v5578 = vmul.f32 %v5495, %v5563
    %v5579 = vmul.f32 %v5496, %v5567
    %v5580 = vmul.f32 %v5547, %v5555
    %v5581 = vmul.f32 %v5497, %v5559
    %v5582 = vmul.f32 %v5498, %v5563
    %v5583 = vmul.f32 %v5499, %v5567
    %v5584 = vmul.f32 %v5548, %v5555
    %v5585 = vmul.f32 %v5500, %v5559
    %v5586 = vmul.f32 %v5501, %v5563
    %v5587 = vmul.f32 %v5502, %v5567
    %v5588 = vmul.f32 %v5549, %v5555
    %v5589 = vmul.f32 %v5503, %v5559
    %v5590 = vmul.f32 %v5504, %v5563
    %v5591 = vmul.f32 %v5505, %v5567
    %v5592 = vmul.f32 %v5550, %v5555
    %v5593 = vmul.f32 %v5506, %v5559
    %v5594 = vmul.f32 %v5507, %v5563
    %v5595 = vmul.f32 %v5508, %v5567
    %v5596 = vmul.f32 %v5551, %v5555
    %v5597 = vmul.f32 %v5509, %v5559
    %v5598 = vmul.f32 %v5510, %v5563
    %v5599 = vmul.f32 %v5511, %v5567
    %5600 = vrot.lane.b32.xlu0 %v5159, 30
    %v5601 = vpop.permute.xlu0 %5600
    %5602 = vrot.lane.b32.xlu0 %v5163, 30
    %v5603 = vpop.permute.xlu0 %5602
    %5604 = vrot.lane.b32.xlu0 %v5167, 30
    %v5605 = vpop.permute.xlu0 %5604
    %5606 = vrot.lane.b32.xlu0 %v5171, 30
    %v5607 = vpop.permute.xlu0 %5606
    %5608 = vrot.lane.b32.xlu0 %v5175, 30
    %v5609 = vpop.permute.xlu0 %5608
    %5610 = vrot.lane.b32.xlu0 %v5179, 30
    %v5611 = vpop.permute.xlu0 %5610
    %5612 = vrot.lane.b32.xlu0 %v5183, 30
    %v5613 = vpop.permute.xlu0 %5612
    %5614 = vrot.lane.b32.xlu0 %v5187, 30
    %v5615 = vpop.permute.xlu0 %5614
    %5624 = vrot.lane.b32.xlu0 %v5156, 30
    %v5625 = vpop.permute.xlu0 %5624
    %5626 = vrot.lane.b32.xlu0 %v5157, 30
    %v5627 = vpop.permute.xlu0 %5626
    %5628 = vrot.lane.b32.xlu0 %v5158, 30
    %v5629 = vpop.permute.xlu0 %5628
    %5630 = vrot.lane.b32.xlu0 %v5160, 30
    %v5631 = vpop.permute.xlu0 %5630
    %5632 = vrot.lane.b32.xlu0 %v5161, 30
    %v5633 = vpop.permute.xlu0 %5632
    %5634 = vrot.lane.b32.xlu0 %v5162, 30
    %v5635 = vpop.permute.xlu0 %5634
    %5636 = vrot.lane.b32.xlu0 %v5164, 30
    %v5637 = vpop.permute.xlu0 %5636
    %5638 = vrot.lane.b32.xlu0 %v5165, 30
    %v5639 = vpop.permute.xlu0 %5638
    %5640 = vrot.lane.b32.xlu0 %v5166, 30
    %v5641 = vpop.permute.xlu0 %5640
    %5642 = vrot.lane.b32.xlu0 %v5168, 30
    %v5643 = vpop.permute.xlu0 %5642
    %5644 = vrot.lane.b32.xlu0 %v5169, 30
    %v5645 = vpop.permute.xlu0 %5644
    %5646 = vrot.lane.b32.xlu0 %v5170, 30
    %v5647 = vpop.permute.xlu0 %5646
    %5648 = vrot.lane.b32.xlu0 %v5172, 30
    %v5649 = vpop.permute.xlu0 %5648
    %5650 = vrot.lane.b32.xlu0 %v5173, 30
    %v5651 = vpop.permute.xlu0 %5650
    %5652 = vrot.lane.b32.xlu0 %v5174, 30
    %v5653 = vpop.permute.xlu0 %5652
    %5654 = vrot.lane.b32.xlu0 %v5176, 30
    %v5655 = vpop.permute.xlu0 %5654
    %5656 = vrot.lane.b32.xlu0 %v5177, 30
    %v5657 = vpop.permute.xlu0 %5656
    %5658 = vrot.lane.b32.xlu0 %v5178, 30
    %v5659 = vpop.permute.xlu0 %5658
    %5660 = vrot.lane.b32.xlu0 %v5180, 30
    %v5661 = vpop.permute.xlu0 %5660
    %5662 = vrot.lane.b32.xlu0 %v5181, 30
    %v5663 = vpop.permute.xlu0 %5662
    %5664 = vrot.lane.b32.xlu0 %v5182, 30
    %v5665 = vpop.permute.xlu0 %5664
    %5666 = vrot.lane.b32.xlu0 %v5184, 30
    %v5667 = vpop.permute.xlu0 %5666
    %5668 = vrot.lane.b32.xlu0 %v5185, 30
    %v5669 = vpop.permute.xlu0 %5668
    %5670 = vrot.lane.b32.xlu0 %v5186, 30
    %v5671 = vpop.permute.xlu0 %5670
    %vm5672 = vcmask 244736
    %v5673 = vsel %vm5672, %v5625, %v5627
    %v5674 = vsel %vm5672, %v5627, %v5629
    %v5675 = vsel %vm5672, %v5629, %v5601
    %v5676 = vsel %vm5672, %v5631, %v5633
    %v5677 = vsel %vm5672, %v5633, %v5635
    %v5678 = vsel %vm5672, %v5635, %v5603
    %v5679 = vsel %vm5672, %v5637, %v5639
    %v5680 = vsel %vm5672, %v5639, %v5641
    %v5681 = vsel %vm5672, %v5641, %v5605
    %v5682 = vsel %vm5672, %v5643, %v5645
    %v5683 = vsel %vm5672, %v5645, %v5647
    %v5684 = vsel %vm5672, %v5647, %v5607
    %v5685 = vsel %vm5672, %v5649, %v5651
    %v5686 = vsel %vm5672, %v5651, %v5653
    %v5687 = vsel %vm5672, %v5653, %v5609
    %v5688 = vsel %vm5672, %v5655, %v5657
    %v5689 = vsel %vm5672, %v5657, %v5659
    %v5690 = vsel %vm5672, %v5659, %v5611
    %v5691 = vsel %vm5672, %v5661, %v5663
    %v5692 = vsel %vm5672, %v5663, %v5665
    %v5693 = vsel %vm5672, %v5665, %v5613
    %v5694 = vsel %vm5672, %v5667, %v5669
    %v5695 = vsel %vm5672, %v5669, %v5671
    %v5696 = vsel %vm5672, %v5671, %v5615
    %v5729 = vsel %vm5672, %v5601, %v5625
    %v5730 = vsel %vm5672, %v5603, %v5631
    %v5731 = vsel %vm5672, %v5605, %v5637
    %v5732 = vsel %vm5672, %v5607, %v5643
    %v5733 = vsel %vm5672, %v5609, %v5649
    %v5734 = vsel %vm5672, %v5611, %v5655
    %v5735 = vsel %vm5672, %v5613, %v5661
    %v5736 = vsel %vm5672, %v5615, %v5667
    %v5737 = vlaneseq
    %v5738 = vshrl.u32 %v5737, 7
    %v5739 = vsub.s32 3, %v5738
    %v5740 = vrot.slane %v591, %v5739
    %v5741 = vlaneseq
    %v5742 = vshrl.u32 %v5741, 7
    %v5743 = vsub.s32 3, %v5742
    %v5744 = vrot.slane %v592, %v5743
    %v5745 = vlaneseq
    %v5746 = vshrl.u32 %v5745, 7
    %v5747 = vsub.s32 3, %v5746
    %v5748 = vrot.slane %v593, %v5747
    %v5749 = vlaneseq
    %v5750 = vshrl.u32 %v5749, 7
    %v5751 = vsub.s32 3, %v5750
    %v5752 = vrot.slane %v594, %v5751
    %v5753 = vmul.f32 %v5729, %v5740
    %v5754 = vmul.f32 %v5673, %v5744
    %v5755 = vmul.f32 %v5674, %v5748
    %v5756 = vmul.f32 %v5675, %v5752
    %v5757 = vmul.f32 %v5730, %v5740
    %v5758 = vmul.f32 %v5676, %v5744
    %v5759 = vmul.f32 %v5677, %v5748
    %v5760 = vmul.f32 %v5678, %v5752
    %v5761 = vmul.f32 %v5731, %v5740
    %v5762 = vmul.f32 %v5679, %v5744
    %v5763 = vmul.f32 %v5680, %v5748
    %v5764 = vmul.f32 %v5681, %v5752
    %v5765 = vmul.f32 %v5732, %v5740
    %v5766 = vmul.f32 %v5682, %v5744
    %v5767 = vmul.f32 %v5683, %v5748
    %v5768 = vmul.f32 %v5684, %v5752
    %v5769 = vmul.f32 %v5733, %v5740
    %v5770 = vmul.f32 %v5685, %v5744
    %v5771 = vmul.f32 %v5686, %v5748
    %v5772 = vmul.f32 %v5687, %v5752
    %v5773 = vmul.f32 %v5734, %v5740
    %v5774 = vmul.f32 %v5688, %v5744
    %v5775 = vmul.f32 %v5689, %v5748
    %v5776 = vmul.f32 %v5690, %v5752
    %v5777 = vmul.f32 %v5735, %v5740
    %v5778 = vmul.f32 %v5691, %v5744
    %v5779 = vmul.f32 %v5692, %v5748
    %v5780 = vmul.f32 %v5693, %v5752
    %v5781 = vmul.f32 %v5736, %v5740
    %v5782 = vmul.f32 %v5694, %v5744
    %v5783 = vmul.f32 %v5695, %v5748
    %v5784 = vmul.f32 %v5696, %v5752
    %5785 = vrot.lane.b32.xlu0 %v5159, 2
    %v5786 = vpop.permute.xlu0 %5785
    %5787 = vrot.lane.b32.xlu0 %v5163, 2
    %v5788 = vpop.permute.xlu0 %5787
    %5789 = vrot.lane.b32.xlu0 %v5167, 2
    %v5790 = vpop.permute.xlu0 %5789
    %5791 = vrot.lane.b32.xlu0 %v5171, 2
    %v5792 = vpop.permute.xlu0 %5791
    %5793 = vrot.lane.b32.xlu0 %v5175, 2
    %v5794 = vpop.permute.xlu0 %5793
    %5795 = vrot.lane.b32.xlu0 %v5179, 2
    %v5796 = vpop.permute.xlu0 %5795
    %5797 = vrot.lane.b32.xlu0 %v5183, 2
    %v5798 = vpop.permute.xlu0 %5797
    %5799 = vrot.lane.b32.xlu0 %v5187, 2
    %v5800 = vpop.permute.xlu0 %5799
    %5809 = vrot.lane.b32.xlu0 %v5156, 2
    %v5810 = vpop.permute.xlu0 %5809
    %5811 = vrot.lane.b32.xlu0 %v5157, 2
    %v5812 = vpop.permute.xlu0 %5811
    %5813 = vrot.lane.b32.xlu0 %v5158, 2
    %v5814 = vpop.permute.xlu0 %5813
    %5815 = vrot.lane.b32.xlu0 %v5160, 2
    %v5816 = vpop.permute.xlu0 %5815
    %5817 = vrot.lane.b32.xlu0 %v5161, 2
    %v5818 = vpop.permute.xlu0 %5817
    %5819 = vrot.lane.b32.xlu0 %v5162, 2
    %v5820 = vpop.permute.xlu0 %5819
    %5821 = vrot.lane.b32.xlu0 %v5164, 2
    %v5822 = vpop.permute.xlu0 %5821
    %5823 = vrot.lane.b32.xlu0 %v5165, 2
    %v5824 = vpop.permute.xlu0 %5823
    %5825 = vrot.lane.b32.xlu0 %v5166, 2
    %v5826 = vpop.permute.xlu0 %5825
    %5827 = vrot.lane.b32.xlu0 %v5168, 2
    %v5828 = vpop.permute.xlu0 %5827
    %5829 = vrot.lane.b32.xlu0 %v5169, 2
    %v5830 = vpop.permute.xlu0 %5829
    %5831 = vrot.lane.b32.xlu0 %v5170, 2
    %v5832 = vpop.permute.xlu0 %5831
    %5833 = vrot.lane.b32.xlu0 %v5172, 2
    %v5834 = vpop.permute.xlu0 %5833
    %5835 = vrot.lane.b32.xlu0 %v5173, 2
    %v5836 = vpop.permute.xlu0 %5835
    %5837 = vrot.lane.b32.xlu0 %v5174, 2
    %v5838 = vpop.permute.xlu0 %5837
    %5839 = vrot.lane.b32.xlu0 %v5176, 2
    %v5840 = vpop.permute.xlu0 %5839
    %5841 = vrot.lane.b32.xlu0 %v5177, 2
    %v5842 = vpop.permute.xlu0 %5841
    %5843 = vrot.lane.b32.xlu0 %v5178, 2
    %v5844 = vpop.permute.xlu0 %5843
    %5845 = vrot.lane.b32.xlu0 %v5180, 2
    %v5846 = vpop.permute.xlu0 %5845
    %5847 = vrot.lane.b32.xlu0 %v5181, 2
    %v5848 = vpop.permute.xlu0 %5847
    %5849 = vrot.lane.b32.xlu0 %v5182, 2
    %v5850 = vpop.permute.xlu0 %5849
    %5851 = vrot.lane.b32.xlu0 %v5184, 2
    %v5852 = vpop.permute.xlu0 %5851
    %5853 = vrot.lane.b32.xlu0 %v5185, 2
    %v5854 = vpop.permute.xlu0 %5853
    %5855 = vrot.lane.b32.xlu0 %v5186, 2
    %v5856 = vpop.permute.xlu0 %5855
    %vm5857 = vcmask 15360
    %v5858 = vsel %vm5857, %v5810, %v5812
    %v5859 = vsel %vm5857, %v5812, %v5814
    %v5860 = vsel %vm5857, %v5814, %v5786
    %v5861 = vsel %vm5857, %v5816, %v5818
    %v5862 = vsel %vm5857, %v5818, %v5820
    %v5863 = vsel %vm5857, %v5820, %v5788
    %v5864 = vsel %vm5857, %v5822, %v5824
    %v5865 = vsel %vm5857, %v5824, %v5826
    %v5866 = vsel %vm5857, %v5826, %v5790
    %v5867 = vsel %vm5857, %v5828, %v5830
    %v5868 = vsel %vm5857, %v5830, %v5832
    %v5869 = vsel %vm5857, %v5832, %v5792
    %v5870 = vsel %vm5857, %v5834, %v5836
    %v5871 = vsel %vm5857, %v5836, %v5838
    %v5872 = vsel %vm5857, %v5838, %v5794
    %v5873 = vsel %vm5857, %v5840, %v5842
    %v5874 = vsel %vm5857, %v5842, %v5844
    %v5875 = vsel %vm5857, %v5844, %v5796
    %v5876 = vsel %vm5857, %v5846, %v5848
    %v5877 = vsel %vm5857, %v5848, %v5850
    %v5878 = vsel %vm5857, %v5850, %v5798
    %v5879 = vsel %vm5857, %v5852, %v5854
    %v5880 = vsel %vm5857, %v5854, %v5856
    %v5881 = vsel %vm5857, %v5856, %v5800
    %v5914 = vsel %vm5857, %v5786, %v5810
    %v5915 = vsel %vm5857, %v5788, %v5816
    %v5916 = vsel %vm5857, %v5790, %v5822
    %v5917 = vsel %vm5857, %v5792, %v5828
    %v5918 = vsel %vm5857, %v5794, %v5834
    %v5919 = vsel %vm5857, %v5796, %v5840
    %v5920 = vsel %vm5857, %v5798, %v5846
    %v5921 = vsel %vm5857, %v5800, %v5852
    %v5922 = vlaneseq
    %v5923 = vshrl.u32 %v5922, 7
    %v5924 = vsub.s32 4, %v5923
    %v5925 = vrot.slane %v591, %v5924
    %v5926 = vlaneseq
    %v5927 = vshrl.u32 %v5926, 7
    %v5928 = vsub.s32 4, %v5927
    %v5929 = vrot.slane %v592, %v5928
    %v5930 = vlaneseq
    %v5931 = vshrl.u32 %v5930, 7
    %v5932 = vsub.s32 4, %v5931
    %v5933 = vrot.slane %v593, %v5932
    %v5934 = vlaneseq
    %v5935 = vshrl.u32 %v5934, 7
    %v5936 = vsub.s32 4, %v5935
    %v5937 = vrot.slane %v594, %v5936
    %v5938 = vmul.f32 %v5914, %v5925
    %v5939 = vmul.f32 %v5858, %v5929
    %v5940 = vmul.f32 %v5859, %v5933
    %v5941 = vmul.f32 %v5860, %v5937
    %v5942 = vmul.f32 %v5915, %v5925
    %v5943 = vmul.f32 %v5861, %v5929
    %v5944 = vmul.f32 %v5862, %v5933
    %v5945 = vmul.f32 %v5863, %v5937
    %v5946 = vmul.f32 %v5916, %v5925
    %v5947 = vmul.f32 %v5864, %v5929
    %v5948 = vmul.f32 %v5865, %v5933
    %v5949 = vmul.f32 %v5866, %v5937
    %v5950 = vmul.f32 %v5917, %v5925
    %v5951 = vmul.f32 %v5867, %v5929
    %v5952 = vmul.f32 %v5868, %v5933
    %v5953 = vmul.f32 %v5869, %v5937
    %v5954 = vmul.f32 %v5918, %v5925
    %v5955 = vmul.f32 %v5870, %v5929
    %v5956 = vmul.f32 %v5871, %v5933
    %v5957 = vmul.f32 %v5872, %v5937
    %v5958 = vmul.f32 %v5919, %v5925
    %v5959 = vmul.f32 %v5873, %v5929
    %v5960 = vmul.f32 %v5874, %v5933
    %v5961 = vmul.f32 %v5875, %v5937
    %v5962 = vmul.f32 %v5920, %v5925
    %v5963 = vmul.f32 %v5876, %v5929
    %v5964 = vmul.f32 %v5877, %v5933
    %v5965 = vmul.f32 %v5878, %v5937
    %v5966 = vmul.f32 %v5921, %v5925
    %v5967 = vmul.f32 %v5879, %v5929
    %v5968 = vmul.f32 %v5880, %v5933
    %v5969 = vmul.f32 %v5881, %v5937
    %5970 = vrot.lane.b32.xlu0 %v5156, 126
    %v5971 = vpop.permute.xlu0 %5970
    %5972 = vrot.lane.b32.xlu0 %v5157, 126
    %v5973 = vpop.permute.xlu0 %5972
    %5974 = vrot.lane.b32.xlu0 %v5158, 126
    %v5975 = vpop.permute.xlu0 %5974
    %5976 = vrot.lane.b32.xlu0 %v5159, 126
    %v5977 = vpop.permute.xlu0 %5976
    %5978 = vrot.lane.b32.xlu0 %v5160, 126
    %v5979 = vpop.permute.xlu0 %5978
    %5980 = vrot.lane.b32.xlu0 %v5161, 126
    %v5981 = vpop.permute.xlu0 %5980
    %5982 = vrot.lane.b32.xlu0 %v5162, 126
    %v5983 = vpop.permute.xlu0 %5982
    %5984 = vrot.lane.b32.xlu0 %v5163, 126
    %v5985 = vpop.permute.xlu0 %5984
    %5986 = vrot.lane.b32.xlu0 %v5164, 126
    %v5987 = vpop.permute.xlu0 %5986
    %5988 = vrot.lane.b32.xlu0 %v5165, 126
    %v5989 = vpop.permute.xlu0 %5988
    %5990 = vrot.lane.b32.xlu0 %v5166, 126
    %v5991 = vpop.permute.xlu0 %5990
    %5992 = vrot.lane.b32.xlu0 %v5167, 126
    %v5993 = vpop.permute.xlu0 %5992
    %5994 = vrot.lane.b32.xlu0 %v5168, 126
    %v5995 = vpop.permute.xlu0 %5994
    %5996 = vrot.lane.b32.xlu0 %v5169, 126
    %v5997 = vpop.permute.xlu0 %5996
    %5998 = vrot.lane.b32.xlu0 %v5170, 126
    %v5999 = vpop.permute.xlu0 %5998
    %6000 = vrot.lane.b32.xlu0 %v5171, 126
    %v6001 = vpop.permute.xlu0 %6000
    %6002 = vrot.lane.b32.xlu0 %v5172, 126
    %v6003 = vpop.permute.xlu0 %6002
    %6004 = vrot.lane.b32.xlu0 %v5173, 126
    %v6005 = vpop.permute.xlu0 %6004
    %6006 = vrot.lane.b32.xlu0 %v5174, 126
    %v6007 = vpop.permute.xlu0 %6006
    %6008 = vrot.lane.b32.xlu0 %v5175, 126
    %v6009 = vpop.permute.xlu0 %6008
    %6010 = vrot.lane.b32.xlu0 %v5176, 126
    %v6011 = vpop.permute.xlu0 %6010
    %6012 = vrot.lane.b32.xlu0 %v5177, 126
    %v6013 = vpop.permute.xlu0 %6012
    %6014 = vrot.lane.b32.xlu0 %v5178, 126
    %v6015 = vpop.permute.xlu0 %6014
    %6016 = vrot.lane.b32.xlu0 %v5179, 126
    %v6017 = vpop.permute.xlu0 %6016
    %6018 = vrot.lane.b32.xlu0 %v5180, 126
    %v6019 = vpop.permute.xlu0 %6018
    %6020 = vrot.lane.b32.xlu0 %v5181, 126
    %v6021 = vpop.permute.xlu0 %6020
    %6022 = vrot.lane.b32.xlu0 %v5182, 126
    %v6023 = vpop.permute.xlu0 %6022
    %6024 = vrot.lane.b32.xlu0 %v5183, 126
    %v6025 = vpop.permute.xlu0 %6024
    %6026 = vrot.lane.b32.xlu0 %v5184, 126
    %v6027 = vpop.permute.xlu0 %6026
    %6028 = vrot.lane.b32.xlu0 %v5185, 126
    %v6029 = vpop.permute.xlu0 %6028
    %6030 = vrot.lane.b32.xlu0 %v5186, 126
    %v6031 = vpop.permute.xlu0 %6030
    %6032 = vrot.lane.b32.xlu0 %v5187, 126
    %v6033 = vpop.permute.xlu0 %6032
    %vm6034 = vcmask 1031168
    %v6035 = vsel %vm6034, %v5971, %v5973
    %v6036 = vsel %vm6034, %v5973, %v5975
    %v6037 = vsel %vm6034, %v5975, %v5977
    %v6038 = vsel %vm6034, %v5979, %v5981
    %v6039 = vsel %vm6034, %v5981, %v5983
    %v6040 = vsel %vm6034, %v5983, %v5985
    %v6041 = vsel %vm6034, %v5987, %v5989
    %v6042 = vsel %vm6034, %v5989, %v5991
    %v6043 = vsel %vm6034, %v5991, %v5993
    %v6044 = vsel %vm6034, %v5995, %v5997
    %v6045 = vsel %vm6034, %v5997, %v5999
    %v6046 = vsel %vm6034, %v5999, %v6001
    %v6047 = vsel %vm6034, %v6003, %v6005
    %v6048 = vsel %vm6034, %v6005, %v6007
    %v6049 = vsel %vm6034, %v6007, %v6009
    %v6050 = vsel %vm6034, %v6011, %v6013
    %v6051 = vsel %vm6034, %v6013, %v6015
    %v6052 = vsel %vm6034, %v6015, %v6017
    %v6053 = vsel %vm6034, %v6019, %v6021
    %v6054 = vsel %vm6034, %v6021, %v6023
    %v6055 = vsel %vm6034, %v6023, %v6025
    %v6056 = vsel %vm6034, %v6027, %v6029
    %v6057 = vsel %vm6034, %v6029, %v6031
    %v6058 = vsel %vm6034, %v6031, %v6033
    %v6099 = vsel %vm6034, %v5977, %v5971
    %v6100 = vsel %vm6034, %v5985, %v5979
    %v6101 = vsel %vm6034, %v5993, %v5987
    %v6102 = vsel %vm6034, %v6001, %v5995
    %v6103 = vsel %vm6034, %v6009, %v6003
    %v6104 = vsel %vm6034, %v6017, %v6011
    %v6105 = vsel %vm6034, %v6025, %v6019
    %v6106 = vsel %vm6034, %v6033, %v6027
    %v6107 = vlaneseq
    %v6108 = vshrl.u32 %v6107, 7
    %v6109 = vsub.s32 6, %v6108
    %v6110 = vrot.slane %v591, %v6109
    %v6111 = vlaneseq
    %v6112 = vshrl.u32 %v6111, 7
    %v6113 = vsub.s32 6, %v6112
    %v6114 = vrot.slane %v592, %v6113
    %v6115 = vlaneseq
    %v6116 = vshrl.u32 %v6115, 7
    %v6117 = vsub.s32 6, %v6116
    %v6118 = vrot.slane %v593, %v6117
    %v6119 = vlaneseq
    %v6120 = vshrl.u32 %v6119, 7
    %v6121 = vsub.s32 6, %v6120
    %v6122 = vrot.slane %v594, %v6121
    %v6123 = vmul.f32 %v6035, %v6110
    %v6124 = vmul.f32 %v6036, %v6114
    %v6125 = vmul.f32 %v6037, %v6118
    %v6126 = vmul.f32 %v6099, %v6122
    %v6127 = vmul.f32 %v6038, %v6110
    %v6128 = vmul.f32 %v6039, %v6114
    %v6129 = vmul.f32 %v6040, %v6118
    %v6130 = vmul.f32 %v6100, %v6122
    %v6131 = vmul.f32 %v6041, %v6110
    %v6132 = vmul.f32 %v6042, %v6114
    %v6133 = vmul.f32 %v6043, %v6118
    %v6134 = vmul.f32 %v6101, %v6122
    %v6135 = vmul.f32 %v6044, %v6110
    %v6136 = vmul.f32 %v6045, %v6114
    %v6137 = vmul.f32 %v6046, %v6118
    %v6138 = vmul.f32 %v6102, %v6122
    %v6139 = vmul.f32 %v6047, %v6110
    %v6140 = vmul.f32 %v6048, %v6114
    %v6141 = vmul.f32 %v6049, %v6118
    %v6142 = vmul.f32 %v6103, %v6122
    %v6143 = vmul.f32 %v6050, %v6110
    %v6144 = vmul.f32 %v6051, %v6114
    %v6145 = vmul.f32 %v6052, %v6118
    %v6146 = vmul.f32 %v6104, %v6122
    %v6147 = vmul.f32 %v6053, %v6110
    %v6148 = vmul.f32 %v6054, %v6114
    %v6149 = vmul.f32 %v6055, %v6118
    %v6150 = vmul.f32 %v6105, %v6122
    %v6151 = vmul.f32 %v6056, %v6110
    %v6152 = vmul.f32 %v6057, %v6114
    %v6153 = vmul.f32 %v6058, %v6118
    %v6154 = vmul.f32 %v6106, %v6122
    %6155 = vrot.lane.b32.xlu0 %v5156, 98
    %v6156 = vpop.permute.xlu0 %6155
    %6157 = vrot.lane.b32.xlu0 %v5157, 98
    %v6158 = vpop.permute.xlu0 %6157
    %6159 = vrot.lane.b32.xlu0 %v5158, 98
    %v6160 = vpop.permute.xlu0 %6159
    %6161 = vrot.lane.b32.xlu0 %v5159, 98
    %v6162 = vpop.permute.xlu0 %6161
    %6163 = vrot.lane.b32.xlu0 %v5160, 98
    %v6164 = vpop.permute.xlu0 %6163
    %6165 = vrot.lane.b32.xlu0 %v5161, 98
    %v6166 = vpop.permute.xlu0 %6165
    %6167 = vrot.lane.b32.xlu0 %v5162, 98
    %v6168 = vpop.permute.xlu0 %6167
    %6169 = vrot.lane.b32.xlu0 %v5163, 98
    %v6170 = vpop.permute.xlu0 %6169
    %6171 = vrot.lane.b32.xlu0 %v5164, 98
    %v6172 = vpop.permute.xlu0 %6171
    %6173 = vrot.lane.b32.xlu0 %v5165, 98
    %v6174 = vpop.permute.xlu0 %6173
    %6175 = vrot.lane.b32.xlu0 %v5166, 98
    %v6176 = vpop.permute.xlu0 %6175
    %6177 = vrot.lane.b32.xlu0 %v5167, 98
    %v6178 = vpop.permute.xlu0 %6177
    %6179 = vrot.lane.b32.xlu0 %v5168, 98
    %v6180 = vpop.permute.xlu0 %6179
    %6181 = vrot.lane.b32.xlu0 %v5169, 98
    %v6182 = vpop.permute.xlu0 %6181
    %6183 = vrot.lane.b32.xlu0 %v5170, 98
    %v6184 = vpop.permute.xlu0 %6183
    %6185 = vrot.lane.b32.xlu0 %v5171, 98
    %v6186 = vpop.permute.xlu0 %6185
    %6187 = vrot.lane.b32.xlu0 %v5172, 98
    %v6188 = vpop.permute.xlu0 %6187
    %6189 = vrot.lane.b32.xlu0 %v5173, 98
    %v6190 = vpop.permute.xlu0 %6189
    %6191 = vrot.lane.b32.xlu0 %v5174, 98
    %v6192 = vpop.permute.xlu0 %6191
    %6193 = vrot.lane.b32.xlu0 %v5175, 98
    %v6194 = vpop.permute.xlu0 %6193
    %6195 = vrot.lane.b32.xlu0 %v5176, 98
    %v6196 = vpop.permute.xlu0 %6195
    %6197 = vrot.lane.b32.xlu0 %v5177, 98
    %v6198 = vpop.permute.xlu0 %6197
    %6199 = vrot.lane.b32.xlu0 %v5178, 98
    %v6200 = vpop.permute.xlu0 %6199
    %6201 = vrot.lane.b32.xlu0 %v5179, 98
    %v6202 = vpop.permute.xlu0 %6201
    %6203 = vrot.lane.b32.xlu0 %v5180, 98
    %v6204 = vpop.permute.xlu0 %6203
    %6205 = vrot.lane.b32.xlu0 %v5181, 98
    %v6206 = vpop.permute.xlu0 %6205
    %6207 = vrot.lane.b32.xlu0 %v5182, 98
    %v6208 = vpop.permute.xlu0 %6207
    %6209 = vrot.lane.b32.xlu0 %v5183, 98
    %v6210 = vpop.permute.xlu0 %6209
    %6211 = vrot.lane.b32.xlu0 %v5184, 98
    %v6212 = vpop.permute.xlu0 %6211
    %6213 = vrot.lane.b32.xlu0 %v5185, 98
    %v6214 = vpop.permute.xlu0 %6213
    %6215 = vrot.lane.b32.xlu0 %v5186, 98
    %v6216 = vpop.permute.xlu0 %6215
    %6217 = vrot.lane.b32.xlu0 %v5187, 98
    %v6218 = vpop.permute.xlu0 %6217
    %vm6219 = vcmask 801792
    %v6220 = vsel %vm6219, %v6156, %v6158
    %v6221 = vsel %vm6219, %v6158, %v6160
    %v6222 = vsel %vm6219, %v6160, %v6162
    %v6223 = vsel %vm6219, %v6164, %v6166
    %v6224 = vsel %vm6219, %v6166, %v6168
    %v6225 = vsel %vm6219, %v6168, %v6170
    %v6226 = vsel %vm6219, %v6172, %v6174
    %v6227 = vsel %vm6219, %v6174, %v6176
    %v6228 = vsel %vm6219, %v6176, %v6178
    %v6229 = vsel %vm6219, %v6180, %v6182
    %v6230 = vsel %vm6219, %v6182, %v6184
    %v6231 = vsel %vm6219, %v6184, %v6186
    %v6232 = vsel %vm6219, %v6188, %v6190
    %v6233 = vsel %vm6219, %v6190, %v6192
    %v6234 = vsel %vm6219, %v6192, %v6194
    %v6235 = vsel %vm6219, %v6196, %v6198
    %v6236 = vsel %vm6219, %v6198, %v6200
    %v6237 = vsel %vm6219, %v6200, %v6202
    %v6238 = vsel %vm6219, %v6204, %v6206
    %v6239 = vsel %vm6219, %v6206, %v6208
    %v6240 = vsel %vm6219, %v6208, %v6210
    %v6241 = vsel %vm6219, %v6212, %v6214
    %v6242 = vsel %vm6219, %v6214, %v6216
    %v6243 = vsel %vm6219, %v6216, %v6218
    %v6284 = vsel %vm6219, %v6162, %v6156
    %v6285 = vsel %vm6219, %v6170, %v6164
    %v6286 = vsel %vm6219, %v6178, %v6172
    %v6287 = vsel %vm6219, %v6186, %v6180
    %v6288 = vsel %vm6219, %v6194, %v6188
    %v6289 = vsel %vm6219, %v6202, %v6196
    %v6290 = vsel %vm6219, %v6210, %v6204
    %v6291 = vsel %vm6219, %v6218, %v6212
    %v6292 = vlaneseq
    %v6293 = vshrl.u32 %v6292, 7
    %v6294 = vsub.s32 7, %v6293
    %v6295 = vrot.slane %v591, %v6294
    %v6296 = vlaneseq
    %v6297 = vshrl.u32 %v6296, 7
    %v6298 = vsub.s32 7, %v6297
    %v6299 = vrot.slane %v592, %v6298
    %v6300 = vlaneseq
    %v6301 = vshrl.u32 %v6300, 7
    %v6302 = vsub.s32 7, %v6301
    %v6303 = vrot.slane %v593, %v6302
    %v6304 = vlaneseq
    %v6305 = vshrl.u32 %v6304, 7
    %v6306 = vsub.s32 7, %v6305
    %v6307 = vrot.slane %v594, %v6306
    %v6308 = vmul.f32 %v6220, %v6295
    %v6309 = vmul.f32 %v6221, %v6299
    %v6310 = vmul.f32 %v6222, %v6303
    %v6311 = vmul.f32 %v6284, %v6307
    %v6312 = vmul.f32 %v6223, %v6295
    %v6313 = vmul.f32 %v6224, %v6299
    %v6314 = vmul.f32 %v6225, %v6303
    %v6315 = vmul.f32 %v6285, %v6307
    %v6316 = vmul.f32 %v6226, %v6295
    %v6317 = vmul.f32 %v6227, %v6299
    %v6318 = vmul.f32 %v6228, %v6303
    %v6319 = vmul.f32 %v6286, %v6307
    %v6320 = vmul.f32 %v6229, %v6295
    %v6321 = vmul.f32 %v6230, %v6299
    %v6322 = vmul.f32 %v6231, %v6303
    %v6323 = vmul.f32 %v6287, %v6307
    %v6324 = vmul.f32 %v6232, %v6295
    %v6325 = vmul.f32 %v6233, %v6299
    %v6326 = vmul.f32 %v6234, %v6303
    %v6327 = vmul.f32 %v6288, %v6307
    %v6328 = vmul.f32 %v6235, %v6295
    %v6329 = vmul.f32 %v6236, %v6299
    %v6330 = vmul.f32 %v6237, %v6303
    %v6331 = vmul.f32 %v6289, %v6307
    %v6332 = vmul.f32 %v6238, %v6295
    %v6333 = vmul.f32 %v6239, %v6299
    %v6334 = vmul.f32 %v6240, %v6303
    %v6335 = vmul.f32 %v6290, %v6307
    %v6336 = vmul.f32 %v6241, %v6295
    %v6337 = vmul.f32 %v6242, %v6299
    %v6338 = vmul.f32 %v6243, %v6303
    %v6339 = vmul.f32 %v6291, %v6307
    %6340 = vrot.lane.b32.xlu0 %v5156, 96
    %v6341 = vpop.permute.xlu0 %6340
    %6342 = vrot.lane.b32.xlu0 %v5157, 96
    %v6343 = vpop.permute.xlu0 %6342
    %6344 = vrot.lane.b32.xlu0 %v5158, 96
    %v6345 = vpop.permute.xlu0 %6344
    %6346 = vrot.lane.b32.xlu0 %v5159, 96
    %v6347 = vpop.permute.xlu0 %6346
    %6348 = vrot.lane.b32.xlu0 %v5160, 96
    %v6349 = vpop.permute.xlu0 %6348
    %6350 = vrot.lane.b32.xlu0 %v5161, 96
    %v6351 = vpop.permute.xlu0 %6350
    %6352 = vrot.lane.b32.xlu0 %v5162, 96
    %v6353 = vpop.permute.xlu0 %6352
    %6354 = vrot.lane.b32.xlu0 %v5163, 96
    %v6355 = vpop.permute.xlu0 %6354
    %6356 = vrot.lane.b32.xlu0 %v5164, 96
    %v6357 = vpop.permute.xlu0 %6356
    %6358 = vrot.lane.b32.xlu0 %v5165, 96
    %v6359 = vpop.permute.xlu0 %6358
    %6360 = vrot.lane.b32.xlu0 %v5166, 96
    %v6361 = vpop.permute.xlu0 %6360
    %6362 = vrot.lane.b32.xlu0 %v5167, 96
    %v6363 = vpop.permute.xlu0 %6362
    %6364 = vrot.lane.b32.xlu0 %v5168, 96
    %v6365 = vpop.permute.xlu0 %6364
    %6366 = vrot.lane.b32.xlu0 %v5169, 96
    %v6367 = vpop.permute.xlu0 %6366
    %6368 = vrot.lane.b32.xlu0 %v5170, 96
    %v6369 = vpop.permute.xlu0 %6368
    %6370 = vrot.lane.b32.xlu0 %v5171, 96
    %v6371 = vpop.permute.xlu0 %6370
    %6372 = vrot.lane.b32.xlu0 %v5172, 96
    %v6373 = vpop.permute.xlu0 %6372
    %6374 = vrot.lane.b32.xlu0 %v5173, 96
    %v6375 = vpop.permute.xlu0 %6374
    %6376 = vrot.lane.b32.xlu0 %v5174, 96
    %v6377 = vpop.permute.xlu0 %6376
    %6378 = vrot.lane.b32.xlu0 %v5175, 96
    %v6379 = vpop.permute.xlu0 %6378
    %6380 = vrot.lane.b32.xlu0 %v5176, 96
    %v6381 = vpop.permute.xlu0 %6380
    %6382 = vrot.lane.b32.xlu0 %v5177, 96
    %v6383 = vpop.permute.xlu0 %6382
    %6384 = vrot.lane.b32.xlu0 %v5178, 96
    %v6385 = vpop.permute.xlu0 %6384
    %6386 = vrot.lane.b32.xlu0 %v5179, 96
    %v6387 = vpop.permute.xlu0 %6386
    %6388 = vrot.lane.b32.xlu0 %v5180, 96
    %v6389 = vpop.permute.xlu0 %6388
    %6390 = vrot.lane.b32.xlu0 %v5181, 96
    %v6391 = vpop.permute.xlu0 %6390
    %6392 = vrot.lane.b32.xlu0 %v5182, 96
    %v6393 = vpop.permute.xlu0 %6392
    %6394 = vrot.lane.b32.xlu0 %v5183, 96
    %v6395 = vpop.permute.xlu0 %6394
    %6396 = vrot.lane.b32.xlu0 %v5184, 96
    %v6397 = vpop.permute.xlu0 %6396
    %6398 = vrot.lane.b32.xlu0 %v5185, 96
    %v6399 = vpop.permute.xlu0 %6398
    %6400 = vrot.lane.b32.xlu0 %v5186, 96
    %v6401 = vpop.permute.xlu0 %6400
    %6402 = vrot.lane.b32.xlu0 %v5187, 96
    %v6403 = vpop.permute.xlu0 %6402
    %v6404 = vsel %vm3812, %v6341, %v6343
    %v6405 = vsel %vm3812, %v6343, %v6345
    %v6406 = vsel %vm3812, %v6345, %v6347
    %v6407 = vsel %vm3812, %v6349, %v6351
    %v6408 = vsel %vm3812, %v6351, %v6353
    %v6409 = vsel %vm3812, %v6353, %v6355
    %v6410 = vsel %vm3812, %v6357, %v6359
    %v6411 = vsel %vm3812, %v6359, %v6361
    %v6412 = vsel %vm3812, %v6361, %v6363
    %v6413 = vsel %vm3812, %v6365, %v6367
    %v6414 = vsel %vm3812, %v6367, %v6369
    %v6415 = vsel %vm3812, %v6369, %v6371
    %v6416 = vsel %vm3812, %v6373, %v6375
    %v6417 = vsel %vm3812, %v6375, %v6377
    %v6418 = vsel %vm3812, %v6377, %v6379
    %v6419 = vsel %vm3812, %v6381, %v6383
    %v6420 = vsel %vm3812, %v6383, %v6385
    %v6421 = vsel %vm3812, %v6385, %v6387
    %v6422 = vsel %vm3812, %v6389, %v6391
    %v6423 = vsel %vm3812, %v6391, %v6393
    %v6424 = vsel %vm3812, %v6393, %v6395
    %v6425 = vsel %vm3812, %v6397, %v6399
    %v6426 = vsel %vm3812, %v6399, %v6401
    %v6427 = vsel %vm3812, %v6401, %v6403
    %v6468 = vsel %vm3812, %v6347, %v6341
    %v6469 = vsel %vm3812, %v6355, %v6349
    %v6470 = vsel %vm3812, %v6363, %v6357
    %v6471 = vsel %vm3812, %v6371, %v6365
    %v6472 = vsel %vm3812, %v6379, %v6373
    %v6473 = vsel %vm3812, %v6387, %v6381
    %v6474 = vsel %vm3812, %v6395, %v6389
    %v6475 = vsel %vm3812, %v6403, %v6397
    %v6476 = vlaneseq
    %v6477 = vshrl.u32 %v6476, 7
    %v6478 = vsub.s32 0, %v6477
    %v6479 = vrot.slane %v595, %v6478
    %v6480 = vlaneseq
    %v6481 = vshrl.u32 %v6480, 7
    %v6482 = vsub.s32 0, %v6481
    %v6483 = vrot.slane %v596, %v6482
    %v6484 = vlaneseq
    %v6485 = vshrl.u32 %v6484, 7
    %v6486 = vsub.s32 0, %v6485
    %v6487 = vrot.slane %v597, %v6486
    %v6488 = vlaneseq
    %v6489 = vshrl.u32 %v6488, 7
    %v6490 = vsub.s32 0, %v6489
    %v6491 = vrot.slane %v598, %v6490
    %v6492 = vmul.f32 %v6404, %v6479
    %v6493 = vmul.f32 %v6405, %v6483
    %v6494 = vmul.f32 %v6406, %v6487
    %v6495 = vmul.f32 %v6468, %v6491
    %v6496 = vmul.f32 %v6407, %v6479
    %v6497 = vmul.f32 %v6408, %v6483
    %v6498 = vmul.f32 %v6409, %v6487
    %v6499 = vmul.f32 %v6469, %v6491
    %v6500 = vmul.f32 %v6410, %v6479
    %v6501 = vmul.f32 %v6411, %v6483
    %v6502 = vmul.f32 %v6412, %v6487
    %v6503 = vmul.f32 %v6470, %v6491
    %v6504 = vmul.f32 %v6413, %v6479
    %v6505 = vmul.f32 %v6414, %v6483
    %v6506 = vmul.f32 %v6415, %v6487
    %v6507 = vmul.f32 %v6471, %v6491
    %v6508 = vmul.f32 %v6416, %v6479
    %v6509 = vmul.f32 %v6417, %v6483
    %v6510 = vmul.f32 %v6418, %v6487
    %v6511 = vmul.f32 %v6472, %v6491
    %v6512 = vmul.f32 %v6419, %v6479
    %v6513 = vmul.f32 %v6420, %v6483
    %v6514 = vmul.f32 %v6421, %v6487
    %v6515 = vmul.f32 %v6473, %v6491
    %v6516 = vmul.f32 %v6422, %v6479
    %v6517 = vmul.f32 %v6423, %v6483
    %v6518 = vmul.f32 %v6424, %v6487
    %v6519 = vmul.f32 %v6474, %v6491
    %v6520 = vmul.f32 %v6425, %v6479
    %v6521 = vmul.f32 %v6426, %v6483
    %v6522 = vmul.f32 %v6427, %v6487
    %v6523 = vmul.f32 %v6475, %v6491
    %6524 = vrot.lane.b32.xlu0 %v5156, 94
    %v6525 = vpop.permute.xlu0 %6524
    %6526 = vrot.lane.b32.xlu0 %v5157, 94
    %v6527 = vpop.permute.xlu0 %6526
    %6528 = vrot.lane.b32.xlu0 %v5158, 94
    %v6529 = vpop.permute.xlu0 %6528
    %6530 = vrot.lane.b32.xlu0 %v5159, 94
    %v6531 = vpop.permute.xlu0 %6530
    %6532 = vrot.lane.b32.xlu0 %v5160, 94
    %v6533 = vpop.permute.xlu0 %6532
    %6534 = vrot.lane.b32.xlu0 %v5161, 94
    %v6535 = vpop.permute.xlu0 %6534
    %6536 = vrot.lane.b32.xlu0 %v5162, 94
    %v6537 = vpop.permute.xlu0 %6536
    %6538 = vrot.lane.b32.xlu0 %v5163, 94
    %v6539 = vpop.permute.xlu0 %6538
    %6540 = vrot.lane.b32.xlu0 %v5164, 94
    %v6541 = vpop.permute.xlu0 %6540
    %6542 = vrot.lane.b32.xlu0 %v5165, 94
    %v6543 = vpop.permute.xlu0 %6542
    %6544 = vrot.lane.b32.xlu0 %v5166, 94
    %v6545 = vpop.permute.xlu0 %6544
    %6546 = vrot.lane.b32.xlu0 %v5167, 94
    %v6547 = vpop.permute.xlu0 %6546
    %6548 = vrot.lane.b32.xlu0 %v5168, 94
    %v6549 = vpop.permute.xlu0 %6548
    %6550 = vrot.lane.b32.xlu0 %v5169, 94
    %v6551 = vpop.permute.xlu0 %6550
    %6552 = vrot.lane.b32.xlu0 %v5170, 94
    %v6553 = vpop.permute.xlu0 %6552
    %6554 = vrot.lane.b32.xlu0 %v5171, 94
    %v6555 = vpop.permute.xlu0 %6554
    %6556 = vrot.lane.b32.xlu0 %v5172, 94
    %v6557 = vpop.permute.xlu0 %6556
    %6558 = vrot.lane.b32.xlu0 %v5173, 94
    %v6559 = vpop.permute.xlu0 %6558
    %6560 = vrot.lane.b32.xlu0 %v5174, 94
    %v6561 = vpop.permute.xlu0 %6560
    %6562 = vrot.lane.b32.xlu0 %v5175, 94
    %v6563 = vpop.permute.xlu0 %6562
    %6564 = vrot.lane.b32.xlu0 %v5176, 94
    %v6565 = vpop.permute.xlu0 %6564
    %6566 = vrot.lane.b32.xlu0 %v5177, 94
    %v6567 = vpop.permute.xlu0 %6566
    %6568 = vrot.lane.b32.xlu0 %v5178, 94
    %v6569 = vpop.permute.xlu0 %6568
    %6570 = vrot.lane.b32.xlu0 %v5179, 94
    %v6571 = vpop.permute.xlu0 %6570
    %6572 = vrot.lane.b32.xlu0 %v5180, 94
    %v6573 = vpop.permute.xlu0 %6572
    %6574 = vrot.lane.b32.xlu0 %v5181, 94
    %v6575 = vpop.permute.xlu0 %6574
    %6576 = vrot.lane.b32.xlu0 %v5182, 94
    %v6577 = vpop.permute.xlu0 %6576
    %6578 = vrot.lane.b32.xlu0 %v5183, 94
    %v6579 = vpop.permute.xlu0 %6578
    %6580 = vrot.lane.b32.xlu0 %v5184, 94
    %v6581 = vpop.permute.xlu0 %6580
    %6582 = vrot.lane.b32.xlu0 %v5185, 94
    %v6583 = vpop.permute.xlu0 %6582
    %6584 = vrot.lane.b32.xlu0 %v5186, 94
    %v6585 = vpop.permute.xlu0 %6584
    %6586 = vrot.lane.b32.xlu0 %v5187, 94
    %v6587 = vpop.permute.xlu0 %6586
    %vm6588 = vcmask 769024
    %v6589 = vsel %vm6588, %v6525, %v6527
    %v6590 = vsel %vm6588, %v6527, %v6529
    %v6591 = vsel %vm6588, %v6529, %v6531
    %v6592 = vsel %vm6588, %v6533, %v6535
    %v6593 = vsel %vm6588, %v6535, %v6537
    %v6594 = vsel %vm6588, %v6537, %v6539
    %v6595 = vsel %vm6588, %v6541, %v6543
    %v6596 = vsel %vm6588, %v6543, %v6545
    %v6597 = vsel %vm6588, %v6545, %v6547
    %v6598 = vsel %vm6588, %v6549, %v6551
    %v6599 = vsel %vm6588, %v6551, %v6553
    %v6600 = vsel %vm6588, %v6553, %v6555
    %v6601 = vsel %vm6588, %v6557, %v6559
    %v6602 = vsel %vm6588, %v6559, %v6561
    %v6603 = vsel %vm6588, %v6561, %v6563
    %v6604 = vsel %vm6588, %v6565, %v6567
    %v6605 = vsel %vm6588, %v6567, %v6569
    %v6606 = vsel %vm6588, %v6569, %v6571
    %v6607 = vsel %vm6588, %v6573, %v6575
    %v6608 = vsel %vm6588, %v6575, %v6577
    %v6609 = vsel %vm6588, %v6577, %v6579
    %v6610 = vsel %vm6588, %v6581, %v6583
    %v6611 = vsel %vm6588, %v6583, %v6585
    %v6612 = vsel %vm6588, %v6585, %v6587
    %v6653 = vsel %vm6588, %v6531, %v6525
    %v6654 = vsel %vm6588, %v6539, %v6533
    %v6655 = vsel %vm6588, %v6547, %v6541
    %v6656 = vsel %vm6588, %v6555, %v6549
    %v6657 = vsel %vm6588, %v6563, %v6557
    %v6658 = vsel %vm6588, %v6571, %v6565
    %v6659 = vsel %vm6588, %v6579, %v6573
    %v6660 = vsel %vm6588, %v6587, %v6581
    %v6661 = vlaneseq
    %v6662 = vshrl.u32 %v6661, 7
    %v6663 = vsub.s32 1, %v6662
    %v6664 = vrot.slane %v595, %v6663
    %v6665 = vlaneseq
    %v6666 = vshrl.u32 %v6665, 7
    %v6667 = vsub.s32 1, %v6666
    %v6668 = vrot.slane %v596, %v6667
    %v6669 = vlaneseq
    %v6670 = vshrl.u32 %v6669, 7
    %v6671 = vsub.s32 1, %v6670
    %v6672 = vrot.slane %v597, %v6671
    %v6673 = vlaneseq
    %v6674 = vshrl.u32 %v6673, 7
    %v6675 = vsub.s32 1, %v6674
    %v6676 = vrot.slane %v598, %v6675
    %v6677 = vmul.f32 %v6589, %v6664
    %v6678 = vmul.f32 %v6590, %v6668
    %v6679 = vmul.f32 %v6591, %v6672
    %v6680 = vmul.f32 %v6653, %v6676
    %v6681 = vmul.f32 %v6592, %v6664
    %v6682 = vmul.f32 %v6593, %v6668
    %v6683 = vmul.f32 %v6594, %v6672
    %v6684 = vmul.f32 %v6654, %v6676
    %v6685 = vmul.f32 %v6595, %v6664
    %v6686 = vmul.f32 %v6596, %v6668
    %v6687 = vmul.f32 %v6597, %v6672
    %v6688 = vmul.f32 %v6655, %v6676
    %v6689 = vmul.f32 %v6598, %v6664
    %v6690 = vmul.f32 %v6599, %v6668
    %v6691 = vmul.f32 %v6600, %v6672
    %v6692 = vmul.f32 %v6656, %v6676
    %v6693 = vmul.f32 %v6601, %v6664
    %v6694 = vmul.f32 %v6602, %v6668
    %v6695 = vmul.f32 %v6603, %v6672
    %v6696 = vmul.f32 %v6657, %v6676
    %v6697 = vmul.f32 %v6604, %v6664
    %v6698 = vmul.f32 %v6605, %v6668
    %v6699 = vmul.f32 %v6606, %v6672
    %v6700 = vmul.f32 %v6658, %v6676
    %v6701 = vmul.f32 %v6607, %v6664
    %v6702 = vmul.f32 %v6608, %v6668
    %v6703 = vmul.f32 %v6609, %v6672
    %v6704 = vmul.f32 %v6659, %v6676
    %v6705 = vmul.f32 %v6610, %v6664
    %v6706 = vmul.f32 %v6611, %v6668
    %v6707 = vmul.f32 %v6612, %v6672
    %v6708 = vmul.f32 %v6660, %v6676
    %v6709 = vld [vmem:[%s13] sm:$0xff]
    %v6710 = vld [vmem:[%s13 + $0x8] sm:$0xff]
    %6712 = vset.pattern.permute.xlu0 0
    %6713 = vperm.xlu0 %6712, %v6709
    %v6714 = vpop.permute.xlu0 %6713
    %6717 = vset.pattern.permute.xlu0 0
    %6718 = vperm.xlu0 %6717, %v6710
    %v6719 = vpop.permute.xlu0 %6718
    %vm6721 = vcmask 523264
    %v6723 = vsel %vm6721, %v5192, 0
    %v6726 = vsel %vm6721, %v5197, 0
    %6728 = vmatprep.subr.mxu0 %v5384
    %6729 = vmatpush1.msra.mxu0 %v5383
    %6730 = vmatprep.subr.mxu0 %v5388
    %6731 = vmatpush1.msra.mxu0 %v5387
    %6732 = vmatprep.subr.mxu0 %v5392
    %6733 = vmatpush1.msra.mxu0 %v5391
    %6734 = vmatprep.subr.mxu0 %v5396
    %6735 = vmatpush1.msra.mxu0 %v5395
    %6736 = vmatprep.subr.mxu0 %v5400
    %6737 = vmatpush1.msra.mxu0 %v5399
    %6738 = vmatprep.subr.mxu0 %v5404
    %6739 = vmatpush1.msra.mxu0 %v5403
    %6740 = vmatprep.subr.mxu0 %v5408
    %6741 = vmatpush1.msra.mxu0 %v5407
    %6742 = vmatprep.subr.mxu0 %v5412
    %6743 = vmatpush1.msra.mxu0 %v5411
    %6744 = vmatprep.subr.mxu0 %v5569
    %6745 = vmatpush1.msra.mxu0 %v5568
    %6746 = vmatprep.subr.mxu0 %v5573
    %6747 = vmatpush1.msra.mxu0 %v5572
    %6748 = vmatprep.subr.mxu0 %v5577
    %6749 = vmatpush1.msra.mxu0 %v5576
    %6750 = vmatprep.subr.mxu0 %v5581
    %6751 = vmatpush1.msra.mxu0 %v5580
    %6752 = vmatprep.subr.mxu0 %v5585
    %6753 = vmatpush1.msra.mxu0 %v5584
    %6754 = vmatprep.subr.mxu0 %v5589
    %6755 = vmatpush1.msra.mxu0 %v5588
    %6756 = vmatprep.subr.mxu0 %v5593
    %6757 = vmatpush1.msra.mxu0 %v5592
    %6758 = vmatprep.subr.mxu0 %v5597
    %6759 = vmatpush1.msra.mxu0 %v5596
    %6760 = vmatprep.subr.mxu0 %v5754
    %6761 = vmatpush1.msra.mxu0 %v5753
    %6762 = vmatprep.subr.mxu0 %v5758
    %6763 = vmatpush1.msra.mxu0 %v5757
    %6764 = vmatprep.subr.mxu0 %v5762
    %6765 = vmatpush1.msra.mxu0 %v5761
    %6766 = vmatprep.subr.mxu0 %v5766
    %6767 = vmatpush1.msra.mxu0 %v5765
    %6768 = vmatprep.subr.mxu0 %v5770
    %6769 = vmatpush1.msra.mxu0 %v5769
    %6770 = vmatprep.subr.mxu0 %v5774
    %6771 = vmatpush1.msra.mxu0 %v5773
    %6772 = vmatprep.subr.mxu0 %v5778
    %6773 = vmatpush1.msra.mxu0 %v5777
    %6774 = vmatprep.subr.mxu0 %v5782
    %6775 = vmatpush1.msra.mxu0 %v5781
    %6776 = vmatprep.subr.mxu0 %v5939
    %6777 = vmatpush1.msra.mxu0 %v5938
    %6778 = vmatprep.subr.mxu0 %v5943
    %6779 = vmatpush1.msra.mxu0 %v5942
    %6780 = vmatprep.subr.mxu0 %v5947
    %6781 = vmatpush1.msra.mxu0 %v5946
    %6782 = vmatprep.subr.mxu0 %v5951
    %6783 = vmatpush1.msra.mxu0 %v5950
    %6784 = vmatprep.subr.mxu0 %v5955
    %6785 = vmatpush1.msra.mxu0 %v5954
    %6786 = vmatprep.subr.mxu0 %v5959
    %6787 = vmatpush1.msra.mxu0 %v5958
    %6788 = vmatprep.subr.mxu0 %v5963
    %6789 = vmatpush1.msra.mxu0 %v5962
    %6790 = vmatprep.subr.mxu0 %v5967
    %6791 = vmatpush1.msra.mxu0 %v5966
    %6792 = vmatprep.mubr.f32.mxu0 %v5189
    %6793 = vmatmul.mubr.f32.gmra.mrb[0].mxu0 %v5188
    %v6794 = vpop.f32.mrb[0].mxu0
    %v6795 = vadd.f32 %v6714, %v6794
    %v6796 = vpop.f32.mrb[0].mxu0
    %v6797 = vadd.f32 %v6714, %v6796
    %6798 = vmatprep.mubr.f32.mxu0 %v5194
    %6799 = vmatmul.mubr.f32.gmra.mrb[0].mxu0 %v5193
    %v6800 = vpop.f32.mrb[0].mxu0
    %v6801 = vadd.f32 %v6719, %v6800
    %v6802 = vpop.f32.mrb[0].mxu0
    %v6803 = vadd.f32 %v6719, %v6802
    %6804 = vdwg.mxu0
    %6805 = vmatprep.subr.mxu0 %v5157
    %6806 = vmatpush1.msra.mxu0 %v5156
    %6807 = vmatprep.subr.mxu0 %v5161
    %6808 = vmatpush1.msra.mxu0 %v5160
    %6809 = vmatprep.subr.mxu0 %v5165
    %6810 = vmatpush1.msra.mxu0 %v5164
    %6811 = vmatprep.subr.mxu0 %v5169
    %6812 = vmatpush1.msra.mxu0 %v5168
    %6813 = vmatprep.subr.mxu0 %v5173
    %6814 = vmatpush1.msra.mxu0 %v5172
    %6815 = vmatprep.subr.mxu0 %v5177
    %6816 = vmatpush1.msra.mxu0 %v5176
    %6817 = vmatprep.subr.mxu0 %v5181
    %6818 = vmatpush1.msra.mxu0 %v5180
    %6819 = vmatprep.subr.mxu0 %v5185
    %6820 = vmatpush1.msra.mxu0 %v5184
    %6821 = vmatprep.subr.mxu0 %v6124
    %6822 = vmatpush1.msra.mxu0 %v6123
    %6823 = vmatprep.subr.mxu0 %v6128
    %6824 = vmatpush1.msra.mxu0 %v6127
    %6825 = vmatprep.subr.mxu0 %v6132
    %6826 = vmatpush1.msra.mxu0 %v6131
    %6827 = vmatprep.subr.mxu0 %v6136
    %6828 = vmatpush1.msra.mxu0 %v6135
    %6829 = vmatprep.subr.mxu0 %v6140
    %6830 = vmatpush1.msra.mxu0 %v6139
    %6831 = vmatprep.subr.mxu0 %v6144
    %6832 = vmatpush1.msra.mxu0 %v6143
    %6833 = vmatprep.subr.mxu0 %v6148
    %6834 = vmatpush1.msra.mxu0 %v6147
    %6835 = vmatprep.subr.mxu0 %v6152
    %6836 = vmatpush1.msra.mxu0 %v6151
    %6837 = vmatprep.subr.mxu0 %v6309
    %6838 = vmatpush1.msra.mxu0 %v6308
    %6839 = vmatprep.subr.mxu0 %v6313
    %6840 = vmatpush1.msra.mxu0 %v6312
    %6841 = vmatprep.subr.mxu0 %v6317
    %6842 = vmatpush1.msra.mxu0 %v6316
    %6843 = vmatprep.subr.mxu0 %v6321
    %6844 = vmatpush1.msra.mxu0 %v6320
    %6845 = vmatprep.subr.mxu0 %v6325
    %6846 = vmatpush1.msra.mxu0 %v6324
    %6847 = vmatprep.subr.mxu0 %v6329
    %6848 = vmatpush1.msra.mxu0 %v6328
    %6849 = vmatprep.subr.mxu0 %v6333
    %6850 = vmatpush1.msra.mxu0 %v6332
    %6851 = vmatprep.subr.mxu0 %v6337
    %6852 = vmatpush1.msra.mxu0 %v6336
    %6853 = vmatprep.subr.mxu0 %v6493
    %6854 = vmatpush1.msra.mxu0 %v6492
    %6855 = vmatprep.subr.mxu0 %v6497
    %6856 = vmatpush1.msra.mxu0 %v6496
    %6857 = vmatprep.subr.mxu0 %v6501
    %6858 = vmatpush1.msra.mxu0 %v6500
    %6859 = vmatprep.subr.mxu0 %v6505
    %6860 = vmatpush1.msra.mxu0 %v6504
    %6861 = vmatprep.subr.mxu0 %v6509
    %6862 = vmatpush1.msra.mxu0 %v6508
    %6863 = vmatprep.subr.mxu0 %v6513
    %6864 = vmatpush1.msra.mxu0 %v6512
    %6865 = vmatprep.subr.mxu0 %v6517
    %6866 = vmatpush1.msra.mxu0 %v6516
    %6867 = vmatprep.subr.mxu0 %v6521
    %6868 = vmatpush1.msra.mxu0 %v6520
    %6869 = vmatprep.mubr.f32.mxu0 %v5191
    %6870 = vmatmul.mubr.f32.gmra.mrb[0].mxu0 %v5190
    %v6871 = vpop.f32.mrb[0].mxu0
    %v6872 = vadd.f32 %v6795, %v6871
    %v6873 = vpop.f32.mrb[0].mxu0
    %v6874 = vadd.f32 %v6797, %v6873
    %6875 = vmatprep.mubr.f32.mxu0 %v5196
    %6876 = vmatmul.mubr.f32.gmra.mrb[0].mxu0 %v5195
    %v6877 = vpop.f32.mrb[0].mxu0
    %v6878 = vadd.f32 %v6801, %v6877
    %v6879 = vpop.f32.mrb[0].mxu0
    %v6880 = vadd.f32 %v6803, %v6879
    %6881 = vdwg.mxu0
    %6882 = vmatprep.subr.mxu0 %v6678
    %6883 = vmatpush1.msra.mxu0 %v6677
    %6884 = vmatprep.subr.mxu0 %v6682
    %6885 = vmatpush1.msra.mxu0 %v6681
    %6886 = vmatprep.subr.mxu0 %v6686
    %6887 = vmatpush1.msra.mxu0 %v6685
    %6888 = vmatprep.subr.mxu0 %v6690
    %6889 = vmatpush1.msra.mxu0 %v6689
    %6890 = vmatprep.subr.mxu0 %v6694
    %6891 = vmatpush1.msra.mxu0 %v6693
    %6892 = vmatprep.subr.mxu0 %v6698
    %6893 = vmatpush1.msra.mxu0 %v6697
    %6894 = vmatprep.subr.mxu0 %v6702
    %6895 = vmatpush1.msra.mxu0 %v6701
    %6896 = vmatprep.subr.mxu0 %v6706
    %6897 = vmatpush1.msra.mxu0 %v6705
    %6898 = vmatprep.subr.mxu0 0.0
    %6899 = vmatpush1.msra.mxu0 0.0
    %6900 = vmatprep.subr.mxu0 0.0
    %6901 = vmatpush1.msra.mxu0 0.0
    %6902 = vmatprep.subr.mxu0 0.0
    %6903 = vmatpush1.msra.mxu0 0.0
    %6904 = vmatprep.subr.mxu0 0.0
    %6905 = vmatpush1.msra.mxu0 0.0
    %6906 = vmatprep.subr.mxu0 0.0
    %6907 = vmatpush1.msra.mxu0 0.0
    %6908 = vmatprep.subr.mxu0 0.0
    %6909 = vmatpush1.msra.mxu0 0.0
    %6910 = vmatprep.subr.mxu0 0.0
    %6911 = vmatpush1.msra.mxu0 0.0
    %6912 = vmatprep.subr.mxu0 0.0
    %6913 = vmatpush1.msra.mxu0 0.0
    %6914 = vmatprep.subr.mxu0 0.0
    %6915 = vmatpush1.msra.mxu0 0.0
    %6916 = vmatprep.subr.mxu0 0.0
    %6917 = vmatpush1.msra.mxu0 0.0
    %6918 = vmatprep.subr.mxu0 0.0
    %6919 = vmatpush1.msra.mxu0 0.0
    %6920 = vmatprep.subr.mxu0 0.0
    %6921 = vmatpush1.msra.mxu0 0.0
    %6922 = vmatprep.subr.mxu0 0.0
    %6923 = vmatpush1.msra.mxu0 0.0
    %6924 = vmatprep.subr.mxu0 0.0
    %6925 = vmatpush1.msra.mxu0 0.0
    %6926 = vmatprep.subr.mxu0 0.0
    %6927 = vmatpush1.msra.mxu0 0.0
    %6928 = vmatprep.subr.mxu0 0.0
    %6929 = vmatpush1.msra.mxu0 0.0
    %6930 = vmatprep.subr.mxu0 0.0
    %6931 = vmatpush1.msra.mxu0 0.0
    %6932 = vmatprep.subr.mxu0 0.0
    %6933 = vmatpush1.msra.mxu0 0.0
    %6934 = vmatprep.subr.mxu0 0.0
    %6935 = vmatpush1.msra.mxu0 0.0
    %6936 = vmatprep.subr.mxu0 0.0
    %6937 = vmatpush1.msra.mxu0 0.0
    %6938 = vmatprep.subr.mxu0 0.0
    %6939 = vmatpush1.msra.mxu0 0.0
    %6940 = vmatprep.subr.mxu0 0.0
    %6941 = vmatpush1.msra.mxu0 0.0
    %6942 = vmatprep.subr.mxu0 0.0
    %6943 = vmatpush1.msra.mxu0 0.0
    %6944 = vmatprep.subr.mxu0 0.0
    %6945 = vmatpush1.msra.mxu0 0.0
    %6946 = vmatprep.mubr.f32.mxu0 0.0
    %6947 = vmatmul.mubr.f32.gmra.mrb[0].mxu0 %v6723
    %v6948 = vpop.f32.mrb[0].mxu0
    %v6949 = vadd.f32 %v6872, %v6948
    %v6950 = vpop.f32.mrb[0].mxu0
    %v6951 = vadd.f32 %v6874, %v6950
    %6952 = vmatprep.mubr.f32.mxu0 0.0
    %6953 = vmatmul.mubr.f32.gmra.mrb[0].mxu0 %v6726
    %v6954 = vpop.f32.mrb[0].mxu0
    %v6955 = vadd.f32 %v6878, %v6954
    %v6956 = vpop.f32.mrb[0].mxu0
    %v6957 = vadd.f32 %v6880, %v6956
    %6958 = vdwg.mxu0
    %6959 = vmatprep.subr.mxu0 %v5386
    %6960 = vmatpush1.msra.mxu0 %v5385
    %6961 = vmatprep.subr.mxu0 %v5390
    %6962 = vmatpush1.msra.mxu0 %v5389
    %6963 = vmatprep.subr.mxu0 %v5394
    %6964 = vmatpush1.msra.mxu0 %v5393
    %6965 = vmatprep.subr.mxu0 %v5398
    %6966 = vmatpush1.msra.mxu0 %v5397
    %6967 = vmatprep.subr.mxu0 %v5402
    %6968 = vmatpush1.msra.mxu0 %v5401
    %6969 = vmatprep.subr.mxu0 %v5406
    %6970 = vmatpush1.msra.mxu0 %v5405
    %6971 = vmatprep.subr.mxu0 %v5410
    %6972 = vmatpush1.msra.mxu0 %v5409
    %6973 = vmatprep.subr.mxu0 %v5414
    %6974 = vmatpush1.msra.mxu0 %v5413
    %6975 = vmatprep.subr.mxu0 %v5571
    %6976 = vmatpush1.msra.mxu0 %v5570
    %6977 = vmatprep.subr.mxu0 %v5575
    %6978 = vmatpush1.msra.mxu0 %v5574
    %6979 = vmatprep.subr.mxu0 %v5579
    %6980 = vmatpush1.msra.mxu0 %v5578
    %6981 = vmatprep.subr.mxu0 %v5583
    %6982 = vmatpush1.msra.mxu0 %v5582
    %6983 = vmatprep.subr.mxu0 %v5587
    %6984 = vmatpush1.msra.mxu0 %v5586
    %6985 = vmatprep.subr.mxu0 %v5591
    %6986 = vmatpush1.msra.mxu0 %v5590
    %6987 = vmatprep.subr.mxu0 %v5595
    %6988 = vmatpush1.msra.mxu0 %v5594
    %6989 = vmatprep.subr.mxu0 %v5599
    %6990 = vmatpush1.msra.mxu0 %v5598
    %6991 = vmatprep.subr.mxu0 %v5756
    %6992 = vmatpush1.msra.mxu0 %v5755
    %6993 = vmatprep.subr.mxu0 %v5760
    %6994 = vmatpush1.msra.mxu0 %v5759
    %6995 = vmatprep.subr.mxu0 %v5764
    %6996 = vmatpush1.msra.mxu0 %v5763
    %6997 = vmatprep.subr.mxu0 %v5768
    %6998 = vmatpush1.msra.mxu0 %v5767
    %6999 = vmatprep.subr.mxu0 %v5772
    %7000 = vmatpush1.msra.mxu0 %v5771
    %7001 = vmatprep.subr.mxu0 %v5776
    %7002 = vmatpush1.msra.mxu0 %v5775
    %7003 = vmatprep.subr.mxu0 %v5780
    %7004 = vmatpush1.msra.mxu0 %v5779
    %7005 = vmatprep.subr.mxu0 %v5784
    %7006 = vmatpush1.msra.mxu0 %v5783
    %7007 = vmatprep.subr.mxu0 %v5941
    %7008 = vmatpush1.msra.mxu0 %v5940
    %7009 = vmatprep.subr.mxu0 %v5945
    %7010 = vmatpush1.msra.mxu0 %v5944
    %7011 = vmatprep.subr.mxu0 %v5949
    %7012 = vmatpush1.msra.mxu0 %v5948
    %7013 = vmatprep.subr.mxu0 %v5953
    %7014 = vmatpush1.msra.mxu0 %v5952
    %7015 = vmatprep.subr.mxu0 %v5957
    %7016 = vmatpush1.msra.mxu0 %v5956
    %7017 = vmatprep.subr.mxu0 %v5961
    %7018 = vmatpush1.msra.mxu0 %v5960
    %7019 = vmatprep.subr.mxu0 %v5965
    %7020 = vmatpush1.msra.mxu0 %v5964
    %7021 = vmatprep.subr.mxu0 %v5969
    %7022 = vmatpush1.msra.mxu0 %v5968
    %7023 = vmatprep.mubr.f32.mxu0 %v5189
    %7024 = vmatmul.mubr.f32.gmra.mrb[0].mxu0 %v5188
    %v7025 = vpop.f32.mrb[0].mxu0
    %v7026 = vadd.f32 %v6714, %v7025
    %v7027 = vpop.f32.mrb[0].mxu0
    %v7028 = vadd.f32 %v6714, %v7027
    %7029 = vmatprep.mubr.f32.mxu0 %v5194
    %7030 = vmatmul.mubr.f32.gmra.mrb[0].mxu0 %v5193
    %v7031 = vpop.f32.mrb[0].mxu0
    %v7032 = vadd.f32 %v6719, %v7031
    %v7033 = vpop.f32.mrb[0].mxu0
    %v7034 = vadd.f32 %v6719, %v7033
    %7035 = vdwg.mxu0
    %7036 = vmatprep.subr.mxu0 %v5159
    %7037 = vmatpush1.msra.mxu0 %v5158
    %7038 = vmatprep.subr.mxu0 %v5163
    %7039 = vmatpush1.msra.mxu0 %v5162
    %7040 = vmatprep.subr.mxu0 %v5167
    %7041 = vmatpush1.msra.mxu0 %v5166
    %7042 = vmatprep.subr.mxu0 %v5171
    %7043 = vmatpush1.msra.mxu0 %v5170
    %7044 = vmatprep.subr.mxu0 %v5175
    %7045 = vmatpush1.msra.mxu0 %v5174
    %7046 = vmatprep.subr.mxu0 %v5179
    %7047 = vmatpush1.msra.mxu0 %v5178
    %7048 = vmatprep.subr.mxu0 %v5183
    %7049 = vmatpush1.msra.mxu0 %v5182
    %7050 = vmatprep.subr.mxu0 %v5187
    %7051 = vmatpush1.msra.mxu0 %v5186
    %7052 = vmatprep.subr.mxu0 %v6126
    %7053 = vmatpush1.msra.mxu0 %v6125
    %7054 = vmatprep.subr.mxu0 %v6130
    %7055 = vmatpush1.msra.mxu0 %v6129
    %7056 = vmatprep.subr.mxu0 %v6134
    %7057 = vmatpush1.msra.mxu0 %v6133
    %7058 = vmatprep.subr.mxu0 %v6138
    %7059 = vmatpush1.msra.mxu0 %v6137
    %7060 = vmatprep.subr.mxu0 %v6142
    %7061 = vmatpush1.msra.mxu0 %v6141
    %7062 = vmatprep.subr.mxu0 %v6146
    %7063 = vmatpush1.msra.mxu0 %v6145
    %7064 = vmatprep.subr.mxu0 %v6150
    %7065 = vmatpush1.msra.mxu0 %v6149
    %7066 = vmatprep.subr.mxu0 %v6154
    %7067 = vmatpush1.msra.mxu0 %v6153
    %7068 = vmatprep.subr.mxu0 %v6311
    %7069 = vmatpush1.msra.mxu0 %v6310
    %7070 = vmatprep.subr.mxu0 %v6315
    %7071 = vmatpush1.msra.mxu0 %v6314
    %7072 = vmatprep.subr.mxu0 %v6319
    %7073 = vmatpush1.msra.mxu0 %v6318
    %7074 = vmatprep.subr.mxu0 %v6323
    %7075 = vmatpush1.msra.mxu0 %v6322
    %7076 = vmatprep.subr.mxu0 %v6327
    %7077 = vmatpush1.msra.mxu0 %v6326
    %7078 = vmatprep.subr.mxu0 %v6331
    %7079 = vmatpush1.msra.mxu0 %v6330
    %7080 = vmatprep.subr.mxu0 %v6335
    %7081 = vmatpush1.msra.mxu0 %v6334
    %7082 = vmatprep.subr.mxu0 %v6339
    %7083 = vmatpush1.msra.mxu0 %v6338
    %7084 = vmatprep.subr.mxu0 %v6495
    %7085 = vmatpush1.msra.mxu0 %v6494
    %7086 = vmatprep.subr.mxu0 %v6499
    %7087 = vmatpush1.msra.mxu0 %v6498
    %7088 = vmatprep.subr.mxu0 %v6503
    %7089 = vmatpush1.msra.mxu0 %v6502
    %7090 = vmatprep.subr.mxu0 %v6507
    %7091 = vmatpush1.msra.mxu0 %v6506
    %7092 = vmatprep.subr.mxu0 %v6511
    %7093 = vmatpush1.msra.mxu0 %v6510
    %7094 = vmatprep.subr.mxu0 %v6515
    %7095 = vmatpush1.msra.mxu0 %v6514
    %7096 = vmatprep.subr.mxu0 %v6519
    %7097 = vmatpush1.msra.mxu0 %v6518
    %7098 = vmatprep.subr.mxu0 %v6523
    %7099 = vmatpush1.msra.mxu0 %v6522
    %7100 = vmatprep.mubr.f32.mxu0 %v5191
    %7101 = vmatmul.mubr.f32.gmra.mrb[0].mxu0 %v5190
    %v7102 = vpop.f32.mrb[0].mxu0
    %v7103 = vadd.f32 %v7026, %v7102
    %v7104 = vpop.f32.mrb[0].mxu0
    %v7105 = vadd.f32 %v7028, %v7104
    %7106 = vmatprep.mubr.f32.mxu0 %v5196
    %7107 = vmatmul.mubr.f32.gmra.mrb[0].mxu0 %v5195
    %v7108 = vpop.f32.mrb[0].mxu0
    %v7109 = vadd.f32 %v7032, %v7108
    %v7110 = vpop.f32.mrb[0].mxu0
    %v7111 = vadd.f32 %v7034, %v7110
    %7112 = vdwg.mxu0
    %7113 = vmatprep.subr.mxu0 %v6680
    %7114 = vmatpush1.msra.mxu0 %v6679
    %7115 = vmatprep.subr.mxu0 %v6684
    %7116 = vmatpush1.msra.mxu0 %v6683
    %7117 = vmatprep.subr.mxu0 %v6688
    %7118 = vmatpush1.msra.mxu0 %v6687
    %7119 = vmatprep.subr.mxu0 %v6692
    %7120 = vmatpush1.msra.mxu0 %v6691
    %7121 = vmatprep.subr.mxu0 %v6696
    %7122 = vmatpush1.msra.mxu0 %v6695
    %7123 = vmatprep.subr.mxu0 %v6700
    %7124 = vmatpush1.msra.mxu0 %v6699
    %7125 = vmatprep.subr.mxu0 %v6704
    %7126 = vmatpush1.msra.mxu0 %v6703
    %7127 = vmatprep.subr.mxu0 %v6708
    %7128 = vmatpush1.msra.mxu0 %v6707
    %7129 = vmatprep.subr.mxu0 0.0
    %7130 = vmatpush1.msra.mxu0 0.0
    %7131 = vmatprep.subr.mxu0 0.0
    %7132 = vmatpush1.msra.mxu0 0.0
    %7133 = vmatprep.subr.mxu0 0.0
    %7134 = vmatpush1.msra.mxu0 0.0
    %7135 = vmatprep.subr.mxu0 0.0
    %7136 = vmatpush1.msra.mxu0 0.0
    %7137 = vmatprep.subr.mxu0 0.0
    %7138 = vmatpush1.msra.mxu0 0.0
    %7139 = vmatprep.subr.mxu0 0.0
    %7140 = vmatpush1.msra.mxu0 0.0
    %7141 = vmatprep.subr.mxu0 0.0
    %7142 = vmatpush1.msra.mxu0 0.0
    %7143 = vmatprep.subr.mxu0 0.0
    %7144 = vmatpush1.msra.mxu0 0.0
    %7145 = vmatprep.subr.mxu0 0.0
    %7146 = vmatpush1.msra.mxu0 0.0
    %7147 = vmatprep.subr.mxu0 0.0
    %7148 = vmatpush1.msra.mxu0 0.0
    %7149 = vmatprep.subr.mxu0 0.0
    %7150 = vmatpush1.msra.mxu0 0.0
    %7151 = vmatprep.subr.mxu0 0.0
    %7152 = vmatpush1.msra.mxu0 0.0
    %7153 = vmatprep.subr.mxu0 0.0
    %7154 = vmatpush1.msra.mxu0 0.0
    %7155 = vmatprep.subr.mxu0 0.0
    %7156 = vmatpush1.msra.mxu0 0.0
    %7157 = vmatprep.subr.mxu0 0.0
    %7158 = vmatpush1.msra.mxu0 0.0
    %7159 = vmatprep.subr.mxu0 0.0
    %7160 = vmatpush1.msra.mxu0 0.0
    %7161 = vmatprep.subr.mxu0 0.0
    %7162 = vmatpush1.msra.mxu0 0.0
    %7163 = vmatprep.subr.mxu0 0.0
    %7164 = vmatpush1.msra.mxu0 0.0
    %7165 = vmatprep.subr.mxu0 0.0
    %7166 = vmatpush1.msra.mxu0 0.0
    %7167 = vmatprep.subr.mxu0 0.0
    %7168 = vmatpush1.msra.mxu0 0.0
    %7169 = vmatprep.subr.mxu0 0.0
    %7170 = vmatpush1.msra.mxu0 0.0
    %7171 = vmatprep.subr.mxu0 0.0
    %7172 = vmatpush1.msra.mxu0 0.0
    %7173 = vmatprep.subr.mxu0 0.0
    %7174 = vmatpush1.msra.mxu0 0.0
    %7175 = vmatprep.subr.mxu0 0.0
    %7176 = vmatpush1.msra.mxu0 0.0
    %7177 = vmatprep.mubr.f32.mxu0 0.0
    %7178 = vmatmul.mubr.f32.gmra.mrb[0].mxu0 %v6723
    %v7179 = vpop.f32.mrb[0].mxu0
    %v7180 = vadd.f32 %v7103, %v7179
    %v7181 = vpop.f32.mrb[0].mxu0
    %v7182 = vadd.f32 %v7105, %v7181
    %7183 = vmatprep.mubr.f32.mxu0 0.0
    %7184 = vmatmul.mubr.f32.gmra.mrb[0].mxu0 %v6726
    %v7185 = vpop.f32.mrb[0].mxu0
    %v7186 = vadd.f32 %v7109, %v7185
    %v7187 = vpop.f32.mrb[0].mxu0
    %v7188 = vadd.f32 %v7111, %v7187
    %7189 = vdwg.mxu0
    %v7190 = vadd.f32 %v6949, %v470
    %v7191 = vadd.f32 %v6951, %v472
    %v7192 = vadd.f32 %v7180, %v571
    %v7193 = vadd.f32 %v7182, %v573
    %v7194 = vadd.f32 %v6955, %v476
    %v7195 = vadd.f32 %v6957, %v478
    %v7196 = vadd.f32 %v7186, %v577
    %v7197 = vadd.f32 %v7188, %v579
    %v7198 = vld [vmem:[#allocation8] sm:$0xff]
    %v7199 = vld [vmem:[#allocation8 + $0x8] sm:$0xff]
    %v7200 = vld [vmem:[#allocation8 + $0x10] sm:$0xff]
    %v7201 = vld [vmem:[#allocation8 + $0x18] sm:$0xff]
    %7203 = vrot.lane.b32.xlu0 %v585, 17
    %v7204 = vpop.permute.xlu0 %7203
    %7209 = vrot.lane.b32.xlu0 %v482, 17
    %v7210 = vpop.permute.xlu0 %7209
    %7211 = vrot.lane.b32.xlu0 %v484, 17
    %v7212 = vpop.permute.xlu0 %7211
    %7213 = vrot.lane.b32.xlu0 %v583, 17
    %v7214 = vpop.permute.xlu0 %7213
    %v7215 = vsel %vm666, %v7210, %v7212
    %v7216 = vsel %vm666, %v7212, %v7214
    %v7217 = vsel %vm666, %v7214, %v7204
    %v7222 = vsel %vm666, %v7204, %v7210
    %v7223 = vmul.f32 %v7222, %v694
    %v7224 = vmul.f32 %v7215, %v698
    %v7225 = vmul.f32 %v7216, %v702
    %v7226 = vmul.f32 %v7217, %v706
    %7227 = vrot.lane.b32.xlu0 %v585, 16
    %v7228 = vpop.permute.xlu0 %7227
    %7230 = vrot.lane.b32.xlu0 %v482, 16
    %v7231 = vpop.permute.xlu0 %7230
    %7232 = vrot.lane.b32.xlu0 %v484, 16
    %v7233 = vpop.permute.xlu0 %7232
    %7234 = vrot.lane.b32.xlu0 %v583, 16
    %v7235 = vpop.permute.xlu0 %7234
    %v7236 = vsel %vm366, %v7231, %v7233
    %v7237 = vsel %vm366, %v7233, %v7235
    %v7238 = vsel %vm366, %v7235, %v7228
    %v7243 = vsel %vm366, %v7228, %v7231
    %v7244 = vmul.f32 %v7243, %v773
    %v7245 = vmul.f32 %v7236, %v777
    %v7246 = vmul.f32 %v7237, %v781
    %v7247 = vmul.f32 %v7238, %v785
    %7248 = vrot.lane.b32.xlu0 %v585, 15
    %v7249 = vpop.permute.xlu0 %7248
    %7251 = vrot.lane.b32.xlu0 %v482, 15
    %v7252 = vpop.permute.xlu0 %7251
    %7253 = vrot.lane.b32.xlu0 %v484, 15
    %v7254 = vpop.permute.xlu0 %7253
    %7255 = vrot.lane.b32.xlu0 %v583, 15
    %v7256 = vpop.permute.xlu0 %7255
    %v7257 = vsel %vm825, %v7252, %v7254
    %v7258 = vsel %vm825, %v7254, %v7256
    %v7259 = vsel %vm825, %v7256, %v7249
    %v7264 = vsel %vm825, %v7249, %v7252
    %v7265 = vmul.f32 %v7264, %v853
    %v7266 = vmul.f32 %v7257, %v857
    %v7267 = vmul.f32 %v7258, %v861
    %v7268 = vmul.f32 %v7259, %v865
    %7269 = vrot.lane.b32.xlu0 %v585, 1
    %v7270 = vpop.permute.xlu0 %7269
    %7272 = vrot.lane.b32.xlu0 %v482, 1
    %v7273 = vpop.permute.xlu0 %7272
    %7274 = vrot.lane.b32.xlu0 %v484, 1
    %v7275 = vpop.permute.xlu0 %7274
    %7276 = vrot.lane.b32.xlu0 %v583, 1
    %v7277 = vpop.permute.xlu0 %7276
    %v7278 = vsel %vm905, %v7273, %v7275
    %v7279 = vsel %vm905, %v7275, %v7277
    %v7280 = vsel %vm905, %v7277, %v7270
    %v7285 = vsel %vm905, %v7270, %v7273
    %v7286 = vmul.f32 %v7285, %v933
    %v7287 = vmul.f32 %v7278, %v937
    %v7288 = vmul.f32 %v7279, %v941
    %v7289 = vmul.f32 %v7280, %v945
    %7290 = vrot.lane.b32.xlu0 %v482, 127
    %v7291 = vpop.permute.xlu0 %7290
    %7292 = vrot.lane.b32.xlu0 %v484, 127
    %v7293 = vpop.permute.xlu0 %7292
    %7294 = vrot.lane.b32.xlu0 %v583, 127
    %v7295 = vpop.permute.xlu0 %7294
    %7296 = vrot.lane.b32.xlu0 %v585, 127
    %v7297 = vpop.permute.xlu0 %7296
    %v7298 = vsel %vm982, %v7291, %v7293
    %v7299 = vsel %vm982, %v7293, %v7295
    %v7300 = vsel %vm982, %v7295, %v7297
    %v7306 = vsel %vm982, %v7297, %v7291
    %v7307 = vmul.f32 %v7298, %v1013
    %v7308 = vmul.f32 %v7299, %v1017
    %v7309 = vmul.f32 %v7300, %v1021
    %v7310 = vmul.f32 %v7306, %v1025
    %7311 = vrot.lane.b32.xlu0 %v482, 113
    %v7312 = vpop.permute.xlu0 %7311
    %7313 = vrot.lane.b32.xlu0 %v484, 113
    %v7314 = vpop.permute.xlu0 %7313
    %7315 = vrot.lane.b32.xlu0 %v583, 113
    %v7316 = vpop.permute.xlu0 %7315
    %7317 = vrot.lane.b32.xlu0 %v585, 113
    %v7318 = vpop.permute.xlu0 %7317
    %v7319 = vsel %vm1062, %v7312, %v7314
    %v7320 = vsel %vm1062, %v7314, %v7316
    %v7321 = vsel %vm1062, %v7316, %v7318
    %v7327 = vsel %vm1062, %v7318, %v7312
    %v7328 = vmul.f32 %v7319, %v1093
    %v7329 = vmul.f32 %v7320, %v1097
    %v7330 = vmul.f32 %v7321, %v1101
    %v7331 = vmul.f32 %v7327, %v1105
    %7332 = vrot.lane.b32.xlu0 %v482, 112
    %v7333 = vpop.permute.xlu0 %7332
    %7334 = vrot.lane.b32.xlu0 %v484, 112
    %v7335 = vpop.permute.xlu0 %7334
    %7336 = vrot.lane.b32.xlu0 %v583, 112
    %v7337 = vpop.permute.xlu0 %7336
    %7338 = vrot.lane.b32.xlu0 %v585, 112
    %v7339 = vpop.permute.xlu0 %7338
    %v7340 = vsel %vm1142, %v7333, %v7335
    %v7341 = vsel %vm1142, %v7335, %v7337
    %v7342 = vsel %vm1142, %v7337, %v7339
    %v7348 = vsel %vm1142, %v7339, %v7333
    %v7349 = vmul.f32 %v7340, %v1173
    %v7350 = vmul.f32 %v7341, %v1177
    %v7351 = vmul.f32 %v7342, %v1181
    %v7352 = vmul.f32 %v7348, %v1185
    %7353 = vrot.lane.b32.xlu0 %v482, 111
    %v7354 = vpop.permute.xlu0 %7353
    %7355 = vrot.lane.b32.xlu0 %v484, 111
    %v7356 = vpop.permute.xlu0 %7355
    %7357 = vrot.lane.b32.xlu0 %v583, 111
    %v7358 = vpop.permute.xlu0 %7357
    %7359 = vrot.lane.b32.xlu0 %v585, 111
    %v7360 = vpop.permute.xlu0 %7359
    %v7361 = vsel %vm1222, %v7354, %v7356
    %v7362 = vsel %vm1222, %v7356, %v7358
    %v7363 = vsel %vm1222, %v7358, %v7360
    %v7369 = vsel %vm1222, %v7360, %v7354
    %v7370 = vmul.f32 %v7361, %v1253
    %v7371 = vmul.f32 %v7362, %v1257
    %v7372 = vmul.f32 %v7363, %v1261
    %v7373 = vmul.f32 %v7369, %v1265
    %v7374 = vld [vmem:[%s15] sm:$0xff]
    %v7375 = vld [vmem:[%s15 + $0x8] sm:$0xff]
    %v7376 = vld [vmem:[%s15 + $0x10] sm:$0xff]
    %v7377 = vld [vmem:[%s15 + $0x18] sm:$0xff]
    %7379 = vset.pattern.permute.xlu0 0
    %7380 = vperm.xlu0 %7379, %v7374
    %v7381 = vpop.permute.xlu0 %7380
    %7384 = vset.pattern.permute.xlu0 0
    %7385 = vperm.xlu0 %7384, %v7375
    %v7386 = vpop.permute.xlu0 %7385
    %7389 = vset.pattern.permute.xlu0 0
    %7390 = vperm.xlu0 %7389, %v7376
    %v7391 = vpop.permute.xlu0 %7390
    %7394 = vset.pattern.permute.xlu0 0
    %7395 = vperm.xlu0 %7394, %v7377
    %v7396 = vpop.permute.xlu0 %7395
    %vm7398 = vcmask 588800
    %v7400 = vsel %vm7398, %v7198, 0
    %v7403 = vsel %vm7398, %v7199, 0
    %v7406 = vsel %vm7398, %v7200, 0
    %v7409 = vsel %vm7398, %v7201, 0
    %7411 = vmatprep.subr.mxu0 %v7224
    %7412 = vmatpush1.msra.mxu0 %v7223
    %7413 = vmatprep.subr.mxu0 %v7245
    %7414 = vmatpush1.msra.mxu0 %v7244
    %7415 = vmatprep.subr.mxu0 %v7266
    %7416 = vmatpush1.msra.mxu0 %v7265
    %7417 = vmatprep.subr.mxu0 %v7287
    %7418 = vmatpush1.msra.mxu0 %v7286
    %7419 = vmatprep.subr.mxu0 %v484
    %7420 = vmatpush1.msra.mxu0 %v482
    %7421 = vmatprep.subr.mxu0 %v7308
    %7422 = vmatpush1.msra.mxu0 %v7307
    %7423 = vmatprep.subr.mxu0 %v7329
    %7424 = vmatpush1.msra.mxu0 %v7328
    %7425 = vmatprep.subr.mxu0 %v7350
    %7426 = vmatpush1.msra.mxu0 %v7349
    %7427 = vmatprep.subr.mxu0 %v7371
    %7428 = vmatpush1.msra.mxu0 %v7370
    %7429 = vmatprep.subr.mxu0 0.0
    %7430 = vmatpush1.msra.mxu0 0.0
    %7431 = vmatprep.subr.mxu0 0.0
    %7432 = vmatpush1.msra.mxu0 0.0
    %7433 = vmatprep.subr.mxu0 0.0
    %7434 = vmatpush1.msra.mxu0 0.0
    %7435 = vmatprep.subr.mxu0 0.0
    %7436 = vmatpush1.msra.mxu0 0.0
    %7437 = vmatprep.subr.mxu0 0.0
    %7438 = vmatpush1.msra.mxu0 0.0
    %7439 = vmatprep.subr.mxu0 0.0
    %7440 = vmatpush1.msra.mxu0 0.0
    %7441 = vmatprep.subr.mxu0 0.0
    %7442 = vmatpush1.msra.mxu0 0.0
    %7443 = vmatprep.subr.mxu0 0.0
    %7444 = vmatpush1.msra.mxu0 0.0
    %7445 = vmatprep.subr.mxu0 0.0
    %7446 = vmatpush1.msra.mxu0 0.0
    %7447 = vmatprep.subr.mxu0 0.0
    %7448 = vmatpush1.msra.mxu0 0.0
    %7449 = vmatprep.subr.mxu0 0.0
    %7450 = vmatpush1.msra.mxu0 0.0
    %7451 = vmatprep.subr.mxu0 0.0
    %7452 = vmatpush1.msra.mxu0 0.0
    %7453 = vmatprep.subr.mxu0 0.0
    %7454 = vmatpush1.msra.mxu0 0.0
    %7455 = vmatprep.subr.mxu0 0.0
    %7456 = vmatpush1.msra.mxu0 0.0
    %7457 = vmatprep.subr.mxu0 0.0
    %7458 = vmatpush1.msra.mxu0 0.0
    %7459 = vmatprep.subr.mxu0 0.0
    %7460 = vmatpush1.msra.mxu0 0.0
    %7461 = vmatprep.subr.mxu0 0.0
    %7462 = vmatpush1.msra.mxu0 0.0
    %7463 = vmatprep.subr.mxu0 0.0
    %7464 = vmatpush1.msra.mxu0 0.0
    %7465 = vmatprep.subr.mxu0 0.0
    %7466 = vmatpush1.msra.mxu0 0.0
    %7467 = vmatprep.subr.mxu0 0.0
    %7468 = vmatpush1.msra.mxu0 0.0
    %7469 = vmatprep.subr.mxu0 0.0
    %7470 = vmatpush1.msra.mxu0 0.0
    %7471 = vmatprep.subr.mxu0 0.0
    %7472 = vmatpush1.msra.mxu0 0.0
    %7473 = vmatprep.subr.mxu0 0.0
    %7474 = vmatpush1.msra.mxu0 0.0
    %7475 = vmatprep.mubr.f32.mxu0 0.0
    %7476 = vmatmul.mubr.f32.gmra.mrb[0].mxu0 %v7400
    %v7477 = vpop.f32.mrb[0].mxu0
    %v7478 = vadd.f32 %v7381, %v7477
    %v7479 = vpop.f32.mrb[0].mxu0
    %v7480 = vadd.f32 %v7381, %v7479
    %7481 = vmatprep.mubr.f32.mxu0 0.0
    %7482 = vmatmul.mubr.f32.gmra.mrb[0].mxu0 %v7403
    %v7483 = vpop.f32.mrb[0].mxu0
    %v7484 = vadd.f32 %v7386, %v7483
    %v7485 = vpop.f32.mrb[0].mxu0
    %v7486 = vadd.f32 %v7386, %v7485
    %7487 = vmatprep.mubr.f32.mxu0 0.0
    %7488 = vmatmul.mubr.f32.gmra.mrb[0].mxu0 %v7406
    %v7489 = vpop.f32.mrb[0].mxu0
    %v7490 = vadd.f32 %v7391, %v7489
    %v7491 = vpop.f32.mrb[0].mxu0
    %v7492 = vadd.f32 %v7391, %v7491
    %7493 = vmatprep.mubr.f32.mxu0 0.0
    %7494 = vmatmul.mubr.f32.gmra.mrb[0].mxu0 %v7409
    %v7495 = vpop.f32.mrb[0].mxu0
    %v7496 = vadd.f32 %v7396, %v7495
    %v7497 = vpop.f32.mrb[0].mxu0
    %v7498 = vadd.f32 %v7396, %v7497
    %7499 = vdwg.mxu0
    %7500 = vmatprep.subr.mxu0 %v7226
    %7501 = vmatpush1.msra.mxu0 %v7225
    %7502 = vmatprep.subr.mxu0 %v7247
    %7503 = vmatpush1.msra.mxu0 %v7246
    %7504 = vmatprep.subr.mxu0 %v7268
    %7505 = vmatpush1.msra.mxu0 %v7267
    %7506 = vmatprep.subr.mxu0 %v7289
    %7507 = vmatpush1.msra.mxu0 %v7288
    %7508 = vmatprep.subr.mxu0 %v585
    %7509 = vmatpush1.msra.mxu0 %v583
    %7510 = vmatprep.subr.mxu0 %v7310
    %7511 = vmatpush1.msra.mxu0 %v7309
    %7512 = vmatprep.subr.mxu0 %v7331
    %7513 = vmatpush1.msra.mxu0 %v7330
    %7514 = vmatprep.subr.mxu0 %v7352
    %7515 = vmatpush1.msra.mxu0 %v7351
    %7516 = vmatprep.subr.mxu0 %v7373
    %7517 = vmatpush1.msra.mxu0 %v7372
    %7518 = vmatprep.subr.mxu0 0.0
    %7519 = vmatpush1.msra.mxu0 0.0
    %7520 = vmatprep.subr.mxu0 0.0
    %7521 = vmatpush1.msra.mxu0 0.0
    %7522 = vmatprep.subr.mxu0 0.0
    %7523 = vmatpush1.msra.mxu0 0.0
    %7524 = vmatprep.subr.mxu0 0.0
    %7525 = vmatpush1.msra.mxu0 0.0
    %7526 = vmatprep.subr.mxu0 0.0
    %7527 = vmatpush1.msra.mxu0 0.0
    %7528 = vmatprep.subr.mxu0 0.0
    %7529 = vmatpush1.msra.mxu0 0.0
    %7530 = vmatprep.subr.mxu0 0.0
    %7531 = vmatpush1.msra.mxu0 0.0
    %7532 = vmatprep.subr.mxu0 0.0
    %7533 = vmatpush1.msra.mxu0 0.0
    %7534 = vmatprep.subr.mxu0 0.0
    %7535 = vmatpush1.msra.mxu0 0.0
    %7536 = vmatprep.subr.mxu0 0.0
    %7537 = vmatpush1.msra.mxu0 0.0
    %7538 = vmatprep.subr.mxu0 0.0
    %7539 = vmatpush1.msra.mxu0 0.0
    %7540 = vmatprep.subr.mxu0 0.0
    %7541 = vmatpush1.msra.mxu0 0.0
    %7542 = vmatprep.subr.mxu0 0.0
    %7543 = vmatpush1.msra.mxu0 0.0
    %7544 = vmatprep.subr.mxu0 0.0
    %7545 = vmatpush1.msra.mxu0 0.0
    %7546 = vmatprep.subr.mxu0 0.0
    %7547 = vmatpush1.msra.mxu0 0.0
    %7548 = vmatprep.subr.mxu0 0.0
    %7549 = vmatpush1.msra.mxu0 0.0
    %7550 = vmatprep.subr.mxu0 0.0
    %7551 = vmatpush1.msra.mxu0 0.0
    %7552 = vmatprep.subr.mxu0 0.0
    %7553 = vmatpush1.msra.mxu0 0.0
    %7554 = vmatprep.subr.mxu0 0.0
    %7555 = vmatpush1.msra.mxu0 0.0
    %7556 = vmatprep.subr.mxu0 0.0
    %7557 = vmatpush1.msra.mxu0 0.0
    %7558 = vmatprep.subr.mxu0 0.0
    %7559 = vmatpush1.msra.mxu0 0.0
    %7560 = vmatprep.subr.mxu0 0.0
    %7561 = vmatpush1.msra.mxu0 0.0
    %7562 = vmatprep.subr.mxu0 0.0
    %7563 = vmatpush1.msra.mxu0 0.0
    %7564 = vmatprep.mubr.f32.mxu0 0.0
    %7565 = vmatmul.mubr.f32.gmra.mrb[0].mxu0 %v7400
    %v7566 = vpop.f32.mrb[0].mxu0
    %v7567 = vadd.f32 %v7381, %v7566
    %v7568 = vpop.f32.mrb[0].mxu0
    %v7569 = vadd.f32 %v7381, %v7568
    %7570 = vmatprep.mubr.f32.mxu0 0.0
    %7571 = vmatmul.mubr.f32.gmra.mrb[0].mxu0 %v7403
    %v7572 = vpop.f32.mrb[0].mxu0
    %v7573 = vadd.f32 %v7386, %v7572
    %v7574 = vpop.f32.mrb[0].mxu0
    %v7575 = vadd.f32 %v7386, %v7574
    %7576 = vmatprep.mubr.f32.mxu0 0.0
    %7577 = vmatmul.mubr.f32.gmra.mrb[0].mxu0 %v7406
    %v7578 = vpop.f32.mrb[0].mxu0
    %v7579 = vadd.f32 %v7391, %v7578
    %v7580 = vpop.f32.mrb[0].mxu0
    %v7581 = vadd.f32 %v7391, %v7580
    %7582 = vmatprep.mubr.f32.mxu0 0.0
    %7583 = vmatmul.mubr.f32.gmra.mrb[0].mxu0 %v7409
    %v7584 = vpop.f32.mrb[0].mxu0
    %v7585 = vadd.f32 %v7396, %v7584
    %v7586 = vpop.f32.mrb[0].mxu0
    %v7587 = vadd.f32 %v7396, %v7586
    %7588 = vdwg.mxu0
    %v7589 = vmax.f32 %v7478, 0.0
    %v7590 = vmax.f32 %v7480, 0.0
    %v7591 = vmax.f32 %v7567, 0.0
    %v7592 = vmax.f32 %v7569, 0.0
    %v7593 = vmax.f32 %v7484, 0.0
    %v7594 = vmax.f32 %v7486, 0.0
    %v7595 = vmax.f32 %v7573, 0.0
    %v7596 = vmax.f32 %v7575, 0.0
    %v7597 = vmax.f32 %v7490, 0.0
    %v7598 = vmax.f32 %v7492, 0.0
    %v7599 = vmax.f32 %v7579, 0.0
    %v7600 = vmax.f32 %v7581, 0.0
    %v7601 = vmax.f32 %v7496, 0.0
    %v7602 = vmax.f32 %v7498, 0.0
    %v7603 = vmax.f32 %v7585, 0.0
    %v7604 = vmax.f32 %v7587, 0.0
    %v7605 = vld [vmem:[%s16] sm:$0xff]
    %v7606 = vld [vmem:[%s16 + $0x8] sm:$0xff]
    %v7607 = vld [vmem:[%s16 + $0x10] sm:$0xff]
    %7612 = vrot.lane.b32.xlu0 %v7592, 51
    %v7613 = vpop.permute.xlu0 %7612
    %7614 = vrot.lane.b32.xlu0 %v7596, 51
    %v7615 = vpop.permute.xlu0 %7614
    %7616 = vrot.lane.b32.xlu0 %v7600, 51
    %v7617 = vpop.permute.xlu0 %7616
    %7618 = vrot.lane.b32.xlu0 %v7604, 51
    %v7619 = vpop.permute.xlu0 %7618
    %7636 = vrot.lane.b32.xlu0 %v7589, 51
    %v7637 = vpop.permute.xlu0 %7636
    %7638 = vrot.lane.b32.xlu0 %v7590, 51
    %v7639 = vpop.permute.xlu0 %7638
    %7640 = vrot.lane.b32.xlu0 %v7591, 51
    %v7641 = vpop.permute.xlu0 %7640
    %7642 = vrot.lane.b32.xlu0 %v7593, 51
    %v7643 = vpop.permute.xlu0 %7642
    %7644 = vrot.lane.b32.xlu0 %v7594, 51
    %v7645 = vpop.permute.xlu0 %7644
    %7646 = vrot.lane.b32.xlu0 %v7595, 51
    %v7647 = vpop.permute.xlu0 %7646
    %7648 = vrot.lane.b32.xlu0 %v7597, 51
    %v7649 = vpop.permute.xlu0 %7648
    %7650 = vrot.lane.b32.xlu0 %v7598, 51
    %v7651 = vpop.permute.xlu0 %7650
    %7652 = vrot.lane.b32.xlu0 %v7599, 51
    %v7653 = vpop.permute.xlu0 %7652
    %7654 = vrot.lane.b32.xlu0 %v7601, 51
    %v7655 = vpop.permute.xlu0 %7654
    %7656 = vrot.lane.b32.xlu0 %v7602, 51
    %v7657 = vpop.permute.xlu0 %7656
    %7658 = vrot.lane.b32.xlu0 %v7603, 51
    %v7659 = vpop.permute.xlu0 %7658
    %vm7660 = vcmask 416768
    %v7661 = vsel %vm7660, %v7637, %v7639
    %v7662 = vsel %vm7660, %v7639, %v7641
    %v7663 = vsel %vm7660, %v7641, %v7613
    %v7664 = vsel %vm7660, %v7643, %v7645
    %v7665 = vsel %vm7660, %v7645, %v7647
    %v7666 = vsel %vm7660, %v7647, %v7615
    %v7667 = vsel %vm7660, %v7649, %v7651
    %v7668 = vsel %vm7660, %v7651, %v7653
    %v7669 = vsel %vm7660, %v7653, %v7617
    %v7670 = vsel %vm7660, %v7655, %v7657
    %v7671 = vsel %vm7660, %v7657, %v7659
    %v7672 = vsel %vm7660, %v7659, %v7619
    %v7689 = vsel %vm7660, %v7613, %v7637
    %v7690 = vsel %vm7660, %v7615, %v7643
    %v7691 = vsel %vm7660, %v7617, %v7649
    %v7692 = vsel %vm7660, %v7619, %v7655
    %v7693 = vlaneseq
    %v7694 = vshrl.u32 %v7693, 7
    %v7695 = vsub.s32 2, %v7694
    %v7696 = vrot.slane %v595, %v7695
    %v7697 = vlaneseq
    %v7698 = vshrl.u32 %v7697, 7
    %v7699 = vsub.s32 2, %v7698
    %v7700 = vrot.slane %v596, %v7699
    %v7701 = vlaneseq
    %v7702 = vshrl.u32 %v7701, 7
    %v7703 = vsub.s32 2, %v7702
    %v7704 = vrot.slane %v597, %v7703
    %v7705 = vlaneseq
    %v7706 = vshrl.u32 %v7705, 7
    %v7707 = vsub.s32 2, %v7706
    %v7708 = vrot.slane %v598, %v7707
    %v7709 = vmul.f32 %v7689, %v7696
    %v7710 = vmul.f32 %v7661, %v7700
    %v7711 = vmul.f32 %v7662, %v7704
    %v7712 = vmul.f32 %v7663, %v7708
    %v7713 = vmul.f32 %v7690, %v7696
    %v7714 = vmul.f32 %v7664, %v7700
    %v7715 = vmul.f32 %v7665, %v7704
    %v7716 = vmul.f32 %v7666, %v7708
    %v7717 = vmul.f32 %v7691, %v7696
    %v7718 = vmul.f32 %v7667, %v7700
    %v7719 = vmul.f32 %v7668, %v7704
    %v7720 = vmul.f32 %v7669, %v7708
    %v7721 = vmul.f32 %v7692, %v7696
    %v7722 = vmul.f32 %v7670, %v7700
    %v7723 = vmul.f32 %v7671, %v7704
    %v7724 = vmul.f32 %v7672, %v7708
    %7725 = vrot.lane.b32.xlu0 %v7592, 48
    %v7726 = vpop.permute.xlu0 %7725
    %7727 = vrot.lane.b32.xlu0 %v7596, 48
    %v7728 = vpop.permute.xlu0 %7727
    %7729 = vrot.lane.b32.xlu0 %v7600, 48
    %v7730 = vpop.permute.xlu0 %7729
    %7731 = vrot.lane.b32.xlu0 %v7604, 48
    %v7732 = vpop.permute.xlu0 %7731
    %7737 = vrot.lane.b32.xlu0 %v7589, 48
    %v7738 = vpop.permute.xlu0 %7737
    %7739 = vrot.lane.b32.xlu0 %v7590, 48
    %v7740 = vpop.permute.xlu0 %7739
    %7741 = vrot.lane.b32.xlu0 %v7591, 48
    %v7742 = vpop.permute.xlu0 %7741
    %7743 = vrot.lane.b32.xlu0 %v7593, 48
    %v7744 = vpop.permute.xlu0 %7743
    %7745 = vrot.lane.b32.xlu0 %v7594, 48
    %v7746 = vpop.permute.xlu0 %7745
    %7747 = vrot.lane.b32.xlu0 %v7595, 48
    %v7748 = vpop.permute.xlu0 %7747
    %7749 = vrot.lane.b32.xlu0 %v7597, 48
    %v7750 = vpop.permute.xlu0 %7749
    %7751 = vrot.lane.b32.xlu0 %v7598, 48
    %v7752 = vpop.permute.xlu0 %7751
    %7753 = vrot.lane.b32.xlu0 %v7599, 48
    %v7754 = vpop.permute.xlu0 %7753
    %7755 = vrot.lane.b32.xlu0 %v7601, 48
    %v7756 = vpop.permute.xlu0 %7755
    %7757 = vrot.lane.b32.xlu0 %v7602, 48
    %v7758 = vpop.permute.xlu0 %7757
    %7759 = vrot.lane.b32.xlu0 %v7603, 48
    %v7760 = vpop.permute.xlu0 %7759
    %vm7761 = vcmask 392192
    %v7762 = vsel %vm7761, %v7738, %v7740
    %v7763 = vsel %vm7761, %v7740, %v7742
    %v7764 = vsel %vm7761, %v7742, %v7726
    %v7765 = vsel %vm7761, %v7744, %v7746
    %v7766 = vsel %vm7761, %v7746, %v7748
    %v7767 = vsel %vm7761, %v7748, %v7728
    %v7768 = vsel %vm7761, %v7750, %v7752
    %v7769 = vsel %vm7761, %v7752, %v7754
    %v7770 = vsel %vm7761, %v7754, %v7730
    %v7771 = vsel %vm7761, %v7756, %v7758
    %v7772 = vsel %vm7761, %v7758, %v7760
    %v7773 = vsel %vm7761, %v7760, %v7732
    %v7790 = vsel %vm7761, %v7726, %v7738
    %v7791 = vsel %vm7761, %v7728, %v7744
    %v7792 = vsel %vm7761, %v7730, %v7750
    %v7793 = vsel %vm7761, %v7732, %v7756
    %v7794 = vlaneseq
    %v7795 = vshrl.u32 %v7794, 7
    %v7796 = vsub.s32 3, %v7795
    %v7797 = vrot.slane %v595, %v7796
    %v7798 = vlaneseq
    %v7799 = vshrl.u32 %v7798, 7
    %v7800 = vsub.s32 3, %v7799
    %v7801 = vrot.slane %v596, %v7800
    %v7802 = vlaneseq
    %v7803 = vshrl.u32 %v7802, 7
    %v7804 = vsub.s32 3, %v7803
    %v7805 = vrot.slane %v597, %v7804
    %v7806 = vlaneseq
    %v7807 = vshrl.u32 %v7806, 7
    %v7808 = vsub.s32 3, %v7807
    %v7809 = vrot.slane %v598, %v7808
    %v7810 = vmul.f32 %v7790, %v7797
    %v7811 = vmul.f32 %v7762, %v7801
    %v7812 = vmul.f32 %v7763, %v7805
    %v7813 = vmul.f32 %v7764, %v7809
    %v7814 = vmul.f32 %v7791, %v7797
    %v7815 = vmul.f32 %v7765, %v7801
    %v7816 = vmul.f32 %v7766, %v7805
    %v7817 = vmul.f32 %v7767, %v7809
    %v7818 = vmul.f32 %v7792, %v7797
    %v7819 = vmul.f32 %v7768, %v7801
    %v7820 = vmul.f32 %v7769, %v7805
    %v7821 = vmul.f32 %v7770, %v7809
    %v7822 = vmul.f32 %v7793, %v7797
    %v7823 = vmul.f32 %v7771, %v7801
    %v7824 = vmul.f32 %v7772, %v7805
    %v7825 = vmul.f32 %v7773, %v7809
    %7826 = vrot.lane.b32.xlu0 %v7592, 45
    %v7827 = vpop.permute.xlu0 %7826
    %7828 = vrot.lane.b32.xlu0 %v7596, 45
    %v7829 = vpop.permute.xlu0 %7828
    %7830 = vrot.lane.b32.xlu0 %v7600, 45
    %v7831 = vpop.permute.xlu0 %7830
    %7832 = vrot.lane.b32.xlu0 %v7604, 45
    %v7833 = vpop.permute.xlu0 %7832
    %7838 = vrot.lane.b32.xlu0 %v7589, 45
    %v7839 = vpop.permute.xlu0 %7838
    %7840 = vrot.lane.b32.xlu0 %v7590, 45
    %v7841 = vpop.permute.xlu0 %7840
    %7842 = vrot.lane.b32.xlu0 %v7591, 45
    %v7843 = vpop.permute.xlu0 %7842
    %7844 = vrot.lane.b32.xlu0 %v7593, 45
    %v7845 = vpop.permute.xlu0 %7844
    %7846 = vrot.lane.b32.xlu0 %v7594, 45
    %v7847 = vpop.permute.xlu0 %7846
    %7848 = vrot.lane.b32.xlu0 %v7595, 45
    %v7849 = vpop.permute.xlu0 %7848
    %7850 = vrot.lane.b32.xlu0 %v7597, 45
    %v7851 = vpop.permute.xlu0 %7850
    %7852 = vrot.lane.b32.xlu0 %v7598, 45
    %v7853 = vpop.permute.xlu0 %7852
    %7854 = vrot.lane.b32.xlu0 %v7599, 45
    %v7855 = vpop.permute.xlu0 %7854
    %7856 = vrot.lane.b32.xlu0 %v7601, 45
    %v7857 = vpop.permute.xlu0 %7856
    %7858 = vrot.lane.b32.xlu0 %v7602, 45
    %v7859 = vpop.permute.xlu0 %7858
    %7860 = vrot.lane.b32.xlu0 %v7603, 45
    %v7861 = vpop.permute.xlu0 %7860
    %vm7862 = vcmask 367616
    %v7863 = vsel %vm7862, %v7839, %v7841
    %v7864 = vsel %vm7862, %v7841, %v7843
    %v7865 = vsel %vm7862, %v7843, %v7827
    %v7866 = vsel %vm7862, %v7845, %v7847
    %v7867 = vsel %vm7862, %v7847, %v7849
    %v7868 = vsel %vm7862, %v7849, %v7829
    %v7869 = vsel %vm7862, %v7851, %v7853
    %v7870 = vsel %vm7862, %v7853, %v7855
    %v7871 = vsel %vm7862, %v7855, %v7831
    %v7872 = vsel %vm7862, %v7857, %v7859
    %v7873 = vsel %vm7862, %v7859, %v7861
    %v7874 = vsel %vm7862, %v7861, %v7833
    %v7891 = vsel %vm7862, %v7827, %v7839
    %v7892 = vsel %vm7862, %v7829, %v7845
    %v7893 = vsel %vm7862, %v7831, %v7851
    %v7894 = vsel %vm7862, %v7833, %v7857
    %v7895 = vlaneseq
    %v7896 = vshrl.u32 %v7895, 7
    %v7897 = vsub.s32 4, %v7896
    %v7898 = vrot.slane %v595, %v7897
    %v7899 = vlaneseq
    %v7900 = vshrl.u32 %v7899, 7
    %v7901 = vsub.s32 4, %v7900
    %v7902 = vrot.slane %v596, %v7901
    %v7903 = vlaneseq
    %v7904 = vshrl.u32 %v7903, 7
    %v7905 = vsub.s32 4, %v7904
    %v7906 = vrot.slane %v597, %v7905
    %v7907 = vlaneseq
    %v7908 = vshrl.u32 %v7907, 7
    %v7909 = vsub.s32 4, %v7908
    %v7910 = vrot.slane %v598, %v7909
    %v7911 = vmul.f32 %v7891, %v7898
    %v7912 = vmul.f32 %v7863, %v7902
    %v7913 = vmul.f32 %v7864, %v7906
    %v7914 = vmul.f32 %v7865, %v7910
    %v7915 = vmul.f32 %v7892, %v7898
    %v7916 = vmul.f32 %v7866, %v7902
    %v7917 = vmul.f32 %v7867, %v7906
    %v7918 = vmul.f32 %v7868, %v7910
    %v7919 = vmul.f32 %v7893, %v7898
    %v7920 = vmul.f32 %v7869, %v7902
    %v7921 = vmul.f32 %v7870, %v7906
    %v7922 = vmul.f32 %v7871, %v7910
    %v7923 = vmul.f32 %v7894, %v7898
    %v7924 = vmul.f32 %v7872, %v7902
    %v7925 = vmul.f32 %v7873, %v7906
    %v7926 = vmul.f32 %v7874, %v7910
    %7927 = vrot.lane.b32.xlu0 %v7592, 3
    %v7928 = vpop.permute.xlu0 %7927
    %7929 = vrot.lane.b32.xlu0 %v7596, 3
    %v7930 = vpop.permute.xlu0 %7929
    %7931 = vrot.lane.b32.xlu0 %v7600, 3
    %v7932 = vpop.permute.xlu0 %7931
    %7933 = vrot.lane.b32.xlu0 %v7604, 3
    %v7934 = vpop.permute.xlu0 %7933
    %7939 = vrot.lane.b32.xlu0 %v7589, 3
    %v7940 = vpop.permute.xlu0 %7939
    %7941 = vrot.lane.b32.xlu0 %v7590, 3
    %v7942 = vpop.permute.xlu0 %7941
    %7943 = vrot.lane.b32.xlu0 %v7591, 3
    %v7944 = vpop.permute.xlu0 %7943
    %7945 = vrot.lane.b32.xlu0 %v7593, 3
    %v7946 = vpop.permute.xlu0 %7945
    %7947 = vrot.lane.b32.xlu0 %v7594, 3
    %v7948 = vpop.permute.xlu0 %7947
    %7949 = vrot.lane.b32.xlu0 %v7595, 3
    %v7950 = vpop.permute.xlu0 %7949
    %7951 = vrot.lane.b32.xlu0 %v7597, 3
    %v7952 = vpop.permute.xlu0 %7951
    %7953 = vrot.lane.b32.xlu0 %v7598, 3
    %v7954 = vpop.permute.xlu0 %7953
    %7955 = vrot.lane.b32.xlu0 %v7599, 3
    %v7956 = vpop.permute.xlu0 %7955
    %7957 = vrot.lane.b32.xlu0 %v7601, 3
    %v7958 = vpop.permute.xlu0 %7957
    %7959 = vrot.lane.b32.xlu0 %v7602, 3
    %v7960 = vpop.permute.xlu0 %7959
    %7961 = vrot.lane.b32.xlu0 %v7603, 3
    %v7962 = vpop.permute.xlu0 %7961
    %vm7963 = vcmask 23552
    %v7964 = vsel %vm7963, %v7940, %v7942
    %v7965 = vsel %vm7963, %v7942, %v7944
    %v7966 = vsel %vm7963, %v7944, %v7928
    %v7967 = vsel %vm7963, %v7946, %v7948
    %v7968 = vsel %vm7963, %v7948, %v7950
    %v7969 = vsel %vm7963, %v7950, %v7930
    %v7970 = vsel %vm7963, %v7952, %v7954
    %v7971 = vsel %vm7963, %v7954, %v7956
    %v7972 = vsel %vm7963, %v7956, %v7932
    %v7973 = vsel %vm7963, %v7958, %v7960
    %v7974 = vsel %vm7963, %v7960, %v7962
    %v7975 = vsel %vm7963, %v7962, %v7934
    %v7992 = vsel %vm7963, %v7928, %v7940
    %v7993 = vsel %vm7963, %v7930, %v7946
    %v7994 = vsel %vm7963, %v7932, %v7952
    %v7995 = vsel %vm7963, %v7934, %v7958
    %v7996 = vlaneseq
    %v7997 = vshrl.u32 %v7996, 7
    %v7998 = vsub.s32 5, %v7997
    %v7999 = vrot.slane %v595, %v7998
    %v8000 = vlaneseq
    %v8001 = vshrl.u32 %v8000, 7
    %v8002 = vsub.s32 5, %v8001
    %v8003 = vrot.slane %v596, %v8002
    %v8004 = vlaneseq
    %v8005 = vshrl.u32 %v8004, 7
    %v8006 = vsub.s32 5, %v8005
    %v8007 = vrot.slane %v597, %v8006
    %v8008 = vlaneseq
    %v8009 = vshrl.u32 %v8008, 7
    %v8010 = vsub.s32 5, %v8009
    %v8011 = vrot.slane %v598, %v8010
    %v8012 = vmul.f32 %v7992, %v7999
    %v8013 = vmul.f32 %v7964, %v8003
    %v8014 = vmul.f32 %v7965, %v8007
    %v8015 = vmul.f32 %v7966, %v8011
    %v8016 = vmul.f32 %v7993, %v7999
    %v8017 = vmul.f32 %v7967, %v8003
    %v8018 = vmul.f32 %v7968, %v8007
    %v8019 = vmul.f32 %v7969, %v8011
    %v8020 = vmul.f32 %v7994, %v7999
    %v8021 = vmul.f32 %v7970, %v8003
    %v8022 = vmul.f32 %v7971, %v8007
    %v8023 = vmul.f32 %v7972, %v8011
    %v8024 = vmul.f32 %v7995, %v7999
    %v8025 = vmul.f32 %v7973, %v8003
    %v8026 = vmul.f32 %v7974, %v8007
    %v8027 = vmul.f32 %v7975, %v8011
    %8028 = vrot.lane.b32.xlu0 %v7589, 125
    %v8029 = vpop.permute.xlu0 %8028
    %8030 = vrot.lane.b32.xlu0 %v7590, 125
    %v8031 = vpop.permute.xlu0 %8030
    %8032 = vrot.lane.b32.xlu0 %v7591, 125
    %v8033 = vpop.permute.xlu0 %8032
    %8034 = vrot.lane.b32.xlu0 %v7592, 125
    %v8035 = vpop.permute.xlu0 %8034
    %8036 = vrot.lane.b32.xlu0 %v7593, 125
    %v8037 = vpop.permute.xlu0 %8036
    %8038 = vrot.lane.b32.xlu0 %v7594, 125
    %v8039 = vpop.permute.xlu0 %8038
    %8040 = vrot.lane.b32.xlu0 %v7595, 125
    %v8041 = vpop.permute.xlu0 %8040
    %8042 = vrot.lane.b32.xlu0 %v7596, 125
    %v8043 = vpop.permute.xlu0 %8042
    %8044 = vrot.lane.b32.xlu0 %v7597, 125
    %v8045 = vpop.permute.xlu0 %8044
    %8046 = vrot.lane.b32.xlu0 %v7598, 125
    %v8047 = vpop.permute.xlu0 %8046
    %8048 = vrot.lane.b32.xlu0 %v7599, 125
    %v8049 = vpop.permute.xlu0 %8048
    %8050 = vrot.lane.b32.xlu0 %v7600, 125
    %v8051 = vpop.permute.xlu0 %8050
    %8052 = vrot.lane.b32.xlu0 %v7601, 125
    %v8053 = vpop.permute.xlu0 %8052
    %8054 = vrot.lane.b32.xlu0 %v7602, 125
    %v8055 = vpop.permute.xlu0 %8054
    %8056 = vrot.lane.b32.xlu0 %v7603, 125
    %v8057 = vpop.permute.xlu0 %8056
    %8058 = vrot.lane.b32.xlu0 %v7604, 125
    %v8059 = vpop.permute.xlu0 %8058
    %vm8060 = vcmask 1022976
    %v8061 = vsel %vm8060, %v8029, %v8031
    %v8062 = vsel %vm8060, %v8031, %v8033
    %v8063 = vsel %vm8060, %v8033, %v8035
    %v8064 = vsel %vm8060, %v8037, %v8039
    %v8065 = vsel %vm8060, %v8039, %v8041
    %v8066 = vsel %vm8060, %v8041, %v8043
    %v8067 = vsel %vm8060, %v8045, %v8047
    %v8068 = vsel %vm8060, %v8047, %v8049
    %v8069 = vsel %vm8060, %v8049, %v8051
    %v8070 = vsel %vm8060, %v8053, %v8055
    %v8071 = vsel %vm8060, %v8055, %v8057
    %v8072 = vsel %vm8060, %v8057, %v8059
    %v8093 = vsel %vm8060, %v8035, %v8029
    %v8094 = vsel %vm8060, %v8043, %v8037
    %v8095 = vsel %vm8060, %v8051, %v8045
    %v8096 = vsel %vm8060, %v8059, %v8053
    %v8097 = vlaneseq
    %v8098 = vshrl.u32 %v8097, 7
    %v8099 = vsub.s32 7, %v8098
    %v8100 = vrot.slane %v595, %v8099
    %v8101 = vlaneseq
    %v8102 = vshrl.u32 %v8101, 7
    %v8103 = vsub.s32 7, %v8102
    %v8104 = vrot.slane %v596, %v8103
    %v8105 = vlaneseq
    %v8106 = vshrl.u32 %v8105, 7
    %v8107 = vsub.s32 7, %v8106
    %v8108 = vrot.slane %v597, %v8107
    %v8109 = vlaneseq
    %v8110 = vshrl.u32 %v8109, 7
    %v8111 = vsub.s32 7, %v8110
    %v8112 = vrot.slane %v598, %v8111
    %v8113 = vmul.f32 %v8061, %v8100
    %v8114 = vmul.f32 %v8062, %v8104
    %v8115 = vmul.f32 %v8063, %v8108
    %v8116 = vmul.f32 %v8093, %v8112
    %v8117 = vmul.f32 %v8064, %v8100
    %v8118 = vmul.f32 %v8065, %v8104
    %v8119 = vmul.f32 %v8066, %v8108
    %v8120 = vmul.f32 %v8094, %v8112
    %v8121 = vmul.f32 %v8067, %v8100
    %v8122 = vmul.f32 %v8068, %v8104
    %v8123 = vmul.f32 %v8069, %v8108
    %v8124 = vmul.f32 %v8095, %v8112
    %v8125 = vmul.f32 %v8070, %v8100
    %v8126 = vmul.f32 %v8071, %v8104
    %v8127 = vmul.f32 %v8072, %v8108
    %v8128 = vmul.f32 %v8096, %v8112
    %8129 = vrot.lane.b32.xlu0 %v7589, 83
    %v8130 = vpop.permute.xlu0 %8129
    %8131 = vrot.lane.b32.xlu0 %v7590, 83
    %v8132 = vpop.permute.xlu0 %8131
    %8133 = vrot.lane.b32.xlu0 %v7591, 83
    %v8134 = vpop.permute.xlu0 %8133
    %8135 = vrot.lane.b32.xlu0 %v7592, 83
    %v8136 = vpop.permute.xlu0 %8135
    %8137 = vrot.lane.b32.xlu0 %v7593, 83
    %v8138 = vpop.permute.xlu0 %8137
    %8139 = vrot.lane.b32.xlu0 %v7594, 83
    %v8140 = vpop.permute.xlu0 %8139
    %8141 = vrot.lane.b32.xlu0 %v7595, 83
    %v8142 = vpop.permute.xlu0 %8141
    %8143 = vrot.lane.b32.xlu0 %v7596, 83
    %v8144 = vpop.permute.xlu0 %8143
    %8145 = vrot.lane.b32.xlu0 %v7597, 83
    %v8146 = vpop.permute.xlu0 %8145
    %8147 = vrot.lane.b32.xlu0 %v7598, 83
    %v8148 = vpop.permute.xlu0 %8147
    %8149 = vrot.lane.b32.xlu0 %v7599, 83
    %v8150 = vpop.permute.xlu0 %8149
    %8151 = vrot.lane.b32.xlu0 %v7600, 83
    %v8152 = vpop.permute.xlu0 %8151
    %8153 = vrot.lane.b32.xlu0 %v7601, 83
    %v8154 = vpop.permute.xlu0 %8153
    %8155 = vrot.lane.b32.xlu0 %v7602, 83
    %v8156 = vpop.permute.xlu0 %8155
    %8157 = vrot.lane.b32.xlu0 %v7603, 83
    %v8158 = vpop.permute.xlu0 %8157
    %8159 = vrot.lane.b32.xlu0 %v7604, 83
    %v8160 = vpop.permute.xlu0 %8159
    %vm8161 = vcmask 678912
    %v8162 = vsel %vm8161, %v8130, %v8132
    %v8163 = vsel %vm8161, %v8132, %v8134
    %v8164 = vsel %vm8161, %v8134, %v8136
    %v8165 = vsel %vm8161, %v8138, %v8140
    %v8166 = vsel %vm8161, %v8140, %v8142
    %v8167 = vsel %vm8161, %v8142, %v8144
    %v8168 = vsel %vm8161, %v8146, %v8148
    %v8169 = vsel %vm8161, %v8148, %v8150
    %v8170 = vsel %vm8161, %v8150, %v8152
    %v8171 = vsel %vm8161, %v8154, %v8156
    %v8172 = vsel %vm8161, %v8156, %v8158
    %v8173 = vsel %vm8161, %v8158, %v8160
    %v8194 = vsel %vm8161, %v8136, %v8130
    %v8195 = vsel %vm8161, %v8144, %v8138
    %v8196 = vsel %vm8161, %v8152, %v8146
    %v8197 = vsel %vm8161, %v8160, %v8154
    %v8198 = vlaneseq
    %v8199 = vshrl.u32 %v8198, 7
    %v8200 = vsub.s32 0, %v8199
    %v8201 = vrot.slane %v599, %v8200
    %v8202 = vlaneseq
    %v8203 = vshrl.u32 %v8202, 7
    %v8204 = vsub.s32 0, %v8203
    %v8205 = vrot.slane %v600, %v8204
    %v8206 = vlaneseq
    %v8207 = vshrl.u32 %v8206, 7
    %v8208 = vsub.s32 0, %v8207
    %v8209 = vrot.slane %v601, %v8208
    %v8210 = vlaneseq
    %v8211 = vshrl.u32 %v8210, 7
    %v8212 = vsub.s32 0, %v8211
    %v8213 = vrot.slane %v602, %v8212
    %v8214 = vmul.f32 %v8162, %v8201
    %v8215 = vmul.f32 %v8163, %v8205
    %v8216 = vmul.f32 %v8164, %v8209
    %v8217 = vmul.f32 %v8194, %v8213
    %v8218 = vmul.f32 %v8165, %v8201
    %v8219 = vmul.f32 %v8166, %v8205
    %v8220 = vmul.f32 %v8167, %v8209
    %v8221 = vmul.f32 %v8195, %v8213
    %v8222 = vmul.f32 %v8168, %v8201
    %v8223 = vmul.f32 %v8169, %v8205
    %v8224 = vmul.f32 %v8170, %v8209
    %v8225 = vmul.f32 %v8196, %v8213
    %v8226 = vmul.f32 %v8171, %v8201
    %v8227 = vmul.f32 %v8172, %v8205
    %v8228 = vmul.f32 %v8173, %v8209
    %v8229 = vmul.f32 %v8197, %v8213
    %8230 = vrot.lane.b32.xlu0 %v7589, 80
    %v8231 = vpop.permute.xlu0 %8230
    %8232 = vrot.lane.b32.xlu0 %v7590, 80
    %v8233 = vpop.permute.xlu0 %8232
    %8234 = vrot.lane.b32.xlu0 %v7591, 80
    %v8235 = vpop.permute.xlu0 %8234
    %8236 = vrot.lane.b32.xlu0 %v7592, 80
    %v8237 = vpop.permute.xlu0 %8236
    %8238 = vrot.lane.b32.xlu0 %v7593, 80
    %v8239 = vpop.permute.xlu0 %8238
    %8240 = vrot.lane.b32.xlu0 %v7594, 80
    %v8241 = vpop.permute.xlu0 %8240
    %8242 = vrot.lane.b32.xlu0 %v7595, 80
    %v8243 = vpop.permute.xlu0 %8242
    %8244 = vrot.lane.b32.xlu0 %v7596, 80
    %v8245 = vpop.permute.xlu0 %8244
    %8246 = vrot.lane.b32.xlu0 %v7597, 80
    %v8247 = vpop.permute.xlu0 %8246
    %8248 = vrot.lane.b32.xlu0 %v7598, 80
    %v8249 = vpop.permute.xlu0 %8248
    %8250 = vrot.lane.b32.xlu0 %v7599, 80
    %v8251 = vpop.permute.xlu0 %8250
    %8252 = vrot.lane.b32.xlu0 %v7600, 80
    %v8253 = vpop.permute.xlu0 %8252
    %8254 = vrot.lane.b32.xlu0 %v7601, 80
    %v8255 = vpop.permute.xlu0 %8254
    %8256 = vrot.lane.b32.xlu0 %v7602, 80
    %v8257 = vpop.permute.xlu0 %8256
    %8258 = vrot.lane.b32.xlu0 %v7603, 80
    %v8259 = vpop.permute.xlu0 %8258
    %8260 = vrot.lane.b32.xlu0 %v7604, 80
    %v8261 = vpop.permute.xlu0 %8260
    %vm8262 = vcmask 654336
    %v8263 = vsel %vm8262, %v8231, %v8233
    %v8264 = vsel %vm8262, %v8233, %v8235
    %v8265 = vsel %vm8262, %v8235, %v8237
    %v8266 = vsel %vm8262, %v8239, %v8241
    %v8267 = vsel %vm8262, %v8241, %v8243
    %v8268 = vsel %vm8262, %v8243, %v8245
    %v8269 = vsel %vm8262, %v8247, %v8249
    %v8270 = vsel %vm8262, %v8249, %v8251
    %v8271 = vsel %vm8262, %v8251, %v8253
    %v8272 = vsel %vm8262, %v8255, %v8257
    %v8273 = vsel %vm8262, %v8257, %v8259
    %v8274 = vsel %vm8262, %v8259, %v8261
    %v8295 = vsel %vm8262, %v8237, %v8231
    %v8296 = vsel %vm8262, %v8245, %v8239
    %v8297 = vsel %vm8262, %v8253, %v8247
    %v8298 = vsel %vm8262, %v8261, %v8255
    %v8299 = vlaneseq
    %v8300 = vshrl.u32 %v8299, 7
    %v8301 = vsub.s32 1, %v8300
    %v8302 = vrot.slane %v599, %v8301
    %v8303 = vlaneseq
    %v8304 = vshrl.u32 %v8303, 7
    %v8305 = vsub.s32 1, %v8304
    %v8306 = vrot.slane %v600, %v8305
    %v8307 = vlaneseq
    %v8308 = vshrl.u32 %v8307, 7
    %v8309 = vsub.s32 1, %v8308
    %v8310 = vrot.slane %v601, %v8309
    %v8311 = vlaneseq
    %v8312 = vshrl.u32 %v8311, 7
    %v8313 = vsub.s32 1, %v8312
    %v8314 = vrot.slane %v602, %v8313
    %v8315 = vmul.f32 %v8263, %v8302
    %v8316 = vmul.f32 %v8264, %v8306
    %v8317 = vmul.f32 %v8265, %v8310
    %v8318 = vmul.f32 %v8295, %v8314
    %v8319 = vmul.f32 %v8266, %v8302
    %v8320 = vmul.f32 %v8267, %v8306
    %v8321 = vmul.f32 %v8268, %v8310
    %v8322 = vmul.f32 %v8296, %v8314
    %v8323 = vmul.f32 %v8269, %v8302
    %v8324 = vmul.f32 %v8270, %v8306
    %v8325 = vmul.f32 %v8271, %v8310
    %v8326 = vmul.f32 %v8297, %v8314
    %v8327 = vmul.f32 %v8272, %v8302
    %v8328 = vmul.f32 %v8273, %v8306
    %v8329 = vmul.f32 %v8274, %v8310
    %v8330 = vmul.f32 %v8298, %v8314
    %8331 = vrot.lane.b32.xlu0 %v7589, 77
    %v8332 = vpop.permute.xlu0 %8331
    %8333 = vrot.lane.b32.xlu0 %v7590, 77
    %v8334 = vpop.permute.xlu0 %8333
    %8335 = vrot.lane.b32.xlu0 %v7591, 77
    %v8336 = vpop.permute.xlu0 %8335
    %8337 = vrot.lane.b32.xlu0 %v7592, 77
    %v8338 = vpop.permute.xlu0 %8337
    %8339 = vrot.lane.b32.xlu0 %v7593, 77
    %v8340 = vpop.permute.xlu0 %8339
    %8341 = vrot.lane.b32.xlu0 %v7594, 77
    %v8342 = vpop.permute.xlu0 %8341
    %8343 = vrot.lane.b32.xlu0 %v7595, 77
    %v8344 = vpop.permute.xlu0 %8343
    %8345 = vrot.lane.b32.xlu0 %v7596, 77
    %v8346 = vpop.permute.xlu0 %8345
    %8347 = vrot.lane.b32.xlu0 %v7597, 77
    %v8348 = vpop.permute.xlu0 %8347
    %8349 = vrot.lane.b32.xlu0 %v7598, 77
    %v8350 = vpop.permute.xlu0 %8349
    %8351 = vrot.lane.b32.xlu0 %v7599, 77
    %v8352 = vpop.permute.xlu0 %8351
    %8353 = vrot.lane.b32.xlu0 %v7600, 77
    %v8354 = vpop.permute.xlu0 %8353
    %8355 = vrot.lane.b32.xlu0 %v7601, 77
    %v8356 = vpop.permute.xlu0 %8355
    %8357 = vrot.lane.b32.xlu0 %v7602, 77
    %v8358 = vpop.permute.xlu0 %8357
    %8359 = vrot.lane.b32.xlu0 %v7603, 77
    %v8360 = vpop.permute.xlu0 %8359
    %8361 = vrot.lane.b32.xlu0 %v7604, 77
    %v8362 = vpop.permute.xlu0 %8361
    %vm8363 = vcmask 629760
    %v8364 = vsel %vm8363, %v8332, %v8334
    %v8365 = vsel %vm8363, %v8334, %v8336
    %v8366 = vsel %vm8363, %v8336, %v8338
    %v8367 = vsel %vm8363, %v8340, %v8342
    %v8368 = vsel %vm8363, %v8342, %v8344
    %v8369 = vsel %vm8363, %v8344, %v8346
    %v8370 = vsel %vm8363, %v8348, %v8350
    %v8371 = vsel %vm8363, %v8350, %v8352
    %v8372 = vsel %vm8363, %v8352, %v8354
    %v8373 = vsel %vm8363, %v8356, %v8358
    %v8374 = vsel %vm8363, %v8358, %v8360
    %v8375 = vsel %vm8363, %v8360, %v8362
    %v8396 = vsel %vm8363, %v8338, %v8332
    %v8397 = vsel %vm8363, %v8346, %v8340
    %v8398 = vsel %vm8363, %v8354, %v8348
    %v8399 = vsel %vm8363, %v8362, %v8356
    %v8400 = vlaneseq
    %v8401 = vshrl.u32 %v8400, 7
    %v8402 = vsub.s32 2, %v8401
    %v8403 = vrot.slane %v599, %v8402
    %v8404 = vlaneseq
    %v8405 = vshrl.u32 %v8404, 7
    %v8406 = vsub.s32 2, %v8405
    %v8407 = vrot.slane %v600, %v8406
    %v8408 = vlaneseq
    %v8409 = vshrl.u32 %v8408, 7
    %v8410 = vsub.s32 2, %v8409
    %v8411 = vrot.slane %v601, %v8410
    %v8412 = vlaneseq
    %v8413 = vshrl.u32 %v8412, 7
    %v8414 = vsub.s32 2, %v8413
    %v8415 = vrot.slane %v602, %v8414
    %v8416 = vmul.f32 %v8364, %v8403
    %v8417 = vmul.f32 %v8365, %v8407
    %v8418 = vmul.f32 %v8366, %v8411
    %v8419 = vmul.f32 %v8396, %v8415
    %v8420 = vmul.f32 %v8367, %v8403
    %v8421 = vmul.f32 %v8368, %v8407
    %v8422 = vmul.f32 %v8369, %v8411
    %v8423 = vmul.f32 %v8397, %v8415
    %v8424 = vmul.f32 %v8370, %v8403
    %v8425 = vmul.f32 %v8371, %v8407
    %v8426 = vmul.f32 %v8372, %v8411
    %v8427 = vmul.f32 %v8398, %v8415
    %v8428 = vmul.f32 %v8373, %v8403
    %v8429 = vmul.f32 %v8374, %v8407
    %v8430 = vmul.f32 %v8375, %v8411
    %v8431 = vmul.f32 %v8399, %v8415
    %v8432 = vld [vmem:[%s17] sm:$0xff]
    %8434 = vset.pattern.permute.xlu0 0
    %8435 = vperm.xlu0 %8434, %v8432
    %v8436 = vpop.permute.xlu0 %8435
    %v8439 = vsel %vm5487, %v7607, 0
    %8441 = vmatprep.subr.mxu0 %v7710
    %8442 = vmatpush1.msra.mxu0 %v7709
    %8443 = vmatprep.subr.mxu0 %v7714
    %8444 = vmatpush1.msra.mxu0 %v7713
    %8445 = vmatprep.subr.mxu0 %v7718
    %8446 = vmatpush1.msra.mxu0 %v7717
    %8447 = vmatprep.subr.mxu0 %v7722
    %8448 = vmatpush1.msra.mxu0 %v7721
    %8449 = vmatprep.subr.mxu0 %v7811
    %8450 = vmatpush1.msra.mxu0 %v7810
    %8451 = vmatprep.subr.mxu0 %v7815
    %8452 = vmatpush1.msra.mxu0 %v7814
    %8453 = vmatprep.subr.mxu0 %v7819
    %8454 = vmatpush1.msra.mxu0 %v7818
    %8455 = vmatprep.subr.mxu0 %v7823
    %8456 = vmatpush1.msra.mxu0 %v7822
    %8457 = vmatprep.subr.mxu0 %v7912
    %8458 = vmatpush1.msra.mxu0 %v7911
    %8459 = vmatprep.subr.mxu0 %v7916
    %8460 = vmatpush1.msra.mxu0 %v7915
    %8461 = vmatprep.subr.mxu0 %v7920
    %8462 = vmatpush1.msra.mxu0 %v7919
    %8463 = vmatprep.subr.mxu0 %v7924
    %8464 = vmatpush1.msra.mxu0 %v7923
    %8465 = vmatprep.subr.mxu0 %v8013
    %8466 = vmatpush1.msra.mxu0 %v8012
    %8467 = vmatprep.subr.mxu0 %v8017
    %8468 = vmatpush1.msra.mxu0 %v8016
    %8469 = vmatprep.subr.mxu0 %v8021
    %8470 = vmatpush1.msra.mxu0 %v8020
    %8471 = vmatprep.subr.mxu0 %v8025
    %8472 = vmatpush1.msra.mxu0 %v8024
    %8473 = vmatprep.subr.mxu0 %v7590
    %8474 = vmatpush1.msra.mxu0 %v7589
    %8475 = vmatprep.subr.mxu0 %v7594
    %8476 = vmatpush1.msra.mxu0 %v7593
    %8477 = vmatprep.subr.mxu0 %v7598
    %8478 = vmatpush1.msra.mxu0 %v7597
    %8479 = vmatprep.subr.mxu0 %v7602
    %8480 = vmatpush1.msra.mxu0 %v7601
    %8481 = vmatprep.subr.mxu0 %v8114
    %8482 = vmatpush1.msra.mxu0 %v8113
    %8483 = vmatprep.subr.mxu0 %v8118
    %8484 = vmatpush1.msra.mxu0 %v8117
    %8485 = vmatprep.subr.mxu0 %v8122
    %8486 = vmatpush1.msra.mxu0 %v8121
    %8487 = vmatprep.subr.mxu0 %v8126
    %8488 = vmatpush1.msra.mxu0 %v8125
    %8489 = vmatprep.subr.mxu0 %v8215
    %8490 = vmatpush1.msra.mxu0 %v8214
    %8491 = vmatprep.subr.mxu0 %v8219
    %8492 = vmatpush1.msra.mxu0 %v8218
    %8493 = vmatprep.subr.mxu0 %v8223
    %8494 = vmatpush1.msra.mxu0 %v8222
    %8495 = vmatprep.subr.mxu0 %v8227
    %8496 = vmatpush1.msra.mxu0 %v8226
    %8497 = vmatprep.subr.mxu0 %v8316
    %8498 = vmatpush1.msra.mxu0 %v8315
    %8499 = vmatprep.subr.mxu0 %v8320
    %8500 = vmatpush1.msra.mxu0 %v8319
    %8501 = vmatprep.subr.mxu0 %v8324
    %8502 = vmatpush1.msra.mxu0 %v8323
    %8503 = vmatprep.subr.mxu0 %v8328
    %8504 = vmatpush1.msra.mxu0 %v8327
    %8505 = vmatprep.mubr.f32.mxu0 %v7606
    %8506 = vmatmul.mubr.f32.gmra.mrb[0].mxu0 %v7605
    %v8507 = vpop.f32.mrb[0].mxu0
    %v8508 = vadd.f32 %v8436, %v8507
    %v8509 = vpop.f32.mrb[0].mxu0
    %v8510 = vadd.f32 %v8436, %v8509
    %8511 = vdwg.mxu0
    %8512 = vmatprep.subr.mxu0 %v8417
    %8513 = vmatpush1.msra.mxu0 %v8416
    %8514 = vmatprep.subr.mxu0 %v8421
    %8515 = vmatpush1.msra.mxu0 %v8420
    %8516 = vmatprep.subr.mxu0 %v8425
    %8517 = vmatpush1.msra.mxu0 %v8424
    %8518 = vmatprep.subr.mxu0 %v8429
    %8519 = vmatpush1.msra.mxu0 %v8428
    %8520 = vmatprep.subr.mxu0 0.0
    %8521 = vmatpush1.msra.mxu0 0.0
    %8522 = vmatprep.subr.mxu0 0.0
    %8523 = vmatpush1.msra.mxu0 0.0
    %8524 = vmatprep.subr.mxu0 0.0
    %8525 = vmatpush1.msra.mxu0 0.0
    %8526 = vmatprep.subr.mxu0 0.0
    %8527 = vmatpush1.msra.mxu0 0.0
    %8528 = vmatprep.subr.mxu0 0.0
    %8529 = vmatpush1.msra.mxu0 0.0
    %8530 = vmatprep.subr.mxu0 0.0
    %8531 = vmatpush1.msra.mxu0 0.0
    %8532 = vmatprep.subr.mxu0 0.0
    %8533 = vmatpush1.msra.mxu0 0.0
    %8534 = vmatprep.subr.mxu0 0.0
    %8535 = vmatpush1.msra.mxu0 0.0
    %8536 = vmatprep.subr.mxu0 0.0
    %8537 = vmatpush1.msra.mxu0 0.0
    %8538 = vmatprep.subr.mxu0 0.0
    %8539 = vmatpush1.msra.mxu0 0.0
    %8540 = vmatprep.subr.mxu0 0.0
    %8541 = vmatpush1.msra.mxu0 0.0
    %8542 = vmatprep.subr.mxu0 0.0
    %8543 = vmatpush1.msra.mxu0 0.0
    %8544 = vmatprep.subr.mxu0 0.0
    %8545 = vmatpush1.msra.mxu0 0.0
    %8546 = vmatprep.subr.mxu0 0.0
    %8547 = vmatpush1.msra.mxu0 0.0
    %8548 = vmatprep.subr.mxu0 0.0
    %8549 = vmatpush1.msra.mxu0 0.0
    %8550 = vmatprep.subr.mxu0 0.0
    %8551 = vmatpush1.msra.mxu0 0.0
    %8552 = vmatprep.subr.mxu0 0.0
    %8553 = vmatpush1.msra.mxu0 0.0
    %8554 = vmatprep.subr.mxu0 0.0
    %8555 = vmatpush1.msra.mxu0 0.0
    %8556 = vmatprep.subr.mxu0 0.0
    %8557 = vmatpush1.msra.mxu0 0.0
    %8558 = vmatprep.subr.mxu0 0.0
    %8559 = vmatpush1.msra.mxu0 0.0
    %8560 = vmatprep.subr.mxu0 0.0
    %8561 = vmatpush1.msra.mxu0 0.0
    %8562 = vmatprep.subr.mxu0 0.0
    %8563 = vmatpush1.msra.mxu0 0.0
    %8564 = vmatprep.subr.mxu0 0.0
    %8565 = vmatpush1.msra.mxu0 0.0
    %8566 = vmatprep.subr.mxu0 0.0
    %8567 = vmatpush1.msra.mxu0 0.0
    %8568 = vmatprep.subr.mxu0 0.0
    %8569 = vmatpush1.msra.mxu0 0.0
    %8570 = vmatprep.subr.mxu0 0.0
    %8571 = vmatpush1.msra.mxu0 0.0
    %8572 = vmatprep.subr.mxu0 0.0
    %8573 = vmatpush1.msra.mxu0 0.0
    %8574 = vmatprep.subr.mxu0 0.0
    %8575 = vmatpush1.msra.mxu0 0.0
    %8576 = vmatprep.mubr.f32.mxu0 0.0
    %8577 = vmatmul.mubr.f32.gmra.mrb[0].mxu0 %v8439
    %v8578 = vpop.f32.mrb[0].mxu0
    %v8579 = vadd.f32 %v8508, %v8578
    %v8580 = vpop.f32.mrb[0].mxu0
    %v8581 = vadd.f32 %v8510, %v8580
    %8582 = vdwg.mxu0
    %8583 = vmatprep.subr.mxu0 %v7712
    %8584 = vmatpush1.msra.mxu0 %v7711
    %8585 = vmatprep.subr.mxu0 %v7716
    %8586 = vmatpush1.msra.mxu0 %v7715
    %8587 = vmatprep.subr.mxu0 %v7720
    %8588 = vmatpush1.msra.mxu0 %v7719
    %8589 = vmatprep.subr.mxu0 %v7724
    %8590 = vmatpush1.msra.mxu0 %v7723
    %8591 = vmatprep.subr.mxu0 %v7813
    %8592 = vmatpush1.msra.mxu0 %v7812
    %8593 = vmatprep.subr.mxu0 %v7817
    %8594 = vmatpush1.msra.mxu0 %v7816
    %8595 = vmatprep.subr.mxu0 %v7821
    %8596 = vmatpush1.msra.mxu0 %v7820
    %8597 = vmatprep.subr.mxu0 %v7825
    %8598 = vmatpush1.msra.mxu0 %v7824
    %8599 = vmatprep.subr.mxu0 %v7914
    %8600 = vmatpush1.msra.mxu0 %v7913
    %8601 = vmatprep.subr.mxu0 %v7918
    %8602 = vmatpush1.msra.mxu0 %v7917
    %8603 = vmatprep.subr.mxu0 %v7922
    %8604 = vmatpush1.msra.mxu0 %v7921
    %8605 = vmatprep.subr.mxu0 %v7926
    %8606 = vmatpush1.msra.mxu0 %v7925
    %8607 = vmatprep.subr.mxu0 %v8015
    %8608 = vmatpush1.msra.mxu0 %v8014
    %8609 = vmatprep.subr.mxu0 %v8019
    %8610 = vmatpush1.msra.mxu0 %v8018
    %8611 = vmatprep.subr.mxu0 %v8023
    %8612 = vmatpush1.msra.mxu0 %v8022
    %8613 = vmatprep.subr.mxu0 %v8027
    %8614 = vmatpush1.msra.mxu0 %v8026
    %8615 = vmatprep.subr.mxu0 %v7592
    %8616 = vmatpush1.msra.mxu0 %v7591
    %8617 = vmatprep.subr.mxu0 %v7596
    %8618 = vmatpush1.msra.mxu0 %v7595
    %8619 = vmatprep.subr.mxu0 %v7600
    %8620 = vmatpush1.msra.mxu0 %v7599
    %8621 = vmatprep.subr.mxu0 %v7604
    %8622 = vmatpush1.msra.mxu0 %v7603
    %8623 = vmatprep.subr.mxu0 %v8116
    %8624 = vmatpush1.msra.mxu0 %v8115
    %8625 = vmatprep.subr.mxu0 %v8120
    %8626 = vmatpush1.msra.mxu0 %v8119
    %8627 = vmatprep.subr.mxu0 %v8124
    %8628 = vmatpush1.msra.mxu0 %v8123
    %8629 = vmatprep.subr.mxu0 %v8128
    %8630 = vmatpush1.msra.mxu0 %v8127
    %8631 = vmatprep.subr.mxu0 %v8217
    %8632 = vmatpush1.msra.mxu0 %v8216
    %8633 = vmatprep.subr.mxu0 %v8221
    %8634 = vmatpush1.msra.mxu0 %v8220
    %8635 = vmatprep.subr.mxu0 %v8225
    %8636 = vmatpush1.msra.mxu0 %v8224
    %8637 = vmatprep.subr.mxu0 %v8229
    %8638 = vmatpush1.msra.mxu0 %v8228
    %8639 = vmatprep.subr.mxu0 %v8318
    %8640 = vmatpush1.msra.mxu0 %v8317
    %8641 = vmatprep.subr.mxu0 %v8322
    %8642 = vmatpush1.msra.mxu0 %v8321
    %8643 = vmatprep.subr.mxu0 %v8326
    %8644 = vmatpush1.msra.mxu0 %v8325
    %8645 = vmatprep.subr.mxu0 %v8330
    %8646 = vmatpush1.msra.mxu0 %v8329
    %8647 = vmatprep.mubr.f32.mxu0 %v7606
    %8648 = vmatmul.mubr.f32.gmra.mrb[0].mxu0 %v7605
    %v8649 = vpop.f32.mrb[0].mxu0
    %v8650 = vadd.f32 %v8436, %v8649
    %v8651 = vpop.f32.mrb[0].mxu0
    %v8652 = vadd.f32 %v8436, %v8651
    %8653 = vdwg.mxu0
    %8654 = vmatprep.subr.mxu0 %v8419
    %8655 = vmatpush1.msra.mxu0 %v8418
    %8656 = vmatprep.subr.mxu0 %v8423
    %8657 = vmatpush1.msra.mxu0 %v8422
    %8658 = vmatprep.subr.mxu0 %v8427
    %8659 = vmatpush1.msra.mxu0 %v8426
    %8660 = vmatprep.subr.mxu0 %v8431
    %8661 = vmatpush1.msra.mxu0 %v8430
    %8662 = vmatprep.subr.mxu0 0.0
    %8663 = vmatpush1.msra.mxu0 0.0
    %8664 = vmatprep.subr.mxu0 0.0
    %8665 = vmatpush1.msra.mxu0 0.0
    %8666 = vmatprep.subr.mxu0 0.0
    %8667 = vmatpush1.msra.mxu0 0.0
    %8668 = vmatprep.subr.mxu0 0.0
    %8669 = vmatpush1.msra.mxu0 0.0
    %8670 = vmatprep.subr.mxu0 0.0
    %8671 = vmatpush1.msra.mxu0 0.0
    %8672 = vmatprep.subr.mxu0 0.0
    %8673 = vmatpush1.msra.mxu0 0.0
    %8674 = vmatprep.subr.mxu0 0.0
    %8675 = vmatpush1.msra.mxu0 0.0
    %8676 = vmatprep.subr.mxu0 0.0
    %8677 = vmatpush1.msra.mxu0 0.0
    %8678 = vmatprep.subr.mxu0 0.0
    %8679 = vmatpush1.msra.mxu0 0.0
    %8680 = vmatprep.subr.mxu0 0.0
    %8681 = vmatpush1.msra.mxu0 0.0
    %8682 = vmatprep.subr.mxu0 0.0
    %8683 = vmatpush1.msra.mxu0 0.0
    %8684 = vmatprep.subr.mxu0 0.0
    %8685 = vmatpush1.msra.mxu0 0.0
    %8686 = vmatprep.subr.mxu0 0.0
    %8687 = vmatpush1.msra.mxu0 0.0
    %8688 = vmatprep.subr.mxu0 0.0
    %8689 = vmatpush1.msra.mxu0 0.0
    %8690 = vmatprep.subr.mxu0 0.0
    %8691 = vmatpush1.msra.mxu0 0.0
    %8692 = vmatprep.subr.mxu0 0.0
    %8693 = vmatpush1.msra.mxu0 0.0
    %8694 = vmatprep.subr.mxu0 0.0
    %8695 = vmatpush1.msra.mxu0 0.0
    %8696 = vmatprep.subr.mxu0 0.0
    %8697 = vmatpush1.msra.mxu0 0.0
    %8698 = vmatprep.subr.mxu0 0.0
    %8699 = vmatpush1.msra.mxu0 0.0
    %8700 = vmatprep.subr.mxu0 0.0
    %8701 = vmatpush1.msra.mxu0 0.0
    %8702 = vmatprep.subr.mxu0 0.0
    %8703 = vmatpush1.msra.mxu0 0.0
    %8704 = vmatprep.subr.mxu0 0.0
    %8705 = vmatpush1.msra.mxu0 0.0
    %8706 = vmatprep.subr.mxu0 0.0
    %8707 = vmatpush1.msra.mxu0 0.0
    %8708 = vmatprep.subr.mxu0 0.0
    %8709 = vmatpush1.msra.mxu0 0.0
    %8710 = vmatprep.subr.mxu0 0.0
    %8711 = vmatpush1.msra.mxu0 0.0
    %8712 = vmatprep.subr.mxu0 0.0
    %8713 = vmatpush1.msra.mxu0 0.0
    %8714 = vmatprep.subr.mxu0 0.0
    %8715 = vmatpush1.msra.mxu0 0.0
    %8716 = vmatprep.subr.mxu0 0.0
    %8717 = vmatpush1.msra.mxu0 0.0
    %8718 = vmatprep.mubr.f32.mxu0 0.0
    %8719 = vmatmul.mubr.f32.gmra.mrb[0].mxu0 %v8439
    %v8720 = vpop.f32.mrb[0].mxu0
    %v8721 = vadd.f32 %v8650, %v8720
    %v8722 = vpop.f32.mrb[0].mxu0
    %v8723 = vadd.f32 %v8652, %v8722
    %8724 = vdwg.mxu0
    %v8725 = vadd.f32 %v8579, %v482
    %v8726 = vadd.f32 %v8581, %v484
    %v8727 = vadd.f32 %v8721, %v583
    %v8728 = vadd.f32 %v8723, %v585
    %v8729 = vld [vmem:[%s18] sm:$0xff]
    %v8730 = vld [vmem:[%s18 + $0x8] sm:$0xff]
    %v8731 = vld [vmem:[%s19] sm:$0xff]
    %v8732 = vld [vmem:[%s19 + $0x8] sm:$0xff]
    %8734 = vset.pattern.permute.xlu0 0
    %8735 = vperm.xlu0 %8734, %v8731
    %v8736 = vpop.permute.xlu0 %8735
    %8739 = vset.pattern.permute.xlu0 0
    %8740 = vperm.xlu0 %8739, %v8732
    %v8741 = vpop.permute.xlu0 %8740
    %v8744 = vsel %vm7761, %v8729, 0
    %v8747 = vsel %vm7761, %v8730, 0
    %8749 = vmatprep.subr.mxu0 %v4487
    %8750 = vmatpush1.msra.mxu0 %v4486
    %8751 = vmatprep.subr.mxu0 %v4491
    %8752 = vmatpush1.msra.mxu0 %v4490
    %8753 = vmatprep.subr.mxu0 %v4495
    %8754 = vmatpush1.msra.mxu0 %v4494
    %8755 = vmatprep.subr.mxu0 %v7191
    %8756 = vmatpush1.msra.mxu0 %v7190
    %8757 = vmatprep.subr.mxu0 %v7195
    %8758 = vmatpush1.msra.mxu0 %v7194
    %8759 = vmatprep.subr.mxu0 %v8726
    %8760 = vmatpush1.msra.mxu0 %v8725
    %8761 = vmatprep.subr.mxu0 0.0
    %8762 = vmatpush1.msra.mxu0 0.0
    %8763 = vmatprep.subr.mxu0 0.0
    %8764 = vmatpush1.msra.mxu0 0.0
    %8765 = vmatprep.subr.mxu0 0.0
    %8766 = vmatpush1.msra.mxu0 0.0
    %8767 = vmatprep.subr.mxu0 0.0
    %8768 = vmatpush1.msra.mxu0 0.0
    %8769 = vmatprep.subr.mxu0 0.0
    %8770 = vmatpush1.msra.mxu0 0.0
    %8771 = vmatprep.subr.mxu0 0.0
    %8772 = vmatpush1.msra.mxu0 0.0
    %8773 = vmatprep.subr.mxu0 0.0
    %8774 = vmatpush1.msra.mxu0 0.0
    %8775 = vmatprep.subr.mxu0 0.0
    %8776 = vmatpush1.msra.mxu0 0.0
    %8777 = vmatprep.subr.mxu0 0.0
    %8778 = vmatpush1.msra.mxu0 0.0
    %8779 = vmatprep.subr.mxu0 0.0
    %8780 = vmatpush1.msra.mxu0 0.0
    %8781 = vmatprep.subr.mxu0 0.0
    %8782 = vmatpush1.msra.mxu0 0.0
    %8783 = vmatprep.subr.mxu0 0.0
    %8784 = vmatpush1.msra.mxu0 0.0
    %8785 = vmatprep.subr.mxu0 0.0
    %8786 = vmatpush1.msra.mxu0 0.0
    %8787 = vmatprep.subr.mxu0 0.0
    %8788 = vmatpush1.msra.mxu0 0.0
    %8789 = vmatprep.subr.mxu0 0.0
    %8790 = vmatpush1.msra.mxu0 0.0
    %8791 = vmatprep.subr.mxu0 0.0
    %8792 = vmatpush1.msra.mxu0 0.0
    %8793 = vmatprep.subr.mxu0 0.0
    %8794 = vmatpush1.msra.mxu0 0.0
    %8795 = vmatprep.subr.mxu0 0.0
    %8796 = vmatpush1.msra.mxu0 0.0
    %8797 = vmatprep.subr.mxu0 0.0
    %8798 = vmatpush1.msra.mxu0 0.0
    %8799 = vmatprep.subr.mxu0 0.0
    %8800 = vmatpush1.msra.mxu0 0.0
    %8801 = vmatprep.subr.mxu0 0.0
    %8802 = vmatpush1.msra.mxu0 0.0
    %8803 = vmatprep.subr.mxu0 0.0
    %8804 = vmatpush1.msra.mxu0 0.0
    %8805 = vmatprep.subr.mxu0 0.0
    %8806 = vmatpush1.msra.mxu0 0.0
    %8807 = vmatprep.subr.mxu0 0.0
    %8808 = vmatpush1.msra.mxu0 0.0
    %8809 = vmatprep.subr.mxu0 0.0
    %8810 = vmatpush1.msra.mxu0 0.0
    %8811 = vmatprep.subr.mxu0 0.0
    %8812 = vmatpush1.msra.mxu0 0.0
    %8813 = vmatprep.mubr.f32.mxu0 0.0
    %8814 = vmatmul.mubr.f32.gmra.mrb[0].mxu0 %v8744
    %v8815 = vpop.f32.mrb[0].mxu0
    %v8816 = vadd.f32 %v8736, %v8815
    %v8817 = vpop.f32.mrb[0].mxu0
    %v8818 = vadd.f32 %v8736, %v8817
    %8819 = vmatprep.mubr.f32.mxu0 0.0
    %8820 = vmatmul.mubr.f32.gmra.mrb[0].mxu0 %v8747
    %v8821 = vpop.f32.mrb[0].mxu0
    %v8822 = vadd.f32 %v8741, %v8821
    %v8823 = vpop.f32.mrb[0].mxu0
    %v8824 = vadd.f32 %v8741, %v8823
    %8825 = vdwg.mxu0
    %8826 = vmatprep.subr.mxu0 %v4489
    %8827 = vmatpush1.msra.mxu0 %v4488
    %8828 = vmatprep.subr.mxu0 %v4493
    %8829 = vmatpush1.msra.mxu0 %v4492
    %8830 = vmatprep.subr.mxu0 %v4497
    %8831 = vmatpush1.msra.mxu0 %v4496
    %8832 = vmatprep.subr.mxu0 %v7193
    %8833 = vmatpush1.msra.mxu0 %v7192
    %8834 = vmatprep.subr.mxu0 %v7197
    %8835 = vmatpush1.msra.mxu0 %v7196
    %8836 = vmatprep.subr.mxu0 %v8728
    %8837 = vmatpush1.msra.mxu0 %v8727
    %8838 = vmatprep.subr.mxu0 0.0
    %8839 = vmatpush1.msra.mxu0 0.0
    %8840 = vmatprep.subr.mxu0 0.0
    %8841 = vmatpush1.msra.mxu0 0.0
    %8842 = vmatprep.subr.mxu0 0.0
    %8843 = vmatpush1.msra.mxu0 0.0
    %8844 = vmatprep.subr.mxu0 0.0
    %8845 = vmatpush1.msra.mxu0 0.0
    %8846 = vmatprep.subr.mxu0 0.0
    %8847 = vmatpush1.msra.mxu0 0.0
    %8848 = vmatprep.subr.mxu0 0.0
    %8849 = vmatpush1.msra.mxu0 0.0
    %8850 = vmatprep.subr.mxu0 0.0
    %8851 = vmatpush1.msra.mxu0 0.0
    %8852 = vmatprep.subr.mxu0 0.0
    %8853 = vmatpush1.msra.mxu0 0.0
    %8854 = vmatprep.subr.mxu0 0.0
    %8855 = vmatpush1.msra.mxu0 0.0
    %8856 = vmatprep.subr.mxu0 0.0
    %8857 = vmatpush1.msra.mxu0 0.0
    %8858 = vmatprep.subr.mxu0 0.0
    %8859 = vmatpush1.msra.mxu0 0.0
    %8860 = vmatprep.subr.mxu0 0.0
    %8861 = vmatpush1.msra.mxu0 0.0
    %8862 = vmatprep.subr.mxu0 0.0
    %8863 = vmatpush1.msra.mxu0 0.0
    %8864 = vmatprep.subr.mxu0 0.0
    %8865 = vmatpush1.msra.mxu0 0.0
    %8866 = vmatprep.subr.mxu0 0.0
    %8867 = vmatpush1.msra.mxu0 0.0
    %8868 = vmatprep.subr.mxu0 0.0
    %8869 = vmatpush1.msra.mxu0 0.0
    %8870 = vmatprep.subr.mxu0 0.0
    %8871 = vmatpush1.msra.mxu0 0.0
    %8872 = vmatprep.subr.mxu0 0.0
    %8873 = vmatpush1.msra.mxu0 0.0
    %8874 = vmatprep.subr.mxu0 0.0
    %8875 = vmatpush1.msra.mxu0 0.0
    %8876 = vmatprep.subr.mxu0 0.0
    %8877 = vmatpush1.msra.mxu0 0.0
    %8878 = vmatprep.subr.mxu0 0.0
    %8879 = vmatpush1.msra.mxu0 0.0
    %8880 = vmatprep.subr.mxu0 0.0
    %8881 = vmatpush1.msra.mxu0 0.0
    %8882 = vmatprep.subr.mxu0 0.0
    %8883 = vmatpush1.msra.mxu0 0.0
    %8884 = vmatprep.subr.mxu0 0.0
    %8885 = vmatpush1.msra.mxu0 0.0
    %8886 = vmatprep.subr.mxu0 0.0
    %8887 = vmatpush1.msra.mxu0 0.0
    %8888 = vmatprep.subr.mxu0 0.0
    %8889 = vmatpush1.msra.mxu0 0.0
    %8890 = vmatprep.mubr.f32.mxu0 0.0
    %8891 = vmatmul.mubr.f32.gmra.mrb[0].mxu0 %v8744
    %v8892 = vpop.f32.mrb[0].mxu0
    %v8893 = vadd.f32 %v8736, %v8892
    %v8894 = vpop.f32.mrb[0].mxu0
    %v8895 = vadd.f32 %v8736, %v8894
    %8896 = vmatprep.mubr.f32.mxu0 0.0
    %8897 = vmatmul.mubr.f32.gmra.mrb[0].mxu0 %v8747
    %v8898 = vpop.f32.mrb[0].mxu0
    %v8899 = vadd.f32 %v8741, %v8898
    %v8900 = vpop.f32.mrb[0].mxu0
    %v8901 = vadd.f32 %v8741, %v8900
    %8902 = vdwg.mxu0
    %v8903 = vadd.f32 %v8816, %v8818
    %8904 = vadd.xlane.f32.xlu0 %v8903
    %v8905 = vpop.xlane.xlu0 %8904
    %v8906 = vadd.f32 %v8822, %v8824
    %8907 = vadd.xlane.f32.xlu0 %v8906
    %v8908 = vpop.xlane.xlu0 %8907
    %v8909 = vrcp.pop 256.0
    %v8910 = vmul.f32 %v8905, %v8909
    %v8911 = vmul.f32 %v8908, %v8909
    %v8912 = vld [vmem:[%s20] sm:$0xff]
    %v8913 = vld [vmem:[%s20 + $0x8] sm:$0xff]
    %v8914 = vmul.f32 %v8912, %v8910
    %v8915 = vmul.f32 %v8913, %v8911
    %v8916 = vsel %vm5857, %v8914, 0.0
    %v8917 = vsel %vm5857, %v8915, 0.0
    %v8918 = vadd.f32 %v8916, %v8917
    %v8919 = vrot.slane %v8918, 4
    %v8920 = vadd.f32 %v8918, %v8919
    %v8921 = vrot.slane %v8920, 2
    %v8922 = vadd.f32 %v8920, %v8921
    %v8923 = vrot.slane %v8922, 1
    %v8924 = vadd.f32 %v8922, %v8923
    %v8925 = vld [vmem:[%s21] sm:$0x1]
    %v8926 = vadd.f32 %v8924, %v8925
    %v8927 = vmax.f32 %v8926, 0.0
    %v8928 = vld [vmem:[%s22] sm:$0xff]
    %v8929 = vld [vmem:[%s22 + $0x8] sm:$0xff]
    %v8930 = vlaneseq
    %v8931 = vshrl.u32 %v8930, 7
    %v8932 = vsub.s32 0, %v8931
    %v8933 = vrot.slane %v8927, %v8932
    %v8934 = vmul.f32 %v8928, %v8933
    %v8935 = vmul.f32 %v8929, %v8933
    %v8936 = vsel %vm5857, %v8934, 0.0
    %8937 = vadd.xlane.f32.xlu0 %v8936
    %v8938 = vpop.xlane.xlu0 %8937
    %v8939 = vsel %vm5857, %v8935, 0.0
    %8940 = vadd.xlane.f32.xlu0 %v8939
    %v8941 = vpop.xlane.xlu0 %8940
    %v8942 = vld [vmem:[%s23] sm:$0xff]
    %v8943 = vld [vmem:[%s23 + $0x8] sm:$0xff]
    %v8944 = vadd.f32 %v8938, %v8942
    %v8945 = vadd.f32 %v8941, %v8943
    %v8946 = vxor.u32 %v8944, 2147483648
    %v8947 = vxor.u32 %v8945, 2147483648
    %v8948 = vmul.f32 %v8946, 1.442695
    %v8949 = vpow.pop %v8948
    %v8950 = vmul.f32 %v8947, 1.442695
    %v8951 = vpow.pop %v8950
    %v8952 = vadd.f32 %v8949, 1.0
    %v8953 = vadd.f32 %v8951, 1.0
    %v8954 = vrcp.pop %v8952
    %v8955 = vmul.f32 1.0, %v8954
    %v8956 = vrcp.pop %v8953
    %v8957 = vmul.f32 1.0, %v8956
    %8959 = vset.pattern.permute.xlu0 0
    %8960 = vperm.xlu0 %8959, %v8955
    %v8961 = vpop.permute.xlu0 %8960
    %8964 = vset.pattern.permute.xlu0 0
    %8965 = vperm.xlu0 %8964, %v8957
    %v8966 = vpop.permute.xlu0 %8965
    %v8968 = vmul.f32 %v8816, %v8961
    %v8969 = vmul.f32 %v8818, %v8961
    %v8970 = vmul.f32 %v8822, %v8966
    %v8971 = vmul.f32 %v8824, %v8966
    %v8972 = vadd.f32 %v8968, %v237
    %v8973 = vadd.f32 %v8969, %v239
    %v8974 = vadd.f32 %v8970, %v243
    %v8975 = vadd.f32 %v8971, %v245
    %8976 = vst [vmem:[#allocation10] sm:$0xff] %v8972
    %8977 = vst [vmem:[#allocation10 + $0x8] sm:$0xff] %v8973
    %8978 = vst [vmem:[#allocation10 + $0x10] sm:$0xff] %v8974
    %8979 = vst [vmem:[#allocation10 + $0x18] sm:$0xff] %v8975
    %v8980 = vadd.f32 %v8893, %v8895
    %8981 = vadd.xlane.f32.xlu0 %v8980
    %v8982 = vpop.xlane.xlu0 %8981
    %v8983 = vadd.f32 %v8899, %v8901
    %8984 = vadd.xlane.f32.xlu0 %v8983
    %v8985 = vpop.xlane.xlu0 %8984
    %v8986 = vmul.f32 %v8982, %v8909
    %v8987 = vmul.f32 %v8985, %v8909
    %v8988 = vld [vmem:[%s20] sm:$0xff]
    %v8989 = vld [vmem:[%s20 + $0x8] sm:$0xff]
    %v8990 = vmul.f32 %v8988, %v8986
    %v8991 = vmul.f32 %v8989, %v8987
    %v8992 = vsel %vm5857, %v8990, 0.0
    %v8993 = vsel %vm5857, %v8991, 0.0
    %v8994 = vadd.f32 %v8992, %v8993
    %v8995 = vrot.slane %v8994, 4
    %v8996 = vadd.f32 %v8994, %v8995
    %v8997 = vrot.slane %v8996, 2
    %v8998 = vadd.f32 %v8996, %v8997
    %v8999 = vrot.slane %v8998, 1
    %v9000 = vadd.f32 %v8998, %v8999
    %v9001 = vld [vmem:[%s21] sm:$0x1]
    %v9002 = vadd.f32 %v9000, %v9001
    %v9003 = vmax.f32 %v9002, 0.0
    %v9004 = vld [vmem:[%s22] sm:$0xff]
    %v9005 = vld [vmem:[%s22 + $0x8] sm:$0xff]
    %v9006 = vlaneseq
    %v9007 = vshrl.u32 %v9006, 7
    %v9008 = vsub.s32 0, %v9007
    %v9009 = vrot.slane %v9003, %v9008
    %v9010 = vmul.f32 %v9004, %v9009
    %v9011 = vmul.f32 %v9005, %v9009
    %v9012 = vsel %vm5857, %v9010, 0.0
    %9013 = vadd.xlane.f32.xlu0 %v9012
    %v9014 = vpop.xlane.xlu0 %9013
    %v9015 = vsel %vm5857, %v9011, 0.0
    %9016 = vadd.xlane.f32.xlu0 %v9015
    %v9017 = vpop.xlane.xlu0 %9016
    %v9018 = vld [vmem:[%s23] sm:$0xff]
    %v9019 = vld [vmem:[%s23 + $0x8] sm:$0xff]
    %v9020 = vadd.f32 %v9014, %v9018
    %v9021 = vadd.f32 %v9017, %v9019
    %v9022 = vxor.u32 %v9020, 2147483648
    %v9023 = vxor.u32 %v9021, 2147483648
    %v9024 = vmul.f32 %v9022, 1.442695
    %v9025 = vpow.pop %v9024
    %v9026 = vmul.f32 %v9023, 1.442695
    %v9027 = vpow.pop %v9026
    %v9028 = vadd.f32 %v9025, 1.0
    %v9029 = vadd.f32 %v9027, 1.0
    %v9030 = vrcp.pop %v9028
    %v9031 = vmul.f32 1.0, %v9030
    %v9032 = vrcp.pop %v9029
    %v9033 = vmul.f32 1.0, %v9032
    %9035 = vset.pattern.permute.xlu0 0
    %9036 = vperm.xlu0 %9035, %v9031
    %v9037 = vpop.permute.xlu0 %9036
    %9040 = vset.pattern.permute.xlu0 0
    %9041 = vperm.xlu0 %9040, %v9033
    %v9042 = vpop.permute.xlu0 %9041
    %v9044 = vmul.f32 %v8893, %v9037
    %v9045 = vmul.f32 %v8895, %v9037
    %v9046 = vmul.f32 %v8899, %v9042
    %v9047 = vmul.f32 %v8901, %v9042
    %v9048 = vadd.f32 %v9044, %v314
    %v9049 = vadd.f32 %v9045, %v316
    %v9050 = vadd.f32 %v9046, %v320
    %v9051 = vadd.f32 %v9047, %v322
    %s9052 = scalar_lea.vmem [#allocation10], 32
    %9053 = vst [vmem:[%s9052] sm:$0xff] %v9048
    %9054 = vst [vmem:[%s9052 + $0x8] sm:$0xff] %v9049
    %9055 = vst [vmem:[%s9052 + $0x10] sm:$0xff] %v9050
    %9056 = vst [vmem:[%s9052 + $0x18] sm:$0xff] %v9051
    // Predicated region
    $region114: #{tpu_custom_call.1} parent=1 // pred_check
      _
    $region115: #{tpu_custom_call.1} parent=1 // pred_check_branch
      %9058 = sbr.rel (0) target = $region117
    $region116: #{tpu_custom_call.1} parent=1 // pred_region
      %s9060 = ssub.s32 1024, 1024
      %9061 = vsyncadd [#allocation4], %s9060
      %s9062 = sshll.u32 [#allocation10], 4
      %s9063 = int_to_ptr.vmem [resolvable:$true] %s9062
      %9068 = dma.vmem_to_hbm [thread:$0]  %s9063, 1024, %s24, [#allocation4], 256, 256, 16
    $region117: #{tpu_custom_call.1} parent=1 // pred_fallthru
      _
    // Predicated region
    $region118: #{tpu_custom_call.1} parent=1 // pred_check
      _
    $region119: #{tpu_custom_call.1} parent=1 // pred_check_branch
      %9070 = sbr.rel (0) target = $region121
    $region120: #{tpu_custom_call.1} parent=1 // pred_region
      %9071 = dma.done [#allocation4], 1024
    $region121: #{tpu_custom_call.1} parent=1 // pred_fallthru
      _
    %9072 = vsyncpa [#allocation3], 1
    %9073 = vsyncpa [#allocation6], 1
    %9074 = vsyncpa [#allocation9], 1
    %9075 = vsyncpa [#allocation4], 1

</llo_original>
